<compile_context>
chip_gen: v7x
topology: tpu7x:2x2x1
jax: 0.10.0
libtpu: 0.0.40
codegen_flags: <defaults>
</compile_context>

<pallas_src>
import functools
import math

import jax
import jax.numpy as jnp
from jax import lax
from jax.experimental import pallas as pl
from jax.experimental.pallas import tpu as pltpu  # noqa: F401  (TPU backend assumed)


# ----------------------------------------------------------------------------
# Shared helpers
# ----------------------------------------------------------------------------
def _pooled_len(lin, k):
    lc = lin + 2 * (k // 2) - k + 1        # Conv1d, stride 1, padding k//2
    return lc // 2 + 1                     # MaxPool1d(2, 2, padding=1)


def _bias_layout(num_layers):
    """Row index of every small (1, C) tensor inside the packed bias buffer."""
    names = ["c1_scale", "c1_shift", "c2_scale", "c2_shift",
             "c3_scale", "c3_shift", "p2e_b", "hb1", "hb2"]
    for li in range(num_layers):
        names += [f"bq{li}", f"bk{li}", f"bv{li}", f"bo{li}",
                  f"ln1g{li}", f"ln1b{li}", f"bf2_{li}",
                  f"ln2g{li}", f"ln2b{li}"]
    return {n: i for i, n in enumerate(names)}


# ----------------------------------------------------------------------------
# Fused forward kernel (whole finetune pass, VMEM resident)
# ----------------------------------------------------------------------------
def _fused_finetune_kernel(
    # inputs ------------------------------------------------------------------
    x_ref,                                   # (B*L, Cin)   channels-last, row-flattened
    c1w_ref, c2w_ref, c3w_ref,               # (cin, K*cout) f32 per conv block
    p2ew_ref,                                 # (Cf, D) f32
    bias_ref,                                 # (rows, >=128) f32 packed small vectors
    wsmall_ref,                               # (4*NL, D, D) f32  [wq, wk, wv, wo] per layer
    wf1_ref,                                  # (NL, D, F)  bf16
    wf2t_ref,                                 # (NL, D, F)  bf16  (transposed FFN-2 weight)
    bf1_ref,                                  # (NL, 1, F)  f32
    hw1t_ref,                                 # (H1, Lf*D)  bf16  (transposed head-1 weight)
    hw2_ref,                                  # (H1, ncls)  f32
    # outputs -----------------------------------------------------------------
    logits_ref,                               # (B, ncls)
    enc_ref,                                  # (B, Lf*D)  lane-dense encoder output
    # static config -----------------------------------------------------------
    *, B, L, nhead, num_layers,
):
    f32 = jnp.float32
    bf16 = jnp.bfloat16
    layout = _bias_layout(num_layers)

    def vec(name, width):
        r = layout[name]
        return bias_ref[r:r + 1, 0:width]                       # (1, width) f32

    # -- block-diagonal index grids (batches stay independent in 2-D layout) --
    def block_id(idx, rows_per_block):
        out = jnp.zeros_like(idx)
        for t in range(1, B):
            out = out + jnp.where(idx >= t * rows_per_block, 1, 0)
        return out

    def blockdiag_locals(rows_per_b, cols_per_b):
        R, C = B * rows_per_b, B * cols_per_b
        ri = lax.broadcasted_iota(jnp.int32, (R, C), 0)
        ci = lax.broadcasted_iota(jnp.int32, (R, C), 1)
        rb = block_id(ri, rows_per_b)
        cb = block_id(ci, cols_per_b)
        return (rb == cb), ri - rb * rows_per_b, ci - cb * cols_per_b

    # ---- instance norm over time per (batch, channel); biased var, eps=1e-5 ----
    x = x_ref[...].astype(f32)                                   # (B*L, Cin)
    same_n, _, _ = blockdiag_locals(L, L)
    avg = jnp.where(same_n, 1.0 / L, 0.0).astype(f32)            # block-diag mean matrix
    mu = jnp.dot(avg, x, preferred_element_type=f32)
    xc = x - mu
    var = jnp.dot(avg, xc * xc, preferred_element_type=f32)
    h = xc * lax.rsqrt(var + 1e-5)

    # ---- conv blocks: Conv1d(stride=1, bias=False) + BN(eval) + ReLU + MaxPool(2,2,1) ----
    def conv_block(h_in, lin, w2d_ref, cout, scale, shift):
        kk = w2d_ref.shape[1] // cout
        pad = kk // 2
        lc = lin + 2 * pad - kk + 1

        # ONE lane-dense weight matmul for all K taps (review item: K+1 matmuls)
        y_all = jnp.dot(h_in, w2d_ref[...], preferred_element_type=f32)   # (B*lin, K*cout)

        same_c, rl_c, cl_c = blockdiag_locals(lc, lin)
        acc = jnp.zeros((B * lc, cout), f32)
        for k in range(kk):
            sel = jnp.where(same_c & (cl_c == rl_c + (k - pad)), 1.0, 0.0).astype(f32)
            acc = acc + jnp.dot(sel, y_all[:, k * cout:(k + 1) * cout],
                                preferred_element_type=f32)

        y = jnp.maximum(acc * scale + shift, 0.0)                # BN(eval) + ReLU

        # MaxPool1d(kernel=2, stride=2, padding=1): out[j] = max(y[2j-1], y[2j]).
        # Out-of-range taps become all-zero selection rows; ReLU output >= 0 so
        # this reproduces PyTorch's -inf padding semantics exactly.
        lp = lc // 2 + 1
        same_p, rl_p, cl_p = blockdiag_locals(lp, lc)
        pa = jnp.where(same_p & (cl_p == 2 * rl_p - 1), 1.0, 0.0).astype(f32)
        pb = jnp.where(same_p & (cl_p == 2 * rl_p), 1.0, 0.0).astype(f32)
        pooled = jnp.maximum(jnp.dot(pa, y, preferred_element_type=f32),
                             jnp.dot(pb, y, preferred_element_type=f32))
        return pooled, lp

    cout3 = c3w_ref.shape[1] // 8
    h, l1 = conv_block(h, L,  c1w_ref, 32,    vec("c1_scale", 32),    vec("c1_shift", 32))
    h, l2 = conv_block(h, l1, c2w_ref, 64,    vec("c2_scale", 64),    vec("c2_shift", 64))
    h, lf = conv_block(h, l2, c3w_ref, cout3, vec("c3_scale", cout3), vec("c3_shift", cout3))

    # ---- patch_to_embedding ----
    D = p2ew_ref.shape[1]
    e = jnp.dot(h, p2ew_ref[...], preferred_element_type=f32) + vec("p2e_b", D)   # (B*Lf, D)
    n = B * lf
    dh = D // nhead
    scale = 1.0 / math.sqrt(dh)

    # additive mask: a token only attends to tokens of its own batch element
    same_a, _, _ = blockdiag_locals(lf, lf)
    neg_mask = jnp.where(same_a, 0.0, -1e9).astype(f32)

    def layer_norm(v, g, b):
        m = jnp.mean(v, axis=1, keepdims=True)
        d = v - m
        var_ = jnp.mean(d * d, axis=1, keepdims=True)
        return d * lax.rsqrt(var_ + 1e-5) * g + b

    # ---- TransformerEncoder (post-norm, ReLU FFN, eval-mode dropout = identity) ----
    for li in range(num_layers):
        wq = wsmall_ref[4 * li + 0]
        wk = wsmall_ref[4 * li + 1]
        wv = wsmall_ref[4 * li + 2]
        wo = wsmall_ref[4 * li + 3]
        q = jnp.dot(e, wq, preferred_element_type=f32) + vec(f"bq{li}", D)
        k = jnp.dot(e, wk, preferred_element_type=f32) + vec(f"bk{li}", D)
        v = jnp.dot(e, wv, preferred_element_type=f32) + vec(f"bv{li}", D)

        head_outs = []
        for hh in range(nhead):
            lo, hi = hh * dh, (hh + 1) * dh
            s = lax.dot_general(q[:, lo:hi] * scale, k[:, lo:hi],
                                (((1,), (1,)), ((), ())),
                                preferred_element_type=f32)       # (n, n)
            s = s + neg_mask
            s = s - jnp.max(s, axis=-1, keepdims=True)
            p = jnp.exp(s)
            p = p * pl.reciprocal(jnp.sum(p, axis=-1, keepdims=True), approx=True)
            head_outs.append(jnp.dot(p, v[:, lo:hi], preferred_element_type=f32))
        attn = jnp.concatenate(head_outs, axis=1)                 # (n, D) == concat(heads)

        attn = jnp.dot(attn, wo, preferred_element_type=f32) + vec(f"bo{li}", D)
        e = layer_norm(e + attn, vec(f"ln1g{li}", D), vec(f"ln1b{li}", D))

        # FFN: bf16 weights, f32 accumulation / bias / residual
        ff = jnp.dot(e.astype(bf16), wf1_ref[li],
                     preferred_element_type=f32) + bf1_ref[li]
        ff = jnp.maximum(ff, 0.0)
        ff = lax.dot_general(ff.astype(bf16), wf2t_ref[li],
                             (((1,), (1,)), ((), ())),
                             preferred_element_type=f32) + vec(f"bf2_{li}", D)
        e = layer_norm(e + ff, vec(f"ln2g{li}", D), vec(f"ln2b{li}", D))

    # ---- flatten (B*Lf, D) -> (B, Lf*D): row-gather matmuls + lane concat ----
    rr = lax.broadcasted_iota(jnp.int32, (B, n), 0)
    rc = lax.broadcasted_iota(jnp.int32, (B, n), 1)
    pieces = []
    for pos in range(lf):
        rsel = jnp.where(rc == rr * lf + pos, 1.0, 0.0).astype(f32)   # pick row b*lf+pos
        pieces.append(jnp.dot(rsel, e, preferred_element_type=f32))   # (B, D)
    enc_flat = jnp.concatenate(pieces, axis=1)                        # (B, Lf*D) lane-dense
    enc_ref[...] = enc_flat

    # ---- logits head: Linear -> ReLU -> Linear (hw1 bf16, lane-dense transposed) ----
    h1w = hw1t_ref.shape[0]
    h1 = lax.dot_general(enc_flat.astype(bf16), hw1t_ref[...],
                         (((1,), (1,)), ((), ())),
                         preferred_element_type=f32) + vec("hb1", h1w)
    h1 = jnp.maximum(h1, 0.0)
    ncls = hw2_ref.shape[1]
    logits_ref[...] = jnp.dot(h1, hw2_ref[...], preferred_element_type=f32) + vec("hb2", ncls)


# ----------------------------------------------------------------------------
# Parameter preparation (BN folding, weight re-layout, bias packing)
# ----------------------------------------------------------------------------
def prepare_params(params):
    f32 = jnp.float32
    bf16 = jnp.bfloat16

    def fold_bn(blk):
        scale = blk["gamma"] / jnp.sqrt(blk["rv"] + 1e-5)
        shift = blk["beta"] - blk["rm"] * scale
        return scale, shift

    def conv_w2d(w):                       # (K, cin, cout) -> (cin, K*cout), lane-dense
        K, cin, cout = w.shape
        return jnp.transpose(w, (1, 0, 2)).reshape(cin, K * cout).astype(f32)

    enc = params["encoder"]
    NL = len(enc)
    layout = _bias_layout(NL)

    # collect every small vector and pack into one (rows, lanes) f32 buffer
    entries = {}
    s, t = fold_bn(params["conv1"]); entries["c1_scale"], entries["c1_shift"] = s, t
    s, t = fold_bn(params["conv2"]); entries["c2_scale"], entries["c2_shift"] = s, t
    s, t = fold_bn(params["conv3"]); entries["c3_scale"], entries["c3_shift"] = s, t
    entries["p2e_b"] = params["p2e_b"]
    entries["hb1"] = params["log1_b"]
    entries["hb2"] = params["log2_b"]
    for li, p in enumerate(enc):
        entries[f"bq{li}"] = p["bq"]; entries[f"bk{li}"] = p["bk"]; entries[f"bv{li}"] = p["bv"]
        entries[f"bo{li}"] = p["bo"]
        entries[f"ln1g{li}"] = p["ln1_g"]; entries[f"ln1b{li}"] = p["ln1_b"]
        entries[f"bf2_{li}"] = p["b2"]
        entries[f"ln2g{li}"] = p["ln2_g"]; entries[f"ln2b{li}"] = p["ln2_b"]

    max_w = max(int(jnp.asarray(v).reshape(-1).shape[0]) for v in entries.values())
    lanes = max(128, ((max_w + 127) // 128) * 128)
    rows = ((len(layout) + 7) // 8) * 8
    bias = jnp.zeros((rows, lanes), f32)
    for name, v in entries.items():
        v = jnp.asarray(v, f32).reshape(-1)
        bias = bias.at[layout[name], :v.shape[0]].set(v)

    return dict(
        c1w=conv_w2d(params["conv1"]["w"]),
        c2w=conv_w2d(params["conv2"]["w"]),
        c3w=conv_w2d(params["conv3"]["w"]),
        p2ew=params["p2e_w"].astype(f32),
        bias=bias,
        wsmall=jnp.stack([p[nm] for p in enc for nm in ("wq", "wk", "wv", "wo")]).astype(f32),
        wf1=jnp.stack([p["w1"] for p in enc]).astype(bf16),            # (NL, D, F)
        wf2t=jnp.stack([p["w2"].T for p in enc]).astype(bf16),         # (NL, D, F) lane-dense
        bf1=jnp.stack([p["b1"].reshape(1, -1) for p in enc]).astype(f32),
        hw1t=params["log1_w"].T.astype(bf16),                          # (H1, Lf*D) lane-dense
        hw2=params["log2_w"].astype(f32),
    )


# ----------------------------------------------------------------------------
# Wrapper
# ----------------------------------------------------------------------------
def make_finetune_forward(cfg):
    nhead = cfg["encode_head_num"]
    num_layers = cfg["encoder_layer_num"]
    k1 = cfg["kernel_size"]

    @jax.jit
    def forward(input_data, prep):
        B, Cin, L = input_data.shape
        D = prep["p2ew"].shape[1]
        ncls = prep["hw2"].shape[1]
        lf = _pooled_len(_pooled_len(_pooled_len(L, k1), 8), 8)

        # (B, C, L) -> channels-last rows (B*L, C)  (the module's transpose(1, 2))
        x2d = jnp.transpose(input_data, (0, 2, 1)).reshape(B * L, Cin).astype(jnp.float32)

        kernel = functools.partial(_fused_finetune_kernel, B=B, L=L,
                                   nhead=nhead, num_layers=num_layers)
        logits, enc_flat = pl.pallas_call(
            kernel,
            out_shape=(jax.ShapeDtypeStruct((B, ncls), jnp.float32),
                       jax.ShapeDtypeStruct((B, lf * D), jnp.float32)),
        )(x2d, prep["c1w"], prep["c2w"], prep["c3w"], prep["p2ew"],
          prep["bias"], prep["wsmall"], prep["wf1"], prep["wf2t"],
          prep["bf1"], prep["hw1t"], prep["hw2"])
        return logits, enc_flat.reshape(B, lf, D)

    return forward


# ----------------------------------------------------------------------------
# Deterministic parameter init (mirrors the PyTorch module's shapes)
# ----------------------------------------------------------------------------
def _dense(key, fan_in, fan_out):
    kw, kb = jax.random.split(key)
    w = jax.random.normal(kw, (fan_in, fan_out), jnp.float32) * (1.0 / math.sqrt(fan_in))
    b = jax.random.normal(kb, (fan_out,), jnp.float32) * 0.01
    return w, b


def _conv_block_params(key, K, cin, cout):
    kw, kg, kb = jax.random.split(key, 3)
    return dict(
        w=jax.random.normal(kw, (K, cin, cout), jnp.float32) * (1.0 / math.sqrt(K * cin)),
        gamma=1.0 + 0.1 * jax.random.normal(kg, (cout,), jnp.float32),
        beta=0.1 * jax.random.normal(kb, (cout,), jnp.float32),
        rm=jnp.zeros((cout,), jnp.float32),
        rv=jnp.ones((cout,), jnp.float32),
    )


def _encoder_layer_params(key, D, ffn):
    keys = jax.random.split(key, 6)
    wq, bq = _dense(keys[0], D, D)
    wk, bk = _dense(keys[1], D, D)
    wv, bv = _dense(keys[2], D, D)
    wo, bo = _dense(keys[3], D, D)
    w1, b1 = _dense(keys[4], D, ffn)
    w2, b2 = _dense(keys[5], ffn, D)
    return dict(
        wq=wq, bq=bq, wk=wk, bk=bk, wv=wv, bv=bv, wo=wo, bo=bo,
        w1=w1, b1=b1, w2=w2, b2=b2,
        ln1_g=jnp.ones((D,), jnp.float32), ln1_b=jnp.zeros((D,), jnp.float32),
        ln2_g=jnp.ones((D,), jnp.float32), ln2_b=jnp.zeros((D,), jnp.float32),
    )


def init_params(key, cfg):
    keys = jax.random.split(key, 8)
    D = cfg["hidden_dim"]
    Lf = cfg["features_len"]
    params = dict(
        conv1=_conv_block_params(keys[0], cfg["kernel_size"], cfg["input_channels"], 32),
        conv2=_conv_block_params(keys[1], 8, 32, 64),
        conv3=_conv_block_params(keys[2], 8, 64, cfg["final_out_channels"]),
    )
    params["p2e_w"], params["p2e_b"] = _dense(keys[3], cfg["final_out_channels"], D)
    params["encoder"] = [
        _encoder_layer_params(k, D, cfg["dim_feedforward"])
        for k in jax.random.split(keys[4], cfg["encoder_layer_num"])
    ]
    params["log1_w"], params["log1_b"] = _dense(keys[5], Lf * D, Lf * D // 2)
    params["log2_w"], params["log2_b"] = _dense(keys[6], Lf * D // 2, cfg["num_classes"])
    return params


# ----------------------------------------------------------------------------
if __name__ == "__main__":
    # config (small, consistent with the module):
    #   seq_len=16, input_channels=4, kernel_size=8, stride=1,
    #   final_out_channels=16, hidden_dim=32, 4 heads, 2 encoder layers,
    #   features_len=4 (16 ->conv/pool-> 9 -> 6 -> 4), num_classes=5
    cfg = dict(
        seq_len=16,
        input_channels=4,
        kernel_size=8,
        stride=1,
        final_out_channels=16,
        hidden_dim=32,
        encode_head_num=4,
        encoder_layer_num=2,
        dim_feedforward=2048,   # nn.TransformerEncoderLayer default
        features_len=4,
        num_classes=5,
    )

    key = jax.random.PRNGKey(0)
    k_param, k_data = jax.random.split(key)
    params = init_params(k_param, cfg)
    prep = prepare_params(params)
    forward = make_finetune_forward(cfg)

    x = jax.random.normal(k_data, (2, cfg["input_channels"], cfg["seq_len"]), jnp.float32)

    logits, enc_x = forward(x, prep)
    jax.block_until_ready((logits, enc_x))

    assert logits.shape == (2, cfg["num_classes"])
    assert enc_x.shape == (2, cfg["features_len"], cfg["hidden_dim"])
    assert bool(jnp.all(jnp.isfinite(logits)))
    assert bool(jnp.all(jnp.isfinite(enc_x)))
    print("KERNEL_OK")
</pallas_src>

<mosaic_0001>
module attributes {stable_mosaic.version = 11 : i64} {
  func.func @_fused_finetune_kernel(%arg0: memref<32x4xf32, #tpu.memory_space<vmem>>, %arg1: memref<4x256xf32, #tpu.memory_space<vmem>>, %arg2: memref<32x512xf32, #tpu.memory_space<vmem>>, %arg3: memref<64x128xf32, #tpu.memory_space<vmem>>, %arg4: memref<16x32xf32, #tpu.memory_space<vmem>>, %arg5: memref<32x128xf32, #tpu.memory_space<vmem>>, %arg6: memref<8x32x32xf32, #tpu.memory_space<vmem>>, %arg7: memref<2x32x2048xbf16, #tpu.memory_space<vmem>>, %arg8: memref<2x32x2048xbf16, #tpu.memory_space<vmem>>, %arg9: memref<2x1x2048xf32, #tpu.memory_space<vmem>>, %arg10: memref<64x128xbf16, #tpu.memory_space<vmem>>, %arg11: memref<64x5xf32, #tpu.memory_space<vmem>>, %arg12: memref<2x5xf32, #tpu.memory_space<vmem>>, %arg13: memref<2x128xf32, #tpu.memory_space<vmem>>) attributes {dimension_semantics = [], scalar_prefetch = 0 : i64, scratch_operands = 0 : i64, tpu.core_type = #tpu.core_type<tc>} {
    %c0 = arith.constant 0 : index
    %c0_0 = arith.constant 0 : index
    %0 = vector.load %arg0[%c0, %c0_0] : memref<32x4xf32, #tpu.memory_space<vmem>>, vector<32x4xf32>
    %1 = tpu.iota {dimensions = array<i32: 0>} : vector<32x32xi32>
    %2 = tpu.iota {dimensions = array<i32: 1>} : vector<32x32xi32>
    %c0_i32 = arith.constant 0 : i32
    %3 = vector.broadcast %c0_i32 : i32 to vector<32x32xi32>
    %c16_i32 = arith.constant 16 : i32
    %4 = vector.broadcast %c16_i32 : i32 to vector<32x32xi32>
    %5 = arith.cmpi sge, %1, %4 : vector<32x32xi32>
    %c1_i32 = arith.constant 1 : i32
    %c0_i32_1 = arith.constant 0 : i32
    %6 = vector.broadcast %c1_i32 : i32 to vector<32x32xi32>
    %7 = vector.broadcast %c0_i32_1 : i32 to vector<32x32xi32>
    %8 = arith.select %5, %6, %7 : vector<32x32xi1>, vector<32x32xi32>
    %9 = arith.addi %3, %8 : vector<32x32xi32>
    %c0_i32_2 = arith.constant 0 : i32
    %10 = vector.broadcast %c0_i32_2 : i32 to vector<32x32xi32>
    %c16_i32_3 = arith.constant 16 : i32
    %11 = vector.broadcast %c16_i32_3 : i32 to vector<32x32xi32>
    %12 = arith.cmpi sge, %2, %11 : vector<32x32xi32>
    %c1_i32_4 = arith.constant 1 : i32
    %c0_i32_5 = arith.constant 0 : i32
    %13 = vector.broadcast %c1_i32_4 : i32 to vector<32x32xi32>
    %14 = vector.broadcast %c0_i32_5 : i32 to vector<32x32xi32>
    %15 = arith.select %12, %13, %14 : vector<32x32xi1>, vector<32x32xi32>
    %16 = arith.addi %10, %15 : vector<32x32xi32>
    %17 = arith.cmpi eq, %9, %16 : vector<32x32xi32>
    %cst = arith.constant 6.250000e-02 : f32
    %cst_6 = arith.constant 0.000000e+00 : f32
    %18 = vector.broadcast %cst : f32 to vector<32x32xf32>
    %19 = vector.broadcast %cst_6 : f32 to vector<32x32xf32>
    %20 = arith.select %17, %18, %19 : vector<32x32xi1>, vector<32x32xf32>
    %cst_7 = arith.constant dense<0.000000e+00> : vector<32x4xf32>
    %21 = tpu.matmul %20, %0, %cst_7 {dimension_numbers = #tpu.dot_dimension_numbers<[1], [0], [0], [1], [0, 0, 1, 1], [], []>} : vector<32x32xf32>, vector<32x4xf32>, vector<32x4xf32> -> vector<32x4xf32>
    %22 = arith.subf %0, %21 : vector<32x4xf32>
    %23 = arith.mulf %22, %22 : vector<32x4xf32>
    %cst_8 = arith.constant dense<0.000000e+00> : vector<32x4xf32>
    %24 = tpu.matmul %20, %23, %cst_8 {dimension_numbers = #tpu.dot_dimension_numbers<[1], [0], [0], [1], [0, 0, 1, 1], [], []>} : vector<32x32xf32>, vector<32x4xf32>, vector<32x4xf32> -> vector<32x4xf32>
    %cst_9 = arith.constant 9.99999974E-6 : f32
    %25 = vector.broadcast %cst_9 : f32 to vector<32x4xf32>
    %26 = arith.addf %24, %25 : vector<32x4xf32>
    %27 = math.rsqrt %26 : vector<32x4xf32>
    %28 = arith.mulf %22, %27 : vector<32x4xf32>
    %c0_10 = arith.constant 0 : index
    %c0_11 = arith.constant 0 : index
    %29 = vector.load %arg5[%c0_10, %c0_11] : memref<32x128xf32, #tpu.memory_space<vmem>>, vector<1x32xf32>
    %c1 = arith.constant 1 : index
    %c0_12 = arith.constant 0 : index
    %30 = vector.load %arg5[%c1, %c0_12] : memref<32x128xf32, #tpu.memory_space<vmem>>, vector<1x32xf32>
    %c0_13 = arith.constant 0 : index
    %c0_14 = arith.constant 0 : index
    %31 = vector.load %arg1[%c0_13, %c0_14] : memref<4x256xf32, #tpu.memory_space<vmem>>, vector<4x256xf32>
    %cst_15 = arith.constant dense<0.000000e+00> : vector<32x256xf32>
    %32 = tpu.matmul %28, %31, %cst_15 {dimension_numbers = #tpu.dot_dimension_numbers<[1], [0], [0], [1], [0, 0, 1, 1], [], []>} : vector<32x4xf32>, vector<4x256xf32>, vector<32x256xf32> -> vector<32x256xf32>
    %33 = tpu.iota {dimensions = array<i32: 0>} : vector<34x32xi32>
    %34 = tpu.iota {dimensions = array<i32: 1>} : vector<34x32xi32>
    %c0_i32_16 = arith.constant 0 : i32
    %35 = vector.broadcast %c0_i32_16 : i32 to vector<34x32xi32>
    %c17_i32 = arith.constant 17 : i32
    %36 = vector.broadcast %c17_i32 : i32 to vector<34x32xi32>
    %37 = arith.cmpi sge, %33, %36 : vector<34x32xi32>
    %c1_i32_17 = arith.constant 1 : i32
    %c0_i32_18 = arith.constant 0 : i32
    %38 = vector.broadcast %c1_i32_17 : i32 to vector<34x32xi32>
    %39 = vector.broadcast %c0_i32_18 : i32 to vector<34x32xi32>
    %40 = arith.select %37, %38, %39 : vector<34x32xi1>, vector<34x32xi32>
    %41 = arith.addi %35, %40 : vector<34x32xi32>
    %c0_i32_19 = arith.constant 0 : i32
    %42 = vector.broadcast %c0_i32_19 : i32 to vector<34x32xi32>
    %c16_i32_20 = arith.constant 16 : i32
    %43 = vector.broadcast %c16_i32_20 : i32 to vector<34x32xi32>
    %44 = arith.cmpi sge, %34, %43 : vector<34x32xi32>
    %c1_i32_21 = arith.constant 1 : i32
    %c0_i32_22 = arith.constant 0 : i32
    %45 = vector.broadcast %c1_i32_21 : i32 to vector<34x32xi32>
    %46 = vector.broadcast %c0_i32_22 : i32 to vector<34x32xi32>
    %47 = arith.select %44, %45, %46 : vector<34x32xi1>, vector<34x32xi32>
    %48 = arith.addi %42, %47 : vector<34x32xi32>
    %49 = arith.cmpi eq, %41, %48 : vector<34x32xi32>
    %c17_i32_23 = arith.constant 17 : i32
    %50 = vector.broadcast %c17_i32_23 : i32 to vector<34x32xi32>
    %51 = arith.muli %41, %50 : vector<34x32xi32>
    %52 = arith.subi %33, %51 : vector<34x32xi32>
    %c16_i32_24 = arith.constant 16 : i32
    %53 = vector.broadcast %c16_i32_24 : i32 to vector<34x32xi32>
    %54 = arith.muli %48, %53 : vector<34x32xi32>
    %55 = arith.subi %34, %54 : vector<34x32xi32>
    %cst_25 = arith.constant 0.000000e+00 : f32
    %56 = vector.broadcast %cst_25 : f32 to vector<34x32xf32>
    %c-4_i32 = arith.constant -4 : i32
    %57 = vector.broadcast %c-4_i32 : i32 to vector<34x32xi32>
    %58 = arith.addi %52, %57 : vector<34x32xi32>
    %59 = arith.cmpi eq, %55, %58 : vector<34x32xi32>
    %60 = arith.andi %49, %59 : vector<34x32xi1>
    %cst_26 = arith.constant 1.000000e+00 : f32
    %cst_27 = arith.constant 0.000000e+00 : f32
    %61 = vector.broadcast %cst_26 : f32 to vector<34x32xf32>
    %62 = vector.broadcast %cst_27 : f32 to vector<34x32xf32>
    %63 = arith.select %60, %61, %62 : vector<34x32xi1>, vector<34x32xf32>
    %64 = vector.extract_strided_slice %32 {offsets = [0, 0], sizes = [32, 32], strides = [1, 1]} : vector<32x256xf32> to vector<32x32xf32>
    %cst_28 = arith.constant dense<0.000000e+00> : vector<34x32xf32>
    %65 = tpu.matmul %63, %64, %cst_28 {dimension_numbers = #tpu.dot_dimension_numbers<[1], [0], [0], [1], [0, 0, 1, 1], [], []>} : vector<34x32xf32>, vector<32x32xf32>, vector<34x32xf32> -> vector<34x32xf32>
    %66 = arith.addf %56, %65 : vector<34x32xf32>
    %c-3_i32 = arith.constant -3 : i32
    %67 = vector.broadcast %c-3_i32 : i32 to vector<34x32xi32>
    %68 = arith.addi %52, %67 : vector<34x32xi32>
    %69 = arith.cmpi eq, %55, %68 : vector<34x32xi32>
    %70 = arith.andi %49, %69 : vector<34x32xi1>
    %cst_29 = arith.constant 1.000000e+00 : f32
    %cst_30 = arith.constant 0.000000e+00 : f32
    %71 = vector.broadcast %cst_29 : f32 to vector<34x32xf32>
    %72 = vector.broadcast %cst_30 : f32 to vector<34x32xf32>
    %73 = arith.select %70, %71, %72 : vector<34x32xi1>, vector<34x32xf32>
    %74 = vector.extract_strided_slice %32 {offsets = [0, 32], sizes = [32, 32], strides = [1, 1]} : vector<32x256xf32> to vector<32x32xf32>
    %cst_31 = arith.constant dense<0.000000e+00> : vector<34x32xf32>
    %75 = tpu.matmul %73, %74, %cst_31 {dimension_numbers = #tpu.dot_dimension_numbers<[1], [0], [0], [1], [0, 0, 1, 1], [], []>} : vector<34x32xf32>, vector<32x32xf32>, vector<34x32xf32> -> vector<34x32xf32>
    %76 = arith.addf %66, %75 : vector<34x32xf32>
    %c-2_i32 = arith.constant -2 : i32
    %77 = vector.broadcast %c-2_i32 : i32 to vector<34x32xi32>
    %78 = arith.addi %52, %77 : vector<34x32xi32>
    %79 = arith.cmpi eq, %55, %78 : vector<34x32xi32>
    %80 = arith.andi %49, %79 : vector<34x32xi1>
    %cst_32 = arith.constant 1.000000e+00 : f32
    %cst_33 = arith.constant 0.000000e+00 : f32
    %81 = vector.broadcast %cst_32 : f32 to vector<34x32xf32>
    %82 = vector.broadcast %cst_33 : f32 to vector<34x32xf32>
    %83 = arith.select %80, %81, %82 : vector<34x32xi1>, vector<34x32xf32>
    %84 = vector.extract_strided_slice %32 {offsets = [0, 64], sizes = [32, 32], strides = [1, 1]} : vector<32x256xf32> to vector<32x32xf32>
    %cst_34 = arith.constant dense<0.000000e+00> : vector<34x32xf32>
    %85 = tpu.matmul %83, %84, %cst_34 {dimension_numbers = #tpu.dot_dimension_numbers<[1], [0], [0], [1], [0, 0, 1, 1], [], []>} : vector<34x32xf32>, vector<32x32xf32>, vector<34x32xf32> -> vector<34x32xf32>
    %86 = arith.addf %76, %85 : vector<34x32xf32>
    %c-1_i32 = arith.constant -1 : i32
    %87 = vector.broadcast %c-1_i32 : i32 to vector<34x32xi32>
    %88 = arith.addi %52, %87 : vector<34x32xi32>
    %89 = arith.cmpi eq, %55, %88 : vector<34x32xi32>
    %90 = arith.andi %49, %89 : vector<34x32xi1>
    %cst_35 = arith.constant 1.000000e+00 : f32
    %cst_36 = arith.constant 0.000000e+00 : f32
    %91 = vector.broadcast %cst_35 : f32 to vector<34x32xf32>
    %92 = vector.broadcast %cst_36 : f32 to vector<34x32xf32>
    %93 = arith.select %90, %91, %92 : vector<34x32xi1>, vector<34x32xf32>
    %94 = vector.extract_strided_slice %32 {offsets = [0, 96], sizes = [32, 32], strides = [1, 1]} : vector<32x256xf32> to vector<32x32xf32>
    %cst_37 = arith.constant dense<0.000000e+00> : vector<34x32xf32>
    %95 = tpu.matmul %93, %94, %cst_37 {dimension_numbers = #tpu.dot_dimension_numbers<[1], [0], [0], [1], [0, 0, 1, 1], [], []>} : vector<34x32xf32>, vector<32x32xf32>, vector<34x32xf32> -> vector<34x32xf32>
    %96 = arith.addf %86, %95 : vector<34x32xf32>
    %c0_i32_38 = arith.constant 0 : i32
    %97 = vector.broadcast %c0_i32_38 : i32 to vector<34x32xi32>
    %98 = arith.addi %52, %97 : vector<34x32xi32>
    %99 = arith.cmpi eq, %55, %98 : vector<34x32xi32>
    %100 = arith.andi %49, %99 : vector<34x32xi1>
    %cst_39 = arith.constant 1.000000e+00 : f32
    %cst_40 = arith.constant 0.000000e+00 : f32
    %101 = vector.broadcast %cst_39 : f32 to vector<34x32xf32>
    %102 = vector.broadcast %cst_40 : f32 to vector<34x32xf32>
    %103 = arith.select %100, %101, %102 : vector<34x32xi1>, vector<34x32xf32>
    %104 = vector.extract_strided_slice %32 {offsets = [0, 128], sizes = [32, 32], strides = [1, 1]} : vector<32x256xf32> to vector<32x32xf32>
    %cst_41 = arith.constant dense<0.000000e+00> : vector<34x32xf32>
    %105 = tpu.matmul %103, %104, %cst_41 {dimension_numbers = #tpu.dot_dimension_numbers<[1], [0], [0], [1], [0, 0, 1, 1], [], []>} : vector<34x32xf32>, vector<32x32xf32>, vector<34x32xf32> -> vector<34x32xf32>
    %106 = arith.addf %96, %105 : vector<34x32xf32>
    %c1_i32_42 = arith.constant 1 : i32
    %107 = vector.broadcast %c1_i32_42 : i32 to vector<34x32xi32>
    %108 = arith.addi %52, %107 : vector<34x32xi32>
    %109 = arith.cmpi eq, %55, %108 : vector<34x32xi32>
    %110 = arith.andi %49, %109 : vector<34x32xi1>
    %cst_43 = arith.constant 1.000000e+00 : f32
    %cst_44 = arith.constant 0.000000e+00 : f32
    %111 = vector.broadcast %cst_43 : f32 to vector<34x32xf32>
    %112 = vector.broadcast %cst_44 : f32 to vector<34x32xf32>
    %113 = arith.select %110, %111, %112 : vector<34x32xi1>, vector<34x32xf32>
    %114 = vector.extract_strided_slice %32 {offsets = [0, 160], sizes = [32, 32], strides = [1, 1]} : vector<32x256xf32> to vector<32x32xf32>
    %cst_45 = arith.constant dense<0.000000e+00> : vector<34x32xf32>
    %115 = tpu.matmul %113, %114, %cst_45 {dimension_numbers = #tpu.dot_dimension_numbers<[1], [0], [0], [1], [0, 0, 1, 1], [], []>} : vector<34x32xf32>, vector<32x32xf32>, vector<34x32xf32> -> vector<34x32xf32>
    %116 = arith.addf %106, %115 : vector<34x32xf32>
    %c2_i32 = arith.constant 2 : i32
    %117 = vector.broadcast %c2_i32 : i32 to vector<34x32xi32>
    %118 = arith.addi %52, %117 : vector<34x32xi32>
    %119 = arith.cmpi eq, %55, %118 : vector<34x32xi32>
    %120 = arith.andi %49, %119 : vector<34x32xi1>
    %cst_46 = arith.constant 1.000000e+00 : f32
    %cst_47 = arith.constant 0.000000e+00 : f32
    %121 = vector.broadcast %cst_46 : f32 to vector<34x32xf32>
    %122 = vector.broadcast %cst_47 : f32 to vector<34x32xf32>
    %123 = arith.select %120, %121, %122 : vector<34x32xi1>, vector<34x32xf32>
    %124 = vector.extract_strided_slice %32 {offsets = [0, 192], sizes = [32, 32], strides = [1, 1]} : vector<32x256xf32> to vector<32x32xf32>
    %cst_48 = arith.constant dense<0.000000e+00> : vector<34x32xf32>
    %125 = tpu.matmul %123, %124, %cst_48 {dimension_numbers = #tpu.dot_dimension_numbers<[1], [0], [0], [1], [0, 0, 1, 1], [], []>} : vector<34x32xf32>, vector<32x32xf32>, vector<34x32xf32> -> vector<34x32xf32>
    %126 = arith.addf %116, %125 : vector<34x32xf32>
    %c3_i32 = arith.constant 3 : i32
    %127 = vector.broadcast %c3_i32 : i32 to vector<34x32xi32>
    %128 = arith.addi %52, %127 : vector<34x32xi32>
    %129 = arith.cmpi eq, %55, %128 : vector<34x32xi32>
    %130 = arith.andi %49, %129 : vector<34x32xi1>
    %cst_49 = arith.constant 1.000000e+00 : f32
    %cst_50 = arith.constant 0.000000e+00 : f32
    %131 = vector.broadcast %cst_49 : f32 to vector<34x32xf32>
    %132 = vector.broadcast %cst_50 : f32 to vector<34x32xf32>
    %133 = arith.select %130, %131, %132 : vector<34x32xi1>, vector<34x32xf32>
    %134 = vector.extract_strided_slice %32 {offsets = [0, 224], sizes = [32, 32], strides = [1, 1]} : vector<32x256xf32> to vector<32x32xf32>
    %cst_51 = arith.constant dense<0.000000e+00> : vector<34x32xf32>
    %135 = tpu.matmul %133, %134, %cst_51 {dimension_numbers = #tpu.dot_dimension_numbers<[1], [0], [0], [1], [0, 0, 1, 1], [], []>} : vector<34x32xf32>, vector<32x32xf32>, vector<34x32xf32> -> vector<34x32xf32>
    %136 = arith.addf %126, %135 : vector<34x32xf32>
    %137 = vector.broadcast %29 : vector<1x32xf32> to vector<34x32xf32>
    %138 = arith.mulf %136, %137 : vector<34x32xf32>
    %139 = vector.broadcast %30 : vector<1x32xf32> to vector<34x32xf32>
    %140 = arith.addf %138, %139 : vector<34x32xf32>
    %cst_52 = arith.constant 0.000000e+00 : f32
    %141 = vector.broadcast %cst_52 : f32 to vector<34x32xf32>
    %142 = arith.maximumf %140, %141 : vector<34x32xf32>
    %143 = tpu.iota {dimensions = array<i32: 0>} : vector<18x34xi32>
    %144 = tpu.iota {dimensions = array<i32: 1>} : vector<18x34xi32>
    %c0_i32_53 = arith.constant 0 : i32
    %145 = vector.broadcast %c0_i32_53 : i32 to vector<18x34xi32>
    %c9_i32 = arith.constant 9 : i32
    %146 = vector.broadcast %c9_i32 : i32 to vector<18x34xi32>
    %147 = arith.cmpi sge, %143, %146 : vector<18x34xi32>
    %c1_i32_54 = arith.constant 1 : i32
    %c0_i32_55 = arith.constant 0 : i32
    %148 = vector.broadcast %c1_i32_54 : i32 to vector<18x34xi32>
    %149 = vector.broadcast %c0_i32_55 : i32 to vector<18x34xi32>
    %150 = arith.select %147, %148, %149 : vector<18x34xi1>, vector<18x34xi32>
    %151 = arith.addi %145, %150 : vector<18x34xi32>
    %c0_i32_56 = arith.constant 0 : i32
    %152 = vector.broadcast %c0_i32_56 : i32 to vector<18x34xi32>
    %c17_i32_57 = arith.constant 17 : i32
    %153 = vector.broadcast %c17_i32_57 : i32 to vector<18x34xi32>
    %154 = arith.cmpi sge, %144, %153 : vector<18x34xi32>
    %c1_i32_58 = arith.constant 1 : i32
    %c0_i32_59 = arith.constant 0 : i32
    %155 = vector.broadcast %c1_i32_58 : i32 to vector<18x34xi32>
    %156 = vector.broadcast %c0_i32_59 : i32 to vector<18x34xi32>
    %157 = arith.select %154, %155, %156 : vector<18x34xi1>, vector<18x34xi32>
    %158 = arith.addi %152, %157 : vector<18x34xi32>
    %159 = arith.cmpi eq, %151, %158 : vector<18x34xi32>
    %c9_i32_60 = arith.constant 9 : i32
    %160 = vector.broadcast %c9_i32_60 : i32 to vector<18x34xi32>
    %161 = arith.muli %151, %160 : vector<18x34xi32>
    %162 = arith.subi %143, %161 : vector<18x34xi32>
    %c17_i32_61 = arith.constant 17 : i32
    %163 = vector.broadcast %c17_i32_61 : i32 to vector<18x34xi32>
    %164 = arith.muli %158, %163 : vector<18x34xi32>
    %165 = arith.subi %144, %164 : vector<18x34xi32>
    %c2_i32_62 = arith.constant 2 : i32
    %166 = vector.broadcast %c2_i32_62 : i32 to vector<18x34xi32>
    %167 = arith.muli %166, %162 : vector<18x34xi32>
    %c1_i32_63 = arith.constant 1 : i32
    %168 = vector.broadcast %c1_i32_63 : i32 to vector<18x34xi32>
    %169 = arith.subi %167, %168 : vector<18x34xi32>
    %170 = arith.cmpi eq, %165, %169 : vector<18x34xi32>
    %171 = arith.andi %159, %170 : vector<18x34xi1>
    %cst_64 = arith.constant 1.000000e+00 : f32
    %cst_65 = arith.constant 0.000000e+00 : f32
    %172 = vector.broadcast %cst_64 : f32 to vector<18x34xf32>
    %173 = vector.broadcast %cst_65 : f32 to vector<18x34xf32>
    %174 = arith.select %171, %172, %173 : vector<18x34xi1>, vector<18x34xf32>
    %c2_i32_66 = arith.constant 2 : i32
    %175 = vector.broadcast %c2_i32_66 : i32 to vector<18x34xi32>
    %176 = arith.muli %175, %162 : vector<18x34xi32>
    %177 = arith.cmpi eq, %165, %176 : vector<18x34xi32>
    %178 = arith.andi %159, %177 : vector<18x34xi1>
    %cst_67 = arith.constant 1.000000e+00 : f32
    %cst_68 = arith.constant 0.000000e+00 : f32
    %179 = vector.broadcast %cst_67 : f32 to vector<18x34xf32>
    %180 = vector.broadcast %cst_68 : f32 to vector<18x34xf32>
    %181 = arith.select %178, %179, %180 : vector<18x34xi1>, vector<18x34xf32>
    %cst_69 = arith.constant dense<0.000000e+00> : vector<18x32xf32>
    %182 = tpu.matmul %174, %142, %cst_69 {dimension_numbers = #tpu.dot_dimension_numbers<[1], [0], [0], [1], [0, 0, 1, 1], [], []>} : vector<18x34xf32>, vector<34x32xf32>, vector<18x32xf32> -> vector<18x32xf32>
    %cst_70 = arith.constant dense<0.000000e+00> : vector<18x32xf32>
    %183 = tpu.matmul %181, %142, %cst_70 {dimension_numbers = #tpu.dot_dimension_numbers<[1], [0], [0], [1], [0, 0, 1, 1], [], []>} : vector<18x34xf32>, vector<34x32xf32>, vector<18x32xf32> -> vector<18x32xf32>
    %184 = arith.maximumf %182, %183 : vector<18x32xf32>
    %c2 = arith.constant 2 : index
    %c0_71 = arith.constant 0 : index
    %185 = vector.load %arg5[%c2, %c0_71] : memref<32x128xf32, #tpu.memory_space<vmem>>, vector<1x64xf32>
    %c3 = arith.constant 3 : index
    %c0_72 = arith.constant 0 : index
    %186 = vector.load %arg5[%c3, %c0_72] : memref<32x128xf32, #tpu.memory_space<vmem>>, vector<1x64xf32>
    %c0_73 = arith.constant 0 : index
    %c0_74 = arith.constant 0 : index
    %187 = vector.load %arg2[%c0_73, %c0_74] : memref<32x512xf32, #tpu.memory_space<vmem>>, vector<32x512xf32>
    %cst_75 = arith.constant dense<0.000000e+00> : vector<18x512xf32>
    %188 = tpu.matmul %184, %187, %cst_75 {dimension_numbers = #tpu.dot_dimension_numbers<[1], [0], [0], [1], [0, 0, 1, 1], [], []>} : vector<18x32xf32>, vector<32x512xf32>, vector<18x512xf32> -> vector<18x512xf32>
    %189 = tpu.iota {dimensions = array<i32: 0>} : vector<20x18xi32>
    %190 = tpu.iota {dimensions = array<i32: 1>} : vector<20x18xi32>
    %c0_i32_76 = arith.constant 0 : i32
    %191 = vector.broadcast %c0_i32_76 : i32 to vector<20x18xi32>
    %c10_i32 = arith.constant 10 : i32
    %192 = vector.broadcast %c10_i32 : i32 to vector<20x18xi32>
    %193 = arith.cmpi sge, %189, %192 : vector<20x18xi32>
    %c1_i32_77 = arith.constant 1 : i32
    %c0_i32_78 = arith.constant 0 : i32
    %194 = vector.broadcast %c1_i32_77 : i32 to vector<20x18xi32>
    %195 = vector.broadcast %c0_i32_78 : i32 to vector<20x18xi32>
    %196 = arith.select %193, %194, %195 : vector<20x18xi1>, vector<20x18xi32>
    %197 = arith.addi %191, %196 : vector<20x18xi32>
    %c0_i32_79 = arith.constant 0 : i32
    %198 = vector.broadcast %c0_i32_79 : i32 to vector<20x18xi32>
    %c9_i32_80 = arith.constant 9 : i32
    %199 = vector.broadcast %c9_i32_80 : i32 to vector<20x18xi32>
    %200 = arith.cmpi sge, %190, %199 : vector<20x18xi32>
    %c1_i32_81 = arith.constant 1 : i32
    %c0_i32_82 = arith.constant 0 : i32
    %201 = vector.broadcast %c1_i32_81 : i32 to vector<20x18xi32>
    %202 = vector.broadcast %c0_i32_82 : i32 to vector<20x18xi32>
    %203 = arith.select %200, %201, %202 : vector<20x18xi1>, vector<20x18xi32>
    %204 = arith.addi %198, %203 : vector<20x18xi32>
    %205 = arith.cmpi eq, %197, %204 : vector<20x18xi32>
    %c10_i32_83 = arith.constant 10 : i32
    %206 = vector.broadcast %c10_i32_83 : i32 to vector<20x18xi32>
    %207 = arith.muli %197, %206 : vector<20x18xi32>
    %208 = arith.subi %189, %207 : vector<20x18xi32>
    %c9_i32_84 = arith.constant 9 : i32
    %209 = vector.broadcast %c9_i32_84 : i32 to vector<20x18xi32>
    %210 = arith.muli %204, %209 : vector<20x18xi32>
    %211 = arith.subi %190, %210 : vector<20x18xi32>
    %cst_85 = arith.constant 0.000000e+00 : f32
    %212 = vector.broadcast %cst_85 : f32 to vector<20x64xf32>
    %c-4_i32_86 = arith.constant -4 : i32
    %213 = vector.broadcast %c-4_i32_86 : i32 to vector<20x18xi32>
    %214 = arith.addi %208, %213 : vector<20x18xi32>
    %215 = arith.cmpi eq, %211, %214 : vector<20x18xi32>
    %216 = arith.andi %205, %215 : vector<20x18xi1>
    %cst_87 = arith.constant 1.000000e+00 : f32
    %cst_88 = arith.constant 0.000000e+00 : f32
    %217 = vector.broadcast %cst_87 : f32 to vector<20x18xf32>
    %218 = vector.broadcast %cst_88 : f32 to vector<20x18xf32>
    %219 = arith.select %216, %217, %218 : vector<20x18xi1>, vector<20x18xf32>
    %220 = vector.extract_strided_slice %188 {offsets = [0, 0], sizes = [18, 64], strides = [1, 1]} : vector<18x512xf32> to vector<18x64xf32>
    %cst_89 = arith.constant dense<0.000000e+00> : vector<20x64xf32>
    %221 = tpu.matmul %219, %220, %cst_89 {dimension_numbers = #tpu.dot_dimension_numbers<[1], [0], [0], [1], [0, 0, 1, 1], [], []>} : vector<20x18xf32>, vector<18x64xf32>, vector<20x64xf32> -> vector<20x64xf32>
    %222 = arith.addf %212, %221 : vector<20x64xf32>
    %c-3_i32_90 = arith.constant -3 : i32
    %223 = vector.broadcast %c-3_i32_90 : i32 to vector<20x18xi32>
    %224 = arith.addi %208, %223 : vector<20x18xi32>
    %225 = arith.cmpi eq, %211, %224 : vector<20x18xi32>
    %226 = arith.andi %205, %225 : vector<20x18xi1>
    %cst_91 = arith.constant 1.000000e+00 : f32
    %cst_92 = arith.constant 0.000000e+00 : f32
    %227 = vector.broadcast %cst_91 : f32 to vector<20x18xf32>
    %228 = vector.broadcast %cst_92 : f32 to vector<20x18xf32>
    %229 = arith.select %226, %227, %228 : vector<20x18xi1>, vector<20x18xf32>
    %230 = vector.extract_strided_slice %188 {offsets = [0, 64], sizes = [18, 64], strides = [1, 1]} : vector<18x512xf32> to vector<18x64xf32>
    %cst_93 = arith.constant dense<0.000000e+00> : vector<20x64xf32>
    %231 = tpu.matmul %229, %230, %cst_93 {dimension_numbers = #tpu.dot_dimension_numbers<[1], [0], [0], [1], [0, 0, 1, 1], [], []>} : vector<20x18xf32>, vector<18x64xf32>, vector<20x64xf32> -> vector<20x64xf32>
    %232 = arith.addf %222, %231 : vector<20x64xf32>
    %c-2_i32_94 = arith.constant -2 : i32
    %233 = vector.broadcast %c-2_i32_94 : i32 to vector<20x18xi32>
    %234 = arith.addi %208, %233 : vector<20x18xi32>
    %235 = arith.cmpi eq, %211, %234 : vector<20x18xi32>
    %236 = arith.andi %205, %235 : vector<20x18xi1>
    %cst_95 = arith.constant 1.000000e+00 : f32
    %cst_96 = arith.constant 0.000000e+00 : f32
    %237 = vector.broadcast %cst_95 : f32 to vector<20x18xf32>
    %238 = vector.broadcast %cst_96 : f32 to vector<20x18xf32>
    %239 = arith.select %236, %237, %238 : vector<20x18xi1>, vector<20x18xf32>
    %240 = vector.extract_strided_slice %188 {offsets = [0, 128], sizes = [18, 64], strides = [1, 1]} : vector<18x512xf32> to vector<18x64xf32>
    %cst_97 = arith.constant dense<0.000000e+00> : vector<20x64xf32>
    %241 = tpu.matmul %239, %240, %cst_97 {dimension_numbers = #tpu.dot_dimension_numbers<[1], [0], [0], [1], [0, 0, 1, 1], [], []>} : vector<20x18xf32>, vector<18x64xf32>, vector<20x64xf32> -> vector<20x64xf32>
    %242 = arith.addf %232, %241 : vector<20x64xf32>
    %c-1_i32_98 = arith.constant -1 : i32
    %243 = vector.broadcast %c-1_i32_98 : i32 to vector<20x18xi32>
    %244 = arith.addi %208, %243 : vector<20x18xi32>
    %245 = arith.cmpi eq, %211, %244 : vector<20x18xi32>
    %246 = arith.andi %205, %245 : vector<20x18xi1>
    %cst_99 = arith.constant 1.000000e+00 : f32
    %cst_100 = arith.constant 0.000000e+00 : f32
    %247 = vector.broadcast %cst_99 : f32 to vector<20x18xf32>
    %248 = vector.broadcast %cst_100 : f32 to vector<20x18xf32>
    %249 = arith.select %246, %247, %248 : vector<20x18xi1>, vector<20x18xf32>
    %250 = vector.extract_strided_slice %188 {offsets = [0, 192], sizes = [18, 64], strides = [1, 1]} : vector<18x512xf32> to vector<18x64xf32>
    %cst_101 = arith.constant dense<0.000000e+00> : vector<20x64xf32>
    %251 = tpu.matmul %249, %250, %cst_101 {dimension_numbers = #tpu.dot_dimension_numbers<[1], [0], [0], [1], [0, 0, 1, 1], [], []>} : vector<20x18xf32>, vector<18x64xf32>, vector<20x64xf32> -> vector<20x64xf32>
    %252 = arith.addf %242, %251 : vector<20x64xf32>
    %c0_i32_102 = arith.constant 0 : i32
    %253 = vector.broadcast %c0_i32_102 : i32 to vector<20x18xi32>
    %254 = arith.addi %208, %253 : vector<20x18xi32>
    %255 = arith.cmpi eq, %211, %254 : vector<20x18xi32>
    %256 = arith.andi %205, %255 : vector<20x18xi1>
    %cst_103 = arith.constant 1.000000e+00 : f32
    %cst_104 = arith.constant 0.000000e+00 : f32
    %257 = vector.broadcast %cst_103 : f32 to vector<20x18xf32>
    %258 = vector.broadcast %cst_104 : f32 to vector<20x18xf32>
    %259 = arith.select %256, %257, %258 : vector<20x18xi1>, vector<20x18xf32>
    %260 = vector.extract_strided_slice %188 {offsets = [0, 256], sizes = [18, 64], strides = [1, 1]} : vector<18x512xf32> to vector<18x64xf32>
    %cst_105 = arith.constant dense<0.000000e+00> : vector<20x64xf32>
    %261 = tpu.matmul %259, %260, %cst_105 {dimension_numbers = #tpu.dot_dimension_numbers<[1], [0], [0], [1], [0, 0, 1, 1], [], []>} : vector<20x18xf32>, vector<18x64xf32>, vector<20x64xf32> -> vector<20x64xf32>
    %262 = arith.addf %252, %261 : vector<20x64xf32>
    %c1_i32_106 = arith.constant 1 : i32
    %263 = vector.broadcast %c1_i32_106 : i32 to vector<20x18xi32>
    %264 = arith.addi %208, %263 : vector<20x18xi32>
    %265 = arith.cmpi eq, %211, %264 : vector<20x18xi32>
    %266 = arith.andi %205, %265 : vector<20x18xi1>
    %cst_107 = arith.constant 1.000000e+00 : f32
    %cst_108 = arith.constant 0.000000e+00 : f32
    %267 = vector.broadcast %cst_107 : f32 to vector<20x18xf32>
    %268 = vector.broadcast %cst_108 : f32 to vector<20x18xf32>
    %269 = arith.select %266, %267, %268 : vector<20x18xi1>, vector<20x18xf32>
    %270 = vector.extract_strided_slice %188 {offsets = [0, 320], sizes = [18, 64], strides = [1, 1]} : vector<18x512xf32> to vector<18x64xf32>
    %cst_109 = arith.constant dense<0.000000e+00> : vector<20x64xf32>
    %271 = tpu.matmul %269, %270, %cst_109 {dimension_numbers = #tpu.dot_dimension_numbers<[1], [0], [0], [1], [0, 0, 1, 1], [], []>} : vector<20x18xf32>, vector<18x64xf32>, vector<20x64xf32> -> vector<20x64xf32>
    %272 = arith.addf %262, %271 : vector<20x64xf32>
    %c2_i32_110 = arith.constant 2 : i32
    %273 = vector.broadcast %c2_i32_110 : i32 to vector<20x18xi32>
    %274 = arith.addi %208, %273 : vector<20x18xi32>
    %275 = arith.cmpi eq, %211, %274 : vector<20x18xi32>
    %276 = arith.andi %205, %275 : vector<20x18xi1>
    %cst_111 = arith.constant 1.000000e+00 : f32
    %cst_112 = arith.constant 0.000000e+00 : f32
    %277 = vector.broadcast %cst_111 : f32 to vector<20x18xf32>
    %278 = vector.broadcast %cst_112 : f32 to vector<20x18xf32>
    %279 = arith.select %276, %277, %278 : vector<20x18xi1>, vector<20x18xf32>
    %280 = vector.extract_strided_slice %188 {offsets = [0, 384], sizes = [18, 64], strides = [1, 1]} : vector<18x512xf32> to vector<18x64xf32>
    %cst_113 = arith.constant dense<0.000000e+00> : vector<20x64xf32>
    %281 = tpu.matmul %279, %280, %cst_113 {dimension_numbers = #tpu.dot_dimension_numbers<[1], [0], [0], [1], [0, 0, 1, 1], [], []>} : vector<20x18xf32>, vector<18x64xf32>, vector<20x64xf32> -> vector<20x64xf32>
    %282 = arith.addf %272, %281 : vector<20x64xf32>
    %c3_i32_114 = arith.constant 3 : i32
    %283 = vector.broadcast %c3_i32_114 : i32 to vector<20x18xi32>
    %284 = arith.addi %208, %283 : vector<20x18xi32>
    %285 = arith.cmpi eq, %211, %284 : vector<20x18xi32>
    %286 = arith.andi %205, %285 : vector<20x18xi1>
    %cst_115 = arith.constant 1.000000e+00 : f32
    %cst_116 = arith.constant 0.000000e+00 : f32
    %287 = vector.broadcast %cst_115 : f32 to vector<20x18xf32>
    %288 = vector.broadcast %cst_116 : f32 to vector<20x18xf32>
    %289 = arith.select %286, %287, %288 : vector<20x18xi1>, vector<20x18xf32>
    %290 = vector.extract_strided_slice %188 {offsets = [0, 448], sizes = [18, 64], strides = [1, 1]} : vector<18x512xf32> to vector<18x64xf32>
    %cst_117 = arith.constant dense<0.000000e+00> : vector<20x64xf32>
    %291 = tpu.matmul %289, %290, %cst_117 {dimension_numbers = #tpu.dot_dimension_numbers<[1], [0], [0], [1], [0, 0, 1, 1], [], []>} : vector<20x18xf32>, vector<18x64xf32>, vector<20x64xf32> -> vector<20x64xf32>
    %292 = arith.addf %282, %291 : vector<20x64xf32>
    %293 = vector.broadcast %185 : vector<1x64xf32> to vector<20x64xf32>
    %294 = arith.mulf %292, %293 : vector<20x64xf32>
    %295 = vector.broadcast %186 : vector<1x64xf32> to vector<20x64xf32>
    %296 = arith.addf %294, %295 : vector<20x64xf32>
    %cst_118 = arith.constant 0.000000e+00 : f32
    %297 = vector.broadcast %cst_118 : f32 to vector<20x64xf32>
    %298 = arith.maximumf %296, %297 : vector<20x64xf32>
    %299 = tpu.iota {dimensions = array<i32: 0>} : vector<12x20xi32>
    %300 = tpu.iota {dimensions = array<i32: 1>} : vector<12x20xi32>
    %c0_i32_119 = arith.constant 0 : i32
    %301 = vector.broadcast %c0_i32_119 : i32 to vector<12x20xi32>
    %c6_i32 = arith.constant 6 : i32
    %302 = vector.broadcast %c6_i32 : i32 to vector<12x20xi32>
    %303 = arith.cmpi sge, %299, %302 : vector<12x20xi32>
    %c1_i32_120 = arith.constant 1 : i32
    %c0_i32_121 = arith.constant 0 : i32
    %304 = vector.broadcast %c1_i32_120 : i32 to vector<12x20xi32>
    %305 = vector.broadcast %c0_i32_121 : i32 to vector<12x20xi32>
    %306 = arith.select %303, %304, %305 : vector<12x20xi1>, vector<12x20xi32>
    %307 = arith.addi %301, %306 : vector<12x20xi32>
    %c0_i32_122 = arith.constant 0 : i32
    %308 = vector.broadcast %c0_i32_122 : i32 to vector<12x20xi32>
    %c10_i32_123 = arith.constant 10 : i32
    %309 = vector.broadcast %c10_i32_123 : i32 to vector<12x20xi32>
    %310 = arith.cmpi sge, %300, %309 : vector<12x20xi32>
    %c1_i32_124 = arith.constant 1 : i32
    %c0_i32_125 = arith.constant 0 : i32
    %311 = vector.broadcast %c1_i32_124 : i32 to vector<12x20xi32>
    %312 = vector.broadcast %c0_i32_125 : i32 to vector<12x20xi32>
    %313 = arith.select %310, %311, %312 : vector<12x20xi1>, vector<12x20xi32>
    %314 = arith.addi %308, %313 : vector<12x20xi32>
    %315 = arith.cmpi eq, %307, %314 : vector<12x20xi32>
    %c6_i32_126 = arith.constant 6 : i32
    %316 = vector.broadcast %c6_i32_126 : i32 to vector<12x20xi32>
    %317 = arith.muli %307, %316 : vector<12x20xi32>
    %318 = arith.subi %299, %317 : vector<12x20xi32>
    %c10_i32_127 = arith.constant 10 : i32
    %319 = vector.broadcast %c10_i32_127 : i32 to vector<12x20xi32>
    %320 = arith.muli %314, %319 : vector<12x20xi32>
    %321 = arith.subi %300, %320 : vector<12x20xi32>
    %c2_i32_128 = arith.constant 2 : i32
    %322 = vector.broadcast %c2_i32_128 : i32 to vector<12x20xi32>
    %323 = arith.muli %322, %318 : vector<12x20xi32>
    %c1_i32_129 = arith.constant 1 : i32
    %324 = vector.broadcast %c1_i32_129 : i32 to vector<12x20xi32>
    %325 = arith.subi %323, %324 : vector<12x20xi32>
    %326 = arith.cmpi eq, %321, %325 : vector<12x20xi32>
    %327 = arith.andi %315, %326 : vector<12x20xi1>
    %cst_130 = arith.constant 1.000000e+00 : f32
    %cst_131 = arith.constant 0.000000e+00 : f32
    %328 = vector.broadcast %cst_130 : f32 to vector<12x20xf32>
    %329 = vector.broadcast %cst_131 : f32 to vector<12x20xf32>
    %330 = arith.select %327, %328, %329 : vector<12x20xi1>, vector<12x20xf32>
    %c2_i32_132 = arith.constant 2 : i32
    %331 = vector.broadcast %c2_i32_132 : i32 to vector<12x20xi32>
    %332 = arith.muli %331, %318 : vector<12x20xi32>
    %333 = arith.cmpi eq, %321, %332 : vector<12x20xi32>
    %334 = arith.andi %315, %333 : vector<12x20xi1>
    %cst_133 = arith.constant 1.000000e+00 : f32
    %cst_134 = arith.constant 0.000000e+00 : f32
    %335 = vector.broadcast %cst_133 : f32 to vector<12x20xf32>
    %336 = vector.broadcast %cst_134 : f32 to vector<12x20xf32>
    %337 = arith.select %334, %335, %336 : vector<12x20xi1>, vector<12x20xf32>
    %cst_135 = arith.constant dense<0.000000e+00> : vector<12x64xf32>
    %338 = tpu.matmul %330, %298, %cst_135 {dimension_numbers = #tpu.dot_dimension_numbers<[1], [0], [0], [1], [0, 0, 1, 1], [], []>} : vector<12x20xf32>, vector<20x64xf32>, vector<12x64xf32> -> vector<12x64xf32>
    %cst_136 = arith.constant dense<0.000000e+00> : vector<12x64xf32>
    %339 = tpu.matmul %337, %298, %cst_136 {dimension_numbers = #tpu.dot_dimension_numbers<[1], [0], [0], [1], [0, 0, 1, 1], [], []>} : vector<12x20xf32>, vector<20x64xf32>, vector<12x64xf32> -> vector<12x64xf32>
    %340 = arith.maximumf %338, %339 : vector<12x64xf32>
    %c4 = arith.constant 4 : index
    %c0_137 = arith.constant 0 : index
    %341 = vector.load %arg5[%c4, %c0_137] : memref<32x128xf32, #tpu.memory_space<vmem>>, vector<1x16xf32>
    %c5 = arith.constant 5 : index
    %c0_138 = arith.constant 0 : index
    %342 = vector.load %arg5[%c5, %c0_138] : memref<32x128xf32, #tpu.memory_space<vmem>>, vector<1x16xf32>
    %c0_139 = arith.constant 0 : index
    %c0_140 = arith.constant 0 : index
    %343 = vector.load %arg3[%c0_139, %c0_140] : memref<64x128xf32, #tpu.memory_space<vmem>>, vector<64x128xf32>
    %cst_141 = arith.constant dense<0.000000e+00> : vector<12x128xf32>
    %344 = tpu.matmul %340, %343, %cst_141 {dimension_numbers = #tpu.dot_dimension_numbers<[1], [0], [0], [1], [0, 0, 1, 1], [], []>} : vector<12x64xf32>, vector<64x128xf32>, vector<12x128xf32> -> vector<12x128xf32>
    %345 = tpu.iota {dimensions = array<i32: 0>} : vector<14x12xi32>
    %346 = tpu.iota {dimensions = array<i32: 1>} : vector<14x12xi32>
    %c0_i32_142 = arith.constant 0 : i32
    %347 = vector.broadcast %c0_i32_142 : i32 to vector<14x12xi32>
    %c7_i32 = arith.constant 7 : i32
    %348 = vector.broadcast %c7_i32 : i32 to vector<14x12xi32>
    %349 = arith.cmpi sge, %345, %348 : vector<14x12xi32>
    %c1_i32_143 = arith.constant 1 : i32
    %c0_i32_144 = arith.constant 0 : i32
    %350 = vector.broadcast %c1_i32_143 : i32 to vector<14x12xi32>
    %351 = vector.broadcast %c0_i32_144 : i32 to vector<14x12xi32>
    %352 = arith.select %349, %350, %351 : vector<14x12xi1>, vector<14x12xi32>
    %353 = arith.addi %347, %352 : vector<14x12xi32>
    %c0_i32_145 = arith.constant 0 : i32
    %354 = vector.broadcast %c0_i32_145 : i32 to vector<14x12xi32>
    %c6_i32_146 = arith.constant 6 : i32
    %355 = vector.broadcast %c6_i32_146 : i32 to vector<14x12xi32>
    %356 = arith.cmpi sge, %346, %355 : vector<14x12xi32>
    %c1_i32_147 = arith.constant 1 : i32
    %c0_i32_148 = arith.constant 0 : i32
    %357 = vector.broadcast %c1_i32_147 : i32 to vector<14x12xi32>
    %358 = vector.broadcast %c0_i32_148 : i32 to vector<14x12xi32>
    %359 = arith.select %356, %357, %358 : vector<14x12xi1>, vector<14x12xi32>
    %360 = arith.addi %354, %359 : vector<14x12xi32>
    %361 = arith.cmpi eq, %353, %360 : vector<14x12xi32>
    %c7_i32_149 = arith.constant 7 : i32
    %362 = vector.broadcast %c7_i32_149 : i32 to vector<14x12xi32>
    %363 = arith.muli %353, %362 : vector<14x12xi32>
    %364 = arith.subi %345, %363 : vector<14x12xi32>
    %c6_i32_150 = arith.constant 6 : i32
    %365 = vector.broadcast %c6_i32_150 : i32 to vector<14x12xi32>
    %366 = arith.muli %360, %365 : vector<14x12xi32>
    %367 = arith.subi %346, %366 : vector<14x12xi32>
    %cst_151 = arith.constant 0.000000e+00 : f32
    %368 = vector.broadcast %cst_151 : f32 to vector<14x16xf32>
    %c-4_i32_152 = arith.constant -4 : i32
    %369 = vector.broadcast %c-4_i32_152 : i32 to vector<14x12xi32>
    %370 = arith.addi %364, %369 : vector<14x12xi32>
    %371 = arith.cmpi eq, %367, %370 : vector<14x12xi32>
    %372 = arith.andi %361, %371 : vector<14x12xi1>
    %cst_153 = arith.constant 1.000000e+00 : f32
    %cst_154 = arith.constant 0.000000e+00 : f32
    %373 = vector.broadcast %cst_153 : f32 to vector<14x12xf32>
    %374 = vector.broadcast %cst_154 : f32 to vector<14x12xf32>
    %375 = arith.select %372, %373, %374 : vector<14x12xi1>, vector<14x12xf32>
    %376 = vector.extract_strided_slice %344 {offsets = [0, 0], sizes = [12, 16], strides = [1, 1]} : vector<12x128xf32> to vector<12x16xf32>
    %cst_155 = arith.constant dense<0.000000e+00> : vector<14x16xf32>
    %377 = tpu.matmul %375, %376, %cst_155 {dimension_numbers = #tpu.dot_dimension_numbers<[1], [0], [0], [1], [0, 0, 1, 1], [], []>} : vector<14x12xf32>, vector<12x16xf32>, vector<14x16xf32> -> vector<14x16xf32>
    %378 = arith.addf %368, %377 : vector<14x16xf32>
    %c-3_i32_156 = arith.constant -3 : i32
    %379 = vector.broadcast %c-3_i32_156 : i32 to vector<14x12xi32>
    %380 = arith.addi %364, %379 : vector<14x12xi32>
    %381 = arith.cmpi eq, %367, %380 : vector<14x12xi32>
    %382 = arith.andi %361, %381 : vector<14x12xi1>
    %cst_157 = arith.constant 1.000000e+00 : f32
    %cst_158 = arith.constant 0.000000e+00 : f32
    %383 = vector.broadcast %cst_157 : f32 to vector<14x12xf32>
    %384 = vector.broadcast %cst_158 : f32 to vector<14x12xf32>
    %385 = arith.select %382, %383, %384 : vector<14x12xi1>, vector<14x12xf32>
    %386 = vector.extract_strided_slice %344 {offsets = [0, 16], sizes = [12, 16], strides = [1, 1]} : vector<12x128xf32> to vector<12x16xf32>
    %cst_159 = arith.constant dense<0.000000e+00> : vector<14x16xf32>
    %387 = tpu.matmul %385, %386, %cst_159 {dimension_numbers = #tpu.dot_dimension_numbers<[1], [0], [0], [1], [0, 0, 1, 1], [], []>} : vector<14x12xf32>, vector<12x16xf32>, vector<14x16xf32> -> vector<14x16xf32>
    %388 = arith.addf %378, %387 : vector<14x16xf32>
    %c-2_i32_160 = arith.constant -2 : i32
    %389 = vector.broadcast %c-2_i32_160 : i32 to vector<14x12xi32>
    %390 = arith.addi %364, %389 : vector<14x12xi32>
    %391 = arith.cmpi eq, %367, %390 : vector<14x12xi32>
    %392 = arith.andi %361, %391 : vector<14x12xi1>
    %cst_161 = arith.constant 1.000000e+00 : f32
    %cst_162 = arith.constant 0.000000e+00 : f32
    %393 = vector.broadcast %cst_161 : f32 to vector<14x12xf32>
    %394 = vector.broadcast %cst_162 : f32 to vector<14x12xf32>
    %395 = arith.select %392, %393, %394 : vector<14x12xi1>, vector<14x12xf32>
    %396 = vector.extract_strided_slice %344 {offsets = [0, 32], sizes = [12, 16], strides = [1, 1]} : vector<12x128xf32> to vector<12x16xf32>
    %cst_163 = arith.constant dense<0.000000e+00> : vector<14x16xf32>
    %397 = tpu.matmul %395, %396, %cst_163 {dimension_numbers = #tpu.dot_dimension_numbers<[1], [0], [0], [1], [0, 0, 1, 1], [], []>} : vector<14x12xf32>, vector<12x16xf32>, vector<14x16xf32> -> vector<14x16xf32>
    %398 = arith.addf %388, %397 : vector<14x16xf32>
    %c-1_i32_164 = arith.constant -1 : i32
    %399 = vector.broadcast %c-1_i32_164 : i32 to vector<14x12xi32>
    %400 = arith.addi %364, %399 : vector<14x12xi32>
    %401 = arith.cmpi eq, %367, %400 : vector<14x12xi32>
    %402 = arith.andi %361, %401 : vector<14x12xi1>
    %cst_165 = arith.constant 1.000000e+00 : f32
    %cst_166 = arith.constant 0.000000e+00 : f32
    %403 = vector.broadcast %cst_165 : f32 to vector<14x12xf32>
    %404 = vector.broadcast %cst_166 : f32 to vector<14x12xf32>
    %405 = arith.select %402, %403, %404 : vector<14x12xi1>, vector<14x12xf32>
    %406 = vector.extract_strided_slice %344 {offsets = [0, 48], sizes = [12, 16], strides = [1, 1]} : vector<12x128xf32> to vector<12x16xf32>
    %cst_167 = arith.constant dense<0.000000e+00> : vector<14x16xf32>
    %407 = tpu.matmul %405, %406, %cst_167 {dimension_numbers = #tpu.dot_dimension_numbers<[1], [0], [0], [1], [0, 0, 1, 1], [], []>} : vector<14x12xf32>, vector<12x16xf32>, vector<14x16xf32> -> vector<14x16xf32>
    %408 = arith.addf %398, %407 : vector<14x16xf32>
    %c0_i32_168 = arith.constant 0 : i32
    %409 = vector.broadcast %c0_i32_168 : i32 to vector<14x12xi32>
    %410 = arith.addi %364, %409 : vector<14x12xi32>
    %411 = arith.cmpi eq, %367, %410 : vector<14x12xi32>
    %412 = arith.andi %361, %411 : vector<14x12xi1>
    %cst_169 = arith.constant 1.000000e+00 : f32
    %cst_170 = arith.constant 0.000000e+00 : f32
    %413 = vector.broadcast %cst_169 : f32 to vector<14x12xf32>
    %414 = vector.broadcast %cst_170 : f32 to vector<14x12xf32>
    %415 = arith.select %412, %413, %414 : vector<14x12xi1>, vector<14x12xf32>
    %416 = vector.extract_strided_slice %344 {offsets = [0, 64], sizes = [12, 16], strides = [1, 1]} : vector<12x128xf32> to vector<12x16xf32>
    %cst_171 = arith.constant dense<0.000000e+00> : vector<14x16xf32>
    %417 = tpu.matmul %415, %416, %cst_171 {dimension_numbers = #tpu.dot_dimension_numbers<[1], [0], [0], [1], [0, 0, 1, 1], [], []>} : vector<14x12xf32>, vector<12x16xf32>, vector<14x16xf32> -> vector<14x16xf32>
    %418 = arith.addf %408, %417 : vector<14x16xf32>
    %c1_i32_172 = arith.constant 1 : i32
    %419 = vector.broadcast %c1_i32_172 : i32 to vector<14x12xi32>
    %420 = arith.addi %364, %419 : vector<14x12xi32>
    %421 = arith.cmpi eq, %367, %420 : vector<14x12xi32>
    %422 = arith.andi %361, %421 : vector<14x12xi1>
    %cst_173 = arith.constant 1.000000e+00 : f32
    %cst_174 = arith.constant 0.000000e+00 : f32
    %423 = vector.broadcast %cst_173 : f32 to vector<14x12xf32>
    %424 = vector.broadcast %cst_174 : f32 to vector<14x12xf32>
    %425 = arith.select %422, %423, %424 : vector<14x12xi1>, vector<14x12xf32>
    %426 = vector.extract_strided_slice %344 {offsets = [0, 80], sizes = [12, 16], strides = [1, 1]} : vector<12x128xf32> to vector<12x16xf32>
    %cst_175 = arith.constant dense<0.000000e+00> : vector<14x16xf32>
    %427 = tpu.matmul %425, %426, %cst_175 {dimension_numbers = #tpu.dot_dimension_numbers<[1], [0], [0], [1], [0, 0, 1, 1], [], []>} : vector<14x12xf32>, vector<12x16xf32>, vector<14x16xf32> -> vector<14x16xf32>
    %428 = arith.addf %418, %427 : vector<14x16xf32>
    %c2_i32_176 = arith.constant 2 : i32
    %429 = vector.broadcast %c2_i32_176 : i32 to vector<14x12xi32>
    %430 = arith.addi %364, %429 : vector<14x12xi32>
    %431 = arith.cmpi eq, %367, %430 : vector<14x12xi32>
    %432 = arith.andi %361, %431 : vector<14x12xi1>
    %cst_177 = arith.constant 1.000000e+00 : f32
    %cst_178 = arith.constant 0.000000e+00 : f32
    %433 = vector.broadcast %cst_177 : f32 to vector<14x12xf32>
    %434 = vector.broadcast %cst_178 : f32 to vector<14x12xf32>
    %435 = arith.select %432, %433, %434 : vector<14x12xi1>, vector<14x12xf32>
    %436 = vector.extract_strided_slice %344 {offsets = [0, 96], sizes = [12, 16], strides = [1, 1]} : vector<12x128xf32> to vector<12x16xf32>
    %cst_179 = arith.constant dense<0.000000e+00> : vector<14x16xf32>
    %437 = tpu.matmul %435, %436, %cst_179 {dimension_numbers = #tpu.dot_dimension_numbers<[1], [0], [0], [1], [0, 0, 1, 1], [], []>} : vector<14x12xf32>, vector<12x16xf32>, vector<14x16xf32> -> vector<14x16xf32>
    %438 = arith.addf %428, %437 : vector<14x16xf32>
    %c3_i32_180 = arith.constant 3 : i32
    %439 = vector.broadcast %c3_i32_180 : i32 to vector<14x12xi32>
    %440 = arith.addi %364, %439 : vector<14x12xi32>
    %441 = arith.cmpi eq, %367, %440 : vector<14x12xi32>
    %442 = arith.andi %361, %441 : vector<14x12xi1>
    %cst_181 = arith.constant 1.000000e+00 : f32
    %cst_182 = arith.constant 0.000000e+00 : f32
    %443 = vector.broadcast %cst_181 : f32 to vector<14x12xf32>
    %444 = vector.broadcast %cst_182 : f32 to vector<14x12xf32>
    %445 = arith.select %442, %443, %444 : vector<14x12xi1>, vector<14x12xf32>
    %446 = vector.extract_strided_slice %344 {offsets = [0, 112], sizes = [12, 16], strides = [1, 1]} : vector<12x128xf32> to vector<12x16xf32>
    %cst_183 = arith.constant dense<0.000000e+00> : vector<14x16xf32>
    %447 = tpu.matmul %445, %446, %cst_183 {dimension_numbers = #tpu.dot_dimension_numbers<[1], [0], [0], [1], [0, 0, 1, 1], [], []>} : vector<14x12xf32>, vector<12x16xf32>, vector<14x16xf32> -> vector<14x16xf32>
    %448 = arith.addf %438, %447 : vector<14x16xf32>
    %449 = vector.broadcast %341 : vector<1x16xf32> to vector<14x16xf32>
    %450 = arith.mulf %448, %449 : vector<14x16xf32>
    %451 = vector.broadcast %342 : vector<1x16xf32> to vector<14x16xf32>
    %452 = arith.addf %450, %451 : vector<14x16xf32>
    %cst_184 = arith.constant 0.000000e+00 : f32
    %453 = vector.broadcast %cst_184 : f32 to vector<14x16xf32>
    %454 = arith.maximumf %452, %453 : vector<14x16xf32>
    %455 = tpu.iota {dimensions = array<i32: 0>} : vector<8x14xi32>
    %456 = tpu.iota {dimensions = array<i32: 1>} : vector<8x14xi32>
    %c0_i32_185 = arith.constant 0 : i32
    %457 = vector.broadcast %c0_i32_185 : i32 to vector<8x14xi32>
    %c4_i32 = arith.constant 4 : i32
    %458 = vector.broadcast %c4_i32 : i32 to vector<8x14xi32>
    %459 = arith.cmpi sge, %455, %458 : vector<8x14xi32>
    %c1_i32_186 = arith.constant 1 : i32
    %c0_i32_187 = arith.constant 0 : i32
    %460 = vector.broadcast %c1_i32_186 : i32 to vector<8x14xi32>
    %461 = vector.broadcast %c0_i32_187 : i32 to vector<8x14xi32>
    %462 = arith.select %459, %460, %461 : vector<8x14xi1>, vector<8x14xi32>
    %463 = arith.addi %457, %462 : vector<8x14xi32>
    %c0_i32_188 = arith.constant 0 : i32
    %464 = vector.broadcast %c0_i32_188 : i32 to vector<8x14xi32>
    %c7_i32_189 = arith.constant 7 : i32
    %465 = vector.broadcast %c7_i32_189 : i32 to vector<8x14xi32>
    %466 = arith.cmpi sge, %456, %465 : vector<8x14xi32>
    %c1_i32_190 = arith.constant 1 : i32
    %c0_i32_191 = arith.constant 0 : i32
    %467 = vector.broadcast %c1_i32_190 : i32 to vector<8x14xi32>
    %468 = vector.broadcast %c0_i32_191 : i32 to vector<8x14xi32>
    %469 = arith.select %466, %467, %468 : vector<8x14xi1>, vector<8x14xi32>
    %470 = arith.addi %464, %469 : vector<8x14xi32>
    %471 = arith.cmpi eq, %463, %470 : vector<8x14xi32>
    %c4_i32_192 = arith.constant 4 : i32
    %472 = vector.broadcast %c4_i32_192 : i32 to vector<8x14xi32>
    %473 = arith.muli %463, %472 : vector<8x14xi32>
    %474 = arith.subi %455, %473 : vector<8x14xi32>
    %c7_i32_193 = arith.constant 7 : i32
    %475 = vector.broadcast %c7_i32_193 : i32 to vector<8x14xi32>
    %476 = arith.muli %470, %475 : vector<8x14xi32>
    %477 = arith.subi %456, %476 : vector<8x14xi32>
    %c2_i32_194 = arith.constant 2 : i32
    %478 = vector.broadcast %c2_i32_194 : i32 to vector<8x14xi32>
    %479 = arith.muli %478, %474 : vector<8x14xi32>
    %c1_i32_195 = arith.constant 1 : i32
    %480 = vector.broadcast %c1_i32_195 : i32 to vector<8x14xi32>
    %481 = arith.subi %479, %480 : vector<8x14xi32>
    %482 = arith.cmpi eq, %477, %481 : vector<8x14xi32>
    %483 = arith.andi %471, %482 : vector<8x14xi1>
    %cst_196 = arith.constant 1.000000e+00 : f32
    %cst_197 = arith.constant 0.000000e+00 : f32
    %484 = vector.broadcast %cst_196 : f32 to vector<8x14xf32>
    %485 = vector.broadcast %cst_197 : f32 to vector<8x14xf32>
    %486 = arith.select %483, %484, %485 : vector<8x14xi1>, vector<8x14xf32>
    %c2_i32_198 = arith.constant 2 : i32
    %487 = vector.broadcast %c2_i32_198 : i32 to vector<8x14xi32>
    %488 = arith.muli %487, %474 : vector<8x14xi32>
    %489 = arith.cmpi eq, %477, %488 : vector<8x14xi32>
    %490 = arith.andi %471, %489 : vector<8x14xi1>
    %cst_199 = arith.constant 1.000000e+00 : f32
    %cst_200 = arith.constant 0.000000e+00 : f32
    %491 = vector.broadcast %cst_199 : f32 to vector<8x14xf32>
    %492 = vector.broadcast %cst_200 : f32 to vector<8x14xf32>
    %493 = arith.select %490, %491, %492 : vector<8x14xi1>, vector<8x14xf32>
    %cst_201 = arith.constant dense<0.000000e+00> : vector<8x16xf32>
    %494 = tpu.matmul %486, %454, %cst_201 {dimension_numbers = #tpu.dot_dimension_numbers<[1], [0], [0], [1], [0, 0, 1, 1], [], []>} : vector<8x14xf32>, vector<14x16xf32>, vector<8x16xf32> -> vector<8x16xf32>
    %cst_202 = arith.constant dense<0.000000e+00> : vector<8x16xf32>
    %495 = tpu.matmul %493, %454, %cst_202 {dimension_numbers = #tpu.dot_dimension_numbers<[1], [0], [0], [1], [0, 0, 1, 1], [], []>} : vector<8x14xf32>, vector<14x16xf32>, vector<8x16xf32> -> vector<8x16xf32>
    %496 = arith.maximumf %494, %495 : vector<8x16xf32>
    %c0_203 = arith.constant 0 : index
    %c0_204 = arith.constant 0 : index
    %497 = vector.load %arg4[%c0_203, %c0_204] : memref<16x32xf32, #tpu.memory_space<vmem>>, vector<16x32xf32>
    %cst_205 = arith.constant dense<0.000000e+00> : vector<8x32xf32>
    %498 = tpu.matmul %496, %497, %cst_205 {dimension_numbers = #tpu.dot_dimension_numbers<[1], [0], [0], [1], [0, 0, 1, 1], [], []>} : vector<8x16xf32>, vector<16x32xf32>, vector<8x32xf32> -> vector<8x32xf32>
    %c6 = arith.constant 6 : index
    %c0_206 = arith.constant 0 : index
    %499 = vector.load %arg5[%c6, %c0_206] : memref<32x128xf32, #tpu.memory_space<vmem>>, vector<1x32xf32>
    %500 = vector.broadcast %499 : vector<1x32xf32> to vector<8x32xf32>
    %501 = arith.addf %498, %500 : vector<8x32xf32>
    %502 = tpu.iota {dimensions = array<i32: 0>} : vector<8x8xi32>
    %503 = tpu.iota {dimensions = array<i32: 1>} : vector<8x8xi32>
    %c0_i32_207 = arith.constant 0 : i32
    %504 = vector.broadcast %c0_i32_207 : i32 to vector<8x8xi32>
    %c4_i32_208 = arith.constant 4 : i32
    %505 = vector.broadcast %c4_i32_208 : i32 to vector<8x8xi32>
    %506 = arith.cmpi sge, %502, %505 : vector<8x8xi32>
    %c1_i32_209 = arith.constant 1 : i32
    %c0_i32_210 = arith.constant 0 : i32
    %507 = vector.broadcast %c1_i32_209 : i32 to vector<8x8xi32>
    %508 = vector.broadcast %c0_i32_210 : i32 to vector<8x8xi32>
    %509 = arith.select %506, %507, %508 : vector<8x8xi1>, vector<8x8xi32>
    %510 = arith.addi %504, %509 : vector<8x8xi32>
    %c0_i32_211 = arith.constant 0 : i32
    %511 = vector.broadcast %c0_i32_211 : i32 to vector<8x8xi32>
    %c4_i32_212 = arith.constant 4 : i32
    %512 = vector.broadcast %c4_i32_212 : i32 to vector<8x8xi32>
    %513 = arith.cmpi sge, %503, %512 : vector<8x8xi32>
    %c1_i32_213 = arith.constant 1 : i32
    %c0_i32_214 = arith.constant 0 : i32
    %514 = vector.broadcast %c1_i32_213 : i32 to vector<8x8xi32>
    %515 = vector.broadcast %c0_i32_214 : i32 to vector<8x8xi32>
    %516 = arith.select %513, %514, %515 : vector<8x8xi1>, vector<8x8xi32>
    %517 = arith.addi %511, %516 : vector<8x8xi32>
    %518 = arith.cmpi eq, %510, %517 : vector<8x8xi32>
    %cst_215 = arith.constant 0.000000e+00 : f32
    %cst_216 = arith.constant -1.000000e+09 : f32
    %519 = vector.broadcast %cst_215 : f32 to vector<8x8xf32>
    %520 = vector.broadcast %cst_216 : f32 to vector<8x8xf32>
    %521 = arith.select %518, %519, %520 : vector<8x8xi1>, vector<8x8xf32>
    %c0_217 = arith.constant 0 : index
    %c0_218 = arith.constant 0 : index
    %c0_219 = arith.constant 0 : index
    %522 = vector.load %arg6[%c0_217, %c0_218, %c0_219] : memref<8x32x32xf32, #tpu.memory_space<vmem>>, vector<1x32x32xf32>
    %523 = vector.shape_cast %522 : vector<1x32x32xf32> to vector<32x32xf32>
    %c1_220 = arith.constant 1 : index
    %c0_221 = arith.constant 0 : index
    %c0_222 = arith.constant 0 : index
    %524 = vector.load %arg6[%c1_220, %c0_221, %c0_222] : memref<8x32x32xf32, #tpu.memory_space<vmem>>, vector<1x32x32xf32>
    %525 = vector.shape_cast %524 : vector<1x32x32xf32> to vector<32x32xf32>
    %c2_223 = arith.constant 2 : index
    %c0_224 = arith.constant 0 : index
    %c0_225 = arith.constant 0 : index
    %526 = vector.load %arg6[%c2_223, %c0_224, %c0_225] : memref<8x32x32xf32, #tpu.memory_space<vmem>>, vector<1x32x32xf32>
    %527 = vector.shape_cast %526 : vector<1x32x32xf32> to vector<32x32xf32>
    %c3_226 = arith.constant 3 : index
    %c0_227 = arith.constant 0 : index
    %c0_228 = arith.constant 0 : index
    %528 = vector.load %arg6[%c3_226, %c0_227, %c0_228] : memref<8x32x32xf32, #tpu.memory_space<vmem>>, vector<1x32x32xf32>
    %529 = vector.shape_cast %528 : vector<1x32x32xf32> to vector<32x32xf32>
    %cst_229 = arith.constant dense<0.000000e+00> : vector<8x32xf32>
    %530 = tpu.matmul %501, %523, %cst_229 {dimension_numbers = #tpu.dot_dimension_numbers<[1], [0], [0], [1], [0, 0, 1, 1], [], []>} : vector<8x32xf32>, vector<32x32xf32>, vector<8x32xf32> -> vector<8x32xf32>
    %c9 = arith.constant 9 : index
    %c0_230 = arith.constant 0 : index
    %531 = vector.load %arg5[%c9, %c0_230] : memref<32x128xf32, #tpu.memory_space<vmem>>, vector<1x32xf32>
    %532 = vector.broadcast %531 : vector<1x32xf32> to vector<8x32xf32>
    %533 = arith.addf %530, %532 : vector<8x32xf32>
    %cst_231 = arith.constant dense<0.000000e+00> : vector<8x32xf32>
    %534 = tpu.matmul %501, %525, %cst_231 {dimension_numbers = #tpu.dot_dimension_numbers<[1], [0], [0], [1], [0, 0, 1, 1], [], []>} : vector<8x32xf32>, vector<32x32xf32>, vector<8x32xf32> -> vector<8x32xf32>
    %c10 = arith.constant 10 : index
    %c0_232 = arith.constant 0 : index
    %535 = vector.load %arg5[%c10, %c0_232] : memref<32x128xf32, #tpu.memory_space<vmem>>, vector<1x32xf32>
    %536 = vector.broadcast %535 : vector<1x32xf32> to vector<8x32xf32>
    %537 = arith.addf %534, %536 : vector<8x32xf32>
    %cst_233 = arith.constant dense<0.000000e+00> : vector<8x32xf32>
    %538 = tpu.matmul %501, %527, %cst_233 {dimension_numbers = #tpu.dot_dimension_numbers<[1], [0], [0], [1], [0, 0, 1, 1], [], []>} : vector<8x32xf32>, vector<32x32xf32>, vector<8x32xf32> -> vector<8x32xf32>
    %c11 = arith.constant 11 : index
    %c0_234 = arith.constant 0 : index
    %539 = vector.load %arg5[%c11, %c0_234] : memref<32x128xf32, #tpu.memory_space<vmem>>, vector<1x32xf32>
    %540 = vector.broadcast %539 : vector<1x32xf32> to vector<8x32xf32>
    %541 = arith.addf %538, %540 : vector<8x32xf32>
    %542 = vector.extract_strided_slice %533 {offsets = [0, 0], sizes = [8, 8], strides = [1, 1]} : vector<8x32xf32> to vector<8x8xf32>
    %cst_235 = arith.constant 0.353553385 : f32
    %543 = vector.broadcast %cst_235 : f32 to vector<8x8xf32>
    %544 = arith.mulf %542, %543 : vector<8x8xf32>
    %545 = vector.extract_strided_slice %537 {offsets = [0, 0], sizes = [8, 8], strides = [1, 1]} : vector<8x32xf32> to vector<8x8xf32>
    %cst_236 = arith.constant dense<0.000000e+00> : vector<8x8xf32>
    %546 = tpu.matmul %544, %545, %cst_236 {dimension_numbers = #tpu.dot_dimension_numbers<[1], [1], [0], [0], [0, 0, 1, 0], [], []>} : vector<8x8xf32>, vector<8x8xf32>, vector<8x8xf32> -> vector<8x8xf32>
    %547 = arith.addf %546, %521 : vector<8x8xf32>
    %cst_237 = arith.constant dense<0xFF800000> : vector<8xf32>
    %548 = vector.multi_reduction <maximumf>, %547, %cst_237 [1] : vector<8x8xf32> to vector<8xf32>
    %549 = vector.shape_cast %548 : vector<8xf32> to vector<8x1xf32>
    %550 = vector.broadcast %549 : vector<8x1xf32> to vector<8x8xf32>
    %551 = arith.subf %547, %550 : vector<8x8xf32>
    %552 = math.exp %551 : vector<8x8xf32>
    %cst_238 = arith.constant dense<0.000000e+00> : vector<8xf32>
    %553 = vector.multi_reduction <add>, %552, %cst_238 [1] : vector<8x8xf32> to vector<8xf32>
    %554 = vector.shape_cast %553 : vector<8xf32> to vector<8x1xf32>
    %555 = tpu.reciprocal %554 {approx = true} : vector<8x1xf32> -> vector<8x1xf32>
    %556 = vector.broadcast %555 : vector<8x1xf32> to vector<8x8xf32>
    %557 = arith.mulf %552, %556 : vector<8x8xf32>
    %558 = vector.extract_strided_slice %541 {offsets = [0, 0], sizes = [8, 8], strides = [1, 1]} : vector<8x32xf32> to vector<8x8xf32>
    %cst_239 = arith.constant dense<0.000000e+00> : vector<8x8xf32>
    %559 = tpu.matmul %557, %558, %cst_239 {dimension_numbers = #tpu.dot_dimension_numbers<[1], [0], [0], [1], [0, 0, 1, 1], [], []>} : vector<8x8xf32>, vector<8x8xf32>, vector<8x8xf32> -> vector<8x8xf32>
    %560 = vector.extract_strided_slice %533 {offsets = [0, 8], sizes = [8, 8], strides = [1, 1]} : vector<8x32xf32> to vector<8x8xf32>
    %cst_240 = arith.constant 0.353553385 : f32
    %561 = vector.broadcast %cst_240 : f32 to vector<8x8xf32>
    %562 = arith.mulf %560, %561 : vector<8x8xf32>
    %563 = vector.extract_strided_slice %537 {offsets = [0, 8], sizes = [8, 8], strides = [1, 1]} : vector<8x32xf32> to vector<8x8xf32>
    %cst_241 = arith.constant dense<0.000000e+00> : vector<8x8xf32>
    %564 = tpu.matmul %562, %563, %cst_241 {dimension_numbers = #tpu.dot_dimension_numbers<[1], [1], [0], [0], [0, 0, 1, 0], [], []>} : vector<8x8xf32>, vector<8x8xf32>, vector<8x8xf32> -> vector<8x8xf32>
    %565 = arith.addf %564, %521 : vector<8x8xf32>
    %cst_242 = arith.constant dense<0xFF800000> : vector<8xf32>
    %566 = vector.multi_reduction <maximumf>, %565, %cst_242 [1] : vector<8x8xf32> to vector<8xf32>
    %567 = vector.shape_cast %566 : vector<8xf32> to vector<8x1xf32>
    %568 = vector.broadcast %567 : vector<8x1xf32> to vector<8x8xf32>
    %569 = arith.subf %565, %568 : vector<8x8xf32>
    %570 = math.exp %569 : vector<8x8xf32>
    %cst_243 = arith.constant dense<0.000000e+00> : vector<8xf32>
    %571 = vector.multi_reduction <add>, %570, %cst_243 [1] : vector<8x8xf32> to vector<8xf32>
    %572 = vector.shape_cast %571 : vector<8xf32> to vector<8x1xf32>
    %573 = tpu.reciprocal %572 {approx = true} : vector<8x1xf32> -> vector<8x1xf32>
    %574 = vector.broadcast %573 : vector<8x1xf32> to vector<8x8xf32>
    %575 = arith.mulf %570, %574 : vector<8x8xf32>
    %576 = vector.extract_strided_slice %541 {offsets = [0, 8], sizes = [8, 8], strides = [1, 1]} : vector<8x32xf32> to vector<8x8xf32>
    %cst_244 = arith.constant dense<0.000000e+00> : vector<8x8xf32>
    %577 = tpu.matmul %575, %576, %cst_244 {dimension_numbers = #tpu.dot_dimension_numbers<[1], [0], [0], [1], [0, 0, 1, 1], [], []>} : vector<8x8xf32>, vector<8x8xf32>, vector<8x8xf32> -> vector<8x8xf32>
    %578 = vector.extract_strided_slice %533 {offsets = [0, 16], sizes = [8, 8], strides = [1, 1]} : vector<8x32xf32> to vector<8x8xf32>
    %cst_245 = arith.constant 0.353553385 : f32
    %579 = vector.broadcast %cst_245 : f32 to vector<8x8xf32>
    %580 = arith.mulf %578, %579 : vector<8x8xf32>
    %581 = vector.extract_strided_slice %537 {offsets = [0, 16], sizes = [8, 8], strides = [1, 1]} : vector<8x32xf32> to vector<8x8xf32>
    %cst_246 = arith.constant dense<0.000000e+00> : vector<8x8xf32>
    %582 = tpu.matmul %580, %581, %cst_246 {dimension_numbers = #tpu.dot_dimension_numbers<[1], [1], [0], [0], [0, 0, 1, 0], [], []>} : vector<8x8xf32>, vector<8x8xf32>, vector<8x8xf32> -> vector<8x8xf32>
    %583 = arith.addf %582, %521 : vector<8x8xf32>
    %cst_247 = arith.constant dense<0xFF800000> : vector<8xf32>
    %584 = vector.multi_reduction <maximumf>, %583, %cst_247 [1] : vector<8x8xf32> to vector<8xf32>
    %585 = vector.shape_cast %584 : vector<8xf32> to vector<8x1xf32>
    %586 = vector.broadcast %585 : vector<8x1xf32> to vector<8x8xf32>
    %587 = arith.subf %583, %586 : vector<8x8xf32>
    %588 = math.exp %587 : vector<8x8xf32>
    %cst_248 = arith.constant dense<0.000000e+00> : vector<8xf32>
    %589 = vector.multi_reduction <add>, %588, %cst_248 [1] : vector<8x8xf32> to vector<8xf32>
    %590 = vector.shape_cast %589 : vector<8xf32> to vector<8x1xf32>
    %591 = tpu.reciprocal %590 {approx = true} : vector<8x1xf32> -> vector<8x1xf32>
    %592 = vector.broadcast %591 : vector<8x1xf32> to vector<8x8xf32>
    %593 = arith.mulf %588, %592 : vector<8x8xf32>
    %594 = vector.extract_strided_slice %541 {offsets = [0, 16], sizes = [8, 8], strides = [1, 1]} : vector<8x32xf32> to vector<8x8xf32>
    %cst_249 = arith.constant dense<0.000000e+00> : vector<8x8xf32>
    %595 = tpu.matmul %593, %594, %cst_249 {dimension_numbers = #tpu.dot_dimension_numbers<[1], [0], [0], [1], [0, 0, 1, 1], [], []>} : vector<8x8xf32>, vector<8x8xf32>, vector<8x8xf32> -> vector<8x8xf32>
    %596 = vector.extract_strided_slice %533 {offsets = [0, 24], sizes = [8, 8], strides = [1, 1]} : vector<8x32xf32> to vector<8x8xf32>
    %cst_250 = arith.constant 0.353553385 : f32
    %597 = vector.broadcast %cst_250 : f32 to vector<8x8xf32>
    %598 = arith.mulf %596, %597 : vector<8x8xf32>
    %599 = vector.extract_strided_slice %537 {offsets = [0, 24], sizes = [8, 8], strides = [1, 1]} : vector<8x32xf32> to vector<8x8xf32>
    %cst_251 = arith.constant dense<0.000000e+00> : vector<8x8xf32>
    %600 = tpu.matmul %598, %599, %cst_251 {dimension_numbers = #tpu.dot_dimension_numbers<[1], [1], [0], [0], [0, 0, 1, 0], [], []>} : vector<8x8xf32>, vector<8x8xf32>, vector<8x8xf32> -> vector<8x8xf32>
    %601 = arith.addf %600, %521 : vector<8x8xf32>
    %cst_252 = arith.constant dense<0xFF800000> : vector<8xf32>
    %602 = vector.multi_reduction <maximumf>, %601, %cst_252 [1] : vector<8x8xf32> to vector<8xf32>
    %603 = vector.shape_cast %602 : vector<8xf32> to vector<8x1xf32>
    %604 = vector.broadcast %603 : vector<8x1xf32> to vector<8x8xf32>
    %605 = arith.subf %601, %604 : vector<8x8xf32>
    %606 = math.exp %605 : vector<8x8xf32>
    %cst_253 = arith.constant dense<0.000000e+00> : vector<8xf32>
    %607 = vector.multi_reduction <add>, %606, %cst_253 [1] : vector<8x8xf32> to vector<8xf32>
    %608 = vector.shape_cast %607 : vector<8xf32> to vector<8x1xf32>
    %609 = tpu.reciprocal %608 {approx = true} : vector<8x1xf32> -> vector<8x1xf32>
    %610 = vector.broadcast %609 : vector<8x1xf32> to vector<8x8xf32>
    %611 = arith.mulf %606, %610 : vector<8x8xf32>
    %612 = vector.extract_strided_slice %541 {offsets = [0, 24], sizes = [8, 8], strides = [1, 1]} : vector<8x32xf32> to vector<8x8xf32>
    %cst_254 = arith.constant dense<0.000000e+00> : vector<8x8xf32>
    %613 = tpu.matmul %611, %612, %cst_254 {dimension_numbers = #tpu.dot_dimension_numbers<[1], [0], [0], [1], [0, 0, 1, 1], [], []>} : vector<8x8xf32>, vector<8x8xf32>, vector<8x8xf32> -> vector<8x8xf32>
    %614 = tpu.concatenate %559, %577, %595, %613 in 1 : vector<8x8xf32>, vector<8x8xf32>, vector<8x8xf32>, vector<8x8xf32> -> vector<8x32xf32>
    %cst_255 = arith.constant dense<0.000000e+00> : vector<8x32xf32>
    %615 = tpu.matmul %614, %529, %cst_255 {dimension_numbers = #tpu.dot_dimension_numbers<[1], [0], [0], [1], [0, 0, 1, 1], [], []>} : vector<8x32xf32>, vector<32x32xf32>, vector<8x32xf32> -> vector<8x32xf32>
    %c12 = arith.constant 12 : index
    %c0_256 = arith.constant 0 : index
    %616 = vector.load %arg5[%c12, %c0_256] : memref<32x128xf32, #tpu.memory_space<vmem>>, vector<1x32xf32>
    %617 = vector.broadcast %616 : vector<1x32xf32> to vector<8x32xf32>
    %618 = arith.addf %615, %617 : vector<8x32xf32>
    %619 = arith.addf %501, %618 : vector<8x32xf32>
    %c13 = arith.constant 13 : index
    %c0_257 = arith.constant 0 : index
    %620 = vector.load %arg5[%c13, %c0_257] : memref<32x128xf32, #tpu.memory_space<vmem>>, vector<1x32xf32>
    %c14 = arith.constant 14 : index
    %c0_258 = arith.constant 0 : index
    %621 = vector.load %arg5[%c14, %c0_258] : memref<32x128xf32, #tpu.memory_space<vmem>>, vector<1x32xf32>
    %cst_259 = arith.constant dense<0.000000e+00> : vector<8xf32>
    %622 = vector.multi_reduction <add>, %619, %cst_259 [1] : vector<8x32xf32> to vector<8xf32>
    %623 = vector.shape_cast %622 : vector<8xf32> to vector<8x1xf32>
    %cst_260 = arith.constant 3.200000e+01 : f32
    %624 = vector.broadcast %cst_260 : f32 to vector<8x1xf32>
    %625 = arith.divf %623, %624 : vector<8x1xf32>
    %626 = vector.broadcast %625 : vector<8x1xf32> to vector<8x32xf32>
    %627 = arith.subf %619, %626 : vector<8x32xf32>
    %628 = arith.mulf %627, %627 : vector<8x32xf32>
    %cst_261 = arith.constant dense<0.000000e+00> : vector<8xf32>
    %629 = vector.multi_reduction <add>, %628, %cst_261 [1] : vector<8x32xf32> to vector<8xf32>
    %630 = vector.shape_cast %629 : vector<8xf32> to vector<8x1xf32>
    %cst_262 = arith.constant 3.200000e+01 : f32
    %631 = vector.broadcast %cst_262 : f32 to vector<8x1xf32>
    %632 = arith.divf %630, %631 : vector<8x1xf32>
    %cst_263 = arith.constant 9.99999974E-6 : f32
    %633 = vector.broadcast %cst_263 : f32 to vector<8x1xf32>
    %634 = arith.addf %632, %633 : vector<8x1xf32>
    %635 = math.rsqrt %634 : vector<8x1xf32>
    %636 = vector.broadcast %635 : vector<8x1xf32> to vector<8x32xf32>
    %637 = arith.mulf %627, %636 : vector<8x32xf32>
    %638 = vector.broadcast %620 : vector<1x32xf32> to vector<8x32xf32>
    %639 = arith.mulf %637, %638 : vector<8x32xf32>
    %640 = vector.broadcast %621 : vector<1x32xf32> to vector<8x32xf32>
    %641 = arith.addf %639, %640 : vector<8x32xf32>
    %642 = arith.truncf %641 : vector<8x32xf32> to vector<8x32xbf16>
    %c0_264 = arith.constant 0 : index
    %c0_265 = arith.constant 0 : index
    %c0_266 = arith.constant 0 : index
    %643 = vector.load %arg7[%c0_264, %c0_265, %c0_266] : memref<2x32x2048xbf16, #tpu.memory_space<vmem>>, vector<1x32x2048xbf16>
    %644 = vector.shape_cast %643 : vector<1x32x2048xbf16> to vector<32x2048xbf16>
    %cst_267 = arith.constant dense<0.000000e+00> : vector<8x2048xf32>
    %645 = tpu.matmul %642, %644, %cst_267 {dimension_numbers = #tpu.dot_dimension_numbers<[1], [0], [0], [1], [0, 0, 1, 1], [], []>} : vector<8x32xbf16>, vector<32x2048xbf16>, vector<8x2048xf32> -> vector<8x2048xf32>
    %c0_268 = arith.constant 0 : index
    %c0_269 = arith.constant 0 : index
    %c0_270 = arith.constant 0 : index
    %646 = vector.load %arg9[%c0_268, %c0_269, %c0_270] : memref<2x1x2048xf32, #tpu.memory_space<vmem>>, vector<1x1x2048xf32>
    %647 = vector.shape_cast %646 : vector<1x1x2048xf32> to vector<1x2048xf32>
    %648 = vector.broadcast %647 : vector<1x2048xf32> to vector<8x2048xf32>
    %649 = arith.addf %645, %648 : vector<8x2048xf32>
    %cst_271 = arith.constant 0.000000e+00 : f32
    %650 = vector.broadcast %cst_271 : f32 to vector<8x2048xf32>
    %651 = arith.maximumf %649, %650 : vector<8x2048xf32>
    %652 = arith.truncf %651 : vector<8x2048xf32> to vector<8x2048xbf16>
    %c0_272 = arith.constant 0 : index
    %c0_273 = arith.constant 0 : index
    %c0_274 = arith.constant 0 : index
    %653 = vector.load %arg8[%c0_272, %c0_273, %c0_274] : memref<2x32x2048xbf16, #tpu.memory_space<vmem>>, vector<1x32x2048xbf16>
    %654 = vector.shape_cast %653 : vector<1x32x2048xbf16> to vector<32x2048xbf16>
    %cst_275 = arith.constant dense<0.000000e+00> : vector<8x32xf32>
    %655 = tpu.matmul %652, %654, %cst_275 {dimension_numbers = #tpu.dot_dimension_numbers<[1], [1], [0], [0], [0, 0, 1, 0], [], []>} : vector<8x2048xbf16>, vector<32x2048xbf16>, vector<8x32xf32> -> vector<8x32xf32>
    %c15 = arith.constant 15 : index
    %c0_276 = arith.constant 0 : index
    %656 = vector.load %arg5[%c15, %c0_276] : memref<32x128xf32, #tpu.memory_space<vmem>>, vector<1x32xf32>
    %657 = vector.broadcast %656 : vector<1x32xf32> to vector<8x32xf32>
    %658 = arith.addf %655, %657 : vector<8x32xf32>
    %659 = arith.addf %641, %658 : vector<8x32xf32>
    %c16 = arith.constant 16 : index
    %c0_277 = arith.constant 0 : index
    %660 = vector.load %arg5[%c16, %c0_277] : memref<32x128xf32, #tpu.memory_space<vmem>>, vector<1x32xf32>
    %c17 = arith.constant 17 : index
    %c0_278 = arith.constant 0 : index
    %661 = vector.load %arg5[%c17, %c0_278] : memref<32x128xf32, #tpu.memory_space<vmem>>, vector<1x32xf32>
    %cst_279 = arith.constant dense<0.000000e+00> : vector<8xf32>
    %662 = vector.multi_reduction <add>, %659, %cst_279 [1] : vector<8x32xf32> to vector<8xf32>
    %663 = vector.shape_cast %662 : vector<8xf32> to vector<8x1xf32>
    %cst_280 = arith.constant 3.200000e+01 : f32
    %664 = vector.broadcast %cst_280 : f32 to vector<8x1xf32>
    %665 = arith.divf %663, %664 : vector<8x1xf32>
    %666 = vector.broadcast %665 : vector<8x1xf32> to vector<8x32xf32>
    %667 = arith.subf %659, %666 : vector<8x32xf32>
    %668 = arith.mulf %667, %667 : vector<8x32xf32>
    %cst_281 = arith.constant dense<0.000000e+00> : vector<8xf32>
    %669 = vector.multi_reduction <add>, %668, %cst_281 [1] : vector<8x32xf32> to vector<8xf32>
    %670 = vector.shape_cast %669 : vector<8xf32> to vector<8x1xf32>
    %cst_282 = arith.constant 3.200000e+01 : f32
    %671 = vector.broadcast %cst_282 : f32 to vector<8x1xf32>
    %672 = arith.divf %670, %671 : vector<8x1xf32>
    %cst_283 = arith.constant 9.99999974E-6 : f32
    %673 = vector.broadcast %cst_283 : f32 to vector<8x1xf32>
    %674 = arith.addf %672, %673 : vector<8x1xf32>
    %675 = math.rsqrt %674 : vector<8x1xf32>
    %676 = vector.broadcast %675 : vector<8x1xf32> to vector<8x32xf32>
    %677 = arith.mulf %667, %676 : vector<8x32xf32>
    %678 = vector.broadcast %660 : vector<1x32xf32> to vector<8x32xf32>
    %679 = arith.mulf %677, %678 : vector<8x32xf32>
    %680 = vector.broadcast %661 : vector<1x32xf32> to vector<8x32xf32>
    %681 = arith.addf %679, %680 : vector<8x32xf32>
    %c4_284 = arith.constant 4 : index
    %c0_285 = arith.constant 0 : index
    %c0_286 = arith.constant 0 : index
    %682 = vector.load %arg6[%c4_284, %c0_285, %c0_286] : memref<8x32x32xf32, #tpu.memory_space<vmem>>, vector<1x32x32xf32>
    %683 = vector.shape_cast %682 : vector<1x32x32xf32> to vector<32x32xf32>
    %c5_287 = arith.constant 5 : index
    %c0_288 = arith.constant 0 : index
    %c0_289 = arith.constant 0 : index
    %684 = vector.load %arg6[%c5_287, %c0_288, %c0_289] : memref<8x32x32xf32, #tpu.memory_space<vmem>>, vector<1x32x32xf32>
    %685 = vector.shape_cast %684 : vector<1x32x32xf32> to vector<32x32xf32>
    %c6_290 = arith.constant 6 : index
    %c0_291 = arith.constant 0 : index
    %c0_292 = arith.constant 0 : index
    %686 = vector.load %arg6[%c6_290, %c0_291, %c0_292] : memref<8x32x32xf32, #tpu.memory_space<vmem>>, vector<1x32x32xf32>
    %687 = vector.shape_cast %686 : vector<1x32x32xf32> to vector<32x32xf32>
    %c7 = arith.constant 7 : index
    %c0_293 = arith.constant 0 : index
    %c0_294 = arith.constant 0 : index
    %688 = vector.load %arg6[%c7, %c0_293, %c0_294] : memref<8x32x32xf32, #tpu.memory_space<vmem>>, vector<1x32x32xf32>
    %689 = vector.shape_cast %688 : vector<1x32x32xf32> to vector<32x32xf32>
    %cst_295 = arith.constant dense<0.000000e+00> : vector<8x32xf32>
    %690 = tpu.matmul %681, %683, %cst_295 {dimension_numbers = #tpu.dot_dimension_numbers<[1], [0], [0], [1], [0, 0, 1, 1], [], []>} : vector<8x32xf32>, vector<32x32xf32>, vector<8x32xf32> -> vector<8x32xf32>
    %c18 = arith.constant 18 : index
    %c0_296 = arith.constant 0 : index
    %691 = vector.load %arg5[%c18, %c0_296] : memref<32x128xf32, #tpu.memory_space<vmem>>, vector<1x32xf32>
    %692 = vector.broadcast %691 : vector<1x32xf32> to vector<8x32xf32>
    %693 = arith.addf %690, %692 : vector<8x32xf32>
    %cst_297 = arith.constant dense<0.000000e+00> : vector<8x32xf32>
    %694 = tpu.matmul %681, %685, %cst_297 {dimension_numbers = #tpu.dot_dimension_numbers<[1], [0], [0], [1], [0, 0, 1, 1], [], []>} : vector<8x32xf32>, vector<32x32xf32>, vector<8x32xf32> -> vector<8x32xf32>
    %c19 = arith.constant 19 : index
    %c0_298 = arith.constant 0 : index
    %695 = vector.load %arg5[%c19, %c0_298] : memref<32x128xf32, #tpu.memory_space<vmem>>, vector<1x32xf32>
    %696 = vector.broadcast %695 : vector<1x32xf32> to vector<8x32xf32>
    %697 = arith.addf %694, %696 : vector<8x32xf32>
    %cst_299 = arith.constant dense<0.000000e+00> : vector<8x32xf32>
    %698 = tpu.matmul %681, %687, %cst_299 {dimension_numbers = #tpu.dot_dimension_numbers<[1], [0], [0], [1], [0, 0, 1, 1], [], []>} : vector<8x32xf32>, vector<32x32xf32>, vector<8x32xf32> -> vector<8x32xf32>
    %c20 = arith.constant 20 : index
    %c0_300 = arith.constant 0 : index
    %699 = vector.load %arg5[%c20, %c0_300] : memref<32x128xf32, #tpu.memory_space<vmem>>, vector<1x32xf32>
    %700 = vector.broadcast %699 : vector<1x32xf32> to vector<8x32xf32>
    %701 = arith.addf %698, %700 : vector<8x32xf32>
    %702 = vector.extract_strided_slice %693 {offsets = [0, 0], sizes = [8, 8], strides = [1, 1]} : vector<8x32xf32> to vector<8x8xf32>
    %cst_301 = arith.constant 0.353553385 : f32
    %703 = vector.broadcast %cst_301 : f32 to vector<8x8xf32>
    %704 = arith.mulf %702, %703 : vector<8x8xf32>
    %705 = vector.extract_strided_slice %697 {offsets = [0, 0], sizes = [8, 8], strides = [1, 1]} : vector<8x32xf32> to vector<8x8xf32>
    %cst_302 = arith.constant dense<0.000000e+00> : vector<8x8xf32>
    %706 = tpu.matmul %704, %705, %cst_302 {dimension_numbers = #tpu.dot_dimension_numbers<[1], [1], [0], [0], [0, 0, 1, 0], [], []>} : vector<8x8xf32>, vector<8x8xf32>, vector<8x8xf32> -> vector<8x8xf32>
    %707 = arith.addf %706, %521 : vector<8x8xf32>
    %cst_303 = arith.constant dense<0xFF800000> : vector<8xf32>
    %708 = vector.multi_reduction <maximumf>, %707, %cst_303 [1] : vector<8x8xf32> to vector<8xf32>
    %709 = vector.shape_cast %708 : vector<8xf32> to vector<8x1xf32>
    %710 = vector.broadcast %709 : vector<8x1xf32> to vector<8x8xf32>
    %711 = arith.subf %707, %710 : vector<8x8xf32>
    %712 = math.exp %711 : vector<8x8xf32>
    %cst_304 = arith.constant dense<0.000000e+00> : vector<8xf32>
    %713 = vector.multi_reduction <add>, %712, %cst_304 [1] : vector<8x8xf32> to vector<8xf32>
    %714 = vector.shape_cast %713 : vector<8xf32> to vector<8x1xf32>
    %715 = tpu.reciprocal %714 {approx = true} : vector<8x1xf32> -> vector<8x1xf32>
    %716 = vector.broadcast %715 : vector<8x1xf32> to vector<8x8xf32>
    %717 = arith.mulf %712, %716 : vector<8x8xf32>
    %718 = vector.extract_strided_slice %701 {offsets = [0, 0], sizes = [8, 8], strides = [1, 1]} : vector<8x32xf32> to vector<8x8xf32>
    %cst_305 = arith.constant dense<0.000000e+00> : vector<8x8xf32>
    %719 = tpu.matmul %717, %718, %cst_305 {dimension_numbers = #tpu.dot_dimension_numbers<[1], [0], [0], [1], [0, 0, 1, 1], [], []>} : vector<8x8xf32>, vector<8x8xf32>, vector<8x8xf32> -> vector<8x8xf32>
    %720 = vector.extract_strided_slice %693 {offsets = [0, 8], sizes = [8, 8], strides = [1, 1]} : vector<8x32xf32> to vector<8x8xf32>
    %cst_306 = arith.constant 0.353553385 : f32
    %721 = vector.broadcast %cst_306 : f32 to vector<8x8xf32>
    %722 = arith.mulf %720, %721 : vector<8x8xf32>
    %723 = vector.extract_strided_slice %697 {offsets = [0, 8], sizes = [8, 8], strides = [1, 1]} : vector<8x32xf32> to vector<8x8xf32>
    %cst_307 = arith.constant dense<0.000000e+00> : vector<8x8xf32>
    %724 = tpu.matmul %722, %723, %cst_307 {dimension_numbers = #tpu.dot_dimension_numbers<[1], [1], [0], [0], [0, 0, 1, 0], [], []>} : vector<8x8xf32>, vector<8x8xf32>, vector<8x8xf32> -> vector<8x8xf32>
    %725 = arith.addf %724, %521 : vector<8x8xf32>
    %cst_308 = arith.constant dense<0xFF800000> : vector<8xf32>
    %726 = vector.multi_reduction <maximumf>, %725, %cst_308 [1] : vector<8x8xf32> to vector<8xf32>
    %727 = vector.shape_cast %726 : vector<8xf32> to vector<8x1xf32>
    %728 = vector.broadcast %727 : vector<8x1xf32> to vector<8x8xf32>
    %729 = arith.subf %725, %728 : vector<8x8xf32>
    %730 = math.exp %729 : vector<8x8xf32>
    %cst_309 = arith.constant dense<0.000000e+00> : vector<8xf32>
    %731 = vector.multi_reduction <add>, %730, %cst_309 [1] : vector<8x8xf32> to vector<8xf32>
    %732 = vector.shape_cast %731 : vector<8xf32> to vector<8x1xf32>
    %733 = tpu.reciprocal %732 {approx = true} : vector<8x1xf32> -> vector<8x1xf32>
    %734 = vector.broadcast %733 : vector<8x1xf32> to vector<8x8xf32>
    %735 = arith.mulf %730, %734 : vector<8x8xf32>
    %736 = vector.extract_strided_slice %701 {offsets = [0, 8], sizes = [8, 8], strides = [1, 1]} : vector<8x32xf32> to vector<8x8xf32>
    %cst_310 = arith.constant dense<0.000000e+00> : vector<8x8xf32>
    %737 = tpu.matmul %735, %736, %cst_310 {dimension_numbers = #tpu.dot_dimension_numbers<[1], [0], [0], [1], [0, 0, 1, 1], [], []>} : vector<8x8xf32>, vector<8x8xf32>, vector<8x8xf32> -> vector<8x8xf32>
    %738 = vector.extract_strided_slice %693 {offsets = [0, 16], sizes = [8, 8], strides = [1, 1]} : vector<8x32xf32> to vector<8x8xf32>
    %cst_311 = arith.constant 0.353553385 : f32
    %739 = vector.broadcast %cst_311 : f32 to vector<8x8xf32>
    %740 = arith.mulf %738, %739 : vector<8x8xf32>
    %741 = vector.extract_strided_slice %697 {offsets = [0, 16], sizes = [8, 8], strides = [1, 1]} : vector<8x32xf32> to vector<8x8xf32>
    %cst_312 = arith.constant dense<0.000000e+00> : vector<8x8xf32>
    %742 = tpu.matmul %740, %741, %cst_312 {dimension_numbers = #tpu.dot_dimension_numbers<[1], [1], [0], [0], [0, 0, 1, 0], [], []>} : vector<8x8xf32>, vector<8x8xf32>, vector<8x8xf32> -> vector<8x8xf32>
    %743 = arith.addf %742, %521 : vector<8x8xf32>
    %cst_313 = arith.constant dense<0xFF800000> : vector<8xf32>
    %744 = vector.multi_reduction <maximumf>, %743, %cst_313 [1] : vector<8x8xf32> to vector<8xf32>
    %745 = vector.shape_cast %744 : vector<8xf32> to vector<8x1xf32>
    %746 = vector.broadcast %745 : vector<8x1xf32> to vector<8x8xf32>
    %747 = arith.subf %743, %746 : vector<8x8xf32>
    %748 = math.exp %747 : vector<8x8xf32>
    %cst_314 = arith.constant dense<0.000000e+00> : vector<8xf32>
    %749 = vector.multi_reduction <add>, %748, %cst_314 [1] : vector<8x8xf32> to vector<8xf32>
    %750 = vector.shape_cast %749 : vector<8xf32> to vector<8x1xf32>
    %751 = tpu.reciprocal %750 {approx = true} : vector<8x1xf32> -> vector<8x1xf32>
    %752 = vector.broadcast %751 : vector<8x1xf32> to vector<8x8xf32>
    %753 = arith.mulf %748, %752 : vector<8x8xf32>
    %754 = vector.extract_strided_slice %701 {offsets = [0, 16], sizes = [8, 8], strides = [1, 1]} : vector<8x32xf32> to vector<8x8xf32>
    %cst_315 = arith.constant dense<0.000000e+00> : vector<8x8xf32>
    %755 = tpu.matmul %753, %754, %cst_315 {dimension_numbers = #tpu.dot_dimension_numbers<[1], [0], [0], [1], [0, 0, 1, 1], [], []>} : vector<8x8xf32>, vector<8x8xf32>, vector<8x8xf32> -> vector<8x8xf32>
    %756 = vector.extract_strided_slice %693 {offsets = [0, 24], sizes = [8, 8], strides = [1, 1]} : vector<8x32xf32> to vector<8x8xf32>
    %cst_316 = arith.constant 0.353553385 : f32
    %757 = vector.broadcast %cst_316 : f32 to vector<8x8xf32>
    %758 = arith.mulf %756, %757 : vector<8x8xf32>
    %759 = vector.extract_strided_slice %697 {offsets = [0, 24], sizes = [8, 8], strides = [1, 1]} : vector<8x32xf32> to vector<8x8xf32>
    %cst_317 = arith.constant dense<0.000000e+00> : vector<8x8xf32>
    %760 = tpu.matmul %758, %759, %cst_317 {dimension_numbers = #tpu.dot_dimension_numbers<[1], [1], [0], [0], [0, 0, 1, 0], [], []>} : vector<8x8xf32>, vector<8x8xf32>, vector<8x8xf32> -> vector<8x8xf32>
    %761 = arith.addf %760, %521 : vector<8x8xf32>
    %cst_318 = arith.constant dense<0xFF800000> : vector<8xf32>
    %762 = vector.multi_reduction <maximumf>, %761, %cst_318 [1] : vector<8x8xf32> to vector<8xf32>
    %763 = vector.shape_cast %762 : vector<8xf32> to vector<8x1xf32>
    %764 = vector.broadcast %763 : vector<8x1xf32> to vector<8x8xf32>
    %765 = arith.subf %761, %764 : vector<8x8xf32>
    %766 = math.exp %765 : vector<8x8xf32>
    %cst_319 = arith.constant dense<0.000000e+00> : vector<8xf32>
    %767 = vector.multi_reduction <add>, %766, %cst_319 [1] : vector<8x8xf32> to vector<8xf32>
    %768 = vector.shape_cast %767 : vector<8xf32> to vector<8x1xf32>
    %769 = tpu.reciprocal %768 {approx = true} : vector<8x1xf32> -> vector<8x1xf32>
    %770 = vector.broadcast %769 : vector<8x1xf32> to vector<8x8xf32>
    %771 = arith.mulf %766, %770 : vector<8x8xf32>
    %772 = vector.extract_strided_slice %701 {offsets = [0, 24], sizes = [8, 8], strides = [1, 1]} : vector<8x32xf32> to vector<8x8xf32>
    %cst_320 = arith.constant dense<0.000000e+00> : vector<8x8xf32>
    %773 = tpu.matmul %771, %772, %cst_320 {dimension_numbers = #tpu.dot_dimension_numbers<[1], [0], [0], [1], [0, 0, 1, 1], [], []>} : vector<8x8xf32>, vector<8x8xf32>, vector<8x8xf32> -> vector<8x8xf32>
    %774 = tpu.concatenate %719, %737, %755, %773 in 1 : vector<8x8xf32>, vector<8x8xf32>, vector<8x8xf32>, vector<8x8xf32> -> vector<8x32xf32>
    %cst_321 = arith.constant dense<0.000000e+00> : vector<8x32xf32>
    %775 = tpu.matmul %774, %689, %cst_321 {dimension_numbers = #tpu.dot_dimension_numbers<[1], [0], [0], [1], [0, 0, 1, 1], [], []>} : vector<8x32xf32>, vector<32x32xf32>, vector<8x32xf32> -> vector<8x32xf32>
    %c21 = arith.constant 21 : index
    %c0_322 = arith.constant 0 : index
    %776 = vector.load %arg5[%c21, %c0_322] : memref<32x128xf32, #tpu.memory_space<vmem>>, vector<1x32xf32>
    %777 = vector.broadcast %776 : vector<1x32xf32> to vector<8x32xf32>
    %778 = arith.addf %775, %777 : vector<8x32xf32>
    %779 = arith.addf %681, %778 : vector<8x32xf32>
    %c22 = arith.constant 22 : index
    %c0_323 = arith.constant 0 : index
    %780 = vector.load %arg5[%c22, %c0_323] : memref<32x128xf32, #tpu.memory_space<vmem>>, vector<1x32xf32>
    %c23 = arith.constant 23 : index
    %c0_324 = arith.constant 0 : index
    %781 = vector.load %arg5[%c23, %c0_324] : memref<32x128xf32, #tpu.memory_space<vmem>>, vector<1x32xf32>
    %cst_325 = arith.constant dense<0.000000e+00> : vector<8xf32>
    %782 = vector.multi_reduction <add>, %779, %cst_325 [1] : vector<8x32xf32> to vector<8xf32>
    %783 = vector.shape_cast %782 : vector<8xf32> to vector<8x1xf32>
    %cst_326 = arith.constant 3.200000e+01 : f32
    %784 = vector.broadcast %cst_326 : f32 to vector<8x1xf32>
    %785 = arith.divf %783, %784 : vector<8x1xf32>
    %786 = vector.broadcast %785 : vector<8x1xf32> to vector<8x32xf32>
    %787 = arith.subf %779, %786 : vector<8x32xf32>
    %788 = arith.mulf %787, %787 : vector<8x32xf32>
    %cst_327 = arith.constant dense<0.000000e+00> : vector<8xf32>
    %789 = vector.multi_reduction <add>, %788, %cst_327 [1] : vector<8x32xf32> to vector<8xf32>
    %790 = vector.shape_cast %789 : vector<8xf32> to vector<8x1xf32>
    %cst_328 = arith.constant 3.200000e+01 : f32
    %791 = vector.broadcast %cst_328 : f32 to vector<8x1xf32>
    %792 = arith.divf %790, %791 : vector<8x1xf32>
    %cst_329 = arith.constant 9.99999974E-6 : f32
    %793 = vector.broadcast %cst_329 : f32 to vector<8x1xf32>
    %794 = arith.addf %792, %793 : vector<8x1xf32>
    %795 = math.rsqrt %794 : vector<8x1xf32>
    %796 = vector.broadcast %795 : vector<8x1xf32> to vector<8x32xf32>
    %797 = arith.mulf %787, %796 : vector<8x32xf32>
    %798 = vector.broadcast %780 : vector<1x32xf32> to vector<8x32xf32>
    %799 = arith.mulf %797, %798 : vector<8x32xf32>
    %800 = vector.broadcast %781 : vector<1x32xf32> to vector<8x32xf32>
    %801 = arith.addf %799, %800 : vector<8x32xf32>
    %802 = arith.truncf %801 : vector<8x32xf32> to vector<8x32xbf16>
    %c1_330 = arith.constant 1 : index
    %c0_331 = arith.constant 0 : index
    %c0_332 = arith.constant 0 : index
    %803 = vector.load %arg7[%c1_330, %c0_331, %c0_332] : memref<2x32x2048xbf16, #tpu.memory_space<vmem>>, vector<1x32x2048xbf16>
    %804 = vector.shape_cast %803 : vector<1x32x2048xbf16> to vector<32x2048xbf16>
    %cst_333 = arith.constant dense<0.000000e+00> : vector<8x2048xf32>
    %805 = tpu.matmul %802, %804, %cst_333 {dimension_numbers = #tpu.dot_dimension_numbers<[1], [0], [0], [1], [0, 0, 1, 1], [], []>} : vector<8x32xbf16>, vector<32x2048xbf16>, vector<8x2048xf32> -> vector<8x2048xf32>
    %c1_334 = arith.constant 1 : index
    %c0_335 = arith.constant 0 : index
    %c0_336 = arith.constant 0 : index
    %806 = vector.load %arg9[%c1_334, %c0_335, %c0_336] : memref<2x1x2048xf32, #tpu.memory_space<vmem>>, vector<1x1x2048xf32>
    %807 = vector.shape_cast %806 : vector<1x1x2048xf32> to vector<1x2048xf32>
    %808 = vector.broadcast %807 : vector<1x2048xf32> to vector<8x2048xf32>
    %809 = arith.addf %805, %808 : vector<8x2048xf32>
    %cst_337 = arith.constant 0.000000e+00 : f32
    %810 = vector.broadcast %cst_337 : f32 to vector<8x2048xf32>
    %811 = arith.maximumf %809, %810 : vector<8x2048xf32>
    %812 = arith.truncf %811 : vector<8x2048xf32> to vector<8x2048xbf16>
    %c1_338 = arith.constant 1 : index
    %c0_339 = arith.constant 0 : index
    %c0_340 = arith.constant 0 : index
    %813 = vector.load %arg8[%c1_338, %c0_339, %c0_340] : memref<2x32x2048xbf16, #tpu.memory_space<vmem>>, vector<1x32x2048xbf16>
    %814 = vector.shape_cast %813 : vector<1x32x2048xbf16> to vector<32x2048xbf16>
    %cst_341 = arith.constant dense<0.000000e+00> : vector<8x32xf32>
    %815 = tpu.matmul %812, %814, %cst_341 {dimension_numbers = #tpu.dot_dimension_numbers<[1], [1], [0], [0], [0, 0, 1, 0], [], []>} : vector<8x2048xbf16>, vector<32x2048xbf16>, vector<8x32xf32> -> vector<8x32xf32>
    %c24 = arith.constant 24 : index
    %c0_342 = arith.constant 0 : index
    %816 = vector.load %arg5[%c24, %c0_342] : memref<32x128xf32, #tpu.memory_space<vmem>>, vector<1x32xf32>
    %817 = vector.broadcast %816 : vector<1x32xf32> to vector<8x32xf32>
    %818 = arith.addf %815, %817 : vector<8x32xf32>
    %819 = arith.addf %801, %818 : vector<8x32xf32>
    %c25 = arith.constant 25 : index
    %c0_343 = arith.constant 0 : index
    %820 = vector.load %arg5[%c25, %c0_343] : memref<32x128xf32, #tpu.memory_space<vmem>>, vector<1x32xf32>
    %c26 = arith.constant 26 : index
    %c0_344 = arith.constant 0 : index
    %821 = vector.load %arg5[%c26, %c0_344] : memref<32x128xf32, #tpu.memory_space<vmem>>, vector<1x32xf32>
    %cst_345 = arith.constant dense<0.000000e+00> : vector<8xf32>
    %822 = vector.multi_reduction <add>, %819, %cst_345 [1] : vector<8x32xf32> to vector<8xf32>
    %823 = vector.shape_cast %822 : vector<8xf32> to vector<8x1xf32>
    %cst_346 = arith.constant 3.200000e+01 : f32
    %824 = vector.broadcast %cst_346 : f32 to vector<8x1xf32>
    %825 = arith.divf %823, %824 : vector<8x1xf32>
    %826 = vector.broadcast %825 : vector<8x1xf32> to vector<8x32xf32>
    %827 = arith.subf %819, %826 : vector<8x32xf32>
    %828 = arith.mulf %827, %827 : vector<8x32xf32>
    %cst_347 = arith.constant dense<0.000000e+00> : vector<8xf32>
    %829 = vector.multi_reduction <add>, %828, %cst_347 [1] : vector<8x32xf32> to vector<8xf32>
    %830 = vector.shape_cast %829 : vector<8xf32> to vector<8x1xf32>
    %cst_348 = arith.constant 3.200000e+01 : f32
    %831 = vector.broadcast %cst_348 : f32 to vector<8x1xf32>
    %832 = arith.divf %830, %831 : vector<8x1xf32>
    %cst_349 = arith.constant 9.99999974E-6 : f32
    %833 = vector.broadcast %cst_349 : f32 to vector<8x1xf32>
    %834 = arith.addf %832, %833 : vector<8x1xf32>
    %835 = math.rsqrt %834 : vector<8x1xf32>
    %836 = vector.broadcast %835 : vector<8x1xf32> to vector<8x32xf32>
    %837 = arith.mulf %827, %836 : vector<8x32xf32>
    %838 = vector.broadcast %820 : vector<1x32xf32> to vector<8x32xf32>
    %839 = arith.mulf %837, %838 : vector<8x32xf32>
    %840 = vector.broadcast %821 : vector<1x32xf32> to vector<8x32xf32>
    %841 = arith.addf %839, %840 : vector<8x32xf32>
    %842 = tpu.iota {dimensions = array<i32: 0>} : vector<2x8xi32>
    %843 = tpu.iota {dimensions = array<i32: 1>} : vector<2x8xi32>
    %c4_i32_350 = arith.constant 4 : i32
    %844 = vector.broadcast %c4_i32_350 : i32 to vector<2x8xi32>
    %845 = arith.muli %842, %844 : vector<2x8xi32>
    %c0_i32_351 = arith.constant 0 : i32
    %846 = vector.broadcast %c0_i32_351 : i32 to vector<2x8xi32>
    %847 = arith.addi %845, %846 : vector<2x8xi32>
    %848 = arith.cmpi eq, %843, %847 : vector<2x8xi32>
    %cst_352 = arith.constant 1.000000e+00 : f32
    %cst_353 = arith.constant 0.000000e+00 : f32
    %849 = vector.broadcast %cst_352 : f32 to vector<2x8xf32>
    %850 = vector.broadcast %cst_353 : f32 to vector<2x8xf32>
    %851 = arith.select %848, %849, %850 : vector<2x8xi1>, vector<2x8xf32>
    %cst_354 = arith.constant dense<0.000000e+00> : vector<2x32xf32>
    %852 = tpu.matmul %851, %841, %cst_354 {dimension_numbers = #tpu.dot_dimension_numbers<[1], [0], [0], [1], [0, 0, 1, 1], [], []>} : vector<2x8xf32>, vector<8x32xf32>, vector<2x32xf32> -> vector<2x32xf32>
    %c4_i32_355 = arith.constant 4 : i32
    %853 = vector.broadcast %c4_i32_355 : i32 to vector<2x8xi32>
    %854 = arith.muli %842, %853 : vector<2x8xi32>
    %c1_i32_356 = arith.constant 1 : i32
    %855 = vector.broadcast %c1_i32_356 : i32 to vector<2x8xi32>
    %856 = arith.addi %854, %855 : vector<2x8xi32>
    %857 = arith.cmpi eq, %843, %856 : vector<2x8xi32>
    %cst_357 = arith.constant 1.000000e+00 : f32
    %cst_358 = arith.constant 0.000000e+00 : f32
    %858 = vector.broadcast %cst_357 : f32 to vector<2x8xf32>
    %859 = vector.broadcast %cst_358 : f32 to vector<2x8xf32>
    %860 = arith.select %857, %858, %859 : vector<2x8xi1>, vector<2x8xf32>
    %cst_359 = arith.constant dense<0.000000e+00> : vector<2x32xf32>
    %861 = tpu.matmul %860, %841, %cst_359 {dimension_numbers = #tpu.dot_dimension_numbers<[1], [0], [0], [1], [0, 0, 1, 1], [], []>} : vector<2x8xf32>, vector<8x32xf32>, vector<2x32xf32> -> vector<2x32xf32>
    %c4_i32_360 = arith.constant 4 : i32
    %862 = vector.broadcast %c4_i32_360 : i32 to vector<2x8xi32>
    %863 = arith.muli %842, %862 : vector<2x8xi32>
    %c2_i32_361 = arith.constant 2 : i32
    %864 = vector.broadcast %c2_i32_361 : i32 to vector<2x8xi32>
    %865 = arith.addi %863, %864 : vector<2x8xi32>
    %866 = arith.cmpi eq, %843, %865 : vector<2x8xi32>
    %cst_362 = arith.constant 1.000000e+00 : f32
    %cst_363 = arith.constant 0.000000e+00 : f32
    %867 = vector.broadcast %cst_362 : f32 to vector<2x8xf32>
    %868 = vector.broadcast %cst_363 : f32 to vector<2x8xf32>
    %869 = arith.select %866, %867, %868 : vector<2x8xi1>, vector<2x8xf32>
    %cst_364 = arith.constant dense<0.000000e+00> : vector<2x32xf32>
    %870 = tpu.matmul %869, %841, %cst_364 {dimension_numbers = #tpu.dot_dimension_numbers<[1], [0], [0], [1], [0, 0, 1, 1], [], []>} : vector<2x8xf32>, vector<8x32xf32>, vector<2x32xf32> -> vector<2x32xf32>
    %c4_i32_365 = arith.constant 4 : i32
    %871 = vector.broadcast %c4_i32_365 : i32 to vector<2x8xi32>
    %872 = arith.muli %842, %871 : vector<2x8xi32>
    %c3_i32_366 = arith.constant 3 : i32
    %873 = vector.broadcast %c3_i32_366 : i32 to vector<2x8xi32>
    %874 = arith.addi %872, %873 : vector<2x8xi32>
    %875 = arith.cmpi eq, %843, %874 : vector<2x8xi32>
    %cst_367 = arith.constant 1.000000e+00 : f32
    %cst_368 = arith.constant 0.000000e+00 : f32
    %876 = vector.broadcast %cst_367 : f32 to vector<2x8xf32>
    %877 = vector.broadcast %cst_368 : f32 to vector<2x8xf32>
    %878 = arith.select %875, %876, %877 : vector<2x8xi1>, vector<2x8xf32>
    %cst_369 = arith.constant dense<0.000000e+00> : vector<2x32xf32>
    %879 = tpu.matmul %878, %841, %cst_369 {dimension_numbers = #tpu.dot_dimension_numbers<[1], [0], [0], [1], [0, 0, 1, 1], [], []>} : vector<2x8xf32>, vector<8x32xf32>, vector<2x32xf32> -> vector<2x32xf32>
    %880 = tpu.concatenate %852, %861, %870, %879 in 1 : vector<2x32xf32>, vector<2x32xf32>, vector<2x32xf32>, vector<2x32xf32> -> vector<2x128xf32>
    %c0_370 = arith.constant 0 : index
    %c0_371 = arith.constant 0 : index
    %881 = vector.load %arg13[%c0_370, %c0_371] : memref<2x128xf32, #tpu.memory_space<vmem>>, vector<2x128xf32>
    tpu.vector_store %arg13[%c0_370, %c0_371], %880 {strides = array<i32>} : memref<2x128xf32, #tpu.memory_space<vmem>>, vector<2x128xf32>,
    %882 = arith.truncf %880 : vector<2x128xf32> to vector<2x128xbf16>
    %c0_372 = arith.constant 0 : index
    %c0_373 = arith.constant 0 : index
    %883 = vector.load %arg10[%c0_372, %c0_373] : memref<64x128xbf16, #tpu.memory_space<vmem>>, vector<64x128xbf16>
    %cst_374 = arith.constant dense<0.000000e+00> : vector<2x64xf32>
    %884 = tpu.matmul %882, %883, %cst_374 {dimension_numbers = #tpu.dot_dimension_numbers<[1], [1], [0], [0], [0, 0, 1, 0], [], []>} : vector<2x128xbf16>, vector<64x128xbf16>, vector<2x64xf32> -> vector<2x64xf32>
    %c7_375 = arith.constant 7 : index
    %c0_376 = arith.constant 0 : index
    %885 = vector.load %arg5[%c7_375, %c0_376] : memref<32x128xf32, #tpu.memory_space<vmem>>, vector<1x64xf32>
    %886 = vector.broadcast %885 : vector<1x64xf32> to vector<2x64xf32>
    %887 = arith.addf %884, %886 : vector<2x64xf32>
    %cst_377 = arith.constant 0.000000e+00 : f32
    %888 = vector.broadcast %cst_377 : f32 to vector<2x64xf32>
    %889 = arith.maximumf %887, %888 : vector<2x64xf32>
    %c0_378 = arith.constant 0 : index
    %c0_379 = arith.constant 0 : index
    %890 = vector.load %arg11[%c0_378, %c0_379] : memref<64x5xf32, #tpu.memory_space<vmem>>, vector<64x5xf32>
    %cst_380 = arith.constant dense<0.000000e+00> : vector<2x5xf32>
    %891 = tpu.matmul %889, %890, %cst_380 {dimension_numbers = #tpu.dot_dimension_numbers<[1], [0], [0], [1], [0, 0, 1, 1], [], []>} : vector<2x64xf32>, vector<64x5xf32>, vector<2x5xf32> -> vector<2x5xf32>
    %c8 = arith.constant 8 : index
    %c0_381 = arith.constant 0 : index
    %892 = vector.load %arg5[%c8, %c0_381] : memref<32x128xf32, #tpu.memory_space<vmem>>, vector<1x5xf32>
    %893 = vector.broadcast %892 : vector<1x5xf32> to vector<2x5xf32>
    %894 = arith.addf %891, %893 : vector<2x5xf32>
    %c0_382 = arith.constant 0 : index
    %c0_383 = arith.constant 0 : index
    %895 = vector.load %arg12[%c0_382, %c0_383] : memref<2x5xf32, #tpu.memory_space<vmem>>, vector<2x5xf32>
    tpu.vector_store %arg12[%c0_382, %c0_383], %894 {strides = array<i32>} : memref<2x5xf32, #tpu.memory_space<vmem>>, vector<2x5xf32>,
    return
  }
}

</mosaic_0001>

<llo_original>
// kernel: forward.1
$region0: #{forward.1}
  #allocation0 [shape = 'u32[]', space=smem, size = 0x4, offset = 0x4, fixed_abs, tag = 'smem constant byte address 0x4 - core index']
  #allocation1 [shape = 'u32[144,128]{1,0:T(1,128)}', space=vmem, size = 0x12000, scoped, tag = 'internal scratch']
  %s0 = inlined_call_operand.vmem [shape: f32[32,4], index: 0, kind: input, shape index: {}]
  %s1 = inlined_call_operand.hbm [shape: f32[4,256], index: 1, kind: input, shape index: {}]
  %s2 = inlined_call_operand.vmem [shape: f32[32,512], index: 2, kind: input, shape index: {}]
  %s3 = inlined_call_operand.hbm [shape: f32[64,128], index: 3, kind: input, shape index: {}]
  %s4 = inlined_call_operand.vmem [shape: f32[16,32], index: 4, kind: input, shape index: {}]
  %s5 = inlined_call_operand.hbm [shape: f32[32,128], index: 5, kind: input, shape index: {}]
  %s6 = inlined_call_operand.hbm [shape: f32[8,32,32], index: 6, kind: input, shape index: {}]
  %s7 = inlined_call_operand.hbm [shape: bf16[2,32,2048], index: 7, kind: input, shape index: {}]
  %s8 = inlined_call_operand.hbm [shape: bf16[2,32,2048], index: 8, kind: input, shape index: {}]
  %s9 = inlined_call_operand.hbm [shape: f32[2,1,2048], index: 9, kind: input, shape index: {}]
  %s10 = inlined_call_operand.hbm [shape: bf16[64,128], index: 10, kind: input, shape index: {}]
  %s11 = inlined_call_operand.vmem [shape: f32[64,5], index: 11, kind: input, shape index: {}]
  %s12 = inlined_call_operand.hbm [shape: f32[2,5], index: 12, kind: output, shape index: {0}]
  %s13 = inlined_call_operand.vmem [shape: f32[2,128], index: 13, kind: output, shape index: {1}]
  %14 = xla_tuple %s12, %s13
  %s15 = sld [smem:[#allocation0]]
  $region98: #{forward.1} parent=0
    _
  %s17 = ssub.s32 1, %s15
  %s18 = scalar_select 0, %s17, %s15
  $region1: #{forward.1} parent=0
    #allocation2 [shape = 'u8[4096]{0}', space=vmem, size = 0x1000, scoped, tag = 'input window, operand 1, single buffered']
    #allocation3 [shape = 's32[1]{0}', space=sflag, size = 0x4, scoped, tag = 'scoped memory for forward.1']
    #allocation4 [shape = 's32[1]{0}', space=sflag, size = 0x4, scoped, tag = 'scoped memory for forward.1']
    #allocation5 [shape = 'u8[32768]{0}', space=vmem, size = 0x8000, scoped, tag = 'input window, operand 3, single buffered']
    #allocation6 [shape = 's32[1]{0}', space=sflag, size = 0x4, scoped, tag = 'scoped memory for forward.1']
    #allocation7 [shape = 'u8[16384]{0}', space=vmem, size = 0x4000, scoped, tag = 'input window, operand 5, single buffered']
    #allocation8 [shape = 'u8[131072]{0}', space=vmem, size = 0x20000, scoped, tag = 'input window, operand 6, single buffered']
    #allocation9 [shape = 's32[1]{0}', space=sflag, size = 0x4, scoped, tag = 'scoped memory for forward.1']
    #allocation10 [shape = 'u8[262144]{0}', space=vmem, size = 0x40000, scoped, tag = 'input window, operand 7, single buffered']
    #allocation11 [shape = 'u8[262144]{0}', space=vmem, size = 0x40000, scoped, tag = 'input window, operand 8, single buffered']
    #allocation12 [shape = 's32[1]{0}', space=sflag, size = 0x4, scoped, tag = 'scoped memory for forward.1']
    #allocation13 [shape = 'u8[16384]{0}', space=vmem, size = 0x4000, scoped, tag = 'input window, operand 9, single buffered']
    #allocation14 [shape = 'u8[16384]{0}', space=vmem, size = 0x4000, scoped, tag = 'input window, operand 10, single buffered']
    #allocation15 [shape = 's32[1]{0}', space=sflag, size = 0x4, scoped, tag = 'scoped memory for forward.1']
    #allocation16 [shape = 'u8[1024]{0}', space=vmem, size = 0x400, scoped, tag = 'output window, operand 0, single buffered']
    %19 = vsyncpa [#allocation3], 0
    %20 = vsyncpa [#allocation6], 0
    %21 = vsyncpa [#allocation9], 0
    %22 = vsyncpa [#allocation12], 0
    %23 = vsyncpa [#allocation15], 0
    %24 = vsyncpa [#allocation4], 0
    // Predicated region
    $region2: #{forward.1} parent=1 // pred_check
      _
    $region3: #{forward.1} parent=1 // pred_check_branch
      %26 = sbr.rel (0) target = $region5
    $region4: #{forward.1} parent=1 // pred_region
      _
    $region5: #{forward.1} parent=1 // pred_fallthru
      _
    // Predicated region
    $region6: #{forward.1} parent=1 // pred_check
      _
    $region7: #{forward.1} parent=1 // pred_check_branch
      %28 = sbr.rel (0) target = $region9
    $region8: #{forward.1} parent=1 // pred_region
      %s30 = ssub.s32 128, 128
      %31 = vsyncadd [#allocation3], %s30
      %s33 = sshll.u32 [#allocation2], 4
      %s34 = int_to_ptr.vmem [resolvable:$true] %s33
      %36 = dma.hbm_to_vmem [thread:$0]  %s1, 128, %s34, [#allocation3]
    $region9: #{forward.1} parent=1 // pred_fallthru
      _
    // Predicated region
    $region10: #{forward.1} parent=1 // pred_check
      _
    $region11: #{forward.1} parent=1 // pred_check_branch
      %38 = sbr.rel (0) target = $region13
    $region12: #{forward.1} parent=1 // pred_region
      _
    $region13: #{forward.1} parent=1 // pred_fallthru
      _
    // Predicated region
    $region14: #{forward.1} parent=1 // pred_check
      _
    $region15: #{forward.1} parent=1 // pred_check_branch
      %40 = sbr.rel (0) target = $region17
    $region16: #{forward.1} parent=1 // pred_region
      %s42 = ssub.s32 1024, 1024
      %43 = vsyncadd [#allocation6], %s42
      %s44 = sshll.u32 [#allocation5], 4
      %s45 = int_to_ptr.vmem [resolvable:$true] %s44
      %50 = dma.hbm_to_vmem [thread:$0]  %s3, 1024, %s45, [#allocation6], 128, 128, 8
    $region17: #{forward.1} parent=1 // pred_fallthru
      _
    // Predicated region
    $region18: #{forward.1} parent=1 // pred_check
      _
    $region19: #{forward.1} parent=1 // pred_check_branch
      %52 = sbr.rel (0) target = $region21
    $region20: #{forward.1} parent=1 // pred_region
      _
    $region21: #{forward.1} parent=1 // pred_fallthru
      _
    // Predicated region
    $region22: #{forward.1} parent=1 // pred_check
      _
    $region23: #{forward.1} parent=1 // pred_check_branch
      %54 = sbr.rel (0) target = $region25
    $region24: #{forward.1} parent=1 // pred_region
      %s56 = ssub.s32 512, 512
      %57 = vsyncadd [#allocation6], %s56
      %s58 = sshll.u32 [#allocation7], 4
      %s59 = int_to_ptr.vmem [resolvable:$true] %s58
      %64 = dma.hbm_to_vmem [thread:$0]  %s5, 512, %s59, [#allocation6], 128, 128, 8
    $region25: #{forward.1} parent=1 // pred_fallthru
      _
    // Predicated region
    $region26: #{forward.1} parent=1 // pred_check
      _
    $region27: #{forward.1} parent=1 // pred_check_branch
      %66 = sbr.rel (0) target = $region29
    $region28: #{forward.1} parent=1 // pred_region
      %s68 = ssub.s32 4096, 4096
      %69 = vsyncadd [#allocation9], %s68
      %s70 = sshll.u32 [#allocation8], 4
      %s71 = int_to_ptr.vmem [resolvable:$true] %s70
      %76 = dma.hbm_to_vmem [thread:$0]  %s6, 4096, %s71, [#allocation9], 128, 128, 8
    $region29: #{forward.1} parent=1 // pred_fallthru
      _
    // Predicated region
    $region30: #{forward.1} parent=1 // pred_check
      _
    $region31: #{forward.1} parent=1 // pred_check_branch
      %78 = sbr.rel (0) target = $region33
    $region32: #{forward.1} parent=1 // pred_region
      %s80 = ssub.s32 8192, 8192
      %81 = vsyncadd [#allocation9], %s80
      %s82 = sshll.u32 [#allocation10], 4
      %s83 = int_to_ptr.vmem [resolvable:$true] %s82
      %88 = dma.hbm_to_vmem [thread:$0]  %s7, 8192, %s83, [#allocation9], 1024, 1024, 64
    $region33: #{forward.1} parent=1 // pred_fallthru
      _
    // Predicated region
    $region34: #{forward.1} parent=1 // pred_check
      _
    $region35: #{forward.1} parent=1 // pred_check_branch
      %90 = sbr.rel (0) target = $region37
    $region36: #{forward.1} parent=1 // pred_region
      %s92 = ssub.s32 8192, 8192
      %93 = vsyncadd [#allocation12], %s92
      %s94 = sshll.u32 [#allocation11], 4
      %s95 = int_to_ptr.vmem [resolvable:$true] %s94
      %100 = dma.hbm_to_vmem [thread:$0]  %s8, 8192, %s95, [#allocation12], 1024, 1024, 64
    $region37: #{forward.1} parent=1 // pred_fallthru
      _
    // Predicated region
    $region38: #{forward.1} parent=1 // pred_check
      _
    $region39: #{forward.1} parent=1 // pred_check_branch
      %102 = sbr.rel (0) target = $region41
    $region40: #{forward.1} parent=1 // pred_region
      %s104 = ssub.s32 512, 512
      %105 = vsyncadd [#allocation12], %s104
      %s106 = sshll.u32 [#allocation13], 4
      %s107 = int_to_ptr.vmem [resolvable:$true] %s106
      %112 = dma.hbm_to_vmem [thread:$0]  %s9, 512, %s107, [#allocation12], 256, 256, 16
    $region41: #{forward.1} parent=1 // pred_fallthru
      _
    // Predicated region
    $region42: #{forward.1} parent=1 // pred_check
      _
    $region43: #{forward.1} parent=1 // pred_check_branch
      %114 = sbr.rel (0) target = $region45
    $region44: #{forward.1} parent=1 // pred_region
      %s116 = ssub.s32 512, 512
      %117 = vsyncadd [#allocation15], %s116
      %s118 = sshll.u32 [#allocation14], 4
      %s119 = int_to_ptr.vmem [resolvable:$true] %s118
      %124 = dma.hbm_to_vmem [thread:$0]  %s10, 512, %s119, [#allocation15], 64, 64, 4
    $region45: #{forward.1} parent=1 // pred_fallthru
      _
    // Predicated region
    $region46: #{forward.1} parent=1 // pred_check
      _
    $region47: #{forward.1} parent=1 // pred_check_branch
      %126 = sbr.rel (0) target = $region49
    $region48: #{forward.1} parent=1 // pred_region
      _
    $region49: #{forward.1} parent=1 // pred_fallthru
      _
    // Predicated region
    $region50: #{forward.1} parent=1 // pred_check
      _
    $region51: #{forward.1} parent=1 // pred_check_branch
      %128 = sbr.rel (0) target = $region53
    $region52: #{forward.1} parent=1 // pred_region
      %129 = dma.done [#allocation3], 128
    $region53: #{forward.1} parent=1 // pred_fallthru
      _
    // Predicated region
    $region54: #{forward.1} parent=1 // pred_check
      _
    $region55: #{forward.1} parent=1 // pred_check_branch
      %131 = sbr.rel (0) target = $region57
    $region56: #{forward.1} parent=1 // pred_region
      %132 = dma.done [#allocation6], 1024
    $region57: #{forward.1} parent=1 // pred_fallthru
      _
    // Predicated region
    $region58: #{forward.1} parent=1 // pred_check
      _
    $region59: #{forward.1} parent=1 // pred_check_branch
      %134 = sbr.rel (0) target = $region61
    $region60: #{forward.1} parent=1 // pred_region
      %135 = dma.done [#allocation6], 512
    $region61: #{forward.1} parent=1 // pred_fallthru
      _
    // Predicated region
    $region62: #{forward.1} parent=1 // pred_check
      _
    $region63: #{forward.1} parent=1 // pred_check_branch
      %137 = sbr.rel (0) target = $region65
    $region64: #{forward.1} parent=1 // pred_region
      %138 = dma.done [#allocation9], 4096
    $region65: #{forward.1} parent=1 // pred_fallthru
      _
    // Predicated region
    $region66: #{forward.1} parent=1 // pred_check
      _
    $region67: #{forward.1} parent=1 // pred_check_branch
      %140 = sbr.rel (0) target = $region69
    $region68: #{forward.1} parent=1 // pred_region
      %141 = dma.done [#allocation9], 8192
    $region69: #{forward.1} parent=1 // pred_fallthru
      _
    // Predicated region
    $region70: #{forward.1} parent=1 // pred_check
      _
    $region71: #{forward.1} parent=1 // pred_check_branch
      %143 = sbr.rel (0) target = $region73
    $region72: #{forward.1} parent=1 // pred_region
      %144 = dma.done [#allocation12], 8192
    $region73: #{forward.1} parent=1 // pred_fallthru
      _
    // Predicated region
    $region74: #{forward.1} parent=1 // pred_check
      _
    $region75: #{forward.1} parent=1 // pred_check_branch
      %146 = sbr.rel (0) target = $region77
    $region76: #{forward.1} parent=1 // pred_region
      %147 = dma.done [#allocation12], 512
    $region77: #{forward.1} parent=1 // pred_fallthru
      _
    // Predicated region
    $region78: #{forward.1} parent=1 // pred_check
      _
    $region79: #{forward.1} parent=1 // pred_check_branch
      %149 = sbr.rel (0) target = $region81
    $region80: #{forward.1} parent=1 // pred_region
      %150 = dma.done [#allocation15], 512
    $region81: #{forward.1} parent=1 // pred_fallthru
      _
    %v152 = vld [vmem:[%s0] sm:$0xff]
    %v153 = vld [vmem:[%s0 + $0x8] sm:$0xff]
    %v154 = vld [vmem:[%s0 + $0x10] sm:$0xff]
    %v155 = vld [vmem:[%s0 + $0x18] sm:$0xff]
    %v156 = vlaneseq
    %v157 = vshrl.u32 %v156, 7
    %v158 = vadd.s32 %v157, 8
    %v159 = vadd.s32 %v157, 16
    %v160 = vadd.s32 %v157, 24
    %v161 = vlaneseq
    %v162 = vand.u32 %v161, 127
    %vm163 = vcmp.ge.s32.totalorder %v157, 16
    %vm164 = vcmp.ge.s32.totalorder %v158, 16
    %vm165 = vcmp.ge.s32.totalorder %v159, 16
    %vm166 = vcmp.ge.s32.totalorder %v160, 16
    %v167 = vsel %vm163, 1, 0
    %v168 = vsel %vm164, 1, 0
    %v169 = vsel %vm165, 1, 0
    %v170 = vsel %vm166, 1, 0
    %vm171 = vcmp.ge.s32.totalorder %v162, 16
    %v172 = vsel %vm171, 1, 0
    %vm173 = vcmp.eq.s32.totalorder %v167, %v172
    %vm174 = vcmp.eq.s32.totalorder %v168, %v172
    %vm175 = vcmp.eq.s32.totalorder %v169, %v172
    %vm176 = vcmp.eq.s32.totalorder %v170, %v172
    %v177 = vsel %vm173, 0.0625, 0.0
    %v178 = vsel %vm174, 0.0625, 0.0
    %v179 = vsel %vm175, 0.0625, 0.0
    %v180 = vsel %vm176, 0.0625, 0.0
    %vm181 = vcmask 261120
    %v183 = vsel %vm181, %v177, 0
    %v186 = vsel %vm181, %v178, 0
    %v189 = vsel %vm181, %v179, 0
    %v192 = vsel %vm181, %v180, 0
    %194 = vmatprep.subr.mxu0 0.0
    %195 = vmatpush1.msra.mxu0 %v152
    %196 = vmatprep.subr.mxu0 0.0
    %197 = vmatpush1.msra.mxu0 %v153
    %198 = vmatprep.subr.mxu0 0.0
    %199 = vmatpush1.msra.mxu0 %v154
    %200 = vmatprep.subr.mxu0 0.0
    %201 = vmatpush1.msra.mxu0 %v155
    %202 = vmatprep.subr.mxu0 0.0
    %203 = vmatpush1.msra.mxu0 0.0
    %204 = vmatprep.subr.mxu0 0.0
    %205 = vmatpush1.msra.mxu0 0.0
    %206 = vmatprep.subr.mxu0 0.0
    %207 = vmatpush1.msra.mxu0 0.0
    %208 = vmatprep.subr.mxu0 0.0
    %209 = vmatpush1.msra.mxu0 0.0
    %210 = vmatprep.subr.mxu0 0.0
    %211 = vmatpush1.msra.mxu0 0.0
    %212 = vmatprep.subr.mxu0 0.0
    %213 = vmatpush1.msra.mxu0 0.0
    %214 = vmatprep.subr.mxu0 0.0
    %215 = vmatpush1.msra.mxu0 0.0
    %216 = vmatprep.subr.mxu0 0.0
    %217 = vmatpush1.msra.mxu0 0.0
    %218 = vmatprep.subr.mxu0 0.0
    %219 = vmatpush1.msra.mxu0 0.0
    %220 = vmatprep.subr.mxu0 0.0
    %221 = vmatpush1.msra.mxu0 0.0
    %222 = vmatprep.subr.mxu0 0.0
    %223 = vmatpush1.msra.mxu0 0.0
    %224 = vmatprep.subr.mxu0 0.0
    %225 = vmatpush1.msra.mxu0 0.0
    %226 = vmatprep.subr.mxu0 0.0
    %227 = vmatpush1.msra.mxu0 0.0
    %228 = vmatprep.subr.mxu0 0.0
    %229 = vmatpush1.msra.mxu0 0.0
    %230 = vmatprep.subr.mxu0 0.0
    %231 = vmatpush1.msra.mxu0 0.0
    %232 = vmatprep.subr.mxu0 0.0
    %233 = vmatpush1.msra.mxu0 0.0
    %234 = vmatprep.subr.mxu0 0.0
    %235 = vmatpush1.msra.mxu0 0.0
    %236 = vmatprep.subr.mxu0 0.0
    %237 = vmatpush1.msra.mxu0 0.0
    %238 = vmatprep.subr.mxu0 0.0
    %239 = vmatpush1.msra.mxu0 0.0
    %240 = vmatprep.subr.mxu0 0.0
    %241 = vmatpush1.msra.mxu0 0.0
    %242 = vmatprep.subr.mxu0 0.0
    %243 = vmatpush1.msra.mxu0 0.0
    %244 = vmatprep.subr.mxu0 0.0
    %245 = vmatpush1.msra.mxu0 0.0
    %246 = vmatprep.subr.mxu0 0.0
    %247 = vmatpush1.msra.mxu0 0.0
    %248 = vmatprep.subr.mxu0 0.0
    %249 = vmatpush1.msra.mxu0 0.0
    %250 = vmatprep.subr.mxu0 0.0
    %251 = vmatpush1.msra.mxu0 0.0
    %252 = vmatprep.subr.mxu0 0.0
    %253 = vmatpush1.msra.mxu0 0.0
    %254 = vmatprep.subr.mxu0 0.0
    %255 = vmatpush1.msra.mxu0 0.0
    %256 = vmatprep.subr.mxu0 0.0
    %257 = vmatpush1.msra.mxu0 0.0
    %258 = vmatprep.mubr.f32.mxu0 0.0
    %259 = vmatmul.mubr.f32.gmra.mrb[0].mxu0 %v183
    %v260 = vpop.f32.mrb[0].mxu0
    %v261 = vadd.f32 0.0, %v260
    %v262 = vpop.f32.mrb[0].mxu0
    %263 = vmatprep.mubr.f32.mxu0 0.0
    %264 = vmatmul.mubr.f32.gmra.mrb[0].mxu0 %v186
    %v265 = vpop.f32.mrb[0].mxu0
    %v266 = vadd.f32 0.0, %v265
    %v267 = vpop.f32.mrb[0].mxu0
    %268 = vmatprep.mubr.f32.mxu0 0.0
    %269 = vmatmul.mubr.f32.gmra.mrb[0].mxu0 %v189
    %v270 = vpop.f32.mrb[0].mxu0
    %v271 = vadd.f32 0.0, %v270
    %v272 = vpop.f32.mrb[0].mxu0
    %273 = vmatprep.mubr.f32.mxu0 0.0
    %274 = vmatmul.mubr.f32.gmra.mrb[0].mxu0 %v192
    %v275 = vpop.f32.mrb[0].mxu0
    %v276 = vadd.f32 0.0, %v275
    %v277 = vpop.f32.mrb[0].mxu0
    %278 = vdwg.mxu0
    %v279 = vsub.f32 %v152, %v261
    %v280 = vsub.f32 %v153, %v266
    %v281 = vsub.f32 %v154, %v271
    %v282 = vsub.f32 %v155, %v276
    %v283 = vmul.f32 %v279, %v279
    %v284 = vmul.f32 %v280, %v280
    %v285 = vmul.f32 %v281, %v281
    %v286 = vmul.f32 %v282, %v282
    %287 = vmatprep.subr.mxu0 0.0
    %288 = vmatpush1.msra.mxu0 %v283
    %289 = vmatprep.subr.mxu0 0.0
    %290 = vmatpush1.msra.mxu0 %v284
    %291 = vmatprep.subr.mxu0 0.0
    %292 = vmatpush1.msra.mxu0 %v285
    %293 = vmatprep.subr.mxu0 0.0
    %294 = vmatpush1.msra.mxu0 %v286
    %295 = vmatprep.subr.mxu0 0.0
    %296 = vmatpush1.msra.mxu0 0.0
    %297 = vmatprep.subr.mxu0 0.0
    %298 = vmatpush1.msra.mxu0 0.0
    %299 = vmatprep.subr.mxu0 0.0
    %300 = vmatpush1.msra.mxu0 0.0
    %301 = vmatprep.subr.mxu0 0.0
    %302 = vmatpush1.msra.mxu0 0.0
    %303 = vmatprep.subr.mxu0 0.0
    %304 = vmatpush1.msra.mxu0 0.0
    %305 = vmatprep.subr.mxu0 0.0
    %306 = vmatpush1.msra.mxu0 0.0
    %307 = vmatprep.subr.mxu0 0.0
    %308 = vmatpush1.msra.mxu0 0.0
    %309 = vmatprep.subr.mxu0 0.0
    %310 = vmatpush1.msra.mxu0 0.0
    %311 = vmatprep.subr.mxu0 0.0
    %312 = vmatpush1.msra.mxu0 0.0
    %313 = vmatprep.subr.mxu0 0.0
    %314 = vmatpush1.msra.mxu0 0.0
    %315 = vmatprep.subr.mxu0 0.0
    %316 = vmatpush1.msra.mxu0 0.0
    %317 = vmatprep.subr.mxu0 0.0
    %318 = vmatpush1.msra.mxu0 0.0
    %319 = vmatprep.subr.mxu0 0.0
    %320 = vmatpush1.msra.mxu0 0.0
    %321 = vmatprep.subr.mxu0 0.0
    %322 = vmatpush1.msra.mxu0 0.0
    %323 = vmatprep.subr.mxu0 0.0
    %324 = vmatpush1.msra.mxu0 0.0
    %325 = vmatprep.subr.mxu0 0.0
    %326 = vmatpush1.msra.mxu0 0.0
    %327 = vmatprep.subr.mxu0 0.0
    %328 = vmatpush1.msra.mxu0 0.0
    %329 = vmatprep.subr.mxu0 0.0
    %330 = vmatpush1.msra.mxu0 0.0
    %331 = vmatprep.subr.mxu0 0.0
    %332 = vmatpush1.msra.mxu0 0.0
    %333 = vmatprep.subr.mxu0 0.0
    %334 = vmatpush1.msra.mxu0 0.0
    %335 = vmatprep.subr.mxu0 0.0
    %336 = vmatpush1.msra.mxu0 0.0
    %337 = vmatprep.subr.mxu0 0.0
    %338 = vmatpush1.msra.mxu0 0.0
    %339 = vmatprep.subr.mxu0 0.0
    %340 = vmatpush1.msra.mxu0 0.0
    %341 = vmatprep.subr.mxu0 0.0
    %342 = vmatpush1.msra.mxu0 0.0
    %343 = vmatprep.subr.mxu0 0.0
    %344 = vmatpush1.msra.mxu0 0.0
    %345 = vmatprep.subr.mxu0 0.0
    %346 = vmatpush1.msra.mxu0 0.0
    %347 = vmatprep.subr.mxu0 0.0
    %348 = vmatpush1.msra.mxu0 0.0
    %349 = vmatprep.subr.mxu0 0.0
    %350 = vmatpush1.msra.mxu0 0.0
    %351 = vmatprep.mubr.f32.mxu0 0.0
    %352 = vmatmul.mubr.f32.gmra.mrb[0].mxu0 %v183
    %v353 = vpop.f32.mrb[0].mxu0
    %v354 = vadd.f32 1e-05, %v353
    %v355 = vpop.f32.mrb[0].mxu0
    %356 = vmatprep.mubr.f32.mxu0 0.0
    %357 = vmatmul.mubr.f32.gmra.mrb[0].mxu0 %v186
    %v358 = vpop.f32.mrb[0].mxu0
    %v359 = vadd.f32 1e-05, %v358
    %v360 = vpop.f32.mrb[0].mxu0
    %361 = vmatprep.mubr.f32.mxu0 0.0
    %362 = vmatmul.mubr.f32.gmra.mrb[0].mxu0 %v189
    %v363 = vpop.f32.mrb[0].mxu0
    %v364 = vadd.f32 1e-05, %v363
    %v365 = vpop.f32.mrb[0].mxu0
    %366 = vmatprep.mubr.f32.mxu0 0.0
    %367 = vmatmul.mubr.f32.gmra.mrb[0].mxu0 %v192
    %v368 = vpop.f32.mrb[0].mxu0
    %v369 = vadd.f32 1e-05, %v368
    %v370 = vpop.f32.mrb[0].mxu0
    %371 = vdwg.mxu0
    %v372 = vrsqrt.pop %v354
    %v373 = vrsqrt.pop %v359
    %v374 = vrsqrt.pop %v364
    %v375 = vrsqrt.pop %v369
    %v376 = vmul.f32 %v279, %v372
    %v377 = vmul.f32 %v280, %v373
    %v378 = vmul.f32 %v281, %v374
    %v379 = vmul.f32 %v282, %v375
    %v380 = vld [vmem:[#allocation7] sm:$0x1]
    %v381 = vld [vmem:[#allocation7 + $0x1] sm:$0x1]
    %v382 = vld [vmem:[#allocation2] sm:$0xff]
    %v384 = vcombine.high %v382, %v382
    %vm385 = vcmask 31744
    %v387 = vsel %vm385, %v376, 0
    %v390 = vsel %vm385, %v377, 0
    %v393 = vsel %vm385, %v378, 0
    %v396 = vsel %vm385, %v379, 0
    %vm398 = vcmask 1043456
    %v399 = vsel %vm398, %v382, 0
    %v401 = vsel %vm398, %v384, 0
    %403 = vmatprep.subr.mxu0 %v401
    %404 = vmatpush1.msra.mxu0 %v399
    %405 = vmatprep.subr.mxu0 0.0
    %406 = vmatpush1.msra.mxu0 0.0
    %407 = vmatprep.subr.mxu0 0.0
    %408 = vmatpush1.msra.mxu0 0.0
    %409 = vmatprep.subr.mxu0 0.0
    %410 = vmatpush1.msra.mxu0 0.0
    %411 = vmatprep.subr.mxu0 0.0
    %412 = vmatpush1.msra.mxu0 0.0
    %413 = vmatprep.subr.mxu0 0.0
    %414 = vmatpush1.msra.mxu0 0.0
    %415 = vmatprep.subr.mxu0 0.0
    %416 = vmatpush1.msra.mxu0 0.0
    %417 = vmatprep.subr.mxu0 0.0
    %418 = vmatpush1.msra.mxu0 0.0
    %419 = vmatprep.subr.mxu0 0.0
    %420 = vmatpush1.msra.mxu0 0.0
    %421 = vmatprep.subr.mxu0 0.0
    %422 = vmatpush1.msra.mxu0 0.0
    %423 = vmatprep.subr.mxu0 0.0
    %424 = vmatpush1.msra.mxu0 0.0
    %425 = vmatprep.subr.mxu0 0.0
    %426 = vmatpush1.msra.mxu0 0.0
    %427 = vmatprep.subr.mxu0 0.0
    %428 = vmatpush1.msra.mxu0 0.0
    %429 = vmatprep.subr.mxu0 0.0
    %430 = vmatpush1.msra.mxu0 0.0
    %431 = vmatprep.subr.mxu0 0.0
    %432 = vmatpush1.msra.mxu0 0.0
    %433 = vmatprep.subr.mxu0 0.0
    %434 = vmatpush1.msra.mxu0 0.0
    %435 = vmatprep.subr.mxu0 0.0
    %436 = vmatpush1.msra.mxu0 0.0
    %437 = vmatprep.subr.mxu0 0.0
    %438 = vmatpush1.msra.mxu0 0.0
    %439 = vmatprep.subr.mxu0 0.0
    %440 = vmatpush1.msra.mxu0 0.0
    %441 = vmatprep.subr.mxu0 0.0
    %442 = vmatpush1.msra.mxu0 0.0
    %443 = vmatprep.subr.mxu0 0.0
    %444 = vmatpush1.msra.mxu0 0.0
    %445 = vmatprep.subr.mxu0 0.0
    %446 = vmatpush1.msra.mxu0 0.0
    %447 = vmatprep.subr.mxu0 0.0
    %448 = vmatpush1.msra.mxu0 0.0
    %449 = vmatprep.subr.mxu0 0.0
    %450 = vmatpush1.msra.mxu0 0.0
    %451 = vmatprep.subr.mxu0 0.0
    %452 = vmatpush1.msra.mxu0 0.0
    %453 = vmatprep.subr.mxu0 0.0
    %454 = vmatpush1.msra.mxu0 0.0
    %455 = vmatprep.subr.mxu0 0.0
    %456 = vmatpush1.msra.mxu0 0.0
    %457 = vmatprep.subr.mxu0 0.0
    %458 = vmatpush1.msra.mxu0 0.0
    %459 = vmatprep.subr.mxu0 0.0
    %460 = vmatpush1.msra.mxu0 0.0
    %461 = vmatprep.subr.mxu0 0.0
    %462 = vmatpush1.msra.mxu0 0.0
    %463 = vmatprep.subr.mxu0 0.0
    %464 = vmatpush1.msra.mxu0 0.0
    %465 = vmatprep.subr.mxu0 0.0
    %466 = vmatpush1.msra.mxu0 0.0
    %467 = vmatprep.mubr.f32.mxu0 0.0
    %468 = vmatmul.mubr.f32.gmra.mrb[0].mxu0 %v387
    %v469 = vpop.f32.mrb[0].mxu0
    %v470 = vadd.f32 0.0, %v469
    %v471 = vpop.f32.mrb[0].mxu0
    %v472 = vadd.f32 0.0, %v471
    %473 = vmatprep.mubr.f32.mxu0 0.0
    %474 = vmatmul.mubr.f32.gmra.mrb[0].mxu0 %v390
    %v475 = vpop.f32.mrb[0].mxu0
    %v476 = vadd.f32 0.0, %v475
    %v477 = vpop.f32.mrb[0].mxu0
    %v478 = vadd.f32 0.0, %v477
    %479 = vmatprep.mubr.f32.mxu0 0.0
    %480 = vmatmul.mubr.f32.gmra.mrb[0].mxu0 %v393
    %v481 = vpop.f32.mrb[0].mxu0
    %v482 = vadd.f32 0.0, %v481
    %v483 = vpop.f32.mrb[0].mxu0
    %v484 = vadd.f32 0.0, %v483
    %485 = vmatprep.mubr.f32.mxu0 0.0
    %486 = vmatmul.mubr.f32.gmra.mrb[0].mxu0 %v396
    %v487 = vpop.f32.mrb[0].mxu0
    %v488 = vadd.f32 0.0, %v487
    %v489 = vpop.f32.mrb[0].mxu0
    %v490 = vadd.f32 0.0, %v489
    %491 = vdwg.mxu0
    %v492 = vadd.s32 %v157, 32
    %vm493 = vcmp.ge.s32.totalorder %v157, 17
    %vm494 = vcmp.ge.s32.totalorder %v158, 17
    %vm495 = vcmp.ge.s32.totalorder %v159, 17
    %vm496 = vcmp.ge.s32.totalorder %v160, 17
    %vm497 = vcmp.ge.s32.totalorder %v492, 17
    %v498 = vsel %vm493, 1, 0
    %v499 = vsel %vm494, 1, 0
    %v500 = vsel %vm495, 1, 0
    %v501 = vsel %vm496, 1, 0
    %v502 = vsel %vm497, 1, 0
    %vm503 = vcmp.eq.s32.totalorder %v498, %v172
    %vm504 = vcmp.eq.s32.totalorder %v499, %v172
    %vm505 = vcmp.eq.s32.totalorder %v500, %v172
    %vm506 = vcmp.eq.s32.totalorder %v501, %v172
    %vm507 = vcmp.eq.s32.totalorder %v502, %v172
    %v508 = vmul.u32 %v498, 17
    %v509 = vmul.u32 %v499, 17
    %v510 = vmul.u32 %v500, 17
    %v511 = vmul.u32 %v501, 17
    %v512 = vmul.u32 %v502, 17
    %v513 = vsub.s32 %v157, %v508
    %v514 = vsub.s32 %v158, %v509
    %v515 = vsub.s32 %v159, %v510
    %v516 = vsub.s32 %v160, %v511
    %v517 = vsub.s32 %v492, %v512
    %v518 = vmul.u32 %v172, 16
    %v519 = vsub.s32 %v162, %v518
    %v520 = vadd.s32 %v513, 4294967292
    %v521 = vadd.s32 %v514, 4294967292
    %v522 = vadd.s32 %v515, 4294967292
    %v523 = vadd.s32 %v516, 4294967292
    %v524 = vadd.s32 %v517, 4294967292
    %vm525 = vcmp.eq.s32.totalorder %v519, %v520
    %vm526 = vcmp.eq.s32.totalorder %v519, %v521
    %vm527 = vcmp.eq.s32.totalorder %v519, %v522
    %vm528 = vcmp.eq.s32.totalorder %v519, %v523
    %vm529 = vcmp.eq.s32.totalorder %v519, %v524
    %vm530 = vmand %vm503, %vm525
    %vm531 = vmand %vm504, %vm526
    %vm532 = vmand %vm505, %vm527
    %vm533 = vmand %vm506, %vm528
    %vm534 = vmand %vm507, %vm529
    %v535 = vsel %vm530, 1.0, 0.0
    %v536 = vsel %vm531, 1.0, 0.0
    %v537 = vsel %vm532, 1.0, 0.0
    %v538 = vsel %vm533, 1.0, 0.0
    %v539 = vsel %vm534, 1.0, 0.0
    %v540 = vadd.s32 %v513, 4294967293
    %v541 = vadd.s32 %v514, 4294967293
    %v542 = vadd.s32 %v515, 4294967293
    %v543 = vadd.s32 %v516, 4294967293
    %v544 = vadd.s32 %v517, 4294967293
    %vm545 = vcmp.eq.s32.totalorder %v519, %v540
    %vm546 = vcmp.eq.s32.totalorder %v519, %v541
    %vm547 = vcmp.eq.s32.totalorder %v519, %v542
    %vm548 = vcmp.eq.s32.totalorder %v519, %v543
    %vm549 = vcmp.eq.s32.totalorder %v519, %v544
    %vm550 = vmand %vm503, %vm545
    %vm551 = vmand %vm504, %vm546
    %vm552 = vmand %vm505, %vm547
    %vm553 = vmand %vm506, %vm548
    %vm554 = vmand %vm507, %vm549
    %v555 = vsel %vm550, 1.0, 0.0
    %v556 = vsel %vm551, 1.0, 0.0
    %v557 = vsel %vm552, 1.0, 0.0
    %v558 = vsel %vm553, 1.0, 0.0
    %v559 = vsel %vm554, 1.0, 0.0
    %564 = vrot.lane.b32.xlu0 %v470, 96
    %v565 = vpop.permute.xlu0 %564
    %566 = vrot.lane.b32.xlu0 %v476, 96
    %v567 = vpop.permute.xlu0 %566
    %568 = vrot.lane.b32.xlu0 %v482, 96
    %v569 = vpop.permute.xlu0 %568
    %570 = vrot.lane.b32.xlu0 %v488, 96
    %v571 = vpop.permute.xlu0 %570
    %v577 = vsel %vm181, %v555, 0
    %v580 = vsel %vm181, %v556, 0
    %v583 = vsel %vm181, %v557, 0
    %v586 = vsel %vm181, %v558, 0
    %v589 = vsel %vm181, %v559, 0
    %591 = vmatprep.subr.mxu0 0.0
    %592 = vmatpush1.msra.mxu0 %v565
    %593 = vmatprep.subr.mxu0 0.0
    %594 = vmatpush1.msra.mxu0 %v567
    %595 = vmatprep.subr.mxu0 0.0
    %596 = vmatpush1.msra.mxu0 %v569
    %597 = vmatprep.subr.mxu0 0.0
    %598 = vmatpush1.msra.mxu0 %v571
    %599 = vmatprep.subr.mxu0 0.0
    %600 = vmatpush1.msra.mxu0 0.0
    %601 = vmatprep.subr.mxu0 0.0
    %602 = vmatpush1.msra.mxu0 0.0
    %603 = vmatprep.subr.mxu0 0.0
    %604 = vmatpush1.msra.mxu0 0.0
    %605 = vmatprep.subr.mxu0 0.0
    %606 = vmatpush1.msra.mxu0 0.0
    %607 = vmatprep.subr.mxu0 0.0
    %608 = vmatpush1.msra.mxu0 0.0
    %609 = vmatprep.subr.mxu0 0.0
    %610 = vmatpush1.msra.mxu0 0.0
    %611 = vmatprep.subr.mxu0 0.0
    %612 = vmatpush1.msra.mxu0 0.0
    %613 = vmatprep.subr.mxu0 0.0
    %614 = vmatpush1.msra.mxu0 0.0
    %615 = vmatprep.subr.mxu0 0.0
    %616 = vmatpush1.msra.mxu0 0.0
    %617 = vmatprep.subr.mxu0 0.0
    %618 = vmatpush1.msra.mxu0 0.0
    %619 = vmatprep.subr.mxu0 0.0
    %620 = vmatpush1.msra.mxu0 0.0
    %621 = vmatprep.subr.mxu0 0.0
    %622 = vmatpush1.msra.mxu0 0.0
    %623 = vmatprep.subr.mxu0 0.0
    %624 = vmatpush1.msra.mxu0 0.0
    %625 = vmatprep.subr.mxu0 0.0
    %626 = vmatpush1.msra.mxu0 0.0
    %627 = vmatprep.subr.mxu0 0.0
    %628 = vmatpush1.msra.mxu0 0.0
    %629 = vmatprep.subr.mxu0 0.0
    %630 = vmatpush1.msra.mxu0 0.0
    %631 = vmatprep.subr.mxu0 0.0
    %632 = vmatpush1.msra.mxu0 0.0
    %633 = vmatprep.subr.mxu0 0.0
    %634 = vmatpush1.msra.mxu0 0.0
    %635 = vmatprep.subr.mxu0 0.0
    %636 = vmatpush1.msra.mxu0 0.0
    %637 = vmatprep.subr.mxu0 0.0
    %638 = vmatpush1.msra.mxu0 0.0
    %639 = vmatprep.subr.mxu0 0.0
    %640 = vmatpush1.msra.mxu0 0.0
    %641 = vmatprep.subr.mxu0 0.0
    %642 = vmatpush1.msra.mxu0 0.0
    %643 = vmatprep.subr.mxu0 0.0
    %644 = vmatpush1.msra.mxu0 0.0
    %645 = vmatprep.subr.mxu0 0.0
    %646 = vmatpush1.msra.mxu0 0.0
    %647 = vmatprep.subr.mxu0 0.0
    %648 = vmatpush1.msra.mxu0 0.0
    %649 = vmatprep.subr.mxu0 0.0
    %650 = vmatpush1.msra.mxu0 0.0
    %651 = vmatprep.subr.mxu0 0.0
    %652 = vmatpush1.msra.mxu0 0.0
    %653 = vmatprep.subr.mxu0 0.0
    %654 = vmatpush1.msra.mxu0 0.0
    %655 = vmatprep.mubr.f32.mxu0 0.0
    %656 = vmatmul.mubr.f32.gmra.mrb[0].mxu0 %v577
    %v657 = vpop.f32.mrb[0].mxu0
    %v658 = vadd.f32 0.0, %v657
    %v659 = vpop.f32.mrb[0].mxu0
    %660 = vmatprep.mubr.f32.mxu0 0.0
    %661 = vmatmul.mubr.f32.gmra.mrb[0].mxu0 %v580
    %v662 = vpop.f32.mrb[0].mxu0
    %v663 = vadd.f32 0.0, %v662
    %v664 = vpop.f32.mrb[0].mxu0
    %665 = vmatprep.mubr.f32.mxu0 0.0
    %666 = vmatmul.mubr.f32.gmra.mrb[0].mxu0 %v583
    %v667 = vpop.f32.mrb[0].mxu0
    %v668 = vadd.f32 0.0, %v667
    %v669 = vpop.f32.mrb[0].mxu0
    %670 = vmatprep.mubr.f32.mxu0 0.0
    %671 = vmatmul.mubr.f32.gmra.mrb[0].mxu0 %v586
    %v672 = vpop.f32.mrb[0].mxu0
    %v673 = vadd.f32 0.0, %v672
    %v674 = vpop.f32.mrb[0].mxu0
    %675 = vmatprep.mubr.f32.mxu0 0.0
    %676 = vmatmul.mubr.f32.gmra.mrb[0].mxu0 %v589
    %v677 = vpop.f32.mrb[0].mxu0
    %v678 = vadd.f32 0.0, %v677
    %v679 = vpop.f32.mrb[0].mxu0
    %680 = vdwg.mxu0
    %v682 = vsel %vm181, %v535, 0
    %v685 = vsel %vm181, %v536, 0
    %v688 = vsel %vm181, %v537, 0
    %v691 = vsel %vm181, %v538, 0
    %v694 = vsel %vm181, %v539, 0
    %696 = vmatprep.subr.mxu0 0.0
    %697 = vmatpush1.msra.mxu0 %v470
    %698 = vmatprep.subr.mxu0 0.0
    %699 = vmatpush1.msra.mxu0 %v476
    %700 = vmatprep.subr.mxu0 0.0
    %701 = vmatpush1.msra.mxu0 %v482
    %702 = vmatprep.subr.mxu0 0.0
    %703 = vmatpush1.msra.mxu0 %v488
    %704 = vmatprep.subr.mxu0 0.0
    %705 = vmatpush1.msra.mxu0 0.0
    %706 = vmatprep.subr.mxu0 0.0
    %707 = vmatpush1.msra.mxu0 0.0
    %708 = vmatprep.subr.mxu0 0.0
    %709 = vmatpush1.msra.mxu0 0.0
    %710 = vmatprep.subr.mxu0 0.0
    %711 = vmatpush1.msra.mxu0 0.0
    %712 = vmatprep.subr.mxu0 0.0
    %713 = vmatpush1.msra.mxu0 0.0
    %714 = vmatprep.subr.mxu0 0.0
    %715 = vmatpush1.msra.mxu0 0.0
    %716 = vmatprep.subr.mxu0 0.0
    %717 = vmatpush1.msra.mxu0 0.0
    %718 = vmatprep.subr.mxu0 0.0
    %719 = vmatpush1.msra.mxu0 0.0
    %720 = vmatprep.subr.mxu0 0.0
    %721 = vmatpush1.msra.mxu0 0.0
    %722 = vmatprep.subr.mxu0 0.0
    %723 = vmatpush1.msra.mxu0 0.0
    %724 = vmatprep.subr.mxu0 0.0
    %725 = vmatpush1.msra.mxu0 0.0
    %726 = vmatprep.subr.mxu0 0.0
    %727 = vmatpush1.msra.mxu0 0.0
    %728 = vmatprep.subr.mxu0 0.0
    %729 = vmatpush1.msra.mxu0 0.0
    %730 = vmatprep.subr.mxu0 0.0
    %731 = vmatpush1.msra.mxu0 0.0
    %732 = vmatprep.subr.mxu0 0.0
    %733 = vmatpush1.msra.mxu0 0.0
    %734 = vmatprep.subr.mxu0 0.0
    %735 = vmatpush1.msra.mxu0 0.0
    %736 = vmatprep.subr.mxu0 0.0
    %737 = vmatpush1.msra.mxu0 0.0
    %738 = vmatprep.subr.mxu0 0.0
    %739 = vmatpush1.msra.mxu0 0.0
    %740 = vmatprep.subr.mxu0 0.0
    %741 = vmatpush1.msra.mxu0 0.0
    %742 = vmatprep.subr.mxu0 0.0
    %743 = vmatpush1.msra.mxu0 0.0
    %744 = vmatprep.subr.mxu0 0.0
    %745 = vmatpush1.msra.mxu0 0.0
    %746 = vmatprep.subr.mxu0 0.0
    %747 = vmatpush1.msra.mxu0 0.0
    %748 = vmatprep.subr.mxu0 0.0
    %749 = vmatpush1.msra.mxu0 0.0
    %750 = vmatprep.subr.mxu0 0.0
    %751 = vmatpush1.msra.mxu0 0.0
    %752 = vmatprep.subr.mxu0 0.0
    %753 = vmatpush1.msra.mxu0 0.0
    %754 = vmatprep.subr.mxu0 0.0
    %755 = vmatpush1.msra.mxu0 0.0
    %756 = vmatprep.subr.mxu0 0.0
    %757 = vmatpush1.msra.mxu0 0.0
    %758 = vmatprep.subr.mxu0 0.0
    %759 = vmatpush1.msra.mxu0 0.0
    %760 = vmatprep.mubr.f32.mxu0 0.0
    %761 = vmatmul.mubr.f32.gmra.mrb[0].mxu0 %v682
    %v762 = vpop.f32.mrb[0].mxu0
    %v763 = vadd.f32 %v658, %v762
    %v764 = vpop.f32.mrb[0].mxu0
    %765 = vmatprep.mubr.f32.mxu0 0.0
    %766 = vmatmul.mubr.f32.gmra.mrb[0].mxu0 %v685
    %v767 = vpop.f32.mrb[0].mxu0
    %v768 = vadd.f32 %v663, %v767
    %v769 = vpop.f32.mrb[0].mxu0
    %770 = vmatprep.mubr.f32.mxu0 0.0
    %771 = vmatmul.mubr.f32.gmra.mrb[0].mxu0 %v688
    %v772 = vpop.f32.mrb[0].mxu0
    %v773 = vadd.f32 %v668, %v772
    %v774 = vpop.f32.mrb[0].mxu0
    %775 = vmatprep.mubr.f32.mxu0 0.0
    %776 = vmatmul.mubr.f32.gmra.mrb[0].mxu0 %v691
    %v777 = vpop.f32.mrb[0].mxu0
    %v778 = vadd.f32 %v673, %v777
    %v779 = vpop.f32.mrb[0].mxu0
    %780 = vmatprep.mubr.f32.mxu0 0.0
    %781 = vmatmul.mubr.f32.gmra.mrb[0].mxu0 %v694
    %v782 = vpop.f32.mrb[0].mxu0
    %v783 = vadd.f32 %v678, %v782
    %v784 = vpop.f32.mrb[0].mxu0
    %785 = vdwg.mxu0
    %v786 = vadd.s32 %v513, 4294967294
    %v787 = vadd.s32 %v514, 4294967294
    %v788 = vadd.s32 %v515, 4294967294
    %v789 = vadd.s32 %v516, 4294967294
    %v790 = vadd.s32 %v517, 4294967294
    %vm791 = vcmp.eq.s32.totalorder %v519, %v786
    %vm792 = vcmp.eq.s32.totalorder %v519, %v787
    %vm793 = vcmp.eq.s32.totalorder %v519, %v788
    %vm794 = vcmp.eq.s32.totalorder %v519, %v789
    %vm795 = vcmp.eq.s32.totalorder %v519, %v790
    %vm796 = vmand %vm503, %vm791
    %vm797 = vmand %vm504, %vm792
    %vm798 = vmand %vm505, %vm793
    %vm799 = vmand %vm506, %vm794
    %vm800 = vmand %vm507, %vm795
    %v801 = vsel %vm796, 1.0, 0.0
    %v802 = vsel %vm797, 1.0, 0.0
    %v803 = vsel %vm798, 1.0, 0.0
    %v804 = vsel %vm799, 1.0, 0.0
    %v805 = vsel %vm800, 1.0, 0.0
    %806 = vrot.lane.b32.xlu0 %v470, 64
    %v807 = vpop.permute.xlu0 %806
    %808 = vrot.lane.b32.xlu0 %v476, 64
    %v809 = vpop.permute.xlu0 %808
    %810 = vrot.lane.b32.xlu0 %v482, 64
    %v811 = vpop.permute.xlu0 %810
    %812 = vrot.lane.b32.xlu0 %v488, 64
    %v813 = vpop.permute.xlu0 %812
    %v819 = vsel %vm181, %v801, 0
    %v822 = vsel %vm181, %v802, 0
    %v825 = vsel %vm181, %v803, 0
    %v828 = vsel %vm181, %v804, 0
    %v831 = vsel %vm181, %v805, 0
    %833 = vmatprep.subr.mxu0 0.0
    %834 = vmatpush1.msra.mxu0 %v807
    %835 = vmatprep.subr.mxu0 0.0
    %836 = vmatpush1.msra.mxu0 %v809
    %837 = vmatprep.subr.mxu0 0.0
    %838 = vmatpush1.msra.mxu0 %v811
    %839 = vmatprep.subr.mxu0 0.0
    %840 = vmatpush1.msra.mxu0 %v813
    %841 = vmatprep.subr.mxu0 0.0
    %842 = vmatpush1.msra.mxu0 0.0
    %843 = vmatprep.subr.mxu0 0.0
    %844 = vmatpush1.msra.mxu0 0.0
    %845 = vmatprep.subr.mxu0 0.0
    %846 = vmatpush1.msra.mxu0 0.0
    %847 = vmatprep.subr.mxu0 0.0
    %848 = vmatpush1.msra.mxu0 0.0
    %849 = vmatprep.subr.mxu0 0.0
    %850 = vmatpush1.msra.mxu0 0.0
    %851 = vmatprep.subr.mxu0 0.0
    %852 = vmatpush1.msra.mxu0 0.0
    %853 = vmatprep.subr.mxu0 0.0
    %854 = vmatpush1.msra.mxu0 0.0
    %855 = vmatprep.subr.mxu0 0.0
    %856 = vmatpush1.msra.mxu0 0.0
    %857 = vmatprep.subr.mxu0 0.0
    %858 = vmatpush1.msra.mxu0 0.0
    %859 = vmatprep.subr.mxu0 0.0
    %860 = vmatpush1.msra.mxu0 0.0
    %861 = vmatprep.subr.mxu0 0.0
    %862 = vmatpush1.msra.mxu0 0.0
    %863 = vmatprep.subr.mxu0 0.0
    %864 = vmatpush1.msra.mxu0 0.0
    %865 = vmatprep.subr.mxu0 0.0
    %866 = vmatpush1.msra.mxu0 0.0
    %867 = vmatprep.subr.mxu0 0.0
    %868 = vmatpush1.msra.mxu0 0.0
    %869 = vmatprep.subr.mxu0 0.0
    %870 = vmatpush1.msra.mxu0 0.0
    %871 = vmatprep.subr.mxu0 0.0
    %872 = vmatpush1.msra.mxu0 0.0
    %873 = vmatprep.subr.mxu0 0.0
    %874 = vmatpush1.msra.mxu0 0.0
    %875 = vmatprep.subr.mxu0 0.0
    %876 = vmatpush1.msra.mxu0 0.0
    %877 = vmatprep.subr.mxu0 0.0
    %878 = vmatpush1.msra.mxu0 0.0
    %879 = vmatprep.subr.mxu0 0.0
    %880 = vmatpush1.msra.mxu0 0.0
    %881 = vmatprep.subr.mxu0 0.0
    %882 = vmatpush1.msra.mxu0 0.0
    %883 = vmatprep.subr.mxu0 0.0
    %884 = vmatpush1.msra.mxu0 0.0
    %885 = vmatprep.subr.mxu0 0.0
    %886 = vmatpush1.msra.mxu0 0.0
    %887 = vmatprep.subr.mxu0 0.0
    %888 = vmatpush1.msra.mxu0 0.0
    %889 = vmatprep.subr.mxu0 0.0
    %890 = vmatpush1.msra.mxu0 0.0
    %891 = vmatprep.subr.mxu0 0.0
    %892 = vmatpush1.msra.mxu0 0.0
    %893 = vmatprep.subr.mxu0 0.0
    %894 = vmatpush1.msra.mxu0 0.0
    %895 = vmatprep.subr.mxu0 0.0
    %896 = vmatpush1.msra.mxu0 0.0
    %897 = vmatprep.mubr.f32.mxu0 0.0
    %898 = vmatmul.mubr.f32.gmra.mrb[0].mxu0 %v819
    %v899 = vpop.f32.mrb[0].mxu0
    %v900 = vadd.f32 0.0, %v899
    %v901 = vpop.f32.mrb[0].mxu0
    %902 = vmatprep.mubr.f32.mxu0 0.0
    %903 = vmatmul.mubr.f32.gmra.mrb[0].mxu0 %v822
    %v904 = vpop.f32.mrb[0].mxu0
    %v905 = vadd.f32 0.0, %v904
    %v906 = vpop.f32.mrb[0].mxu0
    %907 = vmatprep.mubr.f32.mxu0 0.0
    %908 = vmatmul.mubr.f32.gmra.mrb[0].mxu0 %v825
    %v909 = vpop.f32.mrb[0].mxu0
    %v910 = vadd.f32 0.0, %v909
    %v911 = vpop.f32.mrb[0].mxu0
    %912 = vmatprep.mubr.f32.mxu0 0.0
    %913 = vmatmul.mubr.f32.gmra.mrb[0].mxu0 %v828
    %v914 = vpop.f32.mrb[0].mxu0
    %v915 = vadd.f32 0.0, %v914
    %v916 = vpop.f32.mrb[0].mxu0
    %917 = vmatprep.mubr.f32.mxu0 0.0
    %918 = vmatmul.mubr.f32.gmra.mrb[0].mxu0 %v831
    %v919 = vpop.f32.mrb[0].mxu0
    %v920 = vadd.f32 0.0, %v919
    %v921 = vpop.f32.mrb[0].mxu0
    %922 = vdwg.mxu0
    %v923 = vadd.f32 %v763, %v900
    %v924 = vadd.f32 %v768, %v905
    %v925 = vadd.f32 %v773, %v910
    %v926 = vadd.f32 %v778, %v915
    %v927 = vadd.f32 %v783, %v920
    %v928 = vadd.s32 %v513, 4294967295
    %v929 = vadd.s32 %v514, 4294967295
    %v930 = vadd.s32 %v515, 4294967295
    %v931 = vadd.s32 %v516, 4294967295
    %v932 = vadd.s32 %v517, 4294967295
    %vm933 = vcmp.eq.s32.totalorder %v519, %v928
    %vm934 = vcmp.eq.s32.totalorder %v519, %v929
    %vm935 = vcmp.eq.s32.totalorder %v519, %v930
    %vm936 = vcmp.eq.s32.totalorder %v519, %v931
    %vm937 = vcmp.eq.s32.totalorder %v519, %v932
    %vm938 = vmand %vm503, %vm933
    %vm939 = vmand %vm504, %vm934
    %vm940 = vmand %vm505, %vm935
    %vm941 = vmand %vm506, %vm936
    %vm942 = vmand %vm507, %vm937
    %v943 = vsel %vm938, 1.0, 0.0
    %v944 = vsel %vm939, 1.0, 0.0
    %v945 = vsel %vm940, 1.0, 0.0
    %v946 = vsel %vm941, 1.0, 0.0
    %v947 = vsel %vm942, 1.0, 0.0
    %948 = vrot.lane.b32.xlu0 %v470, 32
    %v949 = vpop.permute.xlu0 %948
    %950 = vrot.lane.b32.xlu0 %v476, 32
    %v951 = vpop.permute.xlu0 %950
    %952 = vrot.lane.b32.xlu0 %v482, 32
    %v953 = vpop.permute.xlu0 %952
    %954 = vrot.lane.b32.xlu0 %v488, 32
    %v955 = vpop.permute.xlu0 %954
    %v961 = vsel %vm181, %v943, 0
    %v964 = vsel %vm181, %v944, 0
    %v967 = vsel %vm181, %v945, 0
    %v970 = vsel %vm181, %v946, 0
    %v973 = vsel %vm181, %v947, 0
    %975 = vmatprep.subr.mxu0 0.0
    %976 = vmatpush1.msra.mxu0 %v949
    %977 = vmatprep.subr.mxu0 0.0
    %978 = vmatpush1.msra.mxu0 %v951
    %979 = vmatprep.subr.mxu0 0.0
    %980 = vmatpush1.msra.mxu0 %v953
    %981 = vmatprep.subr.mxu0 0.0
    %982 = vmatpush1.msra.mxu0 %v955
    %983 = vmatprep.subr.mxu0 0.0
    %984 = vmatpush1.msra.mxu0 0.0
    %985 = vmatprep.subr.mxu0 0.0
    %986 = vmatpush1.msra.mxu0 0.0
    %987 = vmatprep.subr.mxu0 0.0
    %988 = vmatpush1.msra.mxu0 0.0
    %989 = vmatprep.subr.mxu0 0.0
    %990 = vmatpush1.msra.mxu0 0.0
    %991 = vmatprep.subr.mxu0 0.0
    %992 = vmatpush1.msra.mxu0 0.0
    %993 = vmatprep.subr.mxu0 0.0
    %994 = vmatpush1.msra.mxu0 0.0
    %995 = vmatprep.subr.mxu0 0.0
    %996 = vmatpush1.msra.mxu0 0.0
    %997 = vmatprep.subr.mxu0 0.0
    %998 = vmatpush1.msra.mxu0 0.0
    %999 = vmatprep.subr.mxu0 0.0
    %1000 = vmatpush1.msra.mxu0 0.0
    %1001 = vmatprep.subr.mxu0 0.0
    %1002 = vmatpush1.msra.mxu0 0.0
    %1003 = vmatprep.subr.mxu0 0.0
    %1004 = vmatpush1.msra.mxu0 0.0
    %1005 = vmatprep.subr.mxu0 0.0
    %1006 = vmatpush1.msra.mxu0 0.0
    %1007 = vmatprep.subr.mxu0 0.0
    %1008 = vmatpush1.msra.mxu0 0.0
    %1009 = vmatprep.subr.mxu0 0.0
    %1010 = vmatpush1.msra.mxu0 0.0
    %1011 = vmatprep.subr.mxu0 0.0
    %1012 = vmatpush1.msra.mxu0 0.0
    %1013 = vmatprep.subr.mxu0 0.0
    %1014 = vmatpush1.msra.mxu0 0.0
    %1015 = vmatprep.subr.mxu0 0.0
    %1016 = vmatpush1.msra.mxu0 0.0
    %1017 = vmatprep.subr.mxu0 0.0
    %1018 = vmatpush1.msra.mxu0 0.0
    %1019 = vmatprep.subr.mxu0 0.0
    %1020 = vmatpush1.msra.mxu0 0.0
    %1021 = vmatprep.subr.mxu0 0.0
    %1022 = vmatpush1.msra.mxu0 0.0
    %1023 = vmatprep.subr.mxu0 0.0
    %1024 = vmatpush1.msra.mxu0 0.0
    %1025 = vmatprep.subr.mxu0 0.0
    %1026 = vmatpush1.msra.mxu0 0.0
    %1027 = vmatprep.subr.mxu0 0.0
    %1028 = vmatpush1.msra.mxu0 0.0
    %1029 = vmatprep.subr.mxu0 0.0
    %1030 = vmatpush1.msra.mxu0 0.0
    %1031 = vmatprep.subr.mxu0 0.0
    %1032 = vmatpush1.msra.mxu0 0.0
    %1033 = vmatprep.subr.mxu0 0.0
    %1034 = vmatpush1.msra.mxu0 0.0
    %1035 = vmatprep.subr.mxu0 0.0
    %1036 = vmatpush1.msra.mxu0 0.0
    %1037 = vmatprep.subr.mxu0 0.0
    %1038 = vmatpush1.msra.mxu0 0.0
    %1039 = vmatprep.mubr.f32.mxu0 0.0
    %1040 = vmatmul.mubr.f32.gmra.mrb[0].mxu0 %v961
    %v1041 = vpop.f32.mrb[0].mxu0
    %v1042 = vadd.f32 0.0, %v1041
    %v1043 = vpop.f32.mrb[0].mxu0
    %1044 = vmatprep.mubr.f32.mxu0 0.0
    %1045 = vmatmul.mubr.f32.gmra.mrb[0].mxu0 %v964
    %v1046 = vpop.f32.mrb[0].mxu0
    %v1047 = vadd.f32 0.0, %v1046
    %v1048 = vpop.f32.mrb[0].mxu0
    %1049 = vmatprep.mubr.f32.mxu0 0.0
    %1050 = vmatmul.mubr.f32.gmra.mrb[0].mxu0 %v967
    %v1051 = vpop.f32.mrb[0].mxu0
    %v1052 = vadd.f32 0.0, %v1051
    %v1053 = vpop.f32.mrb[0].mxu0
    %1054 = vmatprep.mubr.f32.mxu0 0.0
    %1055 = vmatmul.mubr.f32.gmra.mrb[0].mxu0 %v970
    %v1056 = vpop.f32.mrb[0].mxu0
    %v1057 = vadd.f32 0.0, %v1056
    %v1058 = vpop.f32.mrb[0].mxu0
    %1059 = vmatprep.mubr.f32.mxu0 0.0
    %1060 = vmatmul.mubr.f32.gmra.mrb[0].mxu0 %v973
    %v1061 = vpop.f32.mrb[0].mxu0
    %v1062 = vadd.f32 0.0, %v1061
    %v1063 = vpop.f32.mrb[0].mxu0
    %1064 = vdwg.mxu0
    %v1065 = vadd.f32 %v923, %v1042
    %v1066 = vadd.f32 %v924, %v1047
    %v1067 = vadd.f32 %v925, %v1052
    %v1068 = vadd.f32 %v926, %v1057
    %v1069 = vadd.f32 %v927, %v1062
    %vm1070 = vcmp.eq.s32.totalorder %v519, %v513
    %vm1071 = vcmp.eq.s32.totalorder %v519, %v514
    %vm1072 = vcmp.eq.s32.totalorder %v519, %v515
    %vm1073 = vcmp.eq.s32.totalorder %v519, %v516
    %vm1074 = vcmp.eq.s32.totalorder %v519, %v517
    %vm1075 = vmand %vm503, %vm1070
    %vm1076 = vmand %vm504, %vm1071
    %vm1077 = vmand %vm505, %vm1072
    %vm1078 = vmand %vm506, %vm1073
    %vm1079 = vmand %vm507, %vm1074
    %v1080 = vsel %vm1075, 1.0, 0.0
    %v1081 = vsel %vm1076, 1.0, 0.0
    %v1082 = vsel %vm1077, 1.0, 0.0
    %v1083 = vsel %vm1078, 1.0, 0.0
    %v1084 = vsel %vm1079, 1.0, 0.0
    %v1086 = vsel %vm181, %v1080, 0
    %v1089 = vsel %vm181, %v1081, 0
    %v1092 = vsel %vm181, %v1082, 0
    %v1095 = vsel %vm181, %v1083, 0
    %v1098 = vsel %vm181, %v1084, 0
    %1100 = vmatprep.subr.mxu0 0.0
    %1101 = vmatpush1.msra.mxu0 %v472
    %1102 = vmatprep.subr.mxu0 0.0
    %1103 = vmatpush1.msra.mxu0 %v478
    %1104 = vmatprep.subr.mxu0 0.0
    %1105 = vmatpush1.msra.mxu0 %v484
    %1106 = vmatprep.subr.mxu0 0.0
    %1107 = vmatpush1.msra.mxu0 %v490
    %1108 = vmatprep.subr.mxu0 0.0
    %1109 = vmatpush1.msra.mxu0 0.0
    %1110 = vmatprep.subr.mxu0 0.0
    %1111 = vmatpush1.msra.mxu0 0.0
    %1112 = vmatprep.subr.mxu0 0.0
    %1113 = vmatpush1.msra.mxu0 0.0
    %1114 = vmatprep.subr.mxu0 0.0
    %1115 = vmatpush1.msra.mxu0 0.0
    %1116 = vmatprep.subr.mxu0 0.0
    %1117 = vmatpush1.msra.mxu0 0.0
    %1118 = vmatprep.subr.mxu0 0.0
    %1119 = vmatpush1.msra.mxu0 0.0
    %1120 = vmatprep.subr.mxu0 0.0
    %1121 = vmatpush1.msra.mxu0 0.0
    %1122 = vmatprep.subr.mxu0 0.0
    %1123 = vmatpush1.msra.mxu0 0.0
    %1124 = vmatprep.subr.mxu0 0.0
    %1125 = vmatpush1.msra.mxu0 0.0
    %1126 = vmatprep.subr.mxu0 0.0
    %1127 = vmatpush1.msra.mxu0 0.0
    %1128 = vmatprep.subr.mxu0 0.0
    %1129 = vmatpush1.msra.mxu0 0.0
    %1130 = vmatprep.subr.mxu0 0.0
    %1131 = vmatpush1.msra.mxu0 0.0
    %1132 = vmatprep.subr.mxu0 0.0
    %1133 = vmatpush1.msra.mxu0 0.0
    %1134 = vmatprep.subr.mxu0 0.0
    %1135 = vmatpush1.msra.mxu0 0.0
    %1136 = vmatprep.subr.mxu0 0.0
    %1137 = vmatpush1.msra.mxu0 0.0
    %1138 = vmatprep.subr.mxu0 0.0
    %1139 = vmatpush1.msra.mxu0 0.0
    %1140 = vmatprep.subr.mxu0 0.0
    %1141 = vmatpush1.msra.mxu0 0.0
    %1142 = vmatprep.subr.mxu0 0.0
    %1143 = vmatpush1.msra.mxu0 0.0
    %1144 = vmatprep.subr.mxu0 0.0
    %1145 = vmatpush1.msra.mxu0 0.0
    %1146 = vmatprep.subr.mxu0 0.0
    %1147 = vmatpush1.msra.mxu0 0.0
    %1148 = vmatprep.subr.mxu0 0.0
    %1149 = vmatpush1.msra.mxu0 0.0
    %1150 = vmatprep.subr.mxu0 0.0
    %1151 = vmatpush1.msra.mxu0 0.0
    %1152 = vmatprep.subr.mxu0 0.0
    %1153 = vmatpush1.msra.mxu0 0.0
    %1154 = vmatprep.subr.mxu0 0.0
    %1155 = vmatpush1.msra.mxu0 0.0
    %1156 = vmatprep.subr.mxu0 0.0
    %1157 = vmatpush1.msra.mxu0 0.0
    %1158 = vmatprep.subr.mxu0 0.0
    %1159 = vmatpush1.msra.mxu0 0.0
    %1160 = vmatprep.subr.mxu0 0.0
    %1161 = vmatpush1.msra.mxu0 0.0
    %1162 = vmatprep.subr.mxu0 0.0
    %1163 = vmatpush1.msra.mxu0 0.0
    %1164 = vmatprep.mubr.f32.mxu0 0.0
    %1165 = vmatmul.mubr.f32.gmra.mrb[0].mxu0 %v1086
    %v1166 = vpop.f32.mrb[0].mxu0
    %v1167 = vadd.f32 0.0, %v1166
    %v1168 = vpop.f32.mrb[0].mxu0
    %1169 = vmatprep.mubr.f32.mxu0 0.0
    %1170 = vmatmul.mubr.f32.gmra.mrb[0].mxu0 %v1089
    %v1171 = vpop.f32.mrb[0].mxu0
    %v1172 = vadd.f32 0.0, %v1171
    %v1173 = vpop.f32.mrb[0].mxu0
    %1174 = vmatprep.mubr.f32.mxu0 0.0
    %1175 = vmatmul.mubr.f32.gmra.mrb[0].mxu0 %v1092
    %v1176 = vpop.f32.mrb[0].mxu0
    %v1177 = vadd.f32 0.0, %v1176
    %v1178 = vpop.f32.mrb[0].mxu0
    %1179 = vmatprep.mubr.f32.mxu0 0.0
    %1180 = vmatmul.mubr.f32.gmra.mrb[0].mxu0 %v1095
    %v1181 = vpop.f32.mrb[0].mxu0
    %v1182 = vadd.f32 0.0, %v1181
    %v1183 = vpop.f32.mrb[0].mxu0
    %1184 = vmatprep.mubr.f32.mxu0 0.0
    %1185 = vmatmul.mubr.f32.gmra.mrb[0].mxu0 %v1098
    %v1186 = vpop.f32.mrb[0].mxu0
    %v1187 = vadd.f32 0.0, %v1186
    %v1188 = vpop.f32.mrb[0].mxu0
    %1189 = vdwg.mxu0
    %v1190 = vadd.f32 %v1065, %v1167
    %v1191 = vadd.f32 %v1066, %v1172
    %v1192 = vadd.f32 %v1067, %v1177
    %v1193 = vadd.f32 %v1068, %v1182
    %v1194 = vadd.f32 %v1069, %v1187
    %v1195 = vadd.s32 %v513, 1
    %v1196 = vadd.s32 %v514, 1
    %v1197 = vadd.s32 %v515, 1
    %v1198 = vadd.s32 %v516, 1
    %v1199 = vadd.s32 %v517, 1
    %vm1200 = vcmp.eq.s32.totalorder %v519, %v1195
    %vm1201 = vcmp.eq.s32.totalorder %v519, %v1196
    %vm1202 = vcmp.eq.s32.totalorder %v519, %v1197
    %vm1203 = vcmp.eq.s32.totalorder %v519, %v1198
    %vm1204 = vcmp.eq.s32.totalorder %v519, %v1199
    %vm1205 = vmand %vm503, %vm1200
    %vm1206 = vmand %vm504, %vm1201
    %vm1207 = vmand %vm505, %vm1202
    %vm1208 = vmand %vm506, %vm1203
    %vm1209 = vmand %vm507, %vm1204
    %v1210 = vsel %vm1205, 1.0, 0.0
    %v1211 = vsel %vm1206, 1.0, 0.0
    %v1212 = vsel %vm1207, 1.0, 0.0
    %v1213 = vsel %vm1208, 1.0, 0.0
    %v1214 = vsel %vm1209, 1.0, 0.0
    %1219 = vrot.lane.b32.xlu0 %v472, 96
    %v1220 = vpop.permute.xlu0 %1219
    %1221 = vrot.lane.b32.xlu0 %v478, 96
    %v1222 = vpop.permute.xlu0 %1221
    %1223 = vrot.lane.b32.xlu0 %v484, 96
    %v1224 = vpop.permute.xlu0 %1223
    %1225 = vrot.lane.b32.xlu0 %v490, 96
    %v1226 = vpop.permute.xlu0 %1225
    %v1232 = vsel %vm181, %v1210, 0
    %v1235 = vsel %vm181, %v1211, 0
    %v1238 = vsel %vm181, %v1212, 0
    %v1241 = vsel %vm181, %v1213, 0
    %v1244 = vsel %vm181, %v1214, 0
    %1246 = vmatprep.subr.mxu0 0.0
    %1247 = vmatpush1.msra.mxu0 %v1220
    %1248 = vmatprep.subr.mxu0 0.0
    %1249 = vmatpush1.msra.mxu0 %v1222
    %1250 = vmatprep.subr.mxu0 0.0
    %1251 = vmatpush1.msra.mxu0 %v1224
    %1252 = vmatprep.subr.mxu0 0.0
    %1253 = vmatpush1.msra.mxu0 %v1226
    %1254 = vmatprep.subr.mxu0 0.0
    %1255 = vmatpush1.msra.mxu0 0.0
    %1256 = vmatprep.subr.mxu0 0.0
    %1257 = vmatpush1.msra.mxu0 0.0
    %1258 = vmatprep.subr.mxu0 0.0
    %1259 = vmatpush1.msra.mxu0 0.0
    %1260 = vmatprep.subr.mxu0 0.0
    %1261 = vmatpush1.msra.mxu0 0.0
    %1262 = vmatprep.subr.mxu0 0.0
    %1263 = vmatpush1.msra.mxu0 0.0
    %1264 = vmatprep.subr.mxu0 0.0
    %1265 = vmatpush1.msra.mxu0 0.0
    %1266 = vmatprep.subr.mxu0 0.0
    %1267 = vmatpush1.msra.mxu0 0.0
    %1268 = vmatprep.subr.mxu0 0.0
    %1269 = vmatpush1.msra.mxu0 0.0
    %1270 = vmatprep.subr.mxu0 0.0
    %1271 = vmatpush1.msra.mxu0 0.0
    %1272 = vmatprep.subr.mxu0 0.0
    %1273 = vmatpush1.msra.mxu0 0.0
    %1274 = vmatprep.subr.mxu0 0.0
    %1275 = vmatpush1.msra.mxu0 0.0
    %1276 = vmatprep.subr.mxu0 0.0
    %1277 = vmatpush1.msra.mxu0 0.0
    %1278 = vmatprep.subr.mxu0 0.0
    %1279 = vmatpush1.msra.mxu0 0.0
    %1280 = vmatprep.subr.mxu0 0.0
    %1281 = vmatpush1.msra.mxu0 0.0
    %1282 = vmatprep.subr.mxu0 0.0
    %1283 = vmatpush1.msra.mxu0 0.0
    %1284 = vmatprep.subr.mxu0 0.0
    %1285 = vmatpush1.msra.mxu0 0.0
    %1286 = vmatprep.subr.mxu0 0.0
    %1287 = vmatpush1.msra.mxu0 0.0
    %1288 = vmatprep.subr.mxu0 0.0
    %1289 = vmatpush1.msra.mxu0 0.0
    %1290 = vmatprep.subr.mxu0 0.0
    %1291 = vmatpush1.msra.mxu0 0.0
    %1292 = vmatprep.subr.mxu0 0.0
    %1293 = vmatpush1.msra.mxu0 0.0
    %1294 = vmatprep.subr.mxu0 0.0
    %1295 = vmatpush1.msra.mxu0 0.0
    %1296 = vmatprep.subr.mxu0 0.0
    %1297 = vmatpush1.msra.mxu0 0.0
    %1298 = vmatprep.subr.mxu0 0.0
    %1299 = vmatpush1.msra.mxu0 0.0
    %1300 = vmatprep.subr.mxu0 0.0
    %1301 = vmatpush1.msra.mxu0 0.0
    %1302 = vmatprep.subr.mxu0 0.0
    %1303 = vmatpush1.msra.mxu0 0.0
    %1304 = vmatprep.subr.mxu0 0.0
    %1305 = vmatpush1.msra.mxu0 0.0
    %1306 = vmatprep.subr.mxu0 0.0
    %1307 = vmatpush1.msra.mxu0 0.0
    %1308 = vmatprep.subr.mxu0 0.0
    %1309 = vmatpush1.msra.mxu0 0.0
    %1310 = vmatprep.mubr.f32.mxu0 0.0
    %1311 = vmatmul.mubr.f32.gmra.mrb[0].mxu0 %v1232
    %v1312 = vpop.f32.mrb[0].mxu0
    %v1313 = vadd.f32 0.0, %v1312
    %v1314 = vpop.f32.mrb[0].mxu0
    %1315 = vmatprep.mubr.f32.mxu0 0.0
    %1316 = vmatmul.mubr.f32.gmra.mrb[0].mxu0 %v1235
    %v1317 = vpop.f32.mrb[0].mxu0
    %v1318 = vadd.f32 0.0, %v1317
    %v1319 = vpop.f32.mrb[0].mxu0
    %1320 = vmatprep.mubr.f32.mxu0 0.0
    %1321 = vmatmul.mubr.f32.gmra.mrb[0].mxu0 %v1238
    %v1322 = vpop.f32.mrb[0].mxu0
    %v1323 = vadd.f32 0.0, %v1322
    %v1324 = vpop.f32.mrb[0].mxu0
    %1325 = vmatprep.mubr.f32.mxu0 0.0
    %1326 = vmatmul.mubr.f32.gmra.mrb[0].mxu0 %v1241
    %v1327 = vpop.f32.mrb[0].mxu0
    %v1328 = vadd.f32 0.0, %v1327
    %v1329 = vpop.f32.mrb[0].mxu0
    %1330 = vmatprep.mubr.f32.mxu0 0.0
    %1331 = vmatmul.mubr.f32.gmra.mrb[0].mxu0 %v1244
    %v1332 = vpop.f32.mrb[0].mxu0
    %v1333 = vadd.f32 0.0, %v1332
    %v1334 = vpop.f32.mrb[0].mxu0
    %1335 = vdwg.mxu0
    %v1336 = vadd.f32 %v1190, %v1313
    %v1337 = vadd.f32 %v1191, %v1318
    %v1338 = vadd.f32 %v1192, %v1323
    %v1339 = vadd.f32 %v1193, %v1328
    %v1340 = vadd.f32 %v1194, %v1333
    %v1341 = vadd.s32 %v513, 2
    %v1342 = vadd.s32 %v514, 2
    %v1343 = vadd.s32 %v515, 2
    %v1344 = vadd.s32 %v516, 2
    %v1345 = vadd.s32 %v517, 2
    %vm1346 = vcmp.eq.s32.totalorder %v519, %v1341
    %vm1347 = vcmp.eq.s32.totalorder %v519, %v1342
    %vm1348 = vcmp.eq.s32.totalorder %v519, %v1343
    %vm1349 = vcmp.eq.s32.totalorder %v519, %v1344
    %vm1350 = vcmp.eq.s32.totalorder %v519, %v1345
    %vm1351 = vmand %vm503, %vm1346
    %vm1352 = vmand %vm504, %vm1347
    %vm1353 = vmand %vm505, %vm1348
    %vm1354 = vmand %vm506, %vm1349
    %vm1355 = vmand %vm507, %vm1350
    %v1356 = vsel %vm1351, 1.0, 0.0
    %v1357 = vsel %vm1352, 1.0, 0.0
    %v1358 = vsel %vm1353, 1.0, 0.0
    %v1359 = vsel %vm1354, 1.0, 0.0
    %v1360 = vsel %vm1355, 1.0, 0.0
    %1361 = vrot.lane.b32.xlu0 %v472, 64
    %v1362 = vpop.permute.xlu0 %1361
    %1363 = vrot.lane.b32.xlu0 %v478, 64
    %v1364 = vpop.permute.xlu0 %1363
    %1365 = vrot.lane.b32.xlu0 %v484, 64
    %v1366 = vpop.permute.xlu0 %1365
    %1367 = vrot.lane.b32.xlu0 %v490, 64
    %v1368 = vpop.permute.xlu0 %1367
    %v1374 = vsel %vm181, %v1356, 0
    %v1377 = vsel %vm181, %v1357, 0
    %v1380 = vsel %vm181, %v1358, 0
    %v1383 = vsel %vm181, %v1359, 0
    %v1386 = vsel %vm181, %v1360, 0
    %1388 = vmatprep.subr.mxu0 0.0
    %1389 = vmatpush1.msra.mxu0 %v1362
    %1390 = vmatprep.subr.mxu0 0.0
    %1391 = vmatpush1.msra.mxu0 %v1364
    %1392 = vmatprep.subr.mxu0 0.0
    %1393 = vmatpush1.msra.mxu0 %v1366
    %1394 = vmatprep.subr.mxu0 0.0
    %1395 = vmatpush1.msra.mxu0 %v1368
    %1396 = vmatprep.subr.mxu0 0.0
    %1397 = vmatpush1.msra.mxu0 0.0
    %1398 = vmatprep.subr.mxu0 0.0
    %1399 = vmatpush1.msra.mxu0 0.0
    %1400 = vmatprep.subr.mxu0 0.0
    %1401 = vmatpush1.msra.mxu0 0.0
    %1402 = vmatprep.subr.mxu0 0.0
    %1403 = vmatpush1.msra.mxu0 0.0
    %1404 = vmatprep.subr.mxu0 0.0
    %1405 = vmatpush1.msra.mxu0 0.0
    %1406 = vmatprep.subr.mxu0 0.0
    %1407 = vmatpush1.msra.mxu0 0.0
    %1408 = vmatprep.subr.mxu0 0.0
    %1409 = vmatpush1.msra.mxu0 0.0
    %1410 = vmatprep.subr.mxu0 0.0
    %1411 = vmatpush1.msra.mxu0 0.0
    %1412 = vmatprep.subr.mxu0 0.0
    %1413 = vmatpush1.msra.mxu0 0.0
    %1414 = vmatprep.subr.mxu0 0.0
    %1415 = vmatpush1.msra.mxu0 0.0
    %1416 = vmatprep.subr.mxu0 0.0
    %1417 = vmatpush1.msra.mxu0 0.0
    %1418 = vmatprep.subr.mxu0 0.0
    %1419 = vmatpush1.msra.mxu0 0.0
    %1420 = vmatprep.subr.mxu0 0.0
    %1421 = vmatpush1.msra.mxu0 0.0
    %1422 = vmatprep.subr.mxu0 0.0
    %1423 = vmatpush1.msra.mxu0 0.0
    %1424 = vmatprep.subr.mxu0 0.0
    %1425 = vmatpush1.msra.mxu0 0.0
    %1426 = vmatprep.subr.mxu0 0.0
    %1427 = vmatpush1.msra.mxu0 0.0
    %1428 = vmatprep.subr.mxu0 0.0
    %1429 = vmatpush1.msra.mxu0 0.0
    %1430 = vmatprep.subr.mxu0 0.0
    %1431 = vmatpush1.msra.mxu0 0.0
    %1432 = vmatprep.subr.mxu0 0.0
    %1433 = vmatpush1.msra.mxu0 0.0
    %1434 = vmatprep.subr.mxu0 0.0
    %1435 = vmatpush1.msra.mxu0 0.0
    %1436 = vmatprep.subr.mxu0 0.0
    %1437 = vmatpush1.msra.mxu0 0.0
    %1438 = vmatprep.subr.mxu0 0.0
    %1439 = vmatpush1.msra.mxu0 0.0
    %1440 = vmatprep.subr.mxu0 0.0
    %1441 = vmatpush1.msra.mxu0 0.0
    %1442 = vmatprep.subr.mxu0 0.0
    %1443 = vmatpush1.msra.mxu0 0.0
    %1444 = vmatprep.subr.mxu0 0.0
    %1445 = vmatpush1.msra.mxu0 0.0
    %1446 = vmatprep.subr.mxu0 0.0
    %1447 = vmatpush1.msra.mxu0 0.0
    %1448 = vmatprep.subr.mxu0 0.0
    %1449 = vmatpush1.msra.mxu0 0.0
    %1450 = vmatprep.subr.mxu0 0.0
    %1451 = vmatpush1.msra.mxu0 0.0
    %1452 = vmatprep.mubr.f32.mxu0 0.0
    %1453 = vmatmul.mubr.f32.gmra.mrb[0].mxu0 %v1374
    %v1454 = vpop.f32.mrb[0].mxu0
    %v1455 = vadd.f32 0.0, %v1454
    %v1456 = vpop.f32.mrb[0].mxu0
    %1457 = vmatprep.mubr.f32.mxu0 0.0
    %1458 = vmatmul.mubr.f32.gmra.mrb[0].mxu0 %v1377
    %v1459 = vpop.f32.mrb[0].mxu0
    %v1460 = vadd.f32 0.0, %v1459
    %v1461 = vpop.f32.mrb[0].mxu0
    %1462 = vmatprep.mubr.f32.mxu0 0.0
    %1463 = vmatmul.mubr.f32.gmra.mrb[0].mxu0 %v1380
    %v1464 = vpop.f32.mrb[0].mxu0
    %v1465 = vadd.f32 0.0, %v1464
    %v1466 = vpop.f32.mrb[0].mxu0
    %1467 = vmatprep.mubr.f32.mxu0 0.0
    %1468 = vmatmul.mubr.f32.gmra.mrb[0].mxu0 %v1383
    %v1469 = vpop.f32.mrb[0].mxu0
    %v1470 = vadd.f32 0.0, %v1469
    %v1471 = vpop.f32.mrb[0].mxu0
    %1472 = vmatprep.mubr.f32.mxu0 0.0
    %1473 = vmatmul.mubr.f32.gmra.mrb[0].mxu0 %v1386
    %v1474 = vpop.f32.mrb[0].mxu0
    %v1475 = vadd.f32 0.0, %v1474
    %v1476 = vpop.f32.mrb[0].mxu0
    %1477 = vdwg.mxu0
    %v1478 = vadd.f32 %v1336, %v1455
    %v1479 = vadd.f32 %v1337, %v1460
    %v1480 = vadd.f32 %v1338, %v1465
    %v1481 = vadd.f32 %v1339, %v1470
    %v1482 = vadd.f32 %v1340, %v1475
    %v1483 = vadd.s32 %v513, 3
    %v1484 = vadd.s32 %v514, 3
    %v1485 = vadd.s32 %v515, 3
    %v1486 = vadd.s32 %v516, 3
    %v1487 = vadd.s32 %v517, 3
    %vm1488 = vcmp.eq.s32.totalorder %v519, %v1483
    %vm1489 = vcmp.eq.s32.totalorder %v519, %v1484
    %vm1490 = vcmp.eq.s32.totalorder %v519, %v1485
    %vm1491 = vcmp.eq.s32.totalorder %v519, %v1486
    %vm1492 = vcmp.eq.s32.totalorder %v519, %v1487
    %vm1493 = vmand %vm503, %vm1488
    %vm1494 = vmand %vm504, %vm1489
    %vm1495 = vmand %vm505, %vm1490
    %vm1496 = vmand %vm506, %vm1491
    %vm1497 = vmand %vm507, %vm1492
    %v1498 = vsel %vm1493, 1.0, 0.0
    %v1499 = vsel %vm1494, 1.0, 0.0
    %v1500 = vsel %vm1495, 1.0, 0.0
    %v1501 = vsel %vm1496, 1.0, 0.0
    %v1502 = vsel %vm1497, 1.0, 0.0
    %1503 = vrot.lane.b32.xlu0 %v472, 32
    %v1504 = vpop.permute.xlu0 %1503
    %1505 = vrot.lane.b32.xlu0 %v478, 32
    %v1506 = vpop.permute.xlu0 %1505
    %1507 = vrot.lane.b32.xlu0 %v484, 32
    %v1508 = vpop.permute.xlu0 %1507
    %1509 = vrot.lane.b32.xlu0 %v490, 32
    %v1510 = vpop.permute.xlu0 %1509
    %v1516 = vsel %vm181, %v1498, 0
    %v1519 = vsel %vm181, %v1499, 0
    %v1522 = vsel %vm181, %v1500, 0
    %v1525 = vsel %vm181, %v1501, 0
    %v1528 = vsel %vm181, %v1502, 0
    %1530 = vmatprep.subr.mxu0 0.0
    %1531 = vmatpush1.msra.mxu0 %v1504
    %1532 = vmatprep.subr.mxu0 0.0
    %1533 = vmatpush1.msra.mxu0 %v1506
    %1534 = vmatprep.subr.mxu0 0.0
    %1535 = vmatpush1.msra.mxu0 %v1508
    %1536 = vmatprep.subr.mxu0 0.0
    %1537 = vmatpush1.msra.mxu0 %v1510
    %1538 = vmatprep.subr.mxu0 0.0
    %1539 = vmatpush1.msra.mxu0 0.0
    %1540 = vmatprep.subr.mxu0 0.0
    %1541 = vmatpush1.msra.mxu0 0.0
    %1542 = vmatprep.subr.mxu0 0.0
    %1543 = vmatpush1.msra.mxu0 0.0
    %1544 = vmatprep.subr.mxu0 0.0
    %1545 = vmatpush1.msra.mxu0 0.0
    %1546 = vmatprep.subr.mxu0 0.0
    %1547 = vmatpush1.msra.mxu0 0.0
    %1548 = vmatprep.subr.mxu0 0.0
    %1549 = vmatpush1.msra.mxu0 0.0
    %1550 = vmatprep.subr.mxu0 0.0
    %1551 = vmatpush1.msra.mxu0 0.0
    %1552 = vmatprep.subr.mxu0 0.0
    %1553 = vmatpush1.msra.mxu0 0.0
    %1554 = vmatprep.subr.mxu0 0.0
    %1555 = vmatpush1.msra.mxu0 0.0
    %1556 = vmatprep.subr.mxu0 0.0
    %1557 = vmatpush1.msra.mxu0 0.0
    %1558 = vmatprep.subr.mxu0 0.0
    %1559 = vmatpush1.msra.mxu0 0.0
    %1560 = vmatprep.subr.mxu0 0.0
    %1561 = vmatpush1.msra.mxu0 0.0
    %1562 = vmatprep.subr.mxu0 0.0
    %1563 = vmatpush1.msra.mxu0 0.0
    %1564 = vmatprep.subr.mxu0 0.0
    %1565 = vmatpush1.msra.mxu0 0.0
    %1566 = vmatprep.subr.mxu0 0.0
    %1567 = vmatpush1.msra.mxu0 0.0
    %1568 = vmatprep.subr.mxu0 0.0
    %1569 = vmatpush1.msra.mxu0 0.0
    %1570 = vmatprep.subr.mxu0 0.0
    %1571 = vmatpush1.msra.mxu0 0.0
    %1572 = vmatprep.subr.mxu0 0.0
    %1573 = vmatpush1.msra.mxu0 0.0
    %1574 = vmatprep.subr.mxu0 0.0
    %1575 = vmatpush1.msra.mxu0 0.0
    %1576 = vmatprep.subr.mxu0 0.0
    %1577 = vmatpush1.msra.mxu0 0.0
    %1578 = vmatprep.subr.mxu0 0.0
    %1579 = vmatpush1.msra.mxu0 0.0
    %1580 = vmatprep.subr.mxu0 0.0
    %1581 = vmatpush1.msra.mxu0 0.0
    %1582 = vmatprep.subr.mxu0 0.0
    %1583 = vmatpush1.msra.mxu0 0.0
    %1584 = vmatprep.subr.mxu0 0.0
    %1585 = vmatpush1.msra.mxu0 0.0
    %1586 = vmatprep.subr.mxu0 0.0
    %1587 = vmatpush1.msra.mxu0 0.0
    %1588 = vmatprep.subr.mxu0 0.0
    %1589 = vmatpush1.msra.mxu0 0.0
    %1590 = vmatprep.subr.mxu0 0.0
    %1591 = vmatpush1.msra.mxu0 0.0
    %1592 = vmatprep.subr.mxu0 0.0
    %1593 = vmatpush1.msra.mxu0 0.0
    %1594 = vmatprep.mubr.f32.mxu0 0.0
    %1595 = vmatmul.mubr.f32.gmra.mrb[0].mxu0 %v1516
    %v1596 = vpop.f32.mrb[0].mxu0
    %v1597 = vadd.f32 0.0, %v1596
    %v1598 = vpop.f32.mrb[0].mxu0
    %1599 = vmatprep.mubr.f32.mxu0 0.0
    %1600 = vmatmul.mubr.f32.gmra.mrb[0].mxu0 %v1519
    %v1601 = vpop.f32.mrb[0].mxu0
    %v1602 = vadd.f32 0.0, %v1601
    %v1603 = vpop.f32.mrb[0].mxu0
    %1604 = vmatprep.mubr.f32.mxu0 0.0
    %1605 = vmatmul.mubr.f32.gmra.mrb[0].mxu0 %v1522
    %v1606 = vpop.f32.mrb[0].mxu0
    %v1607 = vadd.f32 0.0, %v1606
    %v1608 = vpop.f32.mrb[0].mxu0
    %1609 = vmatprep.mubr.f32.mxu0 0.0
    %1610 = vmatmul.mubr.f32.gmra.mrb[0].mxu0 %v1525
    %v1611 = vpop.f32.mrb[0].mxu0
    %v1612 = vadd.f32 0.0, %v1611
    %v1613 = vpop.f32.mrb[0].mxu0
    %1614 = vmatprep.mubr.f32.mxu0 0.0
    %1615 = vmatmul.mubr.f32.gmra.mrb[0].mxu0 %v1528
    %v1616 = vpop.f32.mrb[0].mxu0
    %v1617 = vadd.f32 0.0, %v1616
    %v1618 = vpop.f32.mrb[0].mxu0
    %1619 = vdwg.mxu0
    %v1620 = vadd.f32 %v1478, %v1597
    %v1621 = vadd.f32 %v1479, %v1602
    %v1622 = vadd.f32 %v1480, %v1607
    %v1623 = vadd.f32 %v1481, %v1612
    %v1624 = vadd.f32 %v1482, %v1617
    %v1625 = vlaneseq
    %v1626 = vshrl.u32 %v1625, 7
    %v1627 = vsub.s32 0, %v1626
    %v1628 = vrot.slane %v380, %v1627
    %v1629 = vmul.f32 %v1620, %v1628
    %v1630 = vmul.f32 %v1621, %v1628
    %v1631 = vmul.f32 %v1622, %v1628
    %v1632 = vmul.f32 %v1623, %v1628
    %v1633 = vmul.f32 %v1624, %v1628
    %v1634 = vlaneseq
    %v1635 = vshrl.u32 %v1634, 7
    %v1636 = vsub.s32 0, %v1635
    %v1637 = vrot.slane %v381, %v1636
    %v1638 = vadd.f32 %v1629, %v1637
    %v1639 = vadd.f32 %v1630, %v1637
    %v1640 = vadd.f32 %v1631, %v1637
    %v1641 = vadd.f32 %v1632, %v1637
    %v1642 = vadd.f32 %v1633, %v1637
    %v1643 = vmax.f32 %v1638, 0.0
    %v1644 = vmax.f32 %v1639, 0.0
    %v1645 = vmax.f32 %v1640, 0.0
    %v1646 = vmax.f32 %v1641, 0.0
    %v1647 = vmax.f32 %v1642, 0.0
    %vm1648 = vcmp.ge.s32.totalorder %v157, 9
    %vm1649 = vcmp.ge.s32.totalorder %v158, 9
    %vm1650 = vcmp.ge.s32.totalorder %v159, 9
    %v1651 = vsel %vm1648, 1, 0
    %v1652 = vsel %vm1649, 1, 0
    %v1653 = vsel %vm1650, 1, 0
    %vm1654 = vcmp.ge.s32.totalorder %v162, 17
    %v1655 = vsel %vm1654, 1, 0
    %vm1656 = vcmp.eq.s32.totalorder %v1651, %v1655
    %vm1657 = vcmp.eq.s32.totalorder %v1652, %v1655
    %vm1658 = vcmp.eq.s32.totalorder %v1653, %v1655
    %v1659 = vmul.u32 %v1651, 9
    %v1660 = vmul.u32 %v1652, 9
    %v1661 = vmul.u32 %v1653, 9
    %v1662 = vsub.s32 %v157, %v1659
    %v1663 = vsub.s32 %v158, %v1660
    %v1664 = vsub.s32 %v159, %v1661
    %v1665 = vmul.u32 %v1655, 17
    %v1666 = vsub.s32 %v162, %v1665
    %v1667 = vmul.u32 %v1662, 2
    %v1668 = vmul.u32 %v1663, 2
    %v1669 = vmul.u32 %v1664, 2
    %v1670 = vsub.s32 %v1667, 1
    %v1671 = vsub.s32 %v1668, 1
    %v1672 = vsub.s32 %v1669, 1
    %vm1673 = vcmp.eq.s32.totalorder %v1666, %v1670
    %vm1674 = vcmp.eq.s32.totalorder %v1666, %v1671
    %vm1675 = vcmp.eq.s32.totalorder %v1666, %v1672
    %vm1676 = vmand %vm1656, %vm1673
    %vm1677 = vmand %vm1657, %vm1674
    %vm1678 = vmand %vm1658, %vm1675
    %v1679 = vsel %vm1676, 1.0, 0.0
    %v1680 = vsel %vm1677, 1.0, 0.0
    %v1681 = vsel %vm1678, 1.0, 0.0
    %vm1682 = vcmp.eq.s32.totalorder %v1666, %v1667
    %vm1683 = vcmp.eq.s32.totalorder %v1666, %v1668
    %vm1684 = vcmp.eq.s32.totalorder %v1666, %v1669
    %vm1685 = vmand %vm1656, %vm1682
    %vm1686 = vmand %vm1657, %vm1683
    %vm1687 = vmand %vm1658, %vm1684
    %v1688 = vsel %vm1685, 1.0, 0.0
    %v1689 = vsel %vm1686, 1.0, 0.0
    %v1690 = vsel %vm1687, 1.0, 0.0
    %vm1691 = vcmask 277504
    %v1693 = vsel %vm1691, %v1679, 0
    %v1696 = vsel %vm1691, %v1680, 0
    %v1699 = vsel %vm1691, %v1681, 0
    %vm1701 = vcmask 1041408
    %v1703 = vsel %vm1701, %v1647, 0
    %1705 = vmatprep.subr.mxu0 0.0
    %1706 = vmatpush1.msra.mxu0 %v1643
    %1707 = vmatprep.subr.mxu0 0.0
    %1708 = vmatpush1.msra.mxu0 %v1644
    %1709 = vmatprep.subr.mxu0 0.0
    %1710 = vmatpush1.msra.mxu0 %v1645
    %1711 = vmatprep.subr.mxu0 0.0
    %1712 = vmatpush1.msra.mxu0 %v1646
    %1713 = vmatprep.subr.mxu0 0.0
    %1714 = vmatpush1.msra.mxu0 %v1703
    %1715 = vmatprep.subr.mxu0 0.0
    %1716 = vmatpush1.msra.mxu0 0.0
    %1717 = vmatprep.subr.mxu0 0.0
    %1718 = vmatpush1.msra.mxu0 0.0
    %1719 = vmatprep.subr.mxu0 0.0
    %1720 = vmatpush1.msra.mxu0 0.0
    %1721 = vmatprep.subr.mxu0 0.0
    %1722 = vmatpush1.msra.mxu0 0.0
    %1723 = vmatprep.subr.mxu0 0.0
    %1724 = vmatpush1.msra.mxu0 0.0
    %1725 = vmatprep.subr.mxu0 0.0
    %1726 = vmatpush1.msra.mxu0 0.0
    %1727 = vmatprep.subr.mxu0 0.0
    %1728 = vmatpush1.msra.mxu0 0.0
    %1729 = vmatprep.subr.mxu0 0.0
    %1730 = vmatpush1.msra.mxu0 0.0
    %1731 = vmatprep.subr.mxu0 0.0
    %1732 = vmatpush1.msra.mxu0 0.0
    %1733 = vmatprep.subr.mxu0 0.0
    %1734 = vmatpush1.msra.mxu0 0.0
    %1735 = vmatprep.subr.mxu0 0.0
    %1736 = vmatpush1.msra.mxu0 0.0
    %1737 = vmatprep.subr.mxu0 0.0
    %1738 = vmatpush1.msra.mxu0 0.0
    %1739 = vmatprep.subr.mxu0 0.0
    %1740 = vmatpush1.msra.mxu0 0.0
    %1741 = vmatprep.subr.mxu0 0.0
    %1742 = vmatpush1.msra.mxu0 0.0
    %1743 = vmatprep.subr.mxu0 0.0
    %1744 = vmatpush1.msra.mxu0 0.0
    %1745 = vmatprep.subr.mxu0 0.0
    %1746 = vmatpush1.msra.mxu0 0.0
    %1747 = vmatprep.subr.mxu0 0.0
    %1748 = vmatpush1.msra.mxu0 0.0
    %1749 = vmatprep.subr.mxu0 0.0
    %1750 = vmatpush1.msra.mxu0 0.0
    %1751 = vmatprep.subr.mxu0 0.0
    %1752 = vmatpush1.msra.mxu0 0.0
    %1753 = vmatprep.subr.mxu0 0.0
    %1754 = vmatpush1.msra.mxu0 0.0
    %1755 = vmatprep.subr.mxu0 0.0
    %1756 = vmatpush1.msra.mxu0 0.0
    %1757 = vmatprep.subr.mxu0 0.0
    %1758 = vmatpush1.msra.mxu0 0.0
    %1759 = vmatprep.subr.mxu0 0.0
    %1760 = vmatpush1.msra.mxu0 0.0
    %1761 = vmatprep.subr.mxu0 0.0
    %1762 = vmatpush1.msra.mxu0 0.0
    %1763 = vmatprep.subr.mxu0 0.0
    %1764 = vmatpush1.msra.mxu0 0.0
    %1765 = vmatprep.subr.mxu0 0.0
    %1766 = vmatpush1.msra.mxu0 0.0
    %1767 = vmatprep.subr.mxu0 0.0
    %1768 = vmatpush1.msra.mxu0 0.0
    %1769 = vmatprep.mubr.f32.mxu0 0.0
    %1770 = vmatmul.mubr.f32.gmra.mrb[0].mxu0 %v1693
    %v1771 = vpop.f32.mrb[0].mxu0
    %v1772 = vadd.f32 0.0, %v1771
    %v1773 = vpop.f32.mrb[0].mxu0
    %1774 = vmatprep.mubr.f32.mxu0 0.0
    %1775 = vmatmul.mubr.f32.gmra.mrb[0].mxu0 %v1696
    %v1776 = vpop.f32.mrb[0].mxu0
    %v1777 = vadd.f32 0.0, %v1776
    %v1778 = vpop.f32.mrb[0].mxu0
    %1779 = vmatprep.mubr.f32.mxu0 0.0
    %1780 = vmatmul.mubr.f32.gmra.mrb[0].mxu0 %v1699
    %v1781 = vpop.f32.mrb[0].mxu0
    %v1782 = vadd.f32 0.0, %v1781
    %v1783 = vpop.f32.mrb[0].mxu0
    %1784 = vdwg.mxu0
    %v1786 = vsel %vm1691, %v1688, 0
    %v1789 = vsel %vm1691, %v1689, 0
    %v1792 = vsel %vm1691, %v1690, 0
    %1794 = vmatprep.subr.mxu0 0.0
    %1795 = vmatpush1.msra.mxu0 %v1643
    %1796 = vmatprep.subr.mxu0 0.0
    %1797 = vmatpush1.msra.mxu0 %v1644
    %1798 = vmatprep.subr.mxu0 0.0
    %1799 = vmatpush1.msra.mxu0 %v1645
    %1800 = vmatprep.subr.mxu0 0.0
    %1801 = vmatpush1.msra.mxu0 %v1646
    %1802 = vmatprep.subr.mxu0 0.0
    %1803 = vmatpush1.msra.mxu0 %v1703
    %1804 = vmatprep.subr.mxu0 0.0
    %1805 = vmatpush1.msra.mxu0 0.0
    %1806 = vmatprep.subr.mxu0 0.0
    %1807 = vmatpush1.msra.mxu0 0.0
    %1808 = vmatprep.subr.mxu0 0.0
    %1809 = vmatpush1.msra.mxu0 0.0
    %1810 = vmatprep.subr.mxu0 0.0
    %1811 = vmatpush1.msra.mxu0 0.0
    %1812 = vmatprep.subr.mxu0 0.0
    %1813 = vmatpush1.msra.mxu0 0.0
    %1814 = vmatprep.subr.mxu0 0.0
    %1815 = vmatpush1.msra.mxu0 0.0
    %1816 = vmatprep.subr.mxu0 0.0
    %1817 = vmatpush1.msra.mxu0 0.0
    %1818 = vmatprep.subr.mxu0 0.0
    %1819 = vmatpush1.msra.mxu0 0.0
    %1820 = vmatprep.subr.mxu0 0.0
    %1821 = vmatpush1.msra.mxu0 0.0
    %1822 = vmatprep.subr.mxu0 0.0
    %1823 = vmatpush1.msra.mxu0 0.0
    %1824 = vmatprep.subr.mxu0 0.0
    %1825 = vmatpush1.msra.mxu0 0.0
    %1826 = vmatprep.subr.mxu0 0.0
    %1827 = vmatpush1.msra.mxu0 0.0
    %1828 = vmatprep.subr.mxu0 0.0
    %1829 = vmatpush1.msra.mxu0 0.0
    %1830 = vmatprep.subr.mxu0 0.0
    %1831 = vmatpush1.msra.mxu0 0.0
    %1832 = vmatprep.subr.mxu0 0.0
    %1833 = vmatpush1.msra.mxu0 0.0
    %1834 = vmatprep.subr.mxu0 0.0
    %1835 = vmatpush1.msra.mxu0 0.0
    %1836 = vmatprep.subr.mxu0 0.0
    %1837 = vmatpush1.msra.mxu0 0.0
    %1838 = vmatprep.subr.mxu0 0.0
    %1839 = vmatpush1.msra.mxu0 0.0
    %1840 = vmatprep.subr.mxu0 0.0
    %1841 = vmatpush1.msra.mxu0 0.0
    %1842 = vmatprep.subr.mxu0 0.0
    %1843 = vmatpush1.msra.mxu0 0.0
    %1844 = vmatprep.subr.mxu0 0.0
    %1845 = vmatpush1.msra.mxu0 0.0
    %1846 = vmatprep.subr.mxu0 0.0
    %1847 = vmatpush1.msra.mxu0 0.0
    %1848 = vmatprep.subr.mxu0 0.0
    %1849 = vmatpush1.msra.mxu0 0.0
    %1850 = vmatprep.subr.mxu0 0.0
    %1851 = vmatpush1.msra.mxu0 0.0
    %1852 = vmatprep.subr.mxu0 0.0
    %1853 = vmatpush1.msra.mxu0 0.0
    %1854 = vmatprep.subr.mxu0 0.0
    %1855 = vmatpush1.msra.mxu0 0.0
    %1856 = vmatprep.subr.mxu0 0.0
    %1857 = vmatpush1.msra.mxu0 0.0
    %1858 = vmatprep.mubr.f32.mxu0 0.0
    %1859 = vmatmul.mubr.f32.gmra.mrb[0].mxu0 %v1786
    %v1860 = vpop.f32.mrb[0].mxu0
    %v1861 = vadd.f32 0.0, %v1860
    %v1862 = vpop.f32.mrb[0].mxu0
    %1863 = vmatprep.mubr.f32.mxu0 0.0
    %1864 = vmatmul.mubr.f32.gmra.mrb[0].mxu0 %v1789
    %v1865 = vpop.f32.mrb[0].mxu0
    %v1866 = vadd.f32 0.0, %v1865
    %v1867 = vpop.f32.mrb[0].mxu0
    %1868 = vmatprep.mubr.f32.mxu0 0.0
    %1869 = vmatmul.mubr.f32.gmra.mrb[0].mxu0 %v1792
    %v1870 = vpop.f32.mrb[0].mxu0
    %v1871 = vadd.f32 0.0, %v1870
    %v1872 = vpop.f32.mrb[0].mxu0
    %1873 = vdwg.mxu0
    %v1874 = vmax.f32 %v1772, %v1861
    %v1875 = vmax.f32 %v1777, %v1866
    %v1876 = vmax.f32 %v1782, %v1871
    %v1877 = vld [vmem:[#allocation7 + $0x2] sm:$0x1]
    %v1878 = vld [vmem:[#allocation7 + $0x3] sm:$0x1]
    %v1879 = vld [vmem:[%s2] sm:$0xff]
    %v1880 = vld [vmem:[%s2 + $0x8] sm:$0xff]
    %v1881 = vld [vmem:[%s2 + $0x10] sm:$0xff]
    %v1882 = vld [vmem:[%s2 + $0x18] sm:$0xff]
    %v1883 = vld [vmem:[%s2 + $0x20] sm:$0xff]
    %v1884 = vld [vmem:[%s2 + $0x28] sm:$0xff]
    %v1885 = vld [vmem:[%s2 + $0x30] sm:$0xff]
    %v1886 = vld [vmem:[%s2 + $0x38] sm:$0xff]
    %v1887 = vld [vmem:[%s2 + $0x40] sm:$0xff]
    %v1888 = vld [vmem:[%s2 + $0x48] sm:$0xff]
    %v1889 = vld [vmem:[%s2 + $0x50] sm:$0xff]
    %v1890 = vld [vmem:[%s2 + $0x58] sm:$0xff]
    %v1891 = vld [vmem:[%s2 + $0x60] sm:$0xff]
    %v1892 = vld [vmem:[%s2 + $0x68] sm:$0xff]
    %v1893 = vld [vmem:[%s2 + $0x70] sm:$0xff]
    %v1894 = vld [vmem:[%s2 + $0x78] sm:$0xff]
    %v1896 = vsel %vm181, %v1874, 0
    %v1899 = vsel %vm181, %v1875, 0
    %v1902 = vsel %vm181, %v1876, 0
    %1904 = vmatprep.subr.mxu0 %v1880
    %1905 = vmatpush1.msra.mxu0 %v1879
    %1906 = vmatprep.subr.mxu0 %v1884
    %1907 = vmatpush1.msra.mxu0 %v1883
    %1908 = vmatprep.subr.mxu0 %v1888
    %1909 = vmatpush1.msra.mxu0 %v1887
    %1910 = vmatprep.subr.mxu0 %v1892
    %1911 = vmatpush1.msra.mxu0 %v1891
    %1912 = vmatprep.subr.mxu0 0.0
    %1913 = vmatpush1.msra.mxu0 0.0
    %1914 = vmatprep.subr.mxu0 0.0
    %1915 = vmatpush1.msra.mxu0 0.0
    %1916 = vmatprep.subr.mxu0 0.0
    %1917 = vmatpush1.msra.mxu0 0.0
    %1918 = vmatprep.subr.mxu0 0.0
    %1919 = vmatpush1.msra.mxu0 0.0
    %1920 = vmatprep.subr.mxu0 0.0
    %1921 = vmatpush1.msra.mxu0 0.0
    %1922 = vmatprep.subr.mxu0 0.0
    %1923 = vmatpush1.msra.mxu0 0.0
    %1924 = vmatprep.subr.mxu0 0.0
    %1925 = vmatpush1.msra.mxu0 0.0
    %1926 = vmatprep.subr.mxu0 0.0
    %1927 = vmatpush1.msra.mxu0 0.0
    %1928 = vmatprep.subr.mxu0 0.0
    %1929 = vmatpush1.msra.mxu0 0.0
    %1930 = vmatprep.subr.mxu0 0.0
    %1931 = vmatpush1.msra.mxu0 0.0
    %1932 = vmatprep.subr.mxu0 0.0
    %1933 = vmatpush1.msra.mxu0 0.0
    %1934 = vmatprep.subr.mxu0 0.0
    %1935 = vmatpush1.msra.mxu0 0.0
    %1936 = vmatprep.subr.mxu0 0.0
    %1937 = vmatpush1.msra.mxu0 0.0
    %1938 = vmatprep.subr.mxu0 0.0
    %1939 = vmatpush1.msra.mxu0 0.0
    %1940 = vmatprep.subr.mxu0 0.0
    %1941 = vmatpush1.msra.mxu0 0.0
    %1942 = vmatprep.subr.mxu0 0.0
    %1943 = vmatpush1.msra.mxu0 0.0
    %1944 = vmatprep.subr.mxu0 0.0
    %1945 = vmatpush1.msra.mxu0 0.0
    %1946 = vmatprep.subr.mxu0 0.0
    %1947 = vmatpush1.msra.mxu0 0.0
    %1948 = vmatprep.subr.mxu0 0.0
    %1949 = vmatpush1.msra.mxu0 0.0
    %1950 = vmatprep.subr.mxu0 0.0
    %1951 = vmatpush1.msra.mxu0 0.0
    %1952 = vmatprep.subr.mxu0 0.0
    %1953 = vmatpush1.msra.mxu0 0.0
    %1954 = vmatprep.subr.mxu0 0.0
    %1955 = vmatpush1.msra.mxu0 0.0
    %1956 = vmatprep.subr.mxu0 0.0
    %1957 = vmatpush1.msra.mxu0 0.0
    %1958 = vmatprep.subr.mxu0 0.0
    %1959 = vmatpush1.msra.mxu0 0.0
    %1960 = vmatprep.subr.mxu0 0.0
    %1961 = vmatpush1.msra.mxu0 0.0
    %1962 = vmatprep.subr.mxu0 0.0
    %1963 = vmatpush1.msra.mxu0 0.0
    %1964 = vmatprep.subr.mxu0 0.0
    %1965 = vmatpush1.msra.mxu0 0.0
    %1966 = vmatprep.subr.mxu0 0.0
    %1967 = vmatpush1.msra.mxu0 0.0
    %1968 = vmatprep.mubr.f32.mxu0 0.0
    %1969 = vmatmul.mubr.f32.gmra.mrb[0].mxu0 %v1896
    %v1970 = vpop.f32.mrb[0].mxu0
    %v1971 = vadd.f32 0.0, %v1970
    %v1972 = vpop.f32.mrb[0].mxu0
    %v1973 = vadd.f32 0.0, %v1972
    %1974 = vmatprep.mubr.f32.mxu0 0.0
    %1975 = vmatmul.mubr.f32.gmra.mrb[0].mxu0 %v1899
    %v1976 = vpop.f32.mrb[0].mxu0
    %v1977 = vadd.f32 0.0, %v1976
    %v1978 = vpop.f32.mrb[0].mxu0
    %v1979 = vadd.f32 0.0, %v1978
    %1980 = vmatprep.mubr.f32.mxu0 0.0
    %1981 = vmatmul.mubr.f32.gmra.mrb[0].mxu0 %v1902
    %v1982 = vpop.f32.mrb[0].mxu0
    %v1983 = vadd.f32 0.0, %v1982
    %v1984 = vpop.f32.mrb[0].mxu0
    %v1985 = vadd.f32 0.0, %v1984
    %1986 = vdwg.mxu0
    %1987 = vmatprep.subr.mxu0 %v1882
    %1988 = vmatpush1.msra.mxu0 %v1881
    %1989 = vmatprep.subr.mxu0 %v1886
    %1990 = vmatpush1.msra.mxu0 %v1885
    %1991 = vmatprep.subr.mxu0 %v1890
    %1992 = vmatpush1.msra.mxu0 %v1889
    %1993 = vmatprep.subr.mxu0 %v1894
    %1994 = vmatpush1.msra.mxu0 %v1893
    %1995 = vmatprep.subr.mxu0 0.0
    %1996 = vmatpush1.msra.mxu0 0.0
    %1997 = vmatprep.subr.mxu0 0.0
    %1998 = vmatpush1.msra.mxu0 0.0
    %1999 = vmatprep.subr.mxu0 0.0
    %2000 = vmatpush1.msra.mxu0 0.0
    %2001 = vmatprep.subr.mxu0 0.0
    %2002 = vmatpush1.msra.mxu0 0.0
    %2003 = vmatprep.subr.mxu0 0.0
    %2004 = vmatpush1.msra.mxu0 0.0
    %2005 = vmatprep.subr.mxu0 0.0
    %2006 = vmatpush1.msra.mxu0 0.0
    %2007 = vmatprep.subr.mxu0 0.0
    %2008 = vmatpush1.msra.mxu0 0.0
    %2009 = vmatprep.subr.mxu0 0.0
    %2010 = vmatpush1.msra.mxu0 0.0
    %2011 = vmatprep.subr.mxu0 0.0
    %2012 = vmatpush1.msra.mxu0 0.0
    %2013 = vmatprep.subr.mxu0 0.0
    %2014 = vmatpush1.msra.mxu0 0.0
    %2015 = vmatprep.subr.mxu0 0.0
    %2016 = vmatpush1.msra.mxu0 0.0
    %2017 = vmatprep.subr.mxu0 0.0
    %2018 = vmatpush1.msra.mxu0 0.0
    %2019 = vmatprep.subr.mxu0 0.0
    %2020 = vmatpush1.msra.mxu0 0.0
    %2021 = vmatprep.subr.mxu0 0.0
    %2022 = vmatpush1.msra.mxu0 0.0
    %2023 = vmatprep.subr.mxu0 0.0
    %2024 = vmatpush1.msra.mxu0 0.0
    %2025 = vmatprep.subr.mxu0 0.0
    %2026 = vmatpush1.msra.mxu0 0.0
    %2027 = vmatprep.subr.mxu0 0.0
    %2028 = vmatpush1.msra.mxu0 0.0
    %2029 = vmatprep.subr.mxu0 0.0
    %2030 = vmatpush1.msra.mxu0 0.0
    %2031 = vmatprep.subr.mxu0 0.0
    %2032 = vmatpush1.msra.mxu0 0.0
    %2033 = vmatprep.subr.mxu0 0.0
    %2034 = vmatpush1.msra.mxu0 0.0
    %2035 = vmatprep.subr.mxu0 0.0
    %2036 = vmatpush1.msra.mxu0 0.0
    %2037 = vmatprep.subr.mxu0 0.0
    %2038 = vmatpush1.msra.mxu0 0.0
    %2039 = vmatprep.subr.mxu0 0.0
    %2040 = vmatpush1.msra.mxu0 0.0
    %2041 = vmatprep.subr.mxu0 0.0
    %2042 = vmatpush1.msra.mxu0 0.0
    %2043 = vmatprep.subr.mxu0 0.0
    %2044 = vmatpush1.msra.mxu0 0.0
    %2045 = vmatprep.subr.mxu0 0.0
    %2046 = vmatpush1.msra.mxu0 0.0
    %2047 = vmatprep.subr.mxu0 0.0
    %2048 = vmatpush1.msra.mxu0 0.0
    %2049 = vmatprep.subr.mxu0 0.0
    %2050 = vmatpush1.msra.mxu0 0.0
    %2051 = vmatprep.mubr.f32.mxu0 0.0
    %2052 = vmatmul.mubr.f32.gmra.mrb[0].mxu0 %v1896
    %v2053 = vpop.f32.mrb[0].mxu0
    %v2054 = vadd.f32 0.0, %v2053
    %v2055 = vpop.f32.mrb[0].mxu0
    %v2056 = vadd.f32 0.0, %v2055
    %2057 = vmatprep.mubr.f32.mxu0 0.0
    %2058 = vmatmul.mubr.f32.gmra.mrb[0].mxu0 %v1899
    %v2059 = vpop.f32.mrb[0].mxu0
    %v2060 = vadd.f32 0.0, %v2059
    %v2061 = vpop.f32.mrb[0].mxu0
    %v2062 = vadd.f32 0.0, %v2061
    %2063 = vmatprep.mubr.f32.mxu0 0.0
    %2064 = vmatmul.mubr.f32.gmra.mrb[0].mxu0 %v1902
    %v2065 = vpop.f32.mrb[0].mxu0
    %v2066 = vadd.f32 0.0, %v2065
    %v2067 = vpop.f32.mrb[0].mxu0
    %v2068 = vadd.f32 0.0, %v2067
    %2069 = vdwg.mxu0
    %vm2070 = vcmp.ge.s32.totalorder %v157, 10
    %vm2071 = vcmp.ge.s32.totalorder %v158, 10
    %vm2072 = vcmp.ge.s32.totalorder %v159, 10
    %v2073 = vsel %vm2070, 1, 0
    %v2074 = vsel %vm2071, 1, 0
    %v2075 = vsel %vm2072, 1, 0
    %vm2076 = vcmp.ge.s32.totalorder %v162, 9
    %v2077 = vsel %vm2076, 1, 0
    %vm2078 = vcmp.eq.s32.totalorder %v2073, %v2077
    %vm2079 = vcmp.eq.s32.totalorder %v2074, %v2077
    %vm2080 = vcmp.eq.s32.totalorder %v2075, %v2077
    %v2081 = vmul.u32 %v2073, 10
    %v2082 = vmul.u32 %v2074, 10
    %v2083 = vmul.u32 %v2075, 10
    %v2084 = vsub.s32 %v157, %v2081
    %v2085 = vsub.s32 %v158, %v2082
    %v2086 = vsub.s32 %v159, %v2083
    %v2087 = vmul.u32 %v2077, 9
    %v2088 = vsub.s32 %v162, %v2087
    %v2089 = vadd.s32 %v2084, 4294967292
    %v2090 = vadd.s32 %v2085, 4294967292
    %v2091 = vadd.s32 %v2086, 4294967292
    %vm2092 = vcmp.eq.s32.totalorder %v2088, %v2089
    %vm2093 = vcmp.eq.s32.totalorder %v2088, %v2090
    %vm2094 = vcmp.eq.s32.totalorder %v2088, %v2091
    %vm2095 = vmand %vm2078, %vm2092
    %vm2096 = vmand %vm2079, %vm2093
    %vm2097 = vmand %vm2080, %vm2094
    %v2098 = vsel %vm2095, 1.0, 0.0
    %v2099 = vsel %vm2096, 1.0, 0.0
    %v2100 = vsel %vm2097, 1.0, 0.0
    %v2101 = vadd.s32 %v2084, 4294967293
    %v2102 = vadd.s32 %v2085, 4294967293
    %v2103 = vadd.s32 %v2086, 4294967293
    %vm2104 = vcmp.eq.s32.totalorder %v2088, %v2101
    %vm2105 = vcmp.eq.s32.totalorder %v2088, %v2102
    %vm2106 = vcmp.eq.s32.totalorder %v2088, %v2103
    %vm2107 = vmand %vm2078, %vm2104
    %vm2108 = vmand %vm2079, %vm2105
    %vm2109 = vmand %vm2080, %vm2106
    %v2110 = vsel %vm2107, 1.0, 0.0
    %v2111 = vsel %vm2108, 1.0, 0.0
    %v2112 = vsel %vm2109, 1.0, 0.0
    %2116 = vrot.lane.b32.xlu0 %v1971, 64
    %v2117 = vpop.permute.xlu0 %2116
    %2118 = vrot.lane.b32.xlu0 %v1977, 64
    %v2119 = vpop.permute.xlu0 %2118
    %2120 = vrot.lane.b32.xlu0 %v1983, 64
    %v2121 = vpop.permute.xlu0 %2120
    %vm2124 = vcmask 146432
    %v2126 = vsel %vm2124, %v2110, 0
    %v2129 = vsel %vm2124, %v2111, 0
    %v2132 = vsel %vm2124, %v2112, 0
    %v2134 = vsel %vm1701, %v2121, 0
    %2136 = vmatprep.subr.mxu0 0.0
    %2137 = vmatpush1.msra.mxu0 %v2117
    %2138 = vmatprep.subr.mxu0 0.0
    %2139 = vmatpush1.msra.mxu0 %v2119
    %2140 = vmatprep.subr.mxu0 0.0
    %2141 = vmatpush1.msra.mxu0 %v2134
    %2142 = vmatprep.subr.mxu0 0.0
    %2143 = vmatpush1.msra.mxu0 0.0
    %2144 = vmatprep.subr.mxu0 0.0
    %2145 = vmatpush1.msra.mxu0 0.0
    %2146 = vmatprep.subr.mxu0 0.0
    %2147 = vmatpush1.msra.mxu0 0.0
    %2148 = vmatprep.subr.mxu0 0.0
    %2149 = vmatpush1.msra.mxu0 0.0
    %2150 = vmatprep.subr.mxu0 0.0
    %2151 = vmatpush1.msra.mxu0 0.0
    %2152 = vmatprep.subr.mxu0 0.0
    %2153 = vmatpush1.msra.mxu0 0.0
    %2154 = vmatprep.subr.mxu0 0.0
    %2155 = vmatpush1.msra.mxu0 0.0
    %2156 = vmatprep.subr.mxu0 0.0
    %2157 = vmatpush1.msra.mxu0 0.0
    %2158 = vmatprep.subr.mxu0 0.0
    %2159 = vmatpush1.msra.mxu0 0.0
    %2160 = vmatprep.subr.mxu0 0.0
    %2161 = vmatpush1.msra.mxu0 0.0
    %2162 = vmatprep.subr.mxu0 0.0
    %2163 = vmatpush1.msra.mxu0 0.0
    %2164 = vmatprep.subr.mxu0 0.0
    %2165 = vmatpush1.msra.mxu0 0.0
    %2166 = vmatprep.subr.mxu0 0.0
    %2167 = vmatpush1.msra.mxu0 0.0
    %2168 = vmatprep.subr.mxu0 0.0
    %2169 = vmatpush1.msra.mxu0 0.0
    %2170 = vmatprep.subr.mxu0 0.0
    %2171 = vmatpush1.msra.mxu0 0.0
    %2172 = vmatprep.subr.mxu0 0.0
    %2173 = vmatpush1.msra.mxu0 0.0
    %2174 = vmatprep.subr.mxu0 0.0
    %2175 = vmatpush1.msra.mxu0 0.0
    %2176 = vmatprep.subr.mxu0 0.0
    %2177 = vmatpush1.msra.mxu0 0.0
    %2178 = vmatprep.subr.mxu0 0.0
    %2179 = vmatpush1.msra.mxu0 0.0
    %2180 = vmatprep.subr.mxu0 0.0
    %2181 = vmatpush1.msra.mxu0 0.0
    %2182 = vmatprep.subr.mxu0 0.0
    %2183 = vmatpush1.msra.mxu0 0.0
    %2184 = vmatprep.subr.mxu0 0.0
    %2185 = vmatpush1.msra.mxu0 0.0
    %2186 = vmatprep.subr.mxu0 0.0
    %2187 = vmatpush1.msra.mxu0 0.0
    %2188 = vmatprep.subr.mxu0 0.0
    %2189 = vmatpush1.msra.mxu0 0.0
    %2190 = vmatprep.subr.mxu0 0.0
    %2191 = vmatpush1.msra.mxu0 0.0
    %2192 = vmatprep.subr.mxu0 0.0
    %2193 = vmatpush1.msra.mxu0 0.0
    %2194 = vmatprep.subr.mxu0 0.0
    %2195 = vmatpush1.msra.mxu0 0.0
    %2196 = vmatprep.subr.mxu0 0.0
    %2197 = vmatpush1.msra.mxu0 0.0
    %2198 = vmatprep.subr.mxu0 0.0
    %2199 = vmatpush1.msra.mxu0 0.0
    %2200 = vmatprep.mubr.f32.mxu0 0.0
    %2201 = vmatmul.mubr.f32.gmra.mrb[0].mxu0 %v2126
    %v2202 = vpop.f32.mrb[0].mxu0
    %v2203 = vadd.f32 0.0, %v2202
    %v2204 = vpop.f32.mrb[0].mxu0
    %2205 = vmatprep.mubr.f32.mxu0 0.0
    %2206 = vmatmul.mubr.f32.gmra.mrb[0].mxu0 %v2129
    %v2207 = vpop.f32.mrb[0].mxu0
    %v2208 = vadd.f32 0.0, %v2207
    %v2209 = vpop.f32.mrb[0].mxu0
    %2210 = vmatprep.mubr.f32.mxu0 0.0
    %2211 = vmatmul.mubr.f32.gmra.mrb[0].mxu0 %v2132
    %v2212 = vpop.f32.mrb[0].mxu0
    %v2213 = vadd.f32 0.0, %v2212
    %v2214 = vpop.f32.mrb[0].mxu0
    %2215 = vdwg.mxu0
    %v2217 = vsel %vm2124, %v2098, 0
    %v2220 = vsel %vm2124, %v2099, 0
    %v2223 = vsel %vm2124, %v2100, 0
    %v2225 = vsel %vm1701, %v1983, 0
    %2227 = vmatprep.subr.mxu0 0.0
    %2228 = vmatpush1.msra.mxu0 %v1971
    %2229 = vmatprep.subr.mxu0 0.0
    %2230 = vmatpush1.msra.mxu0 %v1977
    %2231 = vmatprep.subr.mxu0 0.0
    %2232 = vmatpush1.msra.mxu0 %v2225
    %2233 = vmatprep.subr.mxu0 0.0
    %2234 = vmatpush1.msra.mxu0 0.0
    %2235 = vmatprep.subr.mxu0 0.0
    %2236 = vmatpush1.msra.mxu0 0.0
    %2237 = vmatprep.subr.mxu0 0.0
    %2238 = vmatpush1.msra.mxu0 0.0
    %2239 = vmatprep.subr.mxu0 0.0
    %2240 = vmatpush1.msra.mxu0 0.0
    %2241 = vmatprep.subr.mxu0 0.0
    %2242 = vmatpush1.msra.mxu0 0.0
    %2243 = vmatprep.subr.mxu0 0.0
    %2244 = vmatpush1.msra.mxu0 0.0
    %2245 = vmatprep.subr.mxu0 0.0
    %2246 = vmatpush1.msra.mxu0 0.0
    %2247 = vmatprep.subr.mxu0 0.0
    %2248 = vmatpush1.msra.mxu0 0.0
    %2249 = vmatprep.subr.mxu0 0.0
    %2250 = vmatpush1.msra.mxu0 0.0
    %2251 = vmatprep.subr.mxu0 0.0
    %2252 = vmatpush1.msra.mxu0 0.0
    %2253 = vmatprep.subr.mxu0 0.0
    %2254 = vmatpush1.msra.mxu0 0.0
    %2255 = vmatprep.subr.mxu0 0.0
    %2256 = vmatpush1.msra.mxu0 0.0
    %2257 = vmatprep.subr.mxu0 0.0
    %2258 = vmatpush1.msra.mxu0 0.0
    %2259 = vmatprep.subr.mxu0 0.0
    %2260 = vmatpush1.msra.mxu0 0.0
    %2261 = vmatprep.subr.mxu0 0.0
    %2262 = vmatpush1.msra.mxu0 0.0
    %2263 = vmatprep.subr.mxu0 0.0
    %2264 = vmatpush1.msra.mxu0 0.0
    %2265 = vmatprep.subr.mxu0 0.0
    %2266 = vmatpush1.msra.mxu0 0.0
    %2267 = vmatprep.subr.mxu0 0.0
    %2268 = vmatpush1.msra.mxu0 0.0
    %2269 = vmatprep.subr.mxu0 0.0
    %2270 = vmatpush1.msra.mxu0 0.0
    %2271 = vmatprep.subr.mxu0 0.0
    %2272 = vmatpush1.msra.mxu0 0.0
    %2273 = vmatprep.subr.mxu0 0.0
    %2274 = vmatpush1.msra.mxu0 0.0
    %2275 = vmatprep.subr.mxu0 0.0
    %2276 = vmatpush1.msra.mxu0 0.0
    %2277 = vmatprep.subr.mxu0 0.0
    %2278 = vmatpush1.msra.mxu0 0.0
    %2279 = vmatprep.subr.mxu0 0.0
    %2280 = vmatpush1.msra.mxu0 0.0
    %2281 = vmatprep.subr.mxu0 0.0
    %2282 = vmatpush1.msra.mxu0 0.0
    %2283 = vmatprep.subr.mxu0 0.0
    %2284 = vmatpush1.msra.mxu0 0.0
    %2285 = vmatprep.subr.mxu0 0.0
    %2286 = vmatpush1.msra.mxu0 0.0
    %2287 = vmatprep.subr.mxu0 0.0
    %2288 = vmatpush1.msra.mxu0 0.0
    %2289 = vmatprep.subr.mxu0 0.0
    %2290 = vmatpush1.msra.mxu0 0.0
    %2291 = vmatprep.mubr.f32.mxu0 0.0
    %2292 = vmatmul.mubr.f32.gmra.mrb[0].mxu0 %v2217
    %v2293 = vpop.f32.mrb[0].mxu0
    %v2294 = vadd.f32 %v2203, %v2293
    %v2295 = vpop.f32.mrb[0].mxu0
    %2296 = vmatprep.mubr.f32.mxu0 0.0
    %2297 = vmatmul.mubr.f32.gmra.mrb[0].mxu0 %v2220
    %v2298 = vpop.f32.mrb[0].mxu0
    %v2299 = vadd.f32 %v2208, %v2298
    %v2300 = vpop.f32.mrb[0].mxu0
    %2301 = vmatprep.mubr.f32.mxu0 0.0
    %2302 = vmatmul.mubr.f32.gmra.mrb[0].mxu0 %v2223
    %v2303 = vpop.f32.mrb[0].mxu0
    %v2304 = vadd.f32 %v2213, %v2303
    %v2305 = vpop.f32.mrb[0].mxu0
    %2306 = vdwg.mxu0
    %v2307 = vadd.s32 %v2084, 4294967294
    %v2308 = vadd.s32 %v2085, 4294967294
    %v2309 = vadd.s32 %v2086, 4294967294
    %vm2310 = vcmp.eq.s32.totalorder %v2088, %v2307
    %vm2311 = vcmp.eq.s32.totalorder %v2088, %v2308
    %vm2312 = vcmp.eq.s32.totalorder %v2088, %v2309
    %vm2313 = vmand %vm2078, %vm2310
    %vm2314 = vmand %vm2079, %vm2311
    %vm2315 = vmand %vm2080, %vm2312
    %v2316 = vsel %vm2313, 1.0, 0.0
    %v2317 = vsel %vm2314, 1.0, 0.0
    %v2318 = vsel %vm2315, 1.0, 0.0
    %v2320 = vsel %vm2124, %v2316, 0
    %v2323 = vsel %vm2124, %v2317, 0
    %v2326 = vsel %vm2124, %v2318, 0
    %v2329 = vsel %vm1701, %v1985, 0
    %2331 = vmatprep.subr.mxu0 0.0
    %2332 = vmatpush1.msra.mxu0 %v1973
    %2333 = vmatprep.subr.mxu0 0.0
    %2334 = vmatpush1.msra.mxu0 %v1979
    %2335 = vmatprep.subr.mxu0 0.0
    %2336 = vmatpush1.msra.mxu0 %v2329
    %2337 = vmatprep.subr.mxu0 0.0
    %2338 = vmatpush1.msra.mxu0 0.0
    %2339 = vmatprep.subr.mxu0 0.0
    %2340 = vmatpush1.msra.mxu0 0.0
    %2341 = vmatprep.subr.mxu0 0.0
    %2342 = vmatpush1.msra.mxu0 0.0
    %2343 = vmatprep.subr.mxu0 0.0
    %2344 = vmatpush1.msra.mxu0 0.0
    %2345 = vmatprep.subr.mxu0 0.0
    %2346 = vmatpush1.msra.mxu0 0.0
    %2347 = vmatprep.subr.mxu0 0.0
    %2348 = vmatpush1.msra.mxu0 0.0
    %2349 = vmatprep.subr.mxu0 0.0
    %2350 = vmatpush1.msra.mxu0 0.0
    %2351 = vmatprep.subr.mxu0 0.0
    %2352 = vmatpush1.msra.mxu0 0.0
    %2353 = vmatprep.subr.mxu0 0.0
    %2354 = vmatpush1.msra.mxu0 0.0
    %2355 = vmatprep.subr.mxu0 0.0
    %2356 = vmatpush1.msra.mxu0 0.0
    %2357 = vmatprep.subr.mxu0 0.0
    %2358 = vmatpush1.msra.mxu0 0.0
    %2359 = vmatprep.subr.mxu0 0.0
    %2360 = vmatpush1.msra.mxu0 0.0
    %2361 = vmatprep.subr.mxu0 0.0
    %2362 = vmatpush1.msra.mxu0 0.0
    %2363 = vmatprep.subr.mxu0 0.0
    %2364 = vmatpush1.msra.mxu0 0.0
    %2365 = vmatprep.subr.mxu0 0.0
    %2366 = vmatpush1.msra.mxu0 0.0
    %2367 = vmatprep.subr.mxu0 0.0
    %2368 = vmatpush1.msra.mxu0 0.0
    %2369 = vmatprep.subr.mxu0 0.0
    %2370 = vmatpush1.msra.mxu0 0.0
    %2371 = vmatprep.subr.mxu0 0.0
    %2372 = vmatpush1.msra.mxu0 0.0
    %2373 = vmatprep.subr.mxu0 0.0
    %2374 = vmatpush1.msra.mxu0 0.0
    %2375 = vmatprep.subr.mxu0 0.0
    %2376 = vmatpush1.msra.mxu0 0.0
    %2377 = vmatprep.subr.mxu0 0.0
    %2378 = vmatpush1.msra.mxu0 0.0
    %2379 = vmatprep.subr.mxu0 0.0
    %2380 = vmatpush1.msra.mxu0 0.0
    %2381 = vmatprep.subr.mxu0 0.0
    %2382 = vmatpush1.msra.mxu0 0.0
    %2383 = vmatprep.subr.mxu0 0.0
    %2384 = vmatpush1.msra.mxu0 0.0
    %2385 = vmatprep.subr.mxu0 0.0
    %2386 = vmatpush1.msra.mxu0 0.0
    %2387 = vmatprep.subr.mxu0 0.0
    %2388 = vmatpush1.msra.mxu0 0.0
    %2389 = vmatprep.subr.mxu0 0.0
    %2390 = vmatpush1.msra.mxu0 0.0
    %2391 = vmatprep.subr.mxu0 0.0
    %2392 = vmatpush1.msra.mxu0 0.0
    %2393 = vmatprep.subr.mxu0 0.0
    %2394 = vmatpush1.msra.mxu0 0.0
    %2395 = vmatprep.mubr.f32.mxu0 0.0
    %2396 = vmatmul.mubr.f32.gmra.mrb[0].mxu0 %v2320
    %v2397 = vpop.f32.mrb[0].mxu0
    %v2398 = vadd.f32 0.0, %v2397
    %v2399 = vpop.f32.mrb[0].mxu0
    %2400 = vmatprep.mubr.f32.mxu0 0.0
    %2401 = vmatmul.mubr.f32.gmra.mrb[0].mxu0 %v2323
    %v2402 = vpop.f32.mrb[0].mxu0
    %v2403 = vadd.f32 0.0, %v2402
    %v2404 = vpop.f32.mrb[0].mxu0
    %2405 = vmatprep.mubr.f32.mxu0 0.0
    %2406 = vmatmul.mubr.f32.gmra.mrb[0].mxu0 %v2326
    %v2407 = vpop.f32.mrb[0].mxu0
    %v2408 = vadd.f32 0.0, %v2407
    %v2409 = vpop.f32.mrb[0].mxu0
    %2410 = vdwg.mxu0
    %v2411 = vadd.f32 %v2294, %v2398
    %v2412 = vadd.f32 %v2299, %v2403
    %v2413 = vadd.f32 %v2304, %v2408
    %v2414 = vadd.s32 %v2084, 4294967295
    %v2415 = vadd.s32 %v2085, 4294967295
    %v2416 = vadd.s32 %v2086, 4294967295
    %vm2417 = vcmp.eq.s32.totalorder %v2088, %v2414
    %vm2418 = vcmp.eq.s32.totalorder %v2088, %v2415
    %vm2419 = vcmp.eq.s32.totalorder %v2088, %v2416
    %vm2420 = vmand %vm2078, %vm2417
    %vm2421 = vmand %vm2079, %vm2418
    %vm2422 = vmand %vm2080, %vm2419
    %v2423 = vsel %vm2420, 1.0, 0.0
    %v2424 = vsel %vm2421, 1.0, 0.0
    %v2425 = vsel %vm2422, 1.0, 0.0
    %2428 = vrot.lane.b32.xlu0 %v1973, 64
    %v2429 = vpop.permute.xlu0 %2428
    %2430 = vrot.lane.b32.xlu0 %v1979, 64
    %v2431 = vpop.permute.xlu0 %2430
    %2432 = vrot.lane.b32.xlu0 %v1985, 64
    %v2433 = vpop.permute.xlu0 %2432
    %v2437 = vsel %vm2124, %v2423, 0
    %v2440 = vsel %vm2124, %v2424, 0
    %v2443 = vsel %vm2124, %v2425, 0
    %v2445 = vsel %vm1701, %v2433, 0
    %2447 = vmatprep.subr.mxu0 0.0
    %2448 = vmatpush1.msra.mxu0 %v2429
    %2449 = vmatprep.subr.mxu0 0.0
    %2450 = vmatpush1.msra.mxu0 %v2431
    %2451 = vmatprep.subr.mxu0 0.0
    %2452 = vmatpush1.msra.mxu0 %v2445
    %2453 = vmatprep.subr.mxu0 0.0
    %2454 = vmatpush1.msra.mxu0 0.0
    %2455 = vmatprep.subr.mxu0 0.0
    %2456 = vmatpush1.msra.mxu0 0.0
    %2457 = vmatprep.subr.mxu0 0.0
    %2458 = vmatpush1.msra.mxu0 0.0
    %2459 = vmatprep.subr.mxu0 0.0
    %2460 = vmatpush1.msra.mxu0 0.0
    %2461 = vmatprep.subr.mxu0 0.0
    %2462 = vmatpush1.msra.mxu0 0.0
    %2463 = vmatprep.subr.mxu0 0.0
    %2464 = vmatpush1.msra.mxu0 0.0
    %2465 = vmatprep.subr.mxu0 0.0
    %2466 = vmatpush1.msra.mxu0 0.0
    %2467 = vmatprep.subr.mxu0 0.0
    %2468 = vmatpush1.msra.mxu0 0.0
    %2469 = vmatprep.subr.mxu0 0.0
    %2470 = vmatpush1.msra.mxu0 0.0
    %2471 = vmatprep.subr.mxu0 0.0
    %2472 = vmatpush1.msra.mxu0 0.0
    %2473 = vmatprep.subr.mxu0 0.0
    %2474 = vmatpush1.msra.mxu0 0.0
    %2475 = vmatprep.subr.mxu0 0.0
    %2476 = vmatpush1.msra.mxu0 0.0
    %2477 = vmatprep.subr.mxu0 0.0
    %2478 = vmatpush1.msra.mxu0 0.0
    %2479 = vmatprep.subr.mxu0 0.0
    %2480 = vmatpush1.msra.mxu0 0.0
    %2481 = vmatprep.subr.mxu0 0.0
    %2482 = vmatpush1.msra.mxu0 0.0
    %2483 = vmatprep.subr.mxu0 0.0
    %2484 = vmatpush1.msra.mxu0 0.0
    %2485 = vmatprep.subr.mxu0 0.0
    %2486 = vmatpush1.msra.mxu0 0.0
    %2487 = vmatprep.subr.mxu0 0.0
    %2488 = vmatpush1.msra.mxu0 0.0
    %2489 = vmatprep.subr.mxu0 0.0
    %2490 = vmatpush1.msra.mxu0 0.0
    %2491 = vmatprep.subr.mxu0 0.0
    %2492 = vmatpush1.msra.mxu0 0.0
    %2493 = vmatprep.subr.mxu0 0.0
    %2494 = vmatpush1.msra.mxu0 0.0
    %2495 = vmatprep.subr.mxu0 0.0
    %2496 = vmatpush1.msra.mxu0 0.0
    %2497 = vmatprep.subr.mxu0 0.0
    %2498 = vmatpush1.msra.mxu0 0.0
    %2499 = vmatprep.subr.mxu0 0.0
    %2500 = vmatpush1.msra.mxu0 0.0
    %2501 = vmatprep.subr.mxu0 0.0
    %2502 = vmatpush1.msra.mxu0 0.0
    %2503 = vmatprep.subr.mxu0 0.0
    %2504 = vmatpush1.msra.mxu0 0.0
    %2505 = vmatprep.subr.mxu0 0.0
    %2506 = vmatpush1.msra.mxu0 0.0
    %2507 = vmatprep.subr.mxu0 0.0
    %2508 = vmatpush1.msra.mxu0 0.0
    %2509 = vmatprep.subr.mxu0 0.0
    %2510 = vmatpush1.msra.mxu0 0.0
    %2511 = vmatprep.mubr.f32.mxu0 0.0
    %2512 = vmatmul.mubr.f32.gmra.mrb[0].mxu0 %v2437
    %v2513 = vpop.f32.mrb[0].mxu0
    %v2514 = vadd.f32 0.0, %v2513
    %v2515 = vpop.f32.mrb[0].mxu0
    %2516 = vmatprep.mubr.f32.mxu0 0.0
    %2517 = vmatmul.mubr.f32.gmra.mrb[0].mxu0 %v2440
    %v2518 = vpop.f32.mrb[0].mxu0
    %v2519 = vadd.f32 0.0, %v2518
    %v2520 = vpop.f32.mrb[0].mxu0
    %2521 = vmatprep.mubr.f32.mxu0 0.0
    %2522 = vmatmul.mubr.f32.gmra.mrb[0].mxu0 %v2443
    %v2523 = vpop.f32.mrb[0].mxu0
    %v2524 = vadd.f32 0.0, %v2523
    %v2525 = vpop.f32.mrb[0].mxu0
    %2526 = vdwg.mxu0
    %v2527 = vadd.f32 %v2411, %v2514
    %v2528 = vadd.f32 %v2412, %v2519
    %v2529 = vadd.f32 %v2413, %v2524
    %vm2530 = vcmp.eq.s32.totalorder %v2088, %v2084
    %vm2531 = vcmp.eq.s32.totalorder %v2088, %v2085
    %vm2532 = vcmp.eq.s32.totalorder %v2088, %v2086
    %vm2533 = vmand %vm2078, %vm2530
    %vm2534 = vmand %vm2079, %vm2531
    %vm2535 = vmand %vm2080, %vm2532
    %v2536 = vsel %vm2533, 1.0, 0.0
    %v2537 = vsel %vm2534, 1.0, 0.0
    %v2538 = vsel %vm2535, 1.0, 0.0
    %v2540 = vsel %vm2124, %v2536, 0
    %v2543 = vsel %vm2124, %v2537, 0
    %v2546 = vsel %vm2124, %v2538, 0
    %v2549 = vsel %vm1701, %v2066, 0
    %2551 = vmatprep.subr.mxu0 0.0
    %2552 = vmatpush1.msra.mxu0 %v2054
    %2553 = vmatprep.subr.mxu0 0.0
    %2554 = vmatpush1.msra.mxu0 %v2060
    %2555 = vmatprep.subr.mxu0 0.0
    %2556 = vmatpush1.msra.mxu0 %v2549
    %2557 = vmatprep.subr.mxu0 0.0
    %2558 = vmatpush1.msra.mxu0 0.0
    %2559 = vmatprep.subr.mxu0 0.0
    %2560 = vmatpush1.msra.mxu0 0.0
    %2561 = vmatprep.subr.mxu0 0.0
    %2562 = vmatpush1.msra.mxu0 0.0
    %2563 = vmatprep.subr.mxu0 0.0
    %2564 = vmatpush1.msra.mxu0 0.0
    %2565 = vmatprep.subr.mxu0 0.0
    %2566 = vmatpush1.msra.mxu0 0.0
    %2567 = vmatprep.subr.mxu0 0.0
    %2568 = vmatpush1.msra.mxu0 0.0
    %2569 = vmatprep.subr.mxu0 0.0
    %2570 = vmatpush1.msra.mxu0 0.0
    %2571 = vmatprep.subr.mxu0 0.0
    %2572 = vmatpush1.msra.mxu0 0.0
    %2573 = vmatprep.subr.mxu0 0.0
    %2574 = vmatpush1.msra.mxu0 0.0
    %2575 = vmatprep.subr.mxu0 0.0
    %2576 = vmatpush1.msra.mxu0 0.0
    %2577 = vmatprep.subr.mxu0 0.0
    %2578 = vmatpush1.msra.mxu0 0.0
    %2579 = vmatprep.subr.mxu0 0.0
    %2580 = vmatpush1.msra.mxu0 0.0
    %2581 = vmatprep.subr.mxu0 0.0
    %2582 = vmatpush1.msra.mxu0 0.0
    %2583 = vmatprep.subr.mxu0 0.0
    %2584 = vmatpush1.msra.mxu0 0.0
    %2585 = vmatprep.subr.mxu0 0.0
    %2586 = vmatpush1.msra.mxu0 0.0
    %2587 = vmatprep.subr.mxu0 0.0
    %2588 = vmatpush1.msra.mxu0 0.0
    %2589 = vmatprep.subr.mxu0 0.0
    %2590 = vmatpush1.msra.mxu0 0.0
    %2591 = vmatprep.subr.mxu0 0.0
    %2592 = vmatpush1.msra.mxu0 0.0
    %2593 = vmatprep.subr.mxu0 0.0
    %2594 = vmatpush1.msra.mxu0 0.0
    %2595 = vmatprep.subr.mxu0 0.0
    %2596 = vmatpush1.msra.mxu0 0.0
    %2597 = vmatprep.subr.mxu0 0.0
    %2598 = vmatpush1.msra.mxu0 0.0
    %2599 = vmatprep.subr.mxu0 0.0
    %2600 = vmatpush1.msra.mxu0 0.0
    %2601 = vmatprep.subr.mxu0 0.0
    %2602 = vmatpush1.msra.mxu0 0.0
    %2603 = vmatprep.subr.mxu0 0.0
    %2604 = vmatpush1.msra.mxu0 0.0
    %2605 = vmatprep.subr.mxu0 0.0
    %2606 = vmatpush1.msra.mxu0 0.0
    %2607 = vmatprep.subr.mxu0 0.0
    %2608 = vmatpush1.msra.mxu0 0.0
    %2609 = vmatprep.subr.mxu0 0.0
    %2610 = vmatpush1.msra.mxu0 0.0
    %2611 = vmatprep.subr.mxu0 0.0
    %2612 = vmatpush1.msra.mxu0 0.0
    %2613 = vmatprep.subr.mxu0 0.0
    %2614 = vmatpush1.msra.mxu0 0.0
    %2615 = vmatprep.mubr.f32.mxu0 0.0
    %2616 = vmatmul.mubr.f32.gmra.mrb[0].mxu0 %v2540
    %v2617 = vpop.f32.mrb[0].mxu0
    %v2618 = vadd.f32 0.0, %v2617
    %v2619 = vpop.f32.mrb[0].mxu0
    %2620 = vmatprep.mubr.f32.mxu0 0.0
    %2621 = vmatmul.mubr.f32.gmra.mrb[0].mxu0 %v2543
    %v2622 = vpop.f32.mrb[0].mxu0
    %v2623 = vadd.f32 0.0, %v2622
    %v2624 = vpop.f32.mrb[0].mxu0
    %2625 = vmatprep.mubr.f32.mxu0 0.0
    %2626 = vmatmul.mubr.f32.gmra.mrb[0].mxu0 %v2546
    %v2627 = vpop.f32.mrb[0].mxu0
    %v2628 = vadd.f32 0.0, %v2627
    %v2629 = vpop.f32.mrb[0].mxu0
    %2630 = vdwg.mxu0
    %v2631 = vadd.f32 %v2527, %v2618
    %v2632 = vadd.f32 %v2528, %v2623
    %v2633 = vadd.f32 %v2529, %v2628
    %v2634 = vadd.s32 %v2084, 1
    %v2635 = vadd.s32 %v2085, 1
    %v2636 = vadd.s32 %v2086, 1
    %vm2637 = vcmp.eq.s32.totalorder %v2088, %v2634
    %vm2638 = vcmp.eq.s32.totalorder %v2088, %v2635
    %vm2639 = vcmp.eq.s32.totalorder %v2088, %v2636
    %vm2640 = vmand %vm2078, %vm2637
    %vm2641 = vmand %vm2079, %vm2638
    %vm2642 = vmand %vm2080, %vm2639
    %v2643 = vsel %vm2640, 1.0, 0.0
    %v2644 = vsel %vm2641, 1.0, 0.0
    %v2645 = vsel %vm2642, 1.0, 0.0
    %2648 = vrot.lane.b32.xlu0 %v2054, 64
    %v2649 = vpop.permute.xlu0 %2648
    %2650 = vrot.lane.b32.xlu0 %v2060, 64
    %v2651 = vpop.permute.xlu0 %2650
    %2652 = vrot.lane.b32.xlu0 %v2066, 64
    %v2653 = vpop.permute.xlu0 %2652
    %v2657 = vsel %vm2124, %v2643, 0
    %v2660 = vsel %vm2124, %v2644, 0
    %v2663 = vsel %vm2124, %v2645, 0
    %v2665 = vsel %vm1701, %v2653, 0
    %2667 = vmatprep.subr.mxu0 0.0
    %2668 = vmatpush1.msra.mxu0 %v2649
    %2669 = vmatprep.subr.mxu0 0.0
    %2670 = vmatpush1.msra.mxu0 %v2651
    %2671 = vmatprep.subr.mxu0 0.0
    %2672 = vmatpush1.msra.mxu0 %v2665
    %2673 = vmatprep.subr.mxu0 0.0
    %2674 = vmatpush1.msra.mxu0 0.0
    %2675 = vmatprep.subr.mxu0 0.0
    %2676 = vmatpush1.msra.mxu0 0.0
    %2677 = vmatprep.subr.mxu0 0.0
    %2678 = vmatpush1.msra.mxu0 0.0
    %2679 = vmatprep.subr.mxu0 0.0
    %2680 = vmatpush1.msra.mxu0 0.0
    %2681 = vmatprep.subr.mxu0 0.0
    %2682 = vmatpush1.msra.mxu0 0.0
    %2683 = vmatprep.subr.mxu0 0.0
    %2684 = vmatpush1.msra.mxu0 0.0
    %2685 = vmatprep.subr.mxu0 0.0
    %2686 = vmatpush1.msra.mxu0 0.0
    %2687 = vmatprep.subr.mxu0 0.0
    %2688 = vmatpush1.msra.mxu0 0.0
    %2689 = vmatprep.subr.mxu0 0.0
    %2690 = vmatpush1.msra.mxu0 0.0
    %2691 = vmatprep.subr.mxu0 0.0
    %2692 = vmatpush1.msra.mxu0 0.0
    %2693 = vmatprep.subr.mxu0 0.0
    %2694 = vmatpush1.msra.mxu0 0.0
    %2695 = vmatprep.subr.mxu0 0.0
    %2696 = vmatpush1.msra.mxu0 0.0
    %2697 = vmatprep.subr.mxu0 0.0
    %2698 = vmatpush1.msra.mxu0 0.0
    %2699 = vmatprep.subr.mxu0 0.0
    %2700 = vmatpush1.msra.mxu0 0.0
    %2701 = vmatprep.subr.mxu0 0.0
    %2702 = vmatpush1.msra.mxu0 0.0
    %2703 = vmatprep.subr.mxu0 0.0
    %2704 = vmatpush1.msra.mxu0 0.0
    %2705 = vmatprep.subr.mxu0 0.0
    %2706 = vmatpush1.msra.mxu0 0.0
    %2707 = vmatprep.subr.mxu0 0.0
    %2708 = vmatpush1.msra.mxu0 0.0
    %2709 = vmatprep.subr.mxu0 0.0
    %2710 = vmatpush1.msra.mxu0 0.0
    %2711 = vmatprep.subr.mxu0 0.0
    %2712 = vmatpush1.msra.mxu0 0.0
    %2713 = vmatprep.subr.mxu0 0.0
    %2714 = vmatpush1.msra.mxu0 0.0
    %2715 = vmatprep.subr.mxu0 0.0
    %2716 = vmatpush1.msra.mxu0 0.0
    %2717 = vmatprep.subr.mxu0 0.0
    %2718 = vmatpush1.msra.mxu0 0.0
    %2719 = vmatprep.subr.mxu0 0.0
    %2720 = vmatpush1.msra.mxu0 0.0
    %2721 = vmatprep.subr.mxu0 0.0
    %2722 = vmatpush1.msra.mxu0 0.0
    %2723 = vmatprep.subr.mxu0 0.0
    %2724 = vmatpush1.msra.mxu0 0.0
    %2725 = vmatprep.subr.mxu0 0.0
    %2726 = vmatpush1.msra.mxu0 0.0
    %2727 = vmatprep.subr.mxu0 0.0
    %2728 = vmatpush1.msra.mxu0 0.0
    %2729 = vmatprep.subr.mxu0 0.0
    %2730 = vmatpush1.msra.mxu0 0.0
    %2731 = vmatprep.mubr.f32.mxu0 0.0
    %2732 = vmatmul.mubr.f32.gmra.mrb[0].mxu0 %v2657
    %v2733 = vpop.f32.mrb[0].mxu0
    %v2734 = vadd.f32 0.0, %v2733
    %v2735 = vpop.f32.mrb[0].mxu0
    %2736 = vmatprep.mubr.f32.mxu0 0.0
    %2737 = vmatmul.mubr.f32.gmra.mrb[0].mxu0 %v2660
    %v2738 = vpop.f32.mrb[0].mxu0
    %v2739 = vadd.f32 0.0, %v2738
    %v2740 = vpop.f32.mrb[0].mxu0
    %2741 = vmatprep.mubr.f32.mxu0 0.0
    %2742 = vmatmul.mubr.f32.gmra.mrb[0].mxu0 %v2663
    %v2743 = vpop.f32.mrb[0].mxu0
    %v2744 = vadd.f32 0.0, %v2743
    %v2745 = vpop.f32.mrb[0].mxu0
    %2746 = vdwg.mxu0
    %v2747 = vadd.f32 %v2631, %v2734
    %v2748 = vadd.f32 %v2632, %v2739
    %v2749 = vadd.f32 %v2633, %v2744
    %v2750 = vadd.s32 %v2084, 2
    %v2751 = vadd.s32 %v2085, 2
    %v2752 = vadd.s32 %v2086, 2
    %vm2753 = vcmp.eq.s32.totalorder %v2088, %v2750
    %vm2754 = vcmp.eq.s32.totalorder %v2088, %v2751
    %vm2755 = vcmp.eq.s32.totalorder %v2088, %v2752
    %vm2756 = vmand %vm2078, %vm2753
    %vm2757 = vmand %vm2079, %vm2754
    %vm2758 = vmand %vm2080, %vm2755
    %v2759 = vsel %vm2756, 1.0, 0.0
    %v2760 = vsel %vm2757, 1.0, 0.0
    %v2761 = vsel %vm2758, 1.0, 0.0
    %v2763 = vsel %vm2124, %v2759, 0
    %v2766 = vsel %vm2124, %v2760, 0
    %v2769 = vsel %vm2124, %v2761, 0
    %v2772 = vsel %vm1701, %v2068, 0
    %2774 = vmatprep.subr.mxu0 0.0
    %2775 = vmatpush1.msra.mxu0 %v2056
    %2776 = vmatprep.subr.mxu0 0.0
    %2777 = vmatpush1.msra.mxu0 %v2062
    %2778 = vmatprep.subr.mxu0 0.0
    %2779 = vmatpush1.msra.mxu0 %v2772
    %2780 = vmatprep.subr.mxu0 0.0
    %2781 = vmatpush1.msra.mxu0 0.0
    %2782 = vmatprep.subr.mxu0 0.0
    %2783 = vmatpush1.msra.mxu0 0.0
    %2784 = vmatprep.subr.mxu0 0.0
    %2785 = vmatpush1.msra.mxu0 0.0
    %2786 = vmatprep.subr.mxu0 0.0
    %2787 = vmatpush1.msra.mxu0 0.0
    %2788 = vmatprep.subr.mxu0 0.0
    %2789 = vmatpush1.msra.mxu0 0.0
    %2790 = vmatprep.subr.mxu0 0.0
    %2791 = vmatpush1.msra.mxu0 0.0
    %2792 = vmatprep.subr.mxu0 0.0
    %2793 = vmatpush1.msra.mxu0 0.0
    %2794 = vmatprep.subr.mxu0 0.0
    %2795 = vmatpush1.msra.mxu0 0.0
    %2796 = vmatprep.subr.mxu0 0.0
    %2797 = vmatpush1.msra.mxu0 0.0
    %2798 = vmatprep.subr.mxu0 0.0
    %2799 = vmatpush1.msra.mxu0 0.0
    %2800 = vmatprep.subr.mxu0 0.0
    %2801 = vmatpush1.msra.mxu0 0.0
    %2802 = vmatprep.subr.mxu0 0.0
    %2803 = vmatpush1.msra.mxu0 0.0
    %2804 = vmatprep.subr.mxu0 0.0
    %2805 = vmatpush1.msra.mxu0 0.0
    %2806 = vmatprep.subr.mxu0 0.0
    %2807 = vmatpush1.msra.mxu0 0.0
    %2808 = vmatprep.subr.mxu0 0.0
    %2809 = vmatpush1.msra.mxu0 0.0
    %2810 = vmatprep.subr.mxu0 0.0
    %2811 = vmatpush1.msra.mxu0 0.0
    %2812 = vmatprep.subr.mxu0 0.0
    %2813 = vmatpush1.msra.mxu0 0.0
    %2814 = vmatprep.subr.mxu0 0.0
    %2815 = vmatpush1.msra.mxu0 0.0
    %2816 = vmatprep.subr.mxu0 0.0
    %2817 = vmatpush1.msra.mxu0 0.0
    %2818 = vmatprep.subr.mxu0 0.0
    %2819 = vmatpush1.msra.mxu0 0.0
    %2820 = vmatprep.subr.mxu0 0.0
    %2821 = vmatpush1.msra.mxu0 0.0
    %2822 = vmatprep.subr.mxu0 0.0
    %2823 = vmatpush1.msra.mxu0 0.0
    %2824 = vmatprep.subr.mxu0 0.0
    %2825 = vmatpush1.msra.mxu0 0.0
    %2826 = vmatprep.subr.mxu0 0.0
    %2827 = vmatpush1.msra.mxu0 0.0
    %2828 = vmatprep.subr.mxu0 0.0
    %2829 = vmatpush1.msra.mxu0 0.0
    %2830 = vmatprep.subr.mxu0 0.0
    %2831 = vmatpush1.msra.mxu0 0.0
    %2832 = vmatprep.subr.mxu0 0.0
    %2833 = vmatpush1.msra.mxu0 0.0
    %2834 = vmatprep.subr.mxu0 0.0
    %2835 = vmatpush1.msra.mxu0 0.0
    %2836 = vmatprep.subr.mxu0 0.0
    %2837 = vmatpush1.msra.mxu0 0.0
    %2838 = vmatprep.mubr.f32.mxu0 0.0
    %2839 = vmatmul.mubr.f32.gmra.mrb[0].mxu0 %v2763
    %v2840 = vpop.f32.mrb[0].mxu0
    %v2841 = vadd.f32 0.0, %v2840
    %v2842 = vpop.f32.mrb[0].mxu0
    %2843 = vmatprep.mubr.f32.mxu0 0.0
    %2844 = vmatmul.mubr.f32.gmra.mrb[0].mxu0 %v2766
    %v2845 = vpop.f32.mrb[0].mxu0
    %v2846 = vadd.f32 0.0, %v2845
    %v2847 = vpop.f32.mrb[0].mxu0
    %2848 = vmatprep.mubr.f32.mxu0 0.0
    %2849 = vmatmul.mubr.f32.gmra.mrb[0].mxu0 %v2769
    %v2850 = vpop.f32.mrb[0].mxu0
    %v2851 = vadd.f32 0.0, %v2850
    %v2852 = vpop.f32.mrb[0].mxu0
    %2853 = vdwg.mxu0
    %v2854 = vadd.f32 %v2747, %v2841
    %v2855 = vadd.f32 %v2748, %v2846
    %v2856 = vadd.f32 %v2749, %v2851
    %v2857 = vadd.s32 %v2084, 3
    %v2858 = vadd.s32 %v2085, 3
    %v2859 = vadd.s32 %v2086, 3
    %vm2860 = vcmp.eq.s32.totalorder %v2088, %v2857
    %vm2861 = vcmp.eq.s32.totalorder %v2088, %v2858
    %vm2862 = vcmp.eq.s32.totalorder %v2088, %v2859
    %vm2863 = vmand %vm2078, %vm2860
    %vm2864 = vmand %vm2079, %vm2861
    %vm2865 = vmand %vm2080, %vm2862
    %v2866 = vsel %vm2863, 1.0, 0.0
    %v2867 = vsel %vm2864, 1.0, 0.0
    %v2868 = vsel %vm2865, 1.0, 0.0
    %2871 = vrot.lane.b32.xlu0 %v2056, 64
    %v2872 = vpop.permute.xlu0 %2871
    %2873 = vrot.lane.b32.xlu0 %v2062, 64
    %v2874 = vpop.permute.xlu0 %2873
    %2875 = vrot.lane.b32.xlu0 %v2068, 64
    %v2876 = vpop.permute.xlu0 %2875
    %v2880 = vsel %vm2124, %v2866, 0
    %v2883 = vsel %vm2124, %v2867, 0
    %v2886 = vsel %vm2124, %v2868, 0
    %v2888 = vsel %vm1701, %v2876, 0
    %2890 = vmatprep.subr.mxu0 0.0
    %2891 = vmatpush1.msra.mxu0 %v2872
    %2892 = vmatprep.subr.mxu0 0.0
    %2893 = vmatpush1.msra.mxu0 %v2874
    %2894 = vmatprep.subr.mxu0 0.0
    %2895 = vmatpush1.msra.mxu0 %v2888
    %2896 = vmatprep.subr.mxu0 0.0
    %2897 = vmatpush1.msra.mxu0 0.0
    %2898 = vmatprep.subr.mxu0 0.0
    %2899 = vmatpush1.msra.mxu0 0.0
    %2900 = vmatprep.subr.mxu0 0.0
    %2901 = vmatpush1.msra.mxu0 0.0
    %2902 = vmatprep.subr.mxu0 0.0
    %2903 = vmatpush1.msra.mxu0 0.0
    %2904 = vmatprep.subr.mxu0 0.0
    %2905 = vmatpush1.msra.mxu0 0.0
    %2906 = vmatprep.subr.mxu0 0.0
    %2907 = vmatpush1.msra.mxu0 0.0
    %2908 = vmatprep.subr.mxu0 0.0
    %2909 = vmatpush1.msra.mxu0 0.0
    %2910 = vmatprep.subr.mxu0 0.0
    %2911 = vmatpush1.msra.mxu0 0.0
    %2912 = vmatprep.subr.mxu0 0.0
    %2913 = vmatpush1.msra.mxu0 0.0
    %2914 = vmatprep.subr.mxu0 0.0
    %2915 = vmatpush1.msra.mxu0 0.0
    %2916 = vmatprep.subr.mxu0 0.0
    %2917 = vmatpush1.msra.mxu0 0.0
    %2918 = vmatprep.subr.mxu0 0.0
    %2919 = vmatpush1.msra.mxu0 0.0
    %2920 = vmatprep.subr.mxu0 0.0
    %2921 = vmatpush1.msra.mxu0 0.0
    %2922 = vmatprep.subr.mxu0 0.0
    %2923 = vmatpush1.msra.mxu0 0.0
    %2924 = vmatprep.subr.mxu0 0.0
    %2925 = vmatpush1.msra.mxu0 0.0
    %2926 = vmatprep.subr.mxu0 0.0
    %2927 = vmatpush1.msra.mxu0 0.0
    %2928 = vmatprep.subr.mxu0 0.0
    %2929 = vmatpush1.msra.mxu0 0.0
    %2930 = vmatprep.subr.mxu0 0.0
    %2931 = vmatpush1.msra.mxu0 0.0
    %2932 = vmatprep.subr.mxu0 0.0
    %2933 = vmatpush1.msra.mxu0 0.0
    %2934 = vmatprep.subr.mxu0 0.0
    %2935 = vmatpush1.msra.mxu0 0.0
    %2936 = vmatprep.subr.mxu0 0.0
    %2937 = vmatpush1.msra.mxu0 0.0
    %2938 = vmatprep.subr.mxu0 0.0
    %2939 = vmatpush1.msra.mxu0 0.0
    %2940 = vmatprep.subr.mxu0 0.0
    %2941 = vmatpush1.msra.mxu0 0.0
    %2942 = vmatprep.subr.mxu0 0.0
    %2943 = vmatpush1.msra.mxu0 0.0
    %2944 = vmatprep.subr.mxu0 0.0
    %2945 = vmatpush1.msra.mxu0 0.0
    %2946 = vmatprep.subr.mxu0 0.0
    %2947 = vmatpush1.msra.mxu0 0.0
    %2948 = vmatprep.subr.mxu0 0.0
    %2949 = vmatpush1.msra.mxu0 0.0
    %2950 = vmatprep.subr.mxu0 0.0
    %2951 = vmatpush1.msra.mxu0 0.0
    %2952 = vmatprep.subr.mxu0 0.0
    %2953 = vmatpush1.msra.mxu0 0.0
    %2954 = vmatprep.mubr.f32.mxu0 0.0
    %2955 = vmatmul.mubr.f32.gmra.mrb[0].mxu0 %v2880
    %v2956 = vpop.f32.mrb[0].mxu0
    %v2957 = vadd.f32 0.0, %v2956
    %v2958 = vpop.f32.mrb[0].mxu0
    %2959 = vmatprep.mubr.f32.mxu0 0.0
    %2960 = vmatmul.mubr.f32.gmra.mrb[0].mxu0 %v2883
    %v2961 = vpop.f32.mrb[0].mxu0
    %v2962 = vadd.f32 0.0, %v2961
    %v2963 = vpop.f32.mrb[0].mxu0
    %2964 = vmatprep.mubr.f32.mxu0 0.0
    %2965 = vmatmul.mubr.f32.gmra.mrb[0].mxu0 %v2886
    %v2966 = vpop.f32.mrb[0].mxu0
    %v2967 = vadd.f32 0.0, %v2966
    %v2968 = vpop.f32.mrb[0].mxu0
    %2969 = vdwg.mxu0
    %v2970 = vadd.f32 %v2854, %v2957
    %v2971 = vadd.f32 %v2855, %v2962
    %v2972 = vadd.f32 %v2856, %v2967
    %v2973 = vlaneseq
    %v2974 = vshrl.u32 %v2973, 7
    %v2975 = vsub.s32 0, %v2974
    %v2976 = vrot.slane %v1877, %v2975
    %v2977 = vmul.f32 %v2970, %v2976
    %v2978 = vmul.f32 %v2971, %v2976
    %v2979 = vmul.f32 %v2972, %v2976
    %v2980 = vlaneseq
    %v2981 = vshrl.u32 %v2980, 7
    %v2982 = vsub.s32 0, %v2981
    %v2983 = vrot.slane %v1878, %v2982
    %v2984 = vadd.f32 %v2977, %v2983
    %v2985 = vadd.f32 %v2978, %v2983
    %v2986 = vadd.f32 %v2979, %v2983
    %v2987 = vmax.f32 %v2984, 0.0
    %v2988 = vmax.f32 %v2985, 0.0
    %v2989 = vmax.f32 %v2986, 0.0
    %vm2990 = vcmp.ge.s32.totalorder %v157, 6
    %vm2991 = vcmp.ge.s32.totalorder %v158, 6
    %v2992 = vsel %vm2990, 1, 0
    %v2993 = vsel %vm2991, 1, 0
    %vm2994 = vcmp.ge.s32.totalorder %v162, 10
    %v2995 = vsel %vm2994, 1, 0
    %vm2996 = vcmp.eq.s32.totalorder %v2992, %v2995
    %vm2997 = vcmp.eq.s32.totalorder %v2993, %v2995
    %v2998 = vmul.u32 %v2992, 6
    %v2999 = vmul.u32 %v2993, 6
    %v3000 = vsub.s32 %v157, %v2998
    %v3001 = vsub.s32 %v158, %v2999
    %v3002 = vmul.u32 %v2995, 10
    %v3003 = vsub.s32 %v162, %v3002
    %v3004 = vmul.u32 %v3000, 2
    %v3005 = vmul.u32 %v3001, 2
    %v3006 = vsub.s32 %v3004, 1
    %v3007 = vsub.s32 %v3005, 1
    %vm3008 = vcmp.eq.s32.totalorder %v3003, %v3006
    %vm3009 = vcmp.eq.s32.totalorder %v3003, %v3007
    %vm3010 = vmand %vm2996, %vm3008
    %vm3011 = vmand %vm2997, %vm3009
    %v3012 = vsel %vm3010, 1.0, 0.0
    %v3013 = vsel %vm3011, 1.0, 0.0
    %vm3014 = vcmp.eq.s32.totalorder %v3003, %v3004
    %vm3015 = vcmp.eq.s32.totalorder %v3003, %v3005
    %vm3016 = vmand %vm2996, %vm3014
    %vm3017 = vmand %vm2997, %vm3015
    %v3018 = vsel %vm3016, 1.0, 0.0
    %v3019 = vsel %vm3017, 1.0, 0.0
    %vm3020 = vcmask 162816
    %v3022 = vsel %vm3020, %v3012, 0
    %v3025 = vsel %vm3020, %v3013, 0
    %v3028 = vsel %vm398, %v2989, 0
    %3030 = vmatprep.subr.mxu0 0.0
    %3031 = vmatpush1.msra.mxu0 %v2987
    %3032 = vmatprep.subr.mxu0 0.0
    %3033 = vmatpush1.msra.mxu0 %v2988
    %3034 = vmatprep.subr.mxu0 0.0
    %3035 = vmatpush1.msra.mxu0 %v3028
    %3036 = vmatprep.subr.mxu0 0.0
    %3037 = vmatpush1.msra.mxu0 0.0
    %3038 = vmatprep.subr.mxu0 0.0
    %3039 = vmatpush1.msra.mxu0 0.0
    %3040 = vmatprep.subr.mxu0 0.0
    %3041 = vmatpush1.msra.mxu0 0.0
    %3042 = vmatprep.subr.mxu0 0.0
    %3043 = vmatpush1.msra.mxu0 0.0
    %3044 = vmatprep.subr.mxu0 0.0
    %3045 = vmatpush1.msra.mxu0 0.0
    %3046 = vmatprep.subr.mxu0 0.0
    %3047 = vmatpush1.msra.mxu0 0.0
    %3048 = vmatprep.subr.mxu0 0.0
    %3049 = vmatpush1.msra.mxu0 0.0
    %3050 = vmatprep.subr.mxu0 0.0
    %3051 = vmatpush1.msra.mxu0 0.0
    %3052 = vmatprep.subr.mxu0 0.0
    %3053 = vmatpush1.msra.mxu0 0.0
    %3054 = vmatprep.subr.mxu0 0.0
    %3055 = vmatpush1.msra.mxu0 0.0
    %3056 = vmatprep.subr.mxu0 0.0
    %3057 = vmatpush1.msra.mxu0 0.0
    %3058 = vmatprep.subr.mxu0 0.0
    %3059 = vmatpush1.msra.mxu0 0.0
    %3060 = vmatprep.subr.mxu0 0.0
    %3061 = vmatpush1.msra.mxu0 0.0
    %3062 = vmatprep.subr.mxu0 0.0
    %3063 = vmatpush1.msra.mxu0 0.0
    %3064 = vmatprep.subr.mxu0 0.0
    %3065 = vmatpush1.msra.mxu0 0.0
    %3066 = vmatprep.subr.mxu0 0.0
    %3067 = vmatpush1.msra.mxu0 0.0
    %3068 = vmatprep.subr.mxu0 0.0
    %3069 = vmatpush1.msra.mxu0 0.0
    %3070 = vmatprep.subr.mxu0 0.0
    %3071 = vmatpush1.msra.mxu0 0.0
    %3072 = vmatprep.subr.mxu0 0.0
    %3073 = vmatpush1.msra.mxu0 0.0
    %3074 = vmatprep.subr.mxu0 0.0
    %3075 = vmatpush1.msra.mxu0 0.0
    %3076 = vmatprep.subr.mxu0 0.0
    %3077 = vmatpush1.msra.mxu0 0.0
    %3078 = vmatprep.subr.mxu0 0.0
    %3079 = vmatpush1.msra.mxu0 0.0
    %3080 = vmatprep.subr.mxu0 0.0
    %3081 = vmatpush1.msra.mxu0 0.0
    %3082 = vmatprep.subr.mxu0 0.0
    %3083 = vmatpush1.msra.mxu0 0.0
    %3084 = vmatprep.subr.mxu0 0.0
    %3085 = vmatpush1.msra.mxu0 0.0
    %3086 = vmatprep.subr.mxu0 0.0
    %3087 = vmatpush1.msra.mxu0 0.0
    %3088 = vmatprep.subr.mxu0 0.0
    %3089 = vmatpush1.msra.mxu0 0.0
    %3090 = vmatprep.subr.mxu0 0.0
    %3091 = vmatpush1.msra.mxu0 0.0
    %3092 = vmatprep.subr.mxu0 0.0
    %3093 = vmatpush1.msra.mxu0 0.0
    %3094 = vmatprep.mubr.f32.mxu0 0.0
    %3095 = vmatmul.mubr.f32.gmra.mrb[0].mxu0 %v3022
    %v3096 = vpop.f32.mrb[0].mxu0
    %v3097 = vadd.f32 0.0, %v3096
    %v3098 = vpop.f32.mrb[0].mxu0
    %3099 = vmatprep.mubr.f32.mxu0 0.0
    %3100 = vmatmul.mubr.f32.gmra.mrb[0].mxu0 %v3025
    %v3101 = vpop.f32.mrb[0].mxu0
    %v3102 = vadd.f32 0.0, %v3101
    %v3103 = vpop.f32.mrb[0].mxu0
    %3104 = vdwg.mxu0
    %v3106 = vsel %vm3020, %v3018, 0
    %v3109 = vsel %vm3020, %v3019, 0
    %3111 = vmatprep.subr.mxu0 0.0
    %3112 = vmatpush1.msra.mxu0 %v2987
    %3113 = vmatprep.subr.mxu0 0.0
    %3114 = vmatpush1.msra.mxu0 %v2988
    %3115 = vmatprep.subr.mxu0 0.0
    %3116 = vmatpush1.msra.mxu0 %v3028
    %3117 = vmatprep.subr.mxu0 0.0
    %3118 = vmatpush1.msra.mxu0 0.0
    %3119 = vmatprep.subr.mxu0 0.0
    %3120 = vmatpush1.msra.mxu0 0.0
    %3121 = vmatprep.subr.mxu0 0.0
    %3122 = vmatpush1.msra.mxu0 0.0
    %3123 = vmatprep.subr.mxu0 0.0
    %3124 = vmatpush1.msra.mxu0 0.0
    %3125 = vmatprep.subr.mxu0 0.0
    %3126 = vmatpush1.msra.mxu0 0.0
    %3127 = vmatprep.subr.mxu0 0.0
    %3128 = vmatpush1.msra.mxu0 0.0
    %3129 = vmatprep.subr.mxu0 0.0
    %3130 = vmatpush1.msra.mxu0 0.0
    %3131 = vmatprep.subr.mxu0 0.0
    %3132 = vmatpush1.msra.mxu0 0.0
    %3133 = vmatprep.subr.mxu0 0.0
    %3134 = vmatpush1.msra.mxu0 0.0
    %3135 = vmatprep.subr.mxu0 0.0
    %3136 = vmatpush1.msra.mxu0 0.0
    %3137 = vmatprep.subr.mxu0 0.0
    %3138 = vmatpush1.msra.mxu0 0.0
    %3139 = vmatprep.subr.mxu0 0.0
    %3140 = vmatpush1.msra.mxu0 0.0
    %3141 = vmatprep.subr.mxu0 0.0
    %3142 = vmatpush1.msra.mxu0 0.0
    %3143 = vmatprep.subr.mxu0 0.0
    %3144 = vmatpush1.msra.mxu0 0.0
    %3145 = vmatprep.subr.mxu0 0.0
    %3146 = vmatpush1.msra.mxu0 0.0
    %3147 = vmatprep.subr.mxu0 0.0
    %3148 = vmatpush1.msra.mxu0 0.0
    %3149 = vmatprep.subr.mxu0 0.0
    %3150 = vmatpush1.msra.mxu0 0.0
    %3151 = vmatprep.subr.mxu0 0.0
    %3152 = vmatpush1.msra.mxu0 0.0
    %3153 = vmatprep.subr.mxu0 0.0
    %3154 = vmatpush1.msra.mxu0 0.0
    %3155 = vmatprep.subr.mxu0 0.0
    %3156 = vmatpush1.msra.mxu0 0.0
    %3157 = vmatprep.subr.mxu0 0.0
    %3158 = vmatpush1.msra.mxu0 0.0
    %3159 = vmatprep.subr.mxu0 0.0
    %3160 = vmatpush1.msra.mxu0 0.0
    %3161 = vmatprep.subr.mxu0 0.0
    %3162 = vmatpush1.msra.mxu0 0.0
    %3163 = vmatprep.subr.mxu0 0.0
    %3164 = vmatpush1.msra.mxu0 0.0
    %3165 = vmatprep.subr.mxu0 0.0
    %3166 = vmatpush1.msra.mxu0 0.0
    %3167 = vmatprep.subr.mxu0 0.0
    %3168 = vmatpush1.msra.mxu0 0.0
    %3169 = vmatprep.subr.mxu0 0.0
    %3170 = vmatpush1.msra.mxu0 0.0
    %3171 = vmatprep.subr.mxu0 0.0
    %3172 = vmatpush1.msra.mxu0 0.0
    %3173 = vmatprep.subr.mxu0 0.0
    %3174 = vmatpush1.msra.mxu0 0.0
    %3175 = vmatprep.mubr.f32.mxu0 0.0
    %3176 = vmatmul.mubr.f32.gmra.mrb[0].mxu0 %v3106
    %v3177 = vpop.f32.mrb[0].mxu0
    %v3178 = vadd.f32 0.0, %v3177
    %v3179 = vpop.f32.mrb[0].mxu0
    %3180 = vmatprep.mubr.f32.mxu0 0.0
    %3181 = vmatmul.mubr.f32.gmra.mrb[0].mxu0 %v3109
    %v3182 = vpop.f32.mrb[0].mxu0
    %v3183 = vadd.f32 0.0, %v3182
    %v3184 = vpop.f32.mrb[0].mxu0
    %3185 = vdwg.mxu0
    %v3186 = vmax.f32 %v3097, %v3178
    %v3187 = vmax.f32 %v3102, %v3183
    %v3188 = vld [vmem:[#allocation7 + $0x4] sm:$0x1]
    %v3189 = vld [vmem:[#allocation7 + $0x5] sm:$0x1]
    %v3190 = vld [vmem:[#allocation5] sm:$0xff]
    %v3191 = vld [vmem:[#allocation5 + $0x8] sm:$0xff]
    %v3192 = vld [vmem:[#allocation5 + $0x10] sm:$0xff]
    %v3193 = vld [vmem:[#allocation5 + $0x18] sm:$0xff]
    %v3194 = vld [vmem:[#allocation5 + $0x20] sm:$0xff]
    %v3195 = vld [vmem:[#allocation5 + $0x28] sm:$0xff]
    %v3196 = vld [vmem:[#allocation5 + $0x30] sm:$0xff]
    %v3197 = vld [vmem:[#allocation5 + $0x38] sm:$0xff]
    %vm3198 = vcmask 523264
    %v3200 = vsel %vm3198, %v3186, 0
    %v3203 = vsel %vm3198, %v3187, 0
    %3205 = vmatprep.subr.mxu0 0.0
    %3206 = vmatpush1.msra.mxu0 %v3190
    %3207 = vmatprep.subr.mxu0 0.0
    %3208 = vmatpush1.msra.mxu0 %v3191
    %3209 = vmatprep.subr.mxu0 0.0
    %3210 = vmatpush1.msra.mxu0 %v3192
    %3211 = vmatprep.subr.mxu0 0.0
    %3212 = vmatpush1.msra.mxu0 %v3193
    %3213 = vmatprep.subr.mxu0 0.0
    %3214 = vmatpush1.msra.mxu0 %v3194
    %3215 = vmatprep.subr.mxu0 0.0
    %3216 = vmatpush1.msra.mxu0 %v3195
    %3217 = vmatprep.subr.mxu0 0.0
    %3218 = vmatpush1.msra.mxu0 %v3196
    %3219 = vmatprep.subr.mxu0 0.0
    %3220 = vmatpush1.msra.mxu0 %v3197
    %3221 = vmatprep.subr.mxu0 0.0
    %3222 = vmatpush1.msra.mxu0 0.0
    %3223 = vmatprep.subr.mxu0 0.0
    %3224 = vmatpush1.msra.mxu0 0.0
    %3225 = vmatprep.subr.mxu0 0.0
    %3226 = vmatpush1.msra.mxu0 0.0
    %3227 = vmatprep.subr.mxu0 0.0
    %3228 = vmatpush1.msra.mxu0 0.0
    %3229 = vmatprep.subr.mxu0 0.0
    %3230 = vmatpush1.msra.mxu0 0.0
    %3231 = vmatprep.subr.mxu0 0.0
    %3232 = vmatpush1.msra.mxu0 0.0
    %3233 = vmatprep.subr.mxu0 0.0
    %3234 = vmatpush1.msra.mxu0 0.0
    %3235 = vmatprep.subr.mxu0 0.0
    %3236 = vmatpush1.msra.mxu0 0.0
    %3237 = vmatprep.subr.mxu0 0.0
    %3238 = vmatpush1.msra.mxu0 0.0
    %3239 = vmatprep.subr.mxu0 0.0
    %3240 = vmatpush1.msra.mxu0 0.0
    %3241 = vmatprep.subr.mxu0 0.0
    %3242 = vmatpush1.msra.mxu0 0.0
    %3243 = vmatprep.subr.mxu0 0.0
    %3244 = vmatpush1.msra.mxu0 0.0
    %3245 = vmatprep.subr.mxu0 0.0
    %3246 = vmatpush1.msra.mxu0 0.0
    %3247 = vmatprep.subr.mxu0 0.0
    %3248 = vmatpush1.msra.mxu0 0.0
    %3249 = vmatprep.subr.mxu0 0.0
    %3250 = vmatpush1.msra.mxu0 0.0
    %3251 = vmatprep.subr.mxu0 0.0
    %3252 = vmatpush1.msra.mxu0 0.0
    %3253 = vmatprep.subr.mxu0 0.0
    %3254 = vmatpush1.msra.mxu0 0.0
    %3255 = vmatprep.subr.mxu0 0.0
    %3256 = vmatpush1.msra.mxu0 0.0
    %3257 = vmatprep.subr.mxu0 0.0
    %3258 = vmatpush1.msra.mxu0 0.0
    %3259 = vmatprep.subr.mxu0 0.0
    %3260 = vmatpush1.msra.mxu0 0.0
    %3261 = vmatprep.subr.mxu0 0.0
    %3262 = vmatpush1.msra.mxu0 0.0
    %3263 = vmatprep.subr.mxu0 0.0
    %3264 = vmatpush1.msra.mxu0 0.0
    %3265 = vmatprep.subr.mxu0 0.0
    %3266 = vmatpush1.msra.mxu0 0.0
    %3267 = vmatprep.subr.mxu0 0.0
    %3268 = vmatpush1.msra.mxu0 0.0
    %3269 = vmatprep.mubr.f32.mxu0 0.0
    %3270 = vmatmul.mubr.f32.gmra.mrb[0].mxu0 %v3200
    %v3271 = vpop.f32.mrb[0].mxu0
    %v3272 = vadd.f32 0.0, %v3271
    %v3273 = vpop.f32.mrb[0].mxu0
    %3274 = vmatprep.mubr.f32.mxu0 0.0
    %3275 = vmatmul.mubr.f32.gmra.mrb[0].mxu0 %v3203
    %v3276 = vpop.f32.mrb[0].mxu0
    %v3277 = vadd.f32 0.0, %v3276
    %v3278 = vpop.f32.mrb[0].mxu0
    %3279 = vdwg.mxu0
    %vm3280 = vcmp.ge.s32.totalorder %v157, 7
    %vm3281 = vcmp.ge.s32.totalorder %v158, 7
    %v3282 = vsel %vm3280, 1, 0
    %v3283 = vsel %vm3281, 1, 0
    %vm3284 = vcmp.ge.s32.totalorder %v162, 6
    %v3285 = vsel %vm3284, 1, 0
    %vm3286 = vcmp.eq.s32.totalorder %v3282, %v3285
    %vm3287 = vcmp.eq.s32.totalorder %v3283, %v3285
    %v3288 = vmul.u32 %v3282, 7
    %v3289 = vmul.u32 %v3283, 7
    %v3290 = vsub.s32 %v157, %v3288
    %v3291 = vsub.s32 %v158, %v3289
    %v3292 = vmul.u32 %v3285, 6
    %v3293 = vsub.s32 %v162, %v3292
    %v3294 = vadd.s32 %v3290, 4294967292
    %v3295 = vadd.s32 %v3291, 4294967292
    %vm3296 = vcmp.eq.s32.totalorder %v3293, %v3294
    %vm3297 = vcmp.eq.s32.totalorder %v3293, %v3295
    %vm3298 = vmand %vm3286, %vm3296
    %vm3299 = vmand %vm3287, %vm3297
    %v3300 = vsel %vm3298, 1.0, 0.0
    %v3301 = vsel %vm3299, 1.0, 0.0
    %v3302 = vadd.s32 %v3290, 4294967293
    %v3303 = vadd.s32 %v3291, 4294967293
    %vm3304 = vcmp.eq.s32.totalorder %v3293, %v3302
    %vm3305 = vcmp.eq.s32.totalorder %v3293, %v3303
    %vm3306 = vmand %vm3286, %vm3304
    %vm3307 = vmand %vm3287, %vm3305
    %v3308 = vsel %vm3306, 1.0, 0.0
    %v3309 = vsel %vm3307, 1.0, 0.0
    %3312 = vrot.lane.b32.xlu0 %v3272, 112
    %v3313 = vpop.permute.xlu0 %3312
    %3314 = vrot.lane.b32.xlu0 %v3277, 112
    %v3315 = vpop.permute.xlu0 %3314
    %vm3317 = vcmask 97280
    %v3319 = vsel %vm3317, %v3308, 0
    %v3322 = vsel %vm3317, %v3309, 0
    %v3324 = vsel %vm398, %v3315, 0
    %3326 = vmatprep.subr.mxu0 0.0
    %3327 = vmatpush1.msra.mxu0 %v3313
    %3328 = vmatprep.subr.mxu0 0.0
    %3329 = vmatpush1.msra.mxu0 %v3324
    %3330 = vmatprep.subr.mxu0 0.0
    %3331 = vmatpush1.msra.mxu0 0.0
    %3332 = vmatprep.subr.mxu0 0.0
    %3333 = vmatpush1.msra.mxu0 0.0
    %3334 = vmatprep.subr.mxu0 0.0
    %3335 = vmatpush1.msra.mxu0 0.0
    %3336 = vmatprep.subr.mxu0 0.0
    %3337 = vmatpush1.msra.mxu0 0.0
    %3338 = vmatprep.subr.mxu0 0.0
    %3339 = vmatpush1.msra.mxu0 0.0
    %3340 = vmatprep.subr.mxu0 0.0
    %3341 = vmatpush1.msra.mxu0 0.0
    %3342 = vmatprep.subr.mxu0 0.0
    %3343 = vmatpush1.msra.mxu0 0.0
    %3344 = vmatprep.subr.mxu0 0.0
    %3345 = vmatpush1.msra.mxu0 0.0
    %3346 = vmatprep.subr.mxu0 0.0
    %3347 = vmatpush1.msra.mxu0 0.0
    %3348 = vmatprep.subr.mxu0 0.0
    %3349 = vmatpush1.msra.mxu0 0.0
    %3350 = vmatprep.subr.mxu0 0.0
    %3351 = vmatpush1.msra.mxu0 0.0
    %3352 = vmatprep.subr.mxu0 0.0
    %3353 = vmatpush1.msra.mxu0 0.0
    %3354 = vmatprep.subr.mxu0 0.0
    %3355 = vmatpush1.msra.mxu0 0.0
    %3356 = vmatprep.subr.mxu0 0.0
    %3357 = vmatpush1.msra.mxu0 0.0
    %3358 = vmatprep.subr.mxu0 0.0
    %3359 = vmatpush1.msra.mxu0 0.0
    %3360 = vmatprep.subr.mxu0 0.0
    %3361 = vmatpush1.msra.mxu0 0.0
    %3362 = vmatprep.subr.mxu0 0.0
    %3363 = vmatpush1.msra.mxu0 0.0
    %3364 = vmatprep.subr.mxu0 0.0
    %3365 = vmatpush1.msra.mxu0 0.0
    %3366 = vmatprep.subr.mxu0 0.0
    %3367 = vmatpush1.msra.mxu0 0.0
    %3368 = vmatprep.subr.mxu0 0.0
    %3369 = vmatpush1.msra.mxu0 0.0
    %3370 = vmatprep.subr.mxu0 0.0
    %3371 = vmatpush1.msra.mxu0 0.0
    %3372 = vmatprep.subr.mxu0 0.0
    %3373 = vmatpush1.msra.mxu0 0.0
    %3374 = vmatprep.subr.mxu0 0.0
    %3375 = vmatpush1.msra.mxu0 0.0
    %3376 = vmatprep.subr.mxu0 0.0
    %3377 = vmatpush1.msra.mxu0 0.0
    %3378 = vmatprep.subr.mxu0 0.0
    %3379 = vmatpush1.msra.mxu0 0.0
    %3380 = vmatprep.subr.mxu0 0.0
    %3381 = vmatpush1.msra.mxu0 0.0
    %3382 = vmatprep.subr.mxu0 0.0
    %3383 = vmatpush1.msra.mxu0 0.0
    %3384 = vmatprep.subr.mxu0 0.0
    %3385 = vmatpush1.msra.mxu0 0.0
    %3386 = vmatprep.subr.mxu0 0.0
    %3387 = vmatpush1.msra.mxu0 0.0
    %3388 = vmatprep.subr.mxu0 0.0
    %3389 = vmatpush1.msra.mxu0 0.0
    %3390 = vmatprep.mubr.f32.mxu0 0.0
    %3391 = vmatmul.mubr.f32.gmra.mrb[0].mxu0 %v3319
    %v3392 = vpop.f32.mrb[0].mxu0
    %v3393 = vadd.f32 0.0, %v3392
    %v3394 = vpop.f32.mrb[0].mxu0
    %3395 = vmatprep.mubr.f32.mxu0 0.0
    %3396 = vmatmul.mubr.f32.gmra.mrb[0].mxu0 %v3322
    %v3397 = vpop.f32.mrb[0].mxu0
    %v3398 = vadd.f32 0.0, %v3397
    %v3399 = vpop.f32.mrb[0].mxu0
    %3400 = vdwg.mxu0
    %v3402 = vsel %vm3317, %v3300, 0
    %v3405 = vsel %vm3317, %v3301, 0
    %v3407 = vsel %vm398, %v3277, 0
    %3409 = vmatprep.subr.mxu0 0.0
    %3410 = vmatpush1.msra.mxu0 %v3272
    %3411 = vmatprep.subr.mxu0 0.0
    %3412 = vmatpush1.msra.mxu0 %v3407
    %3413 = vmatprep.subr.mxu0 0.0
    %3414 = vmatpush1.msra.mxu0 0.0
    %3415 = vmatprep.subr.mxu0 0.0
    %3416 = vmatpush1.msra.mxu0 0.0
    %3417 = vmatprep.subr.mxu0 0.0
    %3418 = vmatpush1.msra.mxu0 0.0
    %3419 = vmatprep.subr.mxu0 0.0
    %3420 = vmatpush1.msra.mxu0 0.0
    %3421 = vmatprep.subr.mxu0 0.0
    %3422 = vmatpush1.msra.mxu0 0.0
    %3423 = vmatprep.subr.mxu0 0.0
    %3424 = vmatpush1.msra.mxu0 0.0
    %3425 = vmatprep.subr.mxu0 0.0
    %3426 = vmatpush1.msra.mxu0 0.0
    %3427 = vmatprep.subr.mxu0 0.0
    %3428 = vmatpush1.msra.mxu0 0.0
    %3429 = vmatprep.subr.mxu0 0.0
    %3430 = vmatpush1.msra.mxu0 0.0
    %3431 = vmatprep.subr.mxu0 0.0
    %3432 = vmatpush1.msra.mxu0 0.0
    %3433 = vmatprep.subr.mxu0 0.0
    %3434 = vmatpush1.msra.mxu0 0.0
    %3435 = vmatprep.subr.mxu0 0.0
    %3436 = vmatpush1.msra.mxu0 0.0
    %3437 = vmatprep.subr.mxu0 0.0
    %3438 = vmatpush1.msra.mxu0 0.0
    %3439 = vmatprep.subr.mxu0 0.0
    %3440 = vmatpush1.msra.mxu0 0.0
    %3441 = vmatprep.subr.mxu0 0.0
    %3442 = vmatpush1.msra.mxu0 0.0
    %3443 = vmatprep.subr.mxu0 0.0
    %3444 = vmatpush1.msra.mxu0 0.0
    %3445 = vmatprep.subr.mxu0 0.0
    %3446 = vmatpush1.msra.mxu0 0.0
    %3447 = vmatprep.subr.mxu0 0.0
    %3448 = vmatpush1.msra.mxu0 0.0
    %3449 = vmatprep.subr.mxu0 0.0
    %3450 = vmatpush1.msra.mxu0 0.0
    %3451 = vmatprep.subr.mxu0 0.0
    %3452 = vmatpush1.msra.mxu0 0.0
    %3453 = vmatprep.subr.mxu0 0.0
    %3454 = vmatpush1.msra.mxu0 0.0
    %3455 = vmatprep.subr.mxu0 0.0
    %3456 = vmatpush1.msra.mxu0 0.0
    %3457 = vmatprep.subr.mxu0 0.0
    %3458 = vmatpush1.msra.mxu0 0.0
    %3459 = vmatprep.subr.mxu0 0.0
    %3460 = vmatpush1.msra.mxu0 0.0
    %3461 = vmatprep.subr.mxu0 0.0
    %3462 = vmatpush1.msra.mxu0 0.0
    %3463 = vmatprep.subr.mxu0 0.0
    %3464 = vmatpush1.msra.mxu0 0.0
    %3465 = vmatprep.subr.mxu0 0.0
    %3466 = vmatpush1.msra.mxu0 0.0
    %3467 = vmatprep.subr.mxu0 0.0
    %3468 = vmatpush1.msra.mxu0 0.0
    %3469 = vmatprep.subr.mxu0 0.0
    %3470 = vmatpush1.msra.mxu0 0.0
    %3471 = vmatprep.subr.mxu0 0.0
    %3472 = vmatpush1.msra.mxu0 0.0
    %3473 = vmatprep.mubr.f32.mxu0 0.0
    %3474 = vmatmul.mubr.f32.gmra.mrb[0].mxu0 %v3402
    %v3475 = vpop.f32.mrb[0].mxu0
    %v3476 = vadd.f32 %v3393, %v3475
    %v3477 = vpop.f32.mrb[0].mxu0
    %3478 = vmatprep.mubr.f32.mxu0 0.0
    %3479 = vmatmul.mubr.f32.gmra.mrb[0].mxu0 %v3405
    %v3480 = vpop.f32.mrb[0].mxu0
    %v3481 = vadd.f32 %v3398, %v3480
    %v3482 = vpop.f32.mrb[0].mxu0
    %3483 = vdwg.mxu0
    %v3484 = vadd.s32 %v3290, 4294967294
    %v3485 = vadd.s32 %v3291, 4294967294
    %vm3486 = vcmp.eq.s32.totalorder %v3293, %v3484
    %vm3487 = vcmp.eq.s32.totalorder %v3293, %v3485
    %vm3488 = vmand %vm3286, %vm3486
    %vm3489 = vmand %vm3287, %vm3487
    %v3490 = vsel %vm3488, 1.0, 0.0
    %v3491 = vsel %vm3489, 1.0, 0.0
    %3492 = vrot.lane.b32.xlu0 %v3272, 96
    %v3493 = vpop.permute.xlu0 %3492
    %3494 = vrot.lane.b32.xlu0 %v3277, 96
    %v3495 = vpop.permute.xlu0 %3494
    %v3498 = vsel %vm3317, %v3490, 0
    %v3501 = vsel %vm3317, %v3491, 0
    %v3503 = vsel %vm398, %v3495, 0
    %3505 = vmatprep.subr.mxu0 0.0
    %3506 = vmatpush1.msra.mxu0 %v3493
    %3507 = vmatprep.subr.mxu0 0.0
    %3508 = vmatpush1.msra.mxu0 %v3503
    %3509 = vmatprep.subr.mxu0 0.0
    %3510 = vmatpush1.msra.mxu0 0.0
    %3511 = vmatprep.subr.mxu0 0.0
    %3512 = vmatpush1.msra.mxu0 0.0
    %3513 = vmatprep.subr.mxu0 0.0
    %3514 = vmatpush1.msra.mxu0 0.0
    %3515 = vmatprep.subr.mxu0 0.0
    %3516 = vmatpush1.msra.mxu0 0.0
    %3517 = vmatprep.subr.mxu0 0.0
    %3518 = vmatpush1.msra.mxu0 0.0
    %3519 = vmatprep.subr.mxu0 0.0
    %3520 = vmatpush1.msra.mxu0 0.0
    %3521 = vmatprep.subr.mxu0 0.0
    %3522 = vmatpush1.msra.mxu0 0.0
    %3523 = vmatprep.subr.mxu0 0.0
    %3524 = vmatpush1.msra.mxu0 0.0
    %3525 = vmatprep.subr.mxu0 0.0
    %3526 = vmatpush1.msra.mxu0 0.0
    %3527 = vmatprep.subr.mxu0 0.0
    %3528 = vmatpush1.msra.mxu0 0.0
    %3529 = vmatprep.subr.mxu0 0.0
    %3530 = vmatpush1.msra.mxu0 0.0
    %3531 = vmatprep.subr.mxu0 0.0
    %3532 = vmatpush1.msra.mxu0 0.0
    %3533 = vmatprep.subr.mxu0 0.0
    %3534 = vmatpush1.msra.mxu0 0.0
    %3535 = vmatprep.subr.mxu0 0.0
    %3536 = vmatpush1.msra.mxu0 0.0
    %3537 = vmatprep.subr.mxu0 0.0
    %3538 = vmatpush1.msra.mxu0 0.0
    %3539 = vmatprep.subr.mxu0 0.0
    %3540 = vmatpush1.msra.mxu0 0.0
    %3541 = vmatprep.subr.mxu0 0.0
    %3542 = vmatpush1.msra.mxu0 0.0
    %3543 = vmatprep.subr.mxu0 0.0
    %3544 = vmatpush1.msra.mxu0 0.0
    %3545 = vmatprep.subr.mxu0 0.0
    %3546 = vmatpush1.msra.mxu0 0.0
    %3547 = vmatprep.subr.mxu0 0.0
    %3548 = vmatpush1.msra.mxu0 0.0
    %3549 = vmatprep.subr.mxu0 0.0
    %3550 = vmatpush1.msra.mxu0 0.0
    %3551 = vmatprep.subr.mxu0 0.0
    %3552 = vmatpush1.msra.mxu0 0.0
    %3553 = vmatprep.subr.mxu0 0.0
    %3554 = vmatpush1.msra.mxu0 0.0
    %3555 = vmatprep.subr.mxu0 0.0
    %3556 = vmatpush1.msra.mxu0 0.0
    %3557 = vmatprep.subr.mxu0 0.0
    %3558 = vmatpush1.msra.mxu0 0.0
    %3559 = vmatprep.subr.mxu0 0.0
    %3560 = vmatpush1.msra.mxu0 0.0
    %3561 = vmatprep.subr.mxu0 0.0
    %3562 = vmatpush1.msra.mxu0 0.0
    %3563 = vmatprep.subr.mxu0 0.0
    %3564 = vmatpush1.msra.mxu0 0.0
    %3565 = vmatprep.subr.mxu0 0.0
    %3566 = vmatpush1.msra.mxu0 0.0
    %3567 = vmatprep.subr.mxu0 0.0
    %3568 = vmatpush1.msra.mxu0 0.0
    %3569 = vmatprep.mubr.f32.mxu0 0.0
    %3570 = vmatmul.mubr.f32.gmra.mrb[0].mxu0 %v3498
    %v3571 = vpop.f32.mrb[0].mxu0
    %v3572 = vadd.f32 0.0, %v3571
    %v3573 = vpop.f32.mrb[0].mxu0
    %3574 = vmatprep.mubr.f32.mxu0 0.0
    %3575 = vmatmul.mubr.f32.gmra.mrb[0].mxu0 %v3501
    %v3576 = vpop.f32.mrb[0].mxu0
    %v3577 = vadd.f32 0.0, %v3576
    %v3578 = vpop.f32.mrb[0].mxu0
    %3579 = vdwg.mxu0
    %v3580 = vadd.f32 %v3476, %v3572
    %v3581 = vadd.f32 %v3481, %v3577
    %v3582 = vadd.s32 %v3290, 4294967295
    %v3583 = vadd.s32 %v3291, 4294967295
    %vm3584 = vcmp.eq.s32.totalorder %v3293, %v3582
    %vm3585 = vcmp.eq.s32.totalorder %v3293, %v3583
    %vm3586 = vmand %vm3286, %vm3584
    %vm3587 = vmand %vm3287, %vm3585
    %v3588 = vsel %vm3586, 1.0, 0.0
    %v3589 = vsel %vm3587, 1.0, 0.0
    %3590 = vrot.lane.b32.xlu0 %v3272, 80
    %v3591 = vpop.permute.xlu0 %3590
    %3592 = vrot.lane.b32.xlu0 %v3277, 80
    %v3593 = vpop.permute.xlu0 %3592
    %v3596 = vsel %vm3317, %v3588, 0
    %v3599 = vsel %vm3317, %v3589, 0
    %v3601 = vsel %vm398, %v3593, 0
    %3603 = vmatprep.subr.mxu0 0.0
    %3604 = vmatpush1.msra.mxu0 %v3591
    %3605 = vmatprep.subr.mxu0 0.0
    %3606 = vmatpush1.msra.mxu0 %v3601
    %3607 = vmatprep.subr.mxu0 0.0
    %3608 = vmatpush1.msra.mxu0 0.0
    %3609 = vmatprep.subr.mxu0 0.0
    %3610 = vmatpush1.msra.mxu0 0.0
    %3611 = vmatprep.subr.mxu0 0.0
    %3612 = vmatpush1.msra.mxu0 0.0
    %3613 = vmatprep.subr.mxu0 0.0
    %3614 = vmatpush1.msra.mxu0 0.0
    %3615 = vmatprep.subr.mxu0 0.0
    %3616 = vmatpush1.msra.mxu0 0.0
    %3617 = vmatprep.subr.mxu0 0.0
    %3618 = vmatpush1.msra.mxu0 0.0
    %3619 = vmatprep.subr.mxu0 0.0
    %3620 = vmatpush1.msra.mxu0 0.0
    %3621 = vmatprep.subr.mxu0 0.0
    %3622 = vmatpush1.msra.mxu0 0.0
    %3623 = vmatprep.subr.mxu0 0.0
    %3624 = vmatpush1.msra.mxu0 0.0
    %3625 = vmatprep.subr.mxu0 0.0
    %3626 = vmatpush1.msra.mxu0 0.0
    %3627 = vmatprep.subr.mxu0 0.0
    %3628 = vmatpush1.msra.mxu0 0.0
    %3629 = vmatprep.subr.mxu0 0.0
    %3630 = vmatpush1.msra.mxu0 0.0
    %3631 = vmatprep.subr.mxu0 0.0
    %3632 = vmatpush1.msra.mxu0 0.0
    %3633 = vmatprep.subr.mxu0 0.0
    %3634 = vmatpush1.msra.mxu0 0.0
    %3635 = vmatprep.subr.mxu0 0.0
    %3636 = vmatpush1.msra.mxu0 0.0
    %3637 = vmatprep.subr.mxu0 0.0
    %3638 = vmatpush1.msra.mxu0 0.0
    %3639 = vmatprep.subr.mxu0 0.0
    %3640 = vmatpush1.msra.mxu0 0.0
    %3641 = vmatprep.subr.mxu0 0.0
    %3642 = vmatpush1.msra.mxu0 0.0
    %3643 = vmatprep.subr.mxu0 0.0
    %3644 = vmatpush1.msra.mxu0 0.0
    %3645 = vmatprep.subr.mxu0 0.0
    %3646 = vmatpush1.msra.mxu0 0.0
    %3647 = vmatprep.subr.mxu0 0.0
    %3648 = vmatpush1.msra.mxu0 0.0
    %3649 = vmatprep.subr.mxu0 0.0
    %3650 = vmatpush1.msra.mxu0 0.0
    %3651 = vmatprep.subr.mxu0 0.0
    %3652 = vmatpush1.msra.mxu0 0.0
    %3653 = vmatprep.subr.mxu0 0.0
    %3654 = vmatpush1.msra.mxu0 0.0
    %3655 = vmatprep.subr.mxu0 0.0
    %3656 = vmatpush1.msra.mxu0 0.0
    %3657 = vmatprep.subr.mxu0 0.0
    %3658 = vmatpush1.msra.mxu0 0.0
    %3659 = vmatprep.subr.mxu0 0.0
    %3660 = vmatpush1.msra.mxu0 0.0
    %3661 = vmatprep.subr.mxu0 0.0
    %3662 = vmatpush1.msra.mxu0 0.0
    %3663 = vmatprep.subr.mxu0 0.0
    %3664 = vmatpush1.msra.mxu0 0.0
    %3665 = vmatprep.subr.mxu0 0.0
    %3666 = vmatpush1.msra.mxu0 0.0
    %3667 = vmatprep.mubr.f32.mxu0 0.0
    %3668 = vmatmul.mubr.f32.gmra.mrb[0].mxu0 %v3596
    %v3669 = vpop.f32.mrb[0].mxu0
    %v3670 = vadd.f32 0.0, %v3669
    %v3671 = vpop.f32.mrb[0].mxu0
    %3672 = vmatprep.mubr.f32.mxu0 0.0
    %3673 = vmatmul.mubr.f32.gmra.mrb[0].mxu0 %v3599
    %v3674 = vpop.f32.mrb[0].mxu0
    %v3675 = vadd.f32 0.0, %v3674
    %v3676 = vpop.f32.mrb[0].mxu0
    %3677 = vdwg.mxu0
    %v3678 = vadd.f32 %v3580, %v3670
    %v3679 = vadd.f32 %v3581, %v3675
    %vm3680 = vcmp.eq.s32.totalorder %v3293, %v3290
    %vm3681 = vcmp.eq.s32.totalorder %v3293, %v3291
    %vm3682 = vmand %vm3286, %vm3680
    %vm3683 = vmand %vm3287, %vm3681
    %v3684 = vsel %vm3682, 1.0, 0.0
    %v3685 = vsel %vm3683, 1.0, 0.0
    %3686 = vrot.lane.b32.xlu0 %v3272, 64
    %v3687 = vpop.permute.xlu0 %3686
    %3688 = vrot.lane.b32.xlu0 %v3277, 64
    %v3689 = vpop.permute.xlu0 %3688
    %v3692 = vsel %vm3317, %v3684, 0
    %v3695 = vsel %vm3317, %v3685, 0
    %v3697 = vsel %vm398, %v3689, 0
    %3699 = vmatprep.subr.mxu0 0.0
    %3700 = vmatpush1.msra.mxu0 %v3687
    %3701 = vmatprep.subr.mxu0 0.0
    %3702 = vmatpush1.msra.mxu0 %v3697
    %3703 = vmatprep.subr.mxu0 0.0
    %3704 = vmatpush1.msra.mxu0 0.0
    %3705 = vmatprep.subr.mxu0 0.0
    %3706 = vmatpush1.msra.mxu0 0.0
    %3707 = vmatprep.subr.mxu0 0.0
    %3708 = vmatpush1.msra.mxu0 0.0
    %3709 = vmatprep.subr.mxu0 0.0
    %3710 = vmatpush1.msra.mxu0 0.0
    %3711 = vmatprep.subr.mxu0 0.0
    %3712 = vmatpush1.msra.mxu0 0.0
    %3713 = vmatprep.subr.mxu0 0.0
    %3714 = vmatpush1.msra.mxu0 0.0
    %3715 = vmatprep.subr.mxu0 0.0
    %3716 = vmatpush1.msra.mxu0 0.0
    %3717 = vmatprep.subr.mxu0 0.0
    %3718 = vmatpush1.msra.mxu0 0.0
    %3719 = vmatprep.subr.mxu0 0.0
    %3720 = vmatpush1.msra.mxu0 0.0
    %3721 = vmatprep.subr.mxu0 0.0
    %3722 = vmatpush1.msra.mxu0 0.0
    %3723 = vmatprep.subr.mxu0 0.0
    %3724 = vmatpush1.msra.mxu0 0.0
    %3725 = vmatprep.subr.mxu0 0.0
    %3726 = vmatpush1.msra.mxu0 0.0
    %3727 = vmatprep.subr.mxu0 0.0
    %3728 = vmatpush1.msra.mxu0 0.0
    %3729 = vmatprep.subr.mxu0 0.0
    %3730 = vmatpush1.msra.mxu0 0.0
    %3731 = vmatprep.subr.mxu0 0.0
    %3732 = vmatpush1.msra.mxu0 0.0
    %3733 = vmatprep.subr.mxu0 0.0
    %3734 = vmatpush1.msra.mxu0 0.0
    %3735 = vmatprep.subr.mxu0 0.0
    %3736 = vmatpush1.msra.mxu0 0.0
    %3737 = vmatprep.subr.mxu0 0.0
    %3738 = vmatpush1.msra.mxu0 0.0
    %3739 = vmatprep.subr.mxu0 0.0
    %3740 = vmatpush1.msra.mxu0 0.0
    %3741 = vmatprep.subr.mxu0 0.0
    %3742 = vmatpush1.msra.mxu0 0.0
    %3743 = vmatprep.subr.mxu0 0.0
    %3744 = vmatpush1.msra.mxu0 0.0
    %3745 = vmatprep.subr.mxu0 0.0
    %3746 = vmatpush1.msra.mxu0 0.0
    %3747 = vmatprep.subr.mxu0 0.0
    %3748 = vmatpush1.msra.mxu0 0.0
    %3749 = vmatprep.subr.mxu0 0.0
    %3750 = vmatpush1.msra.mxu0 0.0
    %3751 = vmatprep.subr.mxu0 0.0
    %3752 = vmatpush1.msra.mxu0 0.0
    %3753 = vmatprep.subr.mxu0 0.0
    %3754 = vmatpush1.msra.mxu0 0.0
    %3755 = vmatprep.subr.mxu0 0.0
    %3756 = vmatpush1.msra.mxu0 0.0
    %3757 = vmatprep.subr.mxu0 0.0
    %3758 = vmatpush1.msra.mxu0 0.0
    %3759 = vmatprep.subr.mxu0 0.0
    %3760 = vmatpush1.msra.mxu0 0.0
    %3761 = vmatprep.subr.mxu0 0.0
    %3762 = vmatpush1.msra.mxu0 0.0
    %3763 = vmatprep.mubr.f32.mxu0 0.0
    %3764 = vmatmul.mubr.f32.gmra.mrb[0].mxu0 %v3692
    %v3765 = vpop.f32.mrb[0].mxu0
    %v3766 = vadd.f32 0.0, %v3765
    %v3767 = vpop.f32.mrb[0].mxu0
    %3768 = vmatprep.mubr.f32.mxu0 0.0
    %3769 = vmatmul.mubr.f32.gmra.mrb[0].mxu0 %v3695
    %v3770 = vpop.f32.mrb[0].mxu0
    %v3771 = vadd.f32 0.0, %v3770
    %v3772 = vpop.f32.mrb[0].mxu0
    %3773 = vdwg.mxu0
    %v3774 = vadd.f32 %v3678, %v3766
    %v3775 = vadd.f32 %v3679, %v3771
    %v3776 = vadd.s32 %v3290, 1
    %v3777 = vadd.s32 %v3291, 1
    %vm3778 = vcmp.eq.s32.totalorder %v3293, %v3776
    %vm3779 = vcmp.eq.s32.totalorder %v3293, %v3777
    %vm3780 = vmand %vm3286, %vm3778
    %vm3781 = vmand %vm3287, %vm3779
    %v3782 = vsel %vm3780, 1.0, 0.0
    %v3783 = vsel %vm3781, 1.0, 0.0
    %3784 = vrot.lane.b32.xlu0 %v3272, 48
    %v3785 = vpop.permute.xlu0 %3784
    %3786 = vrot.lane.b32.xlu0 %v3277, 48
    %v3787 = vpop.permute.xlu0 %3786
    %v3790 = vsel %vm3317, %v3782, 0
    %v3793 = vsel %vm3317, %v3783, 0
    %v3795 = vsel %vm398, %v3787, 0
    %3797 = vmatprep.subr.mxu0 0.0
    %3798 = vmatpush1.msra.mxu0 %v3785
    %3799 = vmatprep.subr.mxu0 0.0
    %3800 = vmatpush1.msra.mxu0 %v3795
    %3801 = vmatprep.subr.mxu0 0.0
    %3802 = vmatpush1.msra.mxu0 0.0
    %3803 = vmatprep.subr.mxu0 0.0
    %3804 = vmatpush1.msra.mxu0 0.0
    %3805 = vmatprep.subr.mxu0 0.0
    %3806 = vmatpush1.msra.mxu0 0.0
    %3807 = vmatprep.subr.mxu0 0.0
    %3808 = vmatpush1.msra.mxu0 0.0
    %3809 = vmatprep.subr.mxu0 0.0
    %3810 = vmatpush1.msra.mxu0 0.0
    %3811 = vmatprep.subr.mxu0 0.0
    %3812 = vmatpush1.msra.mxu0 0.0
    %3813 = vmatprep.subr.mxu0 0.0
    %3814 = vmatpush1.msra.mxu0 0.0
    %3815 = vmatprep.subr.mxu0 0.0
    %3816 = vmatpush1.msra.mxu0 0.0
    %3817 = vmatprep.subr.mxu0 0.0
    %3818 = vmatpush1.msra.mxu0 0.0
    %3819 = vmatprep.subr.mxu0 0.0
    %3820 = vmatpush1.msra.mxu0 0.0
    %3821 = vmatprep.subr.mxu0 0.0
    %3822 = vmatpush1.msra.mxu0 0.0
    %3823 = vmatprep.subr.mxu0 0.0
    %3824 = vmatpush1.msra.mxu0 0.0
    %3825 = vmatprep.subr.mxu0 0.0
    %3826 = vmatpush1.msra.mxu0 0.0
    %3827 = vmatprep.subr.mxu0 0.0
    %3828 = vmatpush1.msra.mxu0 0.0
    %3829 = vmatprep.subr.mxu0 0.0
    %3830 = vmatpush1.msra.mxu0 0.0
    %3831 = vmatprep.subr.mxu0 0.0
    %3832 = vmatpush1.msra.mxu0 0.0
    %3833 = vmatprep.subr.mxu0 0.0
    %3834 = vmatpush1.msra.mxu0 0.0
    %3835 = vmatprep.subr.mxu0 0.0
    %3836 = vmatpush1.msra.mxu0 0.0
    %3837 = vmatprep.subr.mxu0 0.0
    %3838 = vmatpush1.msra.mxu0 0.0
    %3839 = vmatprep.subr.mxu0 0.0
    %3840 = vmatpush1.msra.mxu0 0.0
    %3841 = vmatprep.subr.mxu0 0.0
    %3842 = vmatpush1.msra.mxu0 0.0
    %3843 = vmatprep.subr.mxu0 0.0
    %3844 = vmatpush1.msra.mxu0 0.0
    %3845 = vmatprep.subr.mxu0 0.0
    %3846 = vmatpush1.msra.mxu0 0.0
    %3847 = vmatprep.subr.mxu0 0.0
    %3848 = vmatpush1.msra.mxu0 0.0
    %3849 = vmatprep.subr.mxu0 0.0
    %3850 = vmatpush1.msra.mxu0 0.0
    %3851 = vmatprep.subr.mxu0 0.0
    %3852 = vmatpush1.msra.mxu0 0.0
    %3853 = vmatprep.subr.mxu0 0.0
    %3854 = vmatpush1.msra.mxu0 0.0
    %3855 = vmatprep.subr.mxu0 0.0
    %3856 = vmatpush1.msra.mxu0 0.0
    %3857 = vmatprep.subr.mxu0 0.0
    %3858 = vmatpush1.msra.mxu0 0.0
    %3859 = vmatprep.subr.mxu0 0.0
    %3860 = vmatpush1.msra.mxu0 0.0
    %3861 = vmatprep.mubr.f32.mxu0 0.0
    %3862 = vmatmul.mubr.f32.gmra.mrb[0].mxu0 %v3790
    %v3863 = vpop.f32.mrb[0].mxu0
    %v3864 = vadd.f32 0.0, %v3863
    %v3865 = vpop.f32.mrb[0].mxu0
    %3866 = vmatprep.mubr.f32.mxu0 0.0
    %3867 = vmatmul.mubr.f32.gmra.mrb[0].mxu0 %v3793
    %v3868 = vpop.f32.mrb[0].mxu0
    %v3869 = vadd.f32 0.0, %v3868
    %v3870 = vpop.f32.mrb[0].mxu0
    %3871 = vdwg.mxu0
    %v3872 = vadd.f32 %v3774, %v3864
    %v3873 = vadd.f32 %v3775, %v3869
    %v3874 = vadd.s32 %v3290, 2
    %v3875 = vadd.s32 %v3291, 2
    %vm3876 = vcmp.eq.s32.totalorder %v3293, %v3874
    %vm3877 = vcmp.eq.s32.totalorder %v3293, %v3875
    %vm3878 = vmand %vm3286, %vm3876
    %vm3879 = vmand %vm3287, %vm3877
    %v3880 = vsel %vm3878, 1.0, 0.0
    %v3881 = vsel %vm3879, 1.0, 0.0
    %3882 = vrot.lane.b32.xlu0 %v3272, 32
    %v3883 = vpop.permute.xlu0 %3882
    %3884 = vrot.lane.b32.xlu0 %v3277, 32
    %v3885 = vpop.permute.xlu0 %3884
    %v3888 = vsel %vm3317, %v3880, 0
    %v3891 = vsel %vm3317, %v3881, 0
    %v3893 = vsel %vm398, %v3885, 0
    %3895 = vmatprep.subr.mxu0 0.0
    %3896 = vmatpush1.msra.mxu0 %v3883
    %3897 = vmatprep.subr.mxu0 0.0
    %3898 = vmatpush1.msra.mxu0 %v3893
    %3899 = vmatprep.subr.mxu0 0.0
    %3900 = vmatpush1.msra.mxu0 0.0
    %3901 = vmatprep.subr.mxu0 0.0
    %3902 = vmatpush1.msra.mxu0 0.0
    %3903 = vmatprep.subr.mxu0 0.0
    %3904 = vmatpush1.msra.mxu0 0.0
    %3905 = vmatprep.subr.mxu0 0.0
    %3906 = vmatpush1.msra.mxu0 0.0
    %3907 = vmatprep.subr.mxu0 0.0
    %3908 = vmatpush1.msra.mxu0 0.0
    %3909 = vmatprep.subr.mxu0 0.0
    %3910 = vmatpush1.msra.mxu0 0.0
    %3911 = vmatprep.subr.mxu0 0.0
    %3912 = vmatpush1.msra.mxu0 0.0
    %3913 = vmatprep.subr.mxu0 0.0
    %3914 = vmatpush1.msra.mxu0 0.0
    %3915 = vmatprep.subr.mxu0 0.0
    %3916 = vmatpush1.msra.mxu0 0.0
    %3917 = vmatprep.subr.mxu0 0.0
    %3918 = vmatpush1.msra.mxu0 0.0
    %3919 = vmatprep.subr.mxu0 0.0
    %3920 = vmatpush1.msra.mxu0 0.0
    %3921 = vmatprep.subr.mxu0 0.0
    %3922 = vmatpush1.msra.mxu0 0.0
    %3923 = vmatprep.subr.mxu0 0.0
    %3924 = vmatpush1.msra.mxu0 0.0
    %3925 = vmatprep.subr.mxu0 0.0
    %3926 = vmatpush1.msra.mxu0 0.0
    %3927 = vmatprep.subr.mxu0 0.0
    %3928 = vmatpush1.msra.mxu0 0.0
    %3929 = vmatprep.subr.mxu0 0.0
    %3930 = vmatpush1.msra.mxu0 0.0
    %3931 = vmatprep.subr.mxu0 0.0
    %3932 = vmatpush1.msra.mxu0 0.0
    %3933 = vmatprep.subr.mxu0 0.0
    %3934 = vmatpush1.msra.mxu0 0.0
    %3935 = vmatprep.subr.mxu0 0.0
    %3936 = vmatpush1.msra.mxu0 0.0
    %3937 = vmatprep.subr.mxu0 0.0
    %3938 = vmatpush1.msra.mxu0 0.0
    %3939 = vmatprep.subr.mxu0 0.0
    %3940 = vmatpush1.msra.mxu0 0.0
    %3941 = vmatprep.subr.mxu0 0.0
    %3942 = vmatpush1.msra.mxu0 0.0
    %3943 = vmatprep.subr.mxu0 0.0
    %3944 = vmatpush1.msra.mxu0 0.0
    %3945 = vmatprep.subr.mxu0 0.0
    %3946 = vmatpush1.msra.mxu0 0.0
    %3947 = vmatprep.subr.mxu0 0.0
    %3948 = vmatpush1.msra.mxu0 0.0
    %3949 = vmatprep.subr.mxu0 0.0
    %3950 = vmatpush1.msra.mxu0 0.0
    %3951 = vmatprep.subr.mxu0 0.0
    %3952 = vmatpush1.msra.mxu0 0.0
    %3953 = vmatprep.subr.mxu0 0.0
    %3954 = vmatpush1.msra.mxu0 0.0
    %3955 = vmatprep.subr.mxu0 0.0
    %3956 = vmatpush1.msra.mxu0 0.0
    %3957 = vmatprep.subr.mxu0 0.0
    %3958 = vmatpush1.msra.mxu0 0.0
    %3959 = vmatprep.mubr.f32.mxu0 0.0
    %3960 = vmatmul.mubr.f32.gmra.mrb[0].mxu0 %v3888
    %v3961 = vpop.f32.mrb[0].mxu0
    %v3962 = vadd.f32 0.0, %v3961
    %v3963 = vpop.f32.mrb[0].mxu0
    %3964 = vmatprep.mubr.f32.mxu0 0.0
    %3965 = vmatmul.mubr.f32.gmra.mrb[0].mxu0 %v3891
    %v3966 = vpop.f32.mrb[0].mxu0
    %v3967 = vadd.f32 0.0, %v3966
    %v3968 = vpop.f32.mrb[0].mxu0
    %3969 = vdwg.mxu0
    %v3970 = vadd.f32 %v3872, %v3962
    %v3971 = vadd.f32 %v3873, %v3967
    %v3972 = vadd.s32 %v3290, 3
    %v3973 = vadd.s32 %v3291, 3
    %vm3974 = vcmp.eq.s32.totalorder %v3293, %v3972
    %vm3975 = vcmp.eq.s32.totalorder %v3293, %v3973
    %vm3976 = vmand %vm3286, %vm3974
    %vm3977 = vmand %vm3287, %vm3975
    %v3978 = vsel %vm3976, 1.0, 0.0
    %v3979 = vsel %vm3977, 1.0, 0.0
    %3980 = vrot.lane.b32.xlu0 %v3272, 16
    %v3981 = vpop.permute.xlu0 %3980
    %3982 = vrot.lane.b32.xlu0 %v3277, 16
    %v3983 = vpop.permute.xlu0 %3982
    %v3986 = vsel %vm3317, %v3978, 0
    %v3989 = vsel %vm3317, %v3979, 0
    %v3991 = vsel %vm398, %v3983, 0
    %3993 = vmatprep.subr.mxu0 0.0
    %3994 = vmatpush1.msra.mxu0 %v3981
    %3995 = vmatprep.subr.mxu0 0.0
    %3996 = vmatpush1.msra.mxu0 %v3991
    %3997 = vmatprep.subr.mxu0 0.0
    %3998 = vmatpush1.msra.mxu0 0.0
    %3999 = vmatprep.subr.mxu0 0.0
    %4000 = vmatpush1.msra.mxu0 0.0
    %4001 = vmatprep.subr.mxu0 0.0
    %4002 = vmatpush1.msra.mxu0 0.0
    %4003 = vmatprep.subr.mxu0 0.0
    %4004 = vmatpush1.msra.mxu0 0.0
    %4005 = vmatprep.subr.mxu0 0.0
    %4006 = vmatpush1.msra.mxu0 0.0
    %4007 = vmatprep.subr.mxu0 0.0
    %4008 = vmatpush1.msra.mxu0 0.0
    %4009 = vmatprep.subr.mxu0 0.0
    %4010 = vmatpush1.msra.mxu0 0.0
    %4011 = vmatprep.subr.mxu0 0.0
    %4012 = vmatpush1.msra.mxu0 0.0
    %4013 = vmatprep.subr.mxu0 0.0
    %4014 = vmatpush1.msra.mxu0 0.0
    %4015 = vmatprep.subr.mxu0 0.0
    %4016 = vmatpush1.msra.mxu0 0.0
    %4017 = vmatprep.subr.mxu0 0.0
    %4018 = vmatpush1.msra.mxu0 0.0
    %4019 = vmatprep.subr.mxu0 0.0
    %4020 = vmatpush1.msra.mxu0 0.0
    %4021 = vmatprep.subr.mxu0 0.0
    %4022 = vmatpush1.msra.mxu0 0.0
    %4023 = vmatprep.subr.mxu0 0.0
    %4024 = vmatpush1.msra.mxu0 0.0
    %4025 = vmatprep.subr.mxu0 0.0
    %4026 = vmatpush1.msra.mxu0 0.0
    %4027 = vmatprep.subr.mxu0 0.0
    %4028 = vmatpush1.msra.mxu0 0.0
    %4029 = vmatprep.subr.mxu0 0.0
    %4030 = vmatpush1.msra.mxu0 0.0
    %4031 = vmatprep.subr.mxu0 0.0
    %4032 = vmatpush1.msra.mxu0 0.0
    %4033 = vmatprep.subr.mxu0 0.0
    %4034 = vmatpush1.msra.mxu0 0.0
    %4035 = vmatprep.subr.mxu0 0.0
    %4036 = vmatpush1.msra.mxu0 0.0
    %4037 = vmatprep.subr.mxu0 0.0
    %4038 = vmatpush1.msra.mxu0 0.0
    %4039 = vmatprep.subr.mxu0 0.0
    %4040 = vmatpush1.msra.mxu0 0.0
    %4041 = vmatprep.subr.mxu0 0.0
    %4042 = vmatpush1.msra.mxu0 0.0
    %4043 = vmatprep.subr.mxu0 0.0
    %4044 = vmatpush1.msra.mxu0 0.0
    %4045 = vmatprep.subr.mxu0 0.0
    %4046 = vmatpush1.msra.mxu0 0.0
    %4047 = vmatprep.subr.mxu0 0.0
    %4048 = vmatpush1.msra.mxu0 0.0
    %4049 = vmatprep.subr.mxu0 0.0
    %4050 = vmatpush1.msra.mxu0 0.0
    %4051 = vmatprep.subr.mxu0 0.0
    %4052 = vmatpush1.msra.mxu0 0.0
    %4053 = vmatprep.subr.mxu0 0.0
    %4054 = vmatpush1.msra.mxu0 0.0
    %4055 = vmatprep.subr.mxu0 0.0
    %4056 = vmatpush1.msra.mxu0 0.0
    %4057 = vmatprep.mubr.f32.mxu0 0.0
    %4058 = vmatmul.mubr.f32.gmra.mrb[0].mxu0 %v3986
    %v4059 = vpop.f32.mrb[0].mxu0
    %v4060 = vadd.f32 0.0, %v4059
    %v4061 = vpop.f32.mrb[0].mxu0
    %4062 = vmatprep.mubr.f32.mxu0 0.0
    %4063 = vmatmul.mubr.f32.gmra.mrb[0].mxu0 %v3989
    %v4064 = vpop.f32.mrb[0].mxu0
    %v4065 = vadd.f32 0.0, %v4064
    %v4066 = vpop.f32.mrb[0].mxu0
    %4067 = vdwg.mxu0
    %v4068 = vadd.f32 %v3970, %v4060
    %v4069 = vadd.f32 %v3971, %v4065
    %v4070 = vlaneseq
    %v4071 = vshrl.u32 %v4070, 7
    %v4072 = vsub.s32 0, %v4071
    %v4073 = vrot.slane %v3188, %v4072
    %v4074 = vmul.f32 %v4068, %v4073
    %v4075 = vmul.f32 %v4069, %v4073
    %v4076 = vlaneseq
    %v4077 = vshrl.u32 %v4076, 7
    %v4078 = vsub.s32 0, %v4077
    %v4079 = vrot.slane %v3189, %v4078
    %v4080 = vadd.f32 %v4074, %v4079
    %v4081 = vadd.f32 %v4075, %v4079
    %v4082 = vmax.f32 %v4080, 0.0
    %v4083 = vmax.f32 %v4081, 0.0
    %vm4084 = vcmp.ge.s32.totalorder %v157, 4
    %v4085 = vsel %vm4084, 1, 0
    %vm4086 = vcmp.ge.s32.totalorder %v162, 7
    %v4087 = vsel %vm4086, 1, 0
    %vm4088 = vcmp.eq.s32.totalorder %v4085, %v4087
    %v4089 = vmul.u32 %v4085, 4
    %v4090 = vsub.s32 %v157, %v4089
    %v4091 = vmul.u32 %v4087, 7
    %v4092 = vsub.s32 %v162, %v4091
    %v4093 = vmul.u32 %v4090, 2
    %v4094 = vsub.s32 %v4093, 1
    %vm4095 = vcmp.eq.s32.totalorder %v4092, %v4094
    %vm4096 = vmand %vm4088, %vm4095
    %v4097 = vsel %vm4096, 1.0, 0.0
    %vm4098 = vcmp.eq.s32.totalorder %v4092, %v4093
    %vm4099 = vmand %vm4088, %vm4098
    %v4100 = vsel %vm4099, 1.0, 0.0
    %vm4101 = vcmask 113664
    %v4103 = vsel %vm4101, %v4097, 0
    %vm4105 = vcmask 1045504
    %v4107 = vsel %vm4105, %v4083, 0
    %4109 = vmatprep.subr.mxu0 0.0
    %4110 = vmatpush1.msra.mxu0 %v4082
    %4111 = vmatprep.subr.mxu0 0.0
    %4112 = vmatpush1.msra.mxu0 %v4107
    %4113 = vmatprep.subr.mxu0 0.0
    %4114 = vmatpush1.msra.mxu0 0.0
    %4115 = vmatprep.subr.mxu0 0.0
    %4116 = vmatpush1.msra.mxu0 0.0
    %4117 = vmatprep.subr.mxu0 0.0
    %4118 = vmatpush1.msra.mxu0 0.0
    %4119 = vmatprep.subr.mxu0 0.0
    %4120 = vmatpush1.msra.mxu0 0.0
    %4121 = vmatprep.subr.mxu0 0.0
    %4122 = vmatpush1.msra.mxu0 0.0
    %4123 = vmatprep.subr.mxu0 0.0
    %4124 = vmatpush1.msra.mxu0 0.0
    %4125 = vmatprep.subr.mxu0 0.0
    %4126 = vmatpush1.msra.mxu0 0.0
    %4127 = vmatprep.subr.mxu0 0.0
    %4128 = vmatpush1.msra.mxu0 0.0
    %4129 = vmatprep.subr.mxu0 0.0
    %4130 = vmatpush1.msra.mxu0 0.0
    %4131 = vmatprep.subr.mxu0 0.0
    %4132 = vmatpush1.msra.mxu0 0.0
    %4133 = vmatprep.subr.mxu0 0.0
    %4134 = vmatpush1.msra.mxu0 0.0
    %4135 = vmatprep.subr.mxu0 0.0
    %4136 = vmatpush1.msra.mxu0 0.0
    %4137 = vmatprep.subr.mxu0 0.0
    %4138 = vmatpush1.msra.mxu0 0.0
    %4139 = vmatprep.subr.mxu0 0.0
    %4140 = vmatpush1.msra.mxu0 0.0
    %4141 = vmatprep.subr.mxu0 0.0
    %4142 = vmatpush1.msra.mxu0 0.0
    %4143 = vmatprep.subr.mxu0 0.0
    %4144 = vmatpush1.msra.mxu0 0.0
    %4145 = vmatprep.subr.mxu0 0.0
    %4146 = vmatpush1.msra.mxu0 0.0
    %4147 = vmatprep.subr.mxu0 0.0
    %4148 = vmatpush1.msra.mxu0 0.0
    %4149 = vmatprep.subr.mxu0 0.0
    %4150 = vmatpush1.msra.mxu0 0.0
    %4151 = vmatprep.subr.mxu0 0.0
    %4152 = vmatpush1.msra.mxu0 0.0
    %4153 = vmatprep.subr.mxu0 0.0
    %4154 = vmatpush1.msra.mxu0 0.0
    %4155 = vmatprep.subr.mxu0 0.0
    %4156 = vmatpush1.msra.mxu0 0.0
    %4157 = vmatprep.subr.mxu0 0.0
    %4158 = vmatpush1.msra.mxu0 0.0
    %4159 = vmatprep.subr.mxu0 0.0
    %4160 = vmatpush1.msra.mxu0 0.0
    %4161 = vmatprep.subr.mxu0 0.0
    %4162 = vmatpush1.msra.mxu0 0.0
    %4163 = vmatprep.subr.mxu0 0.0
    %4164 = vmatpush1.msra.mxu0 0.0
    %4165 = vmatprep.subr.mxu0 0.0
    %4166 = vmatpush1.msra.mxu0 0.0
    %4167 = vmatprep.subr.mxu0 0.0
    %4168 = vmatpush1.msra.mxu0 0.0
    %4169 = vmatprep.subr.mxu0 0.0
    %4170 = vmatpush1.msra.mxu0 0.0
    %4171 = vmatprep.subr.mxu0 0.0
    %4172 = vmatpush1.msra.mxu0 0.0
    %4173 = vmatprep.mubr.f32.mxu0 0.0
    %4174 = vmatmul.mubr.f32.gmra.mrb[0].mxu0 %v4103
    %v4175 = vpop.f32.mrb[0].mxu0
    %v4176 = vadd.f32 0.0, %v4175
    %v4177 = vpop.f32.mrb[0].mxu0
    %4178 = vdwg.mxu0
    %v4180 = vsel %vm4101, %v4100, 0
    %4182 = vmatprep.subr.mxu0 0.0
    %4183 = vmatpush1.msra.mxu0 %v4082
    %4184 = vmatprep.subr.mxu0 0.0
    %4185 = vmatpush1.msra.mxu0 %v4107
    %4186 = vmatprep.subr.mxu0 0.0
    %4187 = vmatpush1.msra.mxu0 0.0
    %4188 = vmatprep.subr.mxu0 0.0
    %4189 = vmatpush1.msra.mxu0 0.0
    %4190 = vmatprep.subr.mxu0 0.0
    %4191 = vmatpush1.msra.mxu0 0.0
    %4192 = vmatprep.subr.mxu0 0.0
    %4193 = vmatpush1.msra.mxu0 0.0
    %4194 = vmatprep.subr.mxu0 0.0
    %4195 = vmatpush1.msra.mxu0 0.0
    %4196 = vmatprep.subr.mxu0 0.0
    %4197 = vmatpush1.msra.mxu0 0.0
    %4198 = vmatprep.subr.mxu0 0.0
    %4199 = vmatpush1.msra.mxu0 0.0
    %4200 = vmatprep.subr.mxu0 0.0
    %4201 = vmatpush1.msra.mxu0 0.0
    %4202 = vmatprep.subr.mxu0 0.0
    %4203 = vmatpush1.msra.mxu0 0.0
    %4204 = vmatprep.subr.mxu0 0.0
    %4205 = vmatpush1.msra.mxu0 0.0
    %4206 = vmatprep.subr.mxu0 0.0
    %4207 = vmatpush1.msra.mxu0 0.0
    %4208 = vmatprep.subr.mxu0 0.0
    %4209 = vmatpush1.msra.mxu0 0.0
    %4210 = vmatprep.subr.mxu0 0.0
    %4211 = vmatpush1.msra.mxu0 0.0
    %4212 = vmatprep.subr.mxu0 0.0
    %4213 = vmatpush1.msra.mxu0 0.0
    %4214 = vmatprep.subr.mxu0 0.0
    %4215 = vmatpush1.msra.mxu0 0.0
    %4216 = vmatprep.subr.mxu0 0.0
    %4217 = vmatpush1.msra.mxu0 0.0
    %4218 = vmatprep.subr.mxu0 0.0
    %4219 = vmatpush1.msra.mxu0 0.0
    %4220 = vmatprep.subr.mxu0 0.0
    %4221 = vmatpush1.msra.mxu0 0.0
    %4222 = vmatprep.subr.mxu0 0.0
    %4223 = vmatpush1.msra.mxu0 0.0
    %4224 = vmatprep.subr.mxu0 0.0
    %4225 = vmatpush1.msra.mxu0 0.0
    %4226 = vmatprep.subr.mxu0 0.0
    %4227 = vmatpush1.msra.mxu0 0.0
    %4228 = vmatprep.subr.mxu0 0.0
    %4229 = vmatpush1.msra.mxu0 0.0
    %4230 = vmatprep.subr.mxu0 0.0
    %4231 = vmatpush1.msra.mxu0 0.0
    %4232 = vmatprep.subr.mxu0 0.0
    %4233 = vmatpush1.msra.mxu0 0.0
    %4234 = vmatprep.subr.mxu0 0.0
    %4235 = vmatpush1.msra.mxu0 0.0
    %4236 = vmatprep.subr.mxu0 0.0
    %4237 = vmatpush1.msra.mxu0 0.0
    %4238 = vmatprep.subr.mxu0 0.0
    %4239 = vmatpush1.msra.mxu0 0.0
    %4240 = vmatprep.subr.mxu0 0.0
    %4241 = vmatpush1.msra.mxu0 0.0
    %4242 = vmatprep.subr.mxu0 0.0
    %4243 = vmatpush1.msra.mxu0 0.0
    %4244 = vmatprep.subr.mxu0 0.0
    %4245 = vmatpush1.msra.mxu0 0.0
    %4246 = vmatprep.mubr.f32.mxu0 0.0
    %4247 = vmatmul.mubr.f32.gmra.mrb[0].mxu0 %v4180
    %v4248 = vpop.f32.mrb[0].mxu0
    %v4249 = vadd.f32 0.0, %v4248
    %v4250 = vpop.f32.mrb[0].mxu0
    %4251 = vdwg.mxu0
    %v4252 = vmax.f32 %v4176, %v4249
    %v4253 = vld [vmem:[%s4] sm:$0xff]
    %v4254 = vld [vmem:[%s4 + $0x8] sm:$0xff]
    %v4255 = vld [vmem:[#allocation7 + $0x6] sm:$0x1]
    %v4256 = vlaneseq
    %v4257 = vshrl.u32 %v4256, 7
    %v4258 = vsub.s32 0, %v4257
    %v4259 = vrot.slane %v4255, %v4258
    %vm4260 = vcmask 130048
    %v4262 = vsel %vm4260, %v4252, 0
    %4264 = vmatprep.subr.mxu0 0.0
    %4265 = vmatpush1.msra.mxu0 %v4253
    %4266 = vmatprep.subr.mxu0 0.0
    %4267 = vmatpush1.msra.mxu0 %v4254
    %4268 = vmatprep.subr.mxu0 0.0
    %4269 = vmatpush1.msra.mxu0 0.0
    %4270 = vmatprep.subr.mxu0 0.0
    %4271 = vmatpush1.msra.mxu0 0.0
    %4272 = vmatprep.subr.mxu0 0.0
    %4273 = vmatpush1.msra.mxu0 0.0
    %4274 = vmatprep.subr.mxu0 0.0
    %4275 = vmatpush1.msra.mxu0 0.0
    %4276 = vmatprep.subr.mxu0 0.0
    %4277 = vmatpush1.msra.mxu0 0.0
    %4278 = vmatprep.subr.mxu0 0.0
    %4279 = vmatpush1.msra.mxu0 0.0
    %4280 = vmatprep.subr.mxu0 0.0
    %4281 = vmatpush1.msra.mxu0 0.0
    %4282 = vmatprep.subr.mxu0 0.0
    %4283 = vmatpush1.msra.mxu0 0.0
    %4284 = vmatprep.subr.mxu0 0.0
    %4285 = vmatpush1.msra.mxu0 0.0
    %4286 = vmatprep.subr.mxu0 0.0
    %4287 = vmatpush1.msra.mxu0 0.0
    %4288 = vmatprep.subr.mxu0 0.0
    %4289 = vmatpush1.msra.mxu0 0.0
    %4290 = vmatprep.subr.mxu0 0.0
    %4291 = vmatpush1.msra.mxu0 0.0
    %4292 = vmatprep.subr.mxu0 0.0
    %4293 = vmatpush1.msra.mxu0 0.0
    %4294 = vmatprep.subr.mxu0 0.0
    %4295 = vmatpush1.msra.mxu0 0.0
    %4296 = vmatprep.subr.mxu0 0.0
    %4297 = vmatpush1.msra.mxu0 0.0
    %4298 = vmatprep.subr.mxu0 0.0
    %4299 = vmatpush1.msra.mxu0 0.0
    %4300 = vmatprep.subr.mxu0 0.0
    %4301 = vmatpush1.msra.mxu0 0.0
    %4302 = vmatprep.subr.mxu0 0.0
    %4303 = vmatpush1.msra.mxu0 0.0
    %4304 = vmatprep.subr.mxu0 0.0
    %4305 = vmatpush1.msra.mxu0 0.0
    %4306 = vmatprep.subr.mxu0 0.0
    %4307 = vmatpush1.msra.mxu0 0.0
    %4308 = vmatprep.subr.mxu0 0.0
    %4309 = vmatpush1.msra.mxu0 0.0
    %4310 = vmatprep.subr.mxu0 0.0
    %4311 = vmatpush1.msra.mxu0 0.0
    %4312 = vmatprep.subr.mxu0 0.0
    %4313 = vmatpush1.msra.mxu0 0.0
    %4314 = vmatprep.subr.mxu0 0.0
    %4315 = vmatpush1.msra.mxu0 0.0
    %4316 = vmatprep.subr.mxu0 0.0
    %4317 = vmatpush1.msra.mxu0 0.0
    %4318 = vmatprep.subr.mxu0 0.0
    %4319 = vmatpush1.msra.mxu0 0.0
    %4320 = vmatprep.subr.mxu0 0.0
    %4321 = vmatpush1.msra.mxu0 0.0
    %4322 = vmatprep.subr.mxu0 0.0
    %4323 = vmatpush1.msra.mxu0 0.0
    %4324 = vmatprep.subr.mxu0 0.0
    %4325 = vmatpush1.msra.mxu0 0.0
    %4326 = vmatprep.subr.mxu0 0.0
    %4327 = vmatpush1.msra.mxu0 0.0
    %4328 = vmatprep.mubr.f32.mxu0 0.0
    %4329 = vmatmul.mubr.f32.gmra.mrb[0].mxu0 %v4262
    %v4330 = vpop.f32.mrb[0].mxu0
    %v4331 = vadd.f32 %v4259, %v4330
    %v4332 = vpop.f32.mrb[0].mxu0
    %4333 = vdwg.mxu0
    %vm4334 = vcmp.ge.s32.totalorder %v162, 4
    %v4335 = vsel %vm4334, 1, 0
    %vm4336 = vcmp.eq.s32.totalorder %v4085, %v4335
    %v4337 = vsel %vm4336, 0.0, -1e+09
    %v4338 = vld [vmem:[#allocation8] sm:$0xff]
    %v4339 = vld [vmem:[#allocation8 + $0x8] sm:$0xff]
    %v4340 = vld [vmem:[#allocation8 + $0x10] sm:$0xff]
    %v4341 = vld [vmem:[#allocation8 + $0x18] sm:$0xff]
    %s4342 = scalar_lea.vmem [#allocation8], 32
    %v4343 = vld [vmem:[%s4342] sm:$0xff]
    %v4344 = vld [vmem:[%s4342 + $0x8] sm:$0xff]
    %v4345 = vld [vmem:[%s4342 + $0x10] sm:$0xff]
    %v4346 = vld [vmem:[%s4342 + $0x18] sm:$0xff]
    %s4347 = scalar_lea.vmem [#allocation8], 64
    %v4348 = vld [vmem:[%s4347] sm:$0xff]
    %v4349 = vld [vmem:[%s4347 + $0x8] sm:$0xff]
    %v4350 = vld [vmem:[%s4347 + $0x10] sm:$0xff]
    %v4351 = vld [vmem:[%s4347 + $0x18] sm:$0xff]
    %s4352 = scalar_lea.vmem [#allocation8], 96
    %v4353 = vld [vmem:[%s4352] sm:$0xff]
    %v4354 = vld [vmem:[%s4352 + $0x8] sm:$0xff]
    %v4355 = vld [vmem:[%s4352 + $0x10] sm:$0xff]
    %v4356 = vld [vmem:[%s4352 + $0x18] sm:$0xff]
    %v4357 = vld [vmem:[#allocation7 + $0x9] sm:$0x1]
    %v4358 = vlaneseq
    %v4359 = vshrl.u32 %v4358, 7
    %v4360 = vsub.s32 0, %v4359
    %v4361 = vrot.slane %v4357, %v4360
    %v4363 = vsel %vm181, %v4331, 0
    %4365 = vmatprep.subr.mxu0 0.0
    %4366 = vmatpush1.msra.mxu0 %v4338
    %4367 = vmatprep.subr.mxu0 0.0
    %4368 = vmatpush1.msra.mxu0 %v4339
    %4369 = vmatprep.subr.mxu0 0.0
    %4370 = vmatpush1.msra.mxu0 %v4340
    %4371 = vmatprep.subr.mxu0 0.0
    %4372 = vmatpush1.msra.mxu0 %v4341
    %4373 = vmatprep.subr.mxu0 0.0
    %4374 = vmatpush1.msra.mxu0 0.0
    %4375 = vmatprep.subr.mxu0 0.0
    %4376 = vmatpush1.msra.mxu0 0.0
    %4377 = vmatprep.subr.mxu0 0.0
    %4378 = vmatpush1.msra.mxu0 0.0
    %4379 = vmatprep.subr.mxu0 0.0
    %4380 = vmatpush1.msra.mxu0 0.0
    %4381 = vmatprep.subr.mxu0 0.0
    %4382 = vmatpush1.msra.mxu0 0.0
    %4383 = vmatprep.subr.mxu0 0.0
    %4384 = vmatpush1.msra.mxu0 0.0
    %4385 = vmatprep.subr.mxu0 0.0
    %4386 = vmatpush1.msra.mxu0 0.0
    %4387 = vmatprep.subr.mxu0 0.0
    %4388 = vmatpush1.msra.mxu0 0.0
    %4389 = vmatprep.subr.mxu0 0.0
    %4390 = vmatpush1.msra.mxu0 0.0
    %4391 = vmatprep.subr.mxu0 0.0
    %4392 = vmatpush1.msra.mxu0 0.0
    %4393 = vmatprep.subr.mxu0 0.0
    %4394 = vmatpush1.msra.mxu0 0.0
    %4395 = vmatprep.subr.mxu0 0.0
    %4396 = vmatpush1.msra.mxu0 0.0
    %4397 = vmatprep.subr.mxu0 0.0
    %4398 = vmatpush1.msra.mxu0 0.0
    %4399 = vmatprep.subr.mxu0 0.0
    %4400 = vmatpush1.msra.mxu0 0.0
    %4401 = vmatprep.subr.mxu0 0.0
    %4402 = vmatpush1.msra.mxu0 0.0
    %4403 = vmatprep.subr.mxu0 0.0
    %4404 = vmatpush1.msra.mxu0 0.0
    %4405 = vmatprep.subr.mxu0 0.0
    %4406 = vmatpush1.msra.mxu0 0.0
    %4407 = vmatprep.subr.mxu0 0.0
    %4408 = vmatpush1.msra.mxu0 0.0
    %4409 = vmatprep.subr.mxu0 0.0
    %4410 = vmatpush1.msra.mxu0 0.0
    %4411 = vmatprep.subr.mxu0 0.0
    %4412 = vmatpush1.msra.mxu0 0.0
    %4413 = vmatprep.subr.mxu0 0.0
    %4414 = vmatpush1.msra.mxu0 0.0
    %4415 = vmatprep.subr.mxu0 0.0
    %4416 = vmatpush1.msra.mxu0 0.0
    %4417 = vmatprep.subr.mxu0 0.0
    %4418 = vmatpush1.msra.mxu0 0.0
    %4419 = vmatprep.subr.mxu0 0.0
    %4420 = vmatpush1.msra.mxu0 0.0
    %4421 = vmatprep.subr.mxu0 0.0
    %4422 = vmatpush1.msra.mxu0 0.0
    %4423 = vmatprep.subr.mxu0 0.0
    %4424 = vmatpush1.msra.mxu0 0.0
    %4425 = vmatprep.subr.mxu0 0.0
    %4426 = vmatpush1.msra.mxu0 0.0
    %4427 = vmatprep.subr.mxu0 0.0
    %4428 = vmatpush1.msra.mxu0 0.0
    %4429 = vmatprep.mubr.f32.mxu0 0.0
    %4430 = vmatmul.mubr.f32.gmra.mrb[0].mxu0 %v4363
    %v4431 = vpop.f32.mrb[0].mxu0
    %v4432 = vadd.f32 %v4361, %v4431
    %v4433 = vpop.f32.mrb[0].mxu0
    %4434 = vdwg.mxu0
    %v4435 = vld [vmem:[#allocation7 + $0xa] sm:$0x1]
    %v4436 = vlaneseq
    %v4437 = vshrl.u32 %v4436, 7
    %v4438 = vsub.s32 0, %v4437
    %v4439 = vrot.slane %v4435, %v4438
    %4440 = vmatprep.subr.mxu0 0.0
    %4441 = vmatpush1.msra.mxu0 %v4343
    %4442 = vmatprep.subr.mxu0 0.0
    %4443 = vmatpush1.msra.mxu0 %v4344
    %4444 = vmatprep.subr.mxu0 0.0
    %4445 = vmatpush1.msra.mxu0 %v4345
    %4446 = vmatprep.subr.mxu0 0.0
    %4447 = vmatpush1.msra.mxu0 %v4346
    %4448 = vmatprep.subr.mxu0 0.0
    %4449 = vmatpush1.msra.mxu0 0.0
    %4450 = vmatprep.subr.mxu0 0.0
    %4451 = vmatpush1.msra.mxu0 0.0
    %4452 = vmatprep.subr.mxu0 0.0
    %4453 = vmatpush1.msra.mxu0 0.0
    %4454 = vmatprep.subr.mxu0 0.0
    %4455 = vmatpush1.msra.mxu0 0.0
    %4456 = vmatprep.subr.mxu0 0.0
    %4457 = vmatpush1.msra.mxu0 0.0
    %4458 = vmatprep.subr.mxu0 0.0
    %4459 = vmatpush1.msra.mxu0 0.0
    %4460 = vmatprep.subr.mxu0 0.0
    %4461 = vmatpush1.msra.mxu0 0.0
    %4462 = vmatprep.subr.mxu0 0.0
    %4463 = vmatpush1.msra.mxu0 0.0
    %4464 = vmatprep.subr.mxu0 0.0
    %4465 = vmatpush1.msra.mxu0 0.0
    %4466 = vmatprep.subr.mxu0 0.0
    %4467 = vmatpush1.msra.mxu0 0.0
    %4468 = vmatprep.subr.mxu0 0.0
    %4469 = vmatpush1.msra.mxu0 0.0
    %4470 = vmatprep.subr.mxu0 0.0
    %4471 = vmatpush1.msra.mxu0 0.0
    %4472 = vmatprep.subr.mxu0 0.0
    %4473 = vmatpush1.msra.mxu0 0.0
    %4474 = vmatprep.subr.mxu0 0.0
    %4475 = vmatpush1.msra.mxu0 0.0
    %4476 = vmatprep.subr.mxu0 0.0
    %4477 = vmatpush1.msra.mxu0 0.0
    %4478 = vmatprep.subr.mxu0 0.0
    %4479 = vmatpush1.msra.mxu0 0.0
    %4480 = vmatprep.subr.mxu0 0.0
    %4481 = vmatpush1.msra.mxu0 0.0
    %4482 = vmatprep.subr.mxu0 0.0
    %4483 = vmatpush1.msra.mxu0 0.0
    %4484 = vmatprep.subr.mxu0 0.0
    %4485 = vmatpush1.msra.mxu0 0.0
    %4486 = vmatprep.subr.mxu0 0.0
    %4487 = vmatpush1.msra.mxu0 0.0
    %4488 = vmatprep.subr.mxu0 0.0
    %4489 = vmatpush1.msra.mxu0 0.0
    %4490 = vmatprep.subr.mxu0 0.0
    %4491 = vmatpush1.msra.mxu0 0.0
    %4492 = vmatprep.subr.mxu0 0.0
    %4493 = vmatpush1.msra.mxu0 0.0
    %4494 = vmatprep.subr.mxu0 0.0
    %4495 = vmatpush1.msra.mxu0 0.0
    %4496 = vmatprep.subr.mxu0 0.0
    %4497 = vmatpush1.msra.mxu0 0.0
    %4498 = vmatprep.subr.mxu0 0.0
    %4499 = vmatpush1.msra.mxu0 0.0
    %4500 = vmatprep.subr.mxu0 0.0
    %4501 = vmatpush1.msra.mxu0 0.0
    %4502 = vmatprep.subr.mxu0 0.0
    %4503 = vmatpush1.msra.mxu0 0.0
    %4504 = vmatprep.mubr.f32.mxu0 0.0
    %4505 = vmatmul.mubr.f32.gmra.mrb[0].mxu0 %v4363
    %v4506 = vpop.f32.mrb[0].mxu0
    %v4507 = vadd.f32 %v4439, %v4506
    %v4508 = vpop.f32.mrb[0].mxu0
    %4509 = vdwg.mxu0
    %v4510 = vld [vmem:[#allocation7 + $0xb] sm:$0x1]
    %v4511 = vlaneseq
    %v4512 = vshrl.u32 %v4511, 7
    %v4513 = vsub.s32 0, %v4512
    %v4514 = vrot.slane %v4510, %v4513
    %4515 = vmatprep.subr.mxu0 0.0
    %4516 = vmatpush1.msra.mxu0 %v4348
    %4517 = vmatprep.subr.mxu0 0.0
    %4518 = vmatpush1.msra.mxu0 %v4349
    %4519 = vmatprep.subr.mxu0 0.0
    %4520 = vmatpush1.msra.mxu0 %v4350
    %4521 = vmatprep.subr.mxu0 0.0
    %4522 = vmatpush1.msra.mxu0 %v4351
    %4523 = vmatprep.subr.mxu0 0.0
    %4524 = vmatpush1.msra.mxu0 0.0
    %4525 = vmatprep.subr.mxu0 0.0
    %4526 = vmatpush1.msra.mxu0 0.0
    %4527 = vmatprep.subr.mxu0 0.0
    %4528 = vmatpush1.msra.mxu0 0.0
    %4529 = vmatprep.subr.mxu0 0.0
    %4530 = vmatpush1.msra.mxu0 0.0
    %4531 = vmatprep.subr.mxu0 0.0
    %4532 = vmatpush1.msra.mxu0 0.0
    %4533 = vmatprep.subr.mxu0 0.0
    %4534 = vmatpush1.msra.mxu0 0.0
    %4535 = vmatprep.subr.mxu0 0.0
    %4536 = vmatpush1.msra.mxu0 0.0
    %4537 = vmatprep.subr.mxu0 0.0
    %4538 = vmatpush1.msra.mxu0 0.0
    %4539 = vmatprep.subr.mxu0 0.0
    %4540 = vmatpush1.msra.mxu0 0.0
    %4541 = vmatprep.subr.mxu0 0.0
    %4542 = vmatpush1.msra.mxu0 0.0
    %4543 = vmatprep.subr.mxu0 0.0
    %4544 = vmatpush1.msra.mxu0 0.0
    %4545 = vmatprep.subr.mxu0 0.0
    %4546 = vmatpush1.msra.mxu0 0.0
    %4547 = vmatprep.subr.mxu0 0.0
    %4548 = vmatpush1.msra.mxu0 0.0
    %4549 = vmatprep.subr.mxu0 0.0
    %4550 = vmatpush1.msra.mxu0 0.0
    %4551 = vmatprep.subr.mxu0 0.0
    %4552 = vmatpush1.msra.mxu0 0.0
    %4553 = vmatprep.subr.mxu0 0.0
    %4554 = vmatpush1.msra.mxu0 0.0
    %4555 = vmatprep.subr.mxu0 0.0
    %4556 = vmatpush1.msra.mxu0 0.0
    %4557 = vmatprep.subr.mxu0 0.0
    %4558 = vmatpush1.msra.mxu0 0.0
    %4559 = vmatprep.subr.mxu0 0.0
    %4560 = vmatpush1.msra.mxu0 0.0
    %4561 = vmatprep.subr.mxu0 0.0
    %4562 = vmatpush1.msra.mxu0 0.0
    %4563 = vmatprep.subr.mxu0 0.0
    %4564 = vmatpush1.msra.mxu0 0.0
    %4565 = vmatprep.subr.mxu0 0.0
    %4566 = vmatpush1.msra.mxu0 0.0
    %4567 = vmatprep.subr.mxu0 0.0
    %4568 = vmatpush1.msra.mxu0 0.0
    %4569 = vmatprep.subr.mxu0 0.0
    %4570 = vmatpush1.msra.mxu0 0.0
    %4571 = vmatprep.subr.mxu0 0.0
    %4572 = vmatpush1.msra.mxu0 0.0
    %4573 = vmatprep.subr.mxu0 0.0
    %4574 = vmatpush1.msra.mxu0 0.0
    %4575 = vmatprep.subr.mxu0 0.0
    %4576 = vmatpush1.msra.mxu0 0.0
    %4577 = vmatprep.subr.mxu0 0.0
    %4578 = vmatpush1.msra.mxu0 0.0
    %4579 = vmatprep.mubr.f32.mxu0 0.0
    %4580 = vmatmul.mubr.f32.gmra.mrb[0].mxu0 %v4363
    %v4581 = vpop.f32.mrb[0].mxu0
    %v4582 = vadd.f32 %v4514, %v4581
    %v4583 = vpop.f32.mrb[0].mxu0
    %4584 = vdwg.mxu0
    %v4585 = vmul.f32 %v4432, 0.35355338
    %vm4586 = vcmask 64512
    %v4588 = vsel %vm4586, %v4585, 0
    %v4591 = vsel %vm4586, %v4507, 0
    %4593 = vmatprep.subr.mxu0 0.0
    %4594 = vmatpush1.xpose.msra.mxu0 %v4591
    %4595 = vmatprep.subr.mxu0 0.0
    %4596 = vmatpush1.xpose.msra.mxu0 0.0
    %4597 = vmatprep.subr.mxu0 0.0
    %4598 = vmatpush1.xpose.msra.mxu0 0.0
    %4599 = vmatprep.subr.mxu0 0.0
    %4600 = vmatpush1.xpose.msra.mxu0 0.0
    %4601 = vmatprep.subr.mxu0 0.0
    %4602 = vmatpush1.xpose.msra.mxu0 0.0
    %4603 = vmatprep.subr.mxu0 0.0
    %4604 = vmatpush1.xpose.msra.mxu0 0.0
    %4605 = vmatprep.subr.mxu0 0.0
    %4606 = vmatpush1.xpose.msra.mxu0 0.0
    %4607 = vmatprep.subr.mxu0 0.0
    %4608 = vmatpush1.xpose.msra.mxu0 0.0
    %4609 = vmatprep.subr.mxu0 0.0
    %4610 = vmatpush1.xpose.msra.mxu0 0.0
    %4611 = vmatprep.subr.mxu0 0.0
    %4612 = vmatpush1.xpose.msra.mxu0 0.0
    %4613 = vmatprep.subr.mxu0 0.0
    %4614 = vmatpush1.xpose.msra.mxu0 0.0
    %4615 = vmatprep.subr.mxu0 0.0
    %4616 = vmatpush1.xpose.msra.mxu0 0.0
    %4617 = vmatprep.subr.mxu0 0.0
    %4618 = vmatpush1.xpose.msra.mxu0 0.0
    %4619 = vmatprep.subr.mxu0 0.0
    %4620 = vmatpush1.xpose.msra.mxu0 0.0
    %4621 = vmatprep.subr.mxu0 0.0
    %4622 = vmatpush1.xpose.msra.mxu0 0.0
    %4623 = vmatprep.subr.mxu0 0.0
    %4624 = vmatpush1.xpose.msra.mxu0 0.0
    %4625 = vmatprep.subr.mxu0 0.0
    %4626 = vmatpush1.xpose.msra.mxu0 0.0
    %4627 = vmatprep.subr.mxu0 0.0
    %4628 = vmatpush1.xpose.msra.mxu0 0.0
    %4629 = vmatprep.subr.mxu0 0.0
    %4630 = vmatpush1.xpose.msra.mxu0 0.0
    %4631 = vmatprep.subr.mxu0 0.0
    %4632 = vmatpush1.xpose.msra.mxu0 0.0
    %4633 = vmatprep.subr.mxu0 0.0
    %4634 = vmatpush1.xpose.msra.mxu0 0.0
    %4635 = vmatprep.subr.mxu0 0.0
    %4636 = vmatpush1.xpose.msra.mxu0 0.0
    %4637 = vmatprep.subr.mxu0 0.0
    %4638 = vmatpush1.xpose.msra.mxu0 0.0
    %4639 = vmatprep.subr.mxu0 0.0
    %4640 = vmatpush1.xpose.msra.mxu0 0.0
    %4641 = vmatprep.subr.mxu0 0.0
    %4642 = vmatpush1.xpose.msra.mxu0 0.0
    %4643 = vmatprep.subr.mxu0 0.0
    %4644 = vmatpush1.xpose.msra.mxu0 0.0
    %4645 = vmatprep.subr.mxu0 0.0
    %4646 = vmatpush1.xpose.msra.mxu0 0.0
    %4647 = vmatprep.subr.mxu0 0.0
    %4648 = vmatpush1.xpose.msra.mxu0 0.0
    %4649 = vmatprep.subr.mxu0 0.0
    %4650 = vmatpush1.xpose.msra.mxu0 0.0
    %4651 = vmatprep.subr.mxu0 0.0
    %4652 = vmatpush1.xpose.msra.mxu0 0.0
    %4653 = vmatprep.subr.mxu0 0.0
    %4654 = vmatpush1.xpose.msra.mxu0 0.0
    %4655 = vmatprep.subr.mxu0 0.0
    %4656 = vmatpush1.xpose.msra.mxu0 0.0
    %4657 = vmatprep.mubr.f32.mxu0 0.0
    %4658 = vmatmul.mubr.f32.gmra.mrb[0].mxu0 %v4588
    %v4659 = vpop.f32.mrb[0].mxu0
    %v4660 = vadd.f32 %v4337, %v4659
    %v4661 = vpop.f32.mrb[0].mxu0
    %4662 = vdwg.mxu0
    %v4663 = vsel %vm4586, %v4660, -inf
    %4664 = vmax.xlane.f32.xlu0 %v4663
    %v4665 = vpop.xlane.xlu0 %4664
    %v4666 = vsub.f32 %v4660, %v4665
    %v4667 = vmul.f32 %v4666, 1.442695
    %v4668 = vpow.pop %v4667
    %v4669 = vsel %vm4586, %v4668, 0.0
    %4670 = vadd.xlane.f32.xlu0 %v4669
    %v4671 = vpop.xlane.xlu0 %4670
    %v4672 = vrcp.pop %v4671
    %v4673 = vmul.f32 %v4668, %v4672
    %v4675 = vsel %vm4586, %v4673, 0
    %4677 = vmatprep.subr.mxu0 0.0
    %4678 = vmatpush1.msra.mxu0 %v4582
    %4679 = vmatprep.subr.mxu0 0.0
    %4680 = vmatpush1.msra.mxu0 0.0
    %4681 = vmatprep.subr.mxu0 0.0
    %4682 = vmatpush1.msra.mxu0 0.0
    %4683 = vmatprep.subr.mxu0 0.0
    %4684 = vmatpush1.msra.mxu0 0.0
    %4685 = vmatprep.subr.mxu0 0.0
    %4686 = vmatpush1.msra.mxu0 0.0
    %4687 = vmatprep.subr.mxu0 0.0
    %4688 = vmatpush1.msra.mxu0 0.0
    %4689 = vmatprep.subr.mxu0 0.0
    %4690 = vmatpush1.msra.mxu0 0.0
    %4691 = vmatprep.subr.mxu0 0.0
    %4692 = vmatpush1.msra.mxu0 0.0
    %4693 = vmatprep.subr.mxu0 0.0
    %4694 = vmatpush1.msra.mxu0 0.0
    %4695 = vmatprep.subr.mxu0 0.0
    %4696 = vmatpush1.msra.mxu0 0.0
    %4697 = vmatprep.subr.mxu0 0.0
    %4698 = vmatpush1.msra.mxu0 0.0
    %4699 = vmatprep.subr.mxu0 0.0
    %4700 = vmatpush1.msra.mxu0 0.0
    %4701 = vmatprep.subr.mxu0 0.0
    %4702 = vmatpush1.msra.mxu0 0.0
    %4703 = vmatprep.subr.mxu0 0.0
    %4704 = vmatpush1.msra.mxu0 0.0
    %4705 = vmatprep.subr.mxu0 0.0
    %4706 = vmatpush1.msra.mxu0 0.0
    %4707 = vmatprep.subr.mxu0 0.0
    %4708 = vmatpush1.msra.mxu0 0.0
    %4709 = vmatprep.subr.mxu0 0.0
    %4710 = vmatpush1.msra.mxu0 0.0
    %4711 = vmatprep.subr.mxu0 0.0
    %4712 = vmatpush1.msra.mxu0 0.0
    %4713 = vmatprep.subr.mxu0 0.0
    %4714 = vmatpush1.msra.mxu0 0.0
    %4715 = vmatprep.subr.mxu0 0.0
    %4716 = vmatpush1.msra.mxu0 0.0
    %4717 = vmatprep.subr.mxu0 0.0
    %4718 = vmatpush1.msra.mxu0 0.0
    %4719 = vmatprep.subr.mxu0 0.0
    %4720 = vmatpush1.msra.mxu0 0.0
    %4721 = vmatprep.subr.mxu0 0.0
    %4722 = vmatpush1.msra.mxu0 0.0
    %4723 = vmatprep.subr.mxu0 0.0
    %4724 = vmatpush1.msra.mxu0 0.0
    %4725 = vmatprep.subr.mxu0 0.0
    %4726 = vmatpush1.msra.mxu0 0.0
    %4727 = vmatprep.subr.mxu0 0.0
    %4728 = vmatpush1.msra.mxu0 0.0
    %4729 = vmatprep.subr.mxu0 0.0
    %4730 = vmatpush1.msra.mxu0 0.0
    %4731 = vmatprep.subr.mxu0 0.0
    %4732 = vmatpush1.msra.mxu0 0.0
    %4733 = vmatprep.subr.mxu0 0.0
    %4734 = vmatpush1.msra.mxu0 0.0
    %4735 = vmatprep.subr.mxu0 0.0
    %4736 = vmatpush1.msra.mxu0 0.0
    %4737 = vmatprep.subr.mxu0 0.0
    %4738 = vmatpush1.msra.mxu0 0.0
    %4739 = vmatprep.subr.mxu0 0.0
    %4740 = vmatpush1.msra.mxu0 0.0
    %4741 = vmatprep.mubr.f32.mxu0 0.0
    %4742 = vmatmul.mubr.f32.gmra.mrb[0].mxu0 %v4675
    %v4743 = vpop.f32.mrb[0].mxu0
    %v4744 = vadd.f32 0.0, %v4743
    %v4745 = vpop.f32.mrb[0].mxu0
    %4746 = vdwg.mxu0
    %4747 = vrot.lane.b32.xlu0 %v4585, 120
    %v4748 = vpop.permute.xlu0 %4747
    %4749 = vrot.lane.b32.xlu0 %v4507, 120
    %v4750 = vpop.permute.xlu0 %4749
    %v4751 = vsel %vm4586, %v4748, 0
    %v4753 = vsel %vm4586, %v4750, 0
    %4755 = vmatprep.subr.mxu0 0.0
    %4756 = vmatpush1.xpose.msra.mxu0 %v4753
    %4757 = vmatprep.subr.mxu0 0.0
    %4758 = vmatpush1.xpose.msra.mxu0 0.0
    %4759 = vmatprep.subr.mxu0 0.0
    %4760 = vmatpush1.xpose.msra.mxu0 0.0
    %4761 = vmatprep.subr.mxu0 0.0
    %4762 = vmatpush1.xpose.msra.mxu0 0.0
    %4763 = vmatprep.subr.mxu0 0.0
    %4764 = vmatpush1.xpose.msra.mxu0 0.0
    %4765 = vmatprep.subr.mxu0 0.0
    %4766 = vmatpush1.xpose.msra.mxu0 0.0
    %4767 = vmatprep.subr.mxu0 0.0
    %4768 = vmatpush1.xpose.msra.mxu0 0.0
    %4769 = vmatprep.subr.mxu0 0.0
    %4770 = vmatpush1.xpose.msra.mxu0 0.0
    %4771 = vmatprep.subr.mxu0 0.0
    %4772 = vmatpush1.xpose.msra.mxu0 0.0
    %4773 = vmatprep.subr.mxu0 0.0
    %4774 = vmatpush1.xpose.msra.mxu0 0.0
    %4775 = vmatprep.subr.mxu0 0.0
    %4776 = vmatpush1.xpose.msra.mxu0 0.0
    %4777 = vmatprep.subr.mxu0 0.0
    %4778 = vmatpush1.xpose.msra.mxu0 0.0
    %4779 = vmatprep.subr.mxu0 0.0
    %4780 = vmatpush1.xpose.msra.mxu0 0.0
    %4781 = vmatprep.subr.mxu0 0.0
    %4782 = vmatpush1.xpose.msra.mxu0 0.0
    %4783 = vmatprep.subr.mxu0 0.0
    %4784 = vmatpush1.xpose.msra.mxu0 0.0
    %4785 = vmatprep.subr.mxu0 0.0
    %4786 = vmatpush1.xpose.msra.mxu0 0.0
    %4787 = vmatprep.subr.mxu0 0.0
    %4788 = vmatpush1.xpose.msra.mxu0 0.0
    %4789 = vmatprep.subr.mxu0 0.0
    %4790 = vmatpush1.xpose.msra.mxu0 0.0
    %4791 = vmatprep.subr.mxu0 0.0
    %4792 = vmatpush1.xpose.msra.mxu0 0.0
    %4793 = vmatprep.subr.mxu0 0.0
    %4794 = vmatpush1.xpose.msra.mxu0 0.0
    %4795 = vmatprep.subr.mxu0 0.0
    %4796 = vmatpush1.xpose.msra.mxu0 0.0
    %4797 = vmatprep.subr.mxu0 0.0
    %4798 = vmatpush1.xpose.msra.mxu0 0.0
    %4799 = vmatprep.subr.mxu0 0.0
    %4800 = vmatpush1.xpose.msra.mxu0 0.0
    %4801 = vmatprep.subr.mxu0 0.0
    %4802 = vmatpush1.xpose.msra.mxu0 0.0
    %4803 = vmatprep.subr.mxu0 0.0
    %4804 = vmatpush1.xpose.msra.mxu0 0.0
    %4805 = vmatprep.subr.mxu0 0.0
    %4806 = vmatpush1.xpose.msra.mxu0 0.0
    %4807 = vmatprep.subr.mxu0 0.0
    %4808 = vmatpush1.xpose.msra.mxu0 0.0
    %4809 = vmatprep.subr.mxu0 0.0
    %4810 = vmatpush1.xpose.msra.mxu0 0.0
    %4811 = vmatprep.subr.mxu0 0.0
    %4812 = vmatpush1.xpose.msra.mxu0 0.0
    %4813 = vmatprep.subr.mxu0 0.0
    %4814 = vmatpush1.xpose.msra.mxu0 0.0
    %4815 = vmatprep.subr.mxu0 0.0
    %4816 = vmatpush1.xpose.msra.mxu0 0.0
    %4817 = vmatprep.subr.mxu0 0.0
    %4818 = vmatpush1.xpose.msra.mxu0 0.0
    %4819 = vmatprep.mubr.f32.mxu0 0.0
    %4820 = vmatmul.mubr.f32.gmra.mrb[0].mxu0 %v4751
    %v4821 = vpop.f32.mrb[0].mxu0
    %v4822 = vadd.f32 %v4337, %v4821
    %v4823 = vpop.f32.mrb[0].mxu0
    %4824 = vdwg.mxu0
    %v4825 = vsel %vm4586, %v4822, -inf
    %4826 = vmax.xlane.f32.xlu0 %v4825
    %v4827 = vpop.xlane.xlu0 %4826
    %v4828 = vsub.f32 %v4822, %v4827
    %v4829 = vmul.f32 %v4828, 1.442695
    %v4830 = vpow.pop %v4829
    %v4831 = vsel %vm4586, %v4830, 0.0
    %4832 = vadd.xlane.f32.xlu0 %v4831
    %v4833 = vpop.xlane.xlu0 %4832
    %v4834 = vrcp.pop %v4833
    %v4835 = vmul.f32 %v4830, %v4834
    %4837 = vrot.lane.b32.xlu0 %v4582, 120
    %v4838 = vpop.permute.xlu0 %4837
    %v4841 = vsel %vm4586, %v4835, 0
    %4843 = vmatprep.subr.mxu0 0.0
    %4844 = vmatpush1.msra.mxu0 %v4838
    %4845 = vmatprep.subr.mxu0 0.0
    %4846 = vmatpush1.msra.mxu0 0.0
    %4847 = vmatprep.subr.mxu0 0.0
    %4848 = vmatpush1.msra.mxu0 0.0
    %4849 = vmatprep.subr.mxu0 0.0
    %4850 = vmatpush1.msra.mxu0 0.0
    %4851 = vmatprep.subr.mxu0 0.0
    %4852 = vmatpush1.msra.mxu0 0.0
    %4853 = vmatprep.subr.mxu0 0.0
    %4854 = vmatpush1.msra.mxu0 0.0
    %4855 = vmatprep.subr.mxu0 0.0
    %4856 = vmatpush1.msra.mxu0 0.0
    %4857 = vmatprep.subr.mxu0 0.0
    %4858 = vmatpush1.msra.mxu0 0.0
    %4859 = vmatprep.subr.mxu0 0.0
    %4860 = vmatpush1.msra.mxu0 0.0
    %4861 = vmatprep.subr.mxu0 0.0
    %4862 = vmatpush1.msra.mxu0 0.0
    %4863 = vmatprep.subr.mxu0 0.0
    %4864 = vmatpush1.msra.mxu0 0.0
    %4865 = vmatprep.subr.mxu0 0.0
    %4866 = vmatpush1.msra.mxu0 0.0
    %4867 = vmatprep.subr.mxu0 0.0
    %4868 = vmatpush1.msra.mxu0 0.0
    %4869 = vmatprep.subr.mxu0 0.0
    %4870 = vmatpush1.msra.mxu0 0.0
    %4871 = vmatprep.subr.mxu0 0.0
    %4872 = vmatpush1.msra.mxu0 0.0
    %4873 = vmatprep.subr.mxu0 0.0
    %4874 = vmatpush1.msra.mxu0 0.0
    %4875 = vmatprep.subr.mxu0 0.0
    %4876 = vmatpush1.msra.mxu0 0.0
    %4877 = vmatprep.subr.mxu0 0.0
    %4878 = vmatpush1.msra.mxu0 0.0
    %4879 = vmatprep.subr.mxu0 0.0
    %4880 = vmatpush1.msra.mxu0 0.0
    %4881 = vmatprep.subr.mxu0 0.0
    %4882 = vmatpush1.msra.mxu0 0.0
    %4883 = vmatprep.subr.mxu0 0.0
    %4884 = vmatpush1.msra.mxu0 0.0
    %4885 = vmatprep.subr.mxu0 0.0
    %4886 = vmatpush1.msra.mxu0 0.0
    %4887 = vmatprep.subr.mxu0 0.0
    %4888 = vmatpush1.msra.mxu0 0.0
    %4889 = vmatprep.subr.mxu0 0.0
    %4890 = vmatpush1.msra.mxu0 0.0
    %4891 = vmatprep.subr.mxu0 0.0
    %4892 = vmatpush1.msra.mxu0 0.0
    %4893 = vmatprep.subr.mxu0 0.0
    %4894 = vmatpush1.msra.mxu0 0.0
    %4895 = vmatprep.subr.mxu0 0.0
    %4896 = vmatpush1.msra.mxu0 0.0
    %4897 = vmatprep.subr.mxu0 0.0
    %4898 = vmatpush1.msra.mxu0 0.0
    %4899 = vmatprep.subr.mxu0 0.0
    %4900 = vmatpush1.msra.mxu0 0.0
    %4901 = vmatprep.subr.mxu0 0.0
    %4902 = vmatpush1.msra.mxu0 0.0
    %4903 = vmatprep.subr.mxu0 0.0
    %4904 = vmatpush1.msra.mxu0 0.0
    %4905 = vmatprep.subr.mxu0 0.0
    %4906 = vmatpush1.msra.mxu0 0.0
    %4907 = vmatprep.mubr.f32.mxu0 0.0
    %4908 = vmatmul.mubr.f32.gmra.mrb[0].mxu0 %v4841
    %v4909 = vpop.f32.mrb[0].mxu0
    %v4910 = vadd.f32 0.0, %v4909
    %v4911 = vpop.f32.mrb[0].mxu0
    %4912 = vdwg.mxu0
    %4913 = vrot.lane.b32.xlu0 %v4585, 112
    %v4914 = vpop.permute.xlu0 %4913
    %4915 = vrot.lane.b32.xlu0 %v4507, 112
    %v4916 = vpop.permute.xlu0 %4915
    %v4917 = vsel %vm4586, %v4914, 0
    %v4919 = vsel %vm4586, %v4916, 0
    %4921 = vmatprep.subr.mxu0 0.0
    %4922 = vmatpush1.xpose.msra.mxu0 %v4919
    %4923 = vmatprep.subr.mxu0 0.0
    %4924 = vmatpush1.xpose.msra.mxu0 0.0
    %4925 = vmatprep.subr.mxu0 0.0
    %4926 = vmatpush1.xpose.msra.mxu0 0.0
    %4927 = vmatprep.subr.mxu0 0.0
    %4928 = vmatpush1.xpose.msra.mxu0 0.0
    %4929 = vmatprep.subr.mxu0 0.0
    %4930 = vmatpush1.xpose.msra.mxu0 0.0
    %4931 = vmatprep.subr.mxu0 0.0
    %4932 = vmatpush1.xpose.msra.mxu0 0.0
    %4933 = vmatprep.subr.mxu0 0.0
    %4934 = vmatpush1.xpose.msra.mxu0 0.0
    %4935 = vmatprep.subr.mxu0 0.0
    %4936 = vmatpush1.xpose.msra.mxu0 0.0
    %4937 = vmatprep.subr.mxu0 0.0
    %4938 = vmatpush1.xpose.msra.mxu0 0.0
    %4939 = vmatprep.subr.mxu0 0.0
    %4940 = vmatpush1.xpose.msra.mxu0 0.0
    %4941 = vmatprep.subr.mxu0 0.0
    %4942 = vmatpush1.xpose.msra.mxu0 0.0
    %4943 = vmatprep.subr.mxu0 0.0
    %4944 = vmatpush1.xpose.msra.mxu0 0.0
    %4945 = vmatprep.subr.mxu0 0.0
    %4946 = vmatpush1.xpose.msra.mxu0 0.0
    %4947 = vmatprep.subr.mxu0 0.0
    %4948 = vmatpush1.xpose.msra.mxu0 0.0
    %4949 = vmatprep.subr.mxu0 0.0
    %4950 = vmatpush1.xpose.msra.mxu0 0.0
    %4951 = vmatprep.subr.mxu0 0.0
    %4952 = vmatpush1.xpose.msra.mxu0 0.0
    %4953 = vmatprep.subr.mxu0 0.0
    %4954 = vmatpush1.xpose.msra.mxu0 0.0
    %4955 = vmatprep.subr.mxu0 0.0
    %4956 = vmatpush1.xpose.msra.mxu0 0.0
    %4957 = vmatprep.subr.mxu0 0.0
    %4958 = vmatpush1.xpose.msra.mxu0 0.0
    %4959 = vmatprep.subr.mxu0 0.0
    %4960 = vmatpush1.xpose.msra.mxu0 0.0
    %4961 = vmatprep.subr.mxu0 0.0
    %4962 = vmatpush1.xpose.msra.mxu0 0.0
    %4963 = vmatprep.subr.mxu0 0.0
    %4964 = vmatpush1.xpose.msra.mxu0 0.0
    %4965 = vmatprep.subr.mxu0 0.0
    %4966 = vmatpush1.xpose.msra.mxu0 0.0
    %4967 = vmatprep.subr.mxu0 0.0
    %4968 = vmatpush1.xpose.msra.mxu0 0.0
    %4969 = vmatprep.subr.mxu0 0.0
    %4970 = vmatpush1.xpose.msra.mxu0 0.0
    %4971 = vmatprep.subr.mxu0 0.0
    %4972 = vmatpush1.xpose.msra.mxu0 0.0
    %4973 = vmatprep.subr.mxu0 0.0
    %4974 = vmatpush1.xpose.msra.mxu0 0.0
    %4975 = vmatprep.subr.mxu0 0.0
    %4976 = vmatpush1.xpose.msra.mxu0 0.0
    %4977 = vmatprep.subr.mxu0 0.0
    %4978 = vmatpush1.xpose.msra.mxu0 0.0
    %4979 = vmatprep.subr.mxu0 0.0
    %4980 = vmatpush1.xpose.msra.mxu0 0.0
    %4981 = vmatprep.subr.mxu0 0.0
    %4982 = vmatpush1.xpose.msra.mxu0 0.0
    %4983 = vmatprep.subr.mxu0 0.0
    %4984 = vmatpush1.xpose.msra.mxu0 0.0
    %4985 = vmatprep.mubr.f32.mxu0 0.0
    %4986 = vmatmul.mubr.f32.gmra.mrb[0].mxu0 %v4917
    %v4987 = vpop.f32.mrb[0].mxu0
    %v4988 = vadd.f32 %v4337, %v4987
    %v4989 = vpop.f32.mrb[0].mxu0
    %4990 = vdwg.mxu0
    %v4991 = vsel %vm4586, %v4988, -inf
    %4992 = vmax.xlane.f32.xlu0 %v4991
    %v4993 = vpop.xlane.xlu0 %4992
    %v4994 = vsub.f32 %v4988, %v4993
    %v4995 = vmul.f32 %v4994, 1.442695
    %v4996 = vpow.pop %v4995
    %v4997 = vsel %vm4586, %v4996, 0.0
    %4998 = vadd.xlane.f32.xlu0 %v4997
    %v4999 = vpop.xlane.xlu0 %4998
    %v5000 = vrcp.pop %v4999
    %v5001 = vmul.f32 %v4996, %v5000
    %5002 = vrot.lane.b32.xlu0 %v4582, 112
    %v5003 = vpop.permute.xlu0 %5002
    %v5006 = vsel %vm4586, %v5001, 0
    %5008 = vmatprep.subr.mxu0 0.0
    %5009 = vmatpush1.msra.mxu0 %v5003
    %5010 = vmatprep.subr.mxu0 0.0
    %5011 = vmatpush1.msra.mxu0 0.0
    %5012 = vmatprep.subr.mxu0 0.0
    %5013 = vmatpush1.msra.mxu0 0.0
    %5014 = vmatprep.subr.mxu0 0.0
    %5015 = vmatpush1.msra.mxu0 0.0
    %5016 = vmatprep.subr.mxu0 0.0
    %5017 = vmatpush1.msra.mxu0 0.0
    %5018 = vmatprep.subr.mxu0 0.0
    %5019 = vmatpush1.msra.mxu0 0.0
    %5020 = vmatprep.subr.mxu0 0.0
    %5021 = vmatpush1.msra.mxu0 0.0
    %5022 = vmatprep.subr.mxu0 0.0
    %5023 = vmatpush1.msra.mxu0 0.0
    %5024 = vmatprep.subr.mxu0 0.0
    %5025 = vmatpush1.msra.mxu0 0.0
    %5026 = vmatprep.subr.mxu0 0.0
    %5027 = vmatpush1.msra.mxu0 0.0
    %5028 = vmatprep.subr.mxu0 0.0
    %5029 = vmatpush1.msra.mxu0 0.0
    %5030 = vmatprep.subr.mxu0 0.0
    %5031 = vmatpush1.msra.mxu0 0.0
    %5032 = vmatprep.subr.mxu0 0.0
    %5033 = vmatpush1.msra.mxu0 0.0
    %5034 = vmatprep.subr.mxu0 0.0
    %5035 = vmatpush1.msra.mxu0 0.0
    %5036 = vmatprep.subr.mxu0 0.0
    %5037 = vmatpush1.msra.mxu0 0.0
    %5038 = vmatprep.subr.mxu0 0.0
    %5039 = vmatpush1.msra.mxu0 0.0
    %5040 = vmatprep.subr.mxu0 0.0
    %5041 = vmatpush1.msra.mxu0 0.0
    %5042 = vmatprep.subr.mxu0 0.0
    %5043 = vmatpush1.msra.mxu0 0.0
    %5044 = vmatprep.subr.mxu0 0.0
    %5045 = vmatpush1.msra.mxu0 0.0
    %5046 = vmatprep.subr.mxu0 0.0
    %5047 = vmatpush1.msra.mxu0 0.0
    %5048 = vmatprep.subr.mxu0 0.0
    %5049 = vmatpush1.msra.mxu0 0.0
    %5050 = vmatprep.subr.mxu0 0.0
    %5051 = vmatpush1.msra.mxu0 0.0
    %5052 = vmatprep.subr.mxu0 0.0
    %5053 = vmatpush1.msra.mxu0 0.0
    %5054 = vmatprep.subr.mxu0 0.0
    %5055 = vmatpush1.msra.mxu0 0.0
    %5056 = vmatprep.subr.mxu0 0.0
    %5057 = vmatpush1.msra.mxu0 0.0
    %5058 = vmatprep.subr.mxu0 0.0
    %5059 = vmatpush1.msra.mxu0 0.0
    %5060 = vmatprep.subr.mxu0 0.0
    %5061 = vmatpush1.msra.mxu0 0.0
    %5062 = vmatprep.subr.mxu0 0.0
    %5063 = vmatpush1.msra.mxu0 0.0
    %5064 = vmatprep.subr.mxu0 0.0
    %5065 = vmatpush1.msra.mxu0 0.0
    %5066 = vmatprep.subr.mxu0 0.0
    %5067 = vmatpush1.msra.mxu0 0.0
    %5068 = vmatprep.subr.mxu0 0.0
    %5069 = vmatpush1.msra.mxu0 0.0
    %5070 = vmatprep.subr.mxu0 0.0
    %5071 = vmatpush1.msra.mxu0 0.0
    %5072 = vmatprep.mubr.f32.mxu0 0.0
    %5073 = vmatmul.mubr.f32.gmra.mrb[0].mxu0 %v5006
    %v5074 = vpop.f32.mrb[0].mxu0
    %v5075 = vadd.f32 0.0, %v5074
    %v5076 = vpop.f32.mrb[0].mxu0
    %5077 = vdwg.mxu0
    %5078 = vrot.lane.b32.xlu0 %v4585, 104
    %v5079 = vpop.permute.xlu0 %5078
    %5080 = vrot.lane.b32.xlu0 %v4507, 104
    %v5081 = vpop.permute.xlu0 %5080
    %v5082 = vsel %vm4586, %v5079, 0
    %v5084 = vsel %vm4586, %v5081, 0
    %5086 = vmatprep.subr.mxu0 0.0
    %5087 = vmatpush1.xpose.msra.mxu0 %v5084
    %5088 = vmatprep.subr.mxu0 0.0
    %5089 = vmatpush1.xpose.msra.mxu0 0.0
    %5090 = vmatprep.subr.mxu0 0.0
    %5091 = vmatpush1.xpose.msra.mxu0 0.0
    %5092 = vmatprep.subr.mxu0 0.0
    %5093 = vmatpush1.xpose.msra.mxu0 0.0
    %5094 = vmatprep.subr.mxu0 0.0
    %5095 = vmatpush1.xpose.msra.mxu0 0.0
    %5096 = vmatprep.subr.mxu0 0.0
    %5097 = vmatpush1.xpose.msra.mxu0 0.0
    %5098 = vmatprep.subr.mxu0 0.0
    %5099 = vmatpush1.xpose.msra.mxu0 0.0
    %5100 = vmatprep.subr.mxu0 0.0
    %5101 = vmatpush1.xpose.msra.mxu0 0.0
    %5102 = vmatprep.subr.mxu0 0.0
    %5103 = vmatpush1.xpose.msra.mxu0 0.0
    %5104 = vmatprep.subr.mxu0 0.0
    %5105 = vmatpush1.xpose.msra.mxu0 0.0
    %5106 = vmatprep.subr.mxu0 0.0
    %5107 = vmatpush1.xpose.msra.mxu0 0.0
    %5108 = vmatprep.subr.mxu0 0.0
    %5109 = vmatpush1.xpose.msra.mxu0 0.0
    %5110 = vmatprep.subr.mxu0 0.0
    %5111 = vmatpush1.xpose.msra.mxu0 0.0
    %5112 = vmatprep.subr.mxu0 0.0
    %5113 = vmatpush1.xpose.msra.mxu0 0.0
    %5114 = vmatprep.subr.mxu0 0.0
    %5115 = vmatpush1.xpose.msra.mxu0 0.0
    %5116 = vmatprep.subr.mxu0 0.0
    %5117 = vmatpush1.xpose.msra.mxu0 0.0
    %5118 = vmatprep.subr.mxu0 0.0
    %5119 = vmatpush1.xpose.msra.mxu0 0.0
    %5120 = vmatprep.subr.mxu0 0.0
    %5121 = vmatpush1.xpose.msra.mxu0 0.0
    %5122 = vmatprep.subr.mxu0 0.0
    %5123 = vmatpush1.xpose.msra.mxu0 0.0
    %5124 = vmatprep.subr.mxu0 0.0
    %5125 = vmatpush1.xpose.msra.mxu0 0.0
    %5126 = vmatprep.subr.mxu0 0.0
    %5127 = vmatpush1.xpose.msra.mxu0 0.0
    %5128 = vmatprep.subr.mxu0 0.0
    %5129 = vmatpush1.xpose.msra.mxu0 0.0
    %5130 = vmatprep.subr.mxu0 0.0
    %5131 = vmatpush1.xpose.msra.mxu0 0.0
    %5132 = vmatprep.subr.mxu0 0.0
    %5133 = vmatpush1.xpose.msra.mxu0 0.0
    %5134 = vmatprep.subr.mxu0 0.0
    %5135 = vmatpush1.xpose.msra.mxu0 0.0
    %5136 = vmatprep.subr.mxu0 0.0
    %5137 = vmatpush1.xpose.msra.mxu0 0.0
    %5138 = vmatprep.subr.mxu0 0.0
    %5139 = vmatpush1.xpose.msra.mxu0 0.0
    %5140 = vmatprep.subr.mxu0 0.0
    %5141 = vmatpush1.xpose.msra.mxu0 0.0
    %5142 = vmatprep.subr.mxu0 0.0
    %5143 = vmatpush1.xpose.msra.mxu0 0.0
    %5144 = vmatprep.subr.mxu0 0.0
    %5145 = vmatpush1.xpose.msra.mxu0 0.0
    %5146 = vmatprep.subr.mxu0 0.0
    %5147 = vmatpush1.xpose.msra.mxu0 0.0
    %5148 = vmatprep.subr.mxu0 0.0
    %5149 = vmatpush1.xpose.msra.mxu0 0.0
    %5150 = vmatprep.mubr.f32.mxu0 0.0
    %5151 = vmatmul.mubr.f32.gmra.mrb[0].mxu0 %v5082
    %v5152 = vpop.f32.mrb[0].mxu0
    %v5153 = vadd.f32 %v4337, %v5152
    %v5154 = vpop.f32.mrb[0].mxu0
    %5155 = vdwg.mxu0
    %v5156 = vsel %vm4586, %v5153, -inf
    %5157 = vmax.xlane.f32.xlu0 %v5156
    %v5158 = vpop.xlane.xlu0 %5157
    %v5159 = vsub.f32 %v5153, %v5158
    %v5160 = vmul.f32 %v5159, 1.442695
    %v5161 = vpow.pop %v5160
    %v5162 = vsel %vm4586, %v5161, 0.0
    %5163 = vadd.xlane.f32.xlu0 %v5162
    %v5164 = vpop.xlane.xlu0 %5163
    %v5165 = vrcp.pop %v5164
    %v5166 = vmul.f32 %v5161, %v5165
    %5167 = vrot.lane.b32.xlu0 %v4582, 104
    %v5168 = vpop.permute.xlu0 %5167
    %v5171 = vsel %vm4586, %v5166, 0
    %5173 = vmatprep.subr.mxu0 0.0
    %5174 = vmatpush1.msra.mxu0 %v5168
    %5175 = vmatprep.subr.mxu0 0.0
    %5176 = vmatpush1.msra.mxu0 0.0
    %5177 = vmatprep.subr.mxu0 0.0
    %5178 = vmatpush1.msra.mxu0 0.0
    %5179 = vmatprep.subr.mxu0 0.0
    %5180 = vmatpush1.msra.mxu0 0.0
    %5181 = vmatprep.subr.mxu0 0.0
    %5182 = vmatpush1.msra.mxu0 0.0
    %5183 = vmatprep.subr.mxu0 0.0
    %5184 = vmatpush1.msra.mxu0 0.0
    %5185 = vmatprep.subr.mxu0 0.0
    %5186 = vmatpush1.msra.mxu0 0.0
    %5187 = vmatprep.subr.mxu0 0.0
    %5188 = vmatpush1.msra.mxu0 0.0
    %5189 = vmatprep.subr.mxu0 0.0
    %5190 = vmatpush1.msra.mxu0 0.0
    %5191 = vmatprep.subr.mxu0 0.0
    %5192 = vmatpush1.msra.mxu0 0.0
    %5193 = vmatprep.subr.mxu0 0.0
    %5194 = vmatpush1.msra.mxu0 0.0
    %5195 = vmatprep.subr.mxu0 0.0
    %5196 = vmatpush1.msra.mxu0 0.0
    %5197 = vmatprep.subr.mxu0 0.0
    %5198 = vmatpush1.msra.mxu0 0.0
    %5199 = vmatprep.subr.mxu0 0.0
    %5200 = vmatpush1.msra.mxu0 0.0
    %5201 = vmatprep.subr.mxu0 0.0
    %5202 = vmatpush1.msra.mxu0 0.0
    %5203 = vmatprep.subr.mxu0 0.0
    %5204 = vmatpush1.msra.mxu0 0.0
    %5205 = vmatprep.subr.mxu0 0.0
    %5206 = vmatpush1.msra.mxu0 0.0
    %5207 = vmatprep.subr.mxu0 0.0
    %5208 = vmatpush1.msra.mxu0 0.0
    %5209 = vmatprep.subr.mxu0 0.0
    %5210 = vmatpush1.msra.mxu0 0.0
    %5211 = vmatprep.subr.mxu0 0.0
    %5212 = vmatpush1.msra.mxu0 0.0
    %5213 = vmatprep.subr.mxu0 0.0
    %5214 = vmatpush1.msra.mxu0 0.0
    %5215 = vmatprep.subr.mxu0 0.0
    %5216 = vmatpush1.msra.mxu0 0.0
    %5217 = vmatprep.subr.mxu0 0.0
    %5218 = vmatpush1.msra.mxu0 0.0
    %5219 = vmatprep.subr.mxu0 0.0
    %5220 = vmatpush1.msra.mxu0 0.0
    %5221 = vmatprep.subr.mxu0 0.0
    %5222 = vmatpush1.msra.mxu0 0.0
    %5223 = vmatprep.subr.mxu0 0.0
    %5224 = vmatpush1.msra.mxu0 0.0
    %5225 = vmatprep.subr.mxu0 0.0
    %5226 = vmatpush1.msra.mxu0 0.0
    %5227 = vmatprep.subr.mxu0 0.0
    %5228 = vmatpush1.msra.mxu0 0.0
    %5229 = vmatprep.subr.mxu0 0.0
    %5230 = vmatpush1.msra.mxu0 0.0
    %5231 = vmatprep.subr.mxu0 0.0
    %5232 = vmatpush1.msra.mxu0 0.0
    %5233 = vmatprep.subr.mxu0 0.0
    %5234 = vmatpush1.msra.mxu0 0.0
    %5235 = vmatprep.subr.mxu0 0.0
    %5236 = vmatpush1.msra.mxu0 0.0
    %5237 = vmatprep.mubr.f32.mxu0 0.0
    %5238 = vmatmul.mubr.f32.gmra.mrb[0].mxu0 %v5171
    %v5239 = vpop.f32.mrb[0].mxu0
    %v5240 = vadd.f32 0.0, %v5239
    %v5241 = vpop.f32.mrb[0].mxu0
    %5242 = vdwg.mxu0
    %5244 = vrot.lane.b32.xlu0 %v4910, 8
    %v5245 = vpop.permute.xlu0 %5244
    %5248 = vrot.lane.b32.xlu0 %v5075, 16
    %v5249 = vpop.permute.xlu0 %5248
    %5252 = vrot.lane.b32.xlu0 %v5240, 24
    %v5253 = vpop.permute.xlu0 %5252
    %v5255 = vsel %vm4586, %v4744, %v5245
    %v5256 = vsel %vm4260, %v5255, %v5249
    %vm5257 = vcmask 195584
    %v5258 = vsel %vm5257, %v5256, %v5253
    %v5259 = vld [vmem:[#allocation7 + $0xc] sm:$0x1]
    %v5260 = vlaneseq
    %v5261 = vshrl.u32 %v5260, 7
    %v5262 = vsub.s32 0, %v5261
    %v5263 = vrot.slane %v5259, %v5262
    %v5265 = vsel %vm181, %v5258, 0
    %5267 = vmatprep.subr.mxu0 0.0
    %5268 = vmatpush1.msra.mxu0 %v4353
    %5269 = vmatprep.subr.mxu0 0.0
    %5270 = vmatpush1.msra.mxu0 %v4354
    %5271 = vmatprep.subr.mxu0 0.0
    %5272 = vmatpush1.msra.mxu0 %v4355
    %5273 = vmatprep.subr.mxu0 0.0
    %5274 = vmatpush1.msra.mxu0 %v4356
    %5275 = vmatprep.subr.mxu0 0.0
    %5276 = vmatpush1.msra.mxu0 0.0
    %5277 = vmatprep.subr.mxu0 0.0
    %5278 = vmatpush1.msra.mxu0 0.0
    %5279 = vmatprep.subr.mxu0 0.0
    %5280 = vmatpush1.msra.mxu0 0.0
    %5281 = vmatprep.subr.mxu0 0.0
    %5282 = vmatpush1.msra.mxu0 0.0
    %5283 = vmatprep.subr.mxu0 0.0
    %5284 = vmatpush1.msra.mxu0 0.0
    %5285 = vmatprep.subr.mxu0 0.0
    %5286 = vmatpush1.msra.mxu0 0.0
    %5287 = vmatprep.subr.mxu0 0.0
    %5288 = vmatpush1.msra.mxu0 0.0
    %5289 = vmatprep.subr.mxu0 0.0
    %5290 = vmatpush1.msra.mxu0 0.0
    %5291 = vmatprep.subr.mxu0 0.0
    %5292 = vmatpush1.msra.mxu0 0.0
    %5293 = vmatprep.subr.mxu0 0.0
    %5294 = vmatpush1.msra.mxu0 0.0
    %5295 = vmatprep.subr.mxu0 0.0
    %5296 = vmatpush1.msra.mxu0 0.0
    %5297 = vmatprep.subr.mxu0 0.0
    %5298 = vmatpush1.msra.mxu0 0.0
    %5299 = vmatprep.subr.mxu0 0.0
    %5300 = vmatpush1.msra.mxu0 0.0
    %5301 = vmatprep.subr.mxu0 0.0
    %5302 = vmatpush1.msra.mxu0 0.0
    %5303 = vmatprep.subr.mxu0 0.0
    %5304 = vmatpush1.msra.mxu0 0.0
    %5305 = vmatprep.subr.mxu0 0.0
    %5306 = vmatpush1.msra.mxu0 0.0
    %5307 = vmatprep.subr.mxu0 0.0
    %5308 = vmatpush1.msra.mxu0 0.0
    %5309 = vmatprep.subr.mxu0 0.0
    %5310 = vmatpush1.msra.mxu0 0.0
    %5311 = vmatprep.subr.mxu0 0.0
    %5312 = vmatpush1.msra.mxu0 0.0
    %5313 = vmatprep.subr.mxu0 0.0
    %5314 = vmatpush1.msra.mxu0 0.0
    %5315 = vmatprep.subr.mxu0 0.0
    %5316 = vmatpush1.msra.mxu0 0.0
    %5317 = vmatprep.subr.mxu0 0.0
    %5318 = vmatpush1.msra.mxu0 0.0
    %5319 = vmatprep.subr.mxu0 0.0
    %5320 = vmatpush1.msra.mxu0 0.0
    %5321 = vmatprep.subr.mxu0 0.0
    %5322 = vmatpush1.msra.mxu0 0.0
    %5323 = vmatprep.subr.mxu0 0.0
    %5324 = vmatpush1.msra.mxu0 0.0
    %5325 = vmatprep.subr.mxu0 0.0
    %5326 = vmatpush1.msra.mxu0 0.0
    %5327 = vmatprep.subr.mxu0 0.0
    %5328 = vmatpush1.msra.mxu0 0.0
    %5329 = vmatprep.subr.mxu0 0.0
    %5330 = vmatpush1.msra.mxu0 0.0
    %5331 = vmatprep.mubr.f32.mxu0 0.0
    %5332 = vmatmul.mubr.f32.gmra.mrb[0].mxu0 %v5265
    %v5333 = vpop.f32.mrb[0].mxu0
    %v5334 = vadd.f32 %v5263, %v5333
    %v5335 = vpop.f32.mrb[0].mxu0
    %5336 = vdwg.mxu0
    %v5337 = vadd.f32 %v4331, %v5334
    %v5338 = vld [vmem:[#allocation7 + $0xd] sm:$0x1]
    %v5339 = vld [vmem:[#allocation7 + $0xe] sm:$0x1]
    %v5340 = vsel %vm181, %v5337, 0.0
    %5341 = vadd.xlane.f32.xlu0 %v5340
    %v5342 = vpop.xlane.xlu0 %5341
    %v5343 = vrcp.pop 32.0
    %v5344 = vmul.f32 %v5342, %v5343
    %v5345 = vsub.f32 %v5337, %v5344
    %v5346 = vmul.f32 %v5345, %v5345
    %v5347 = vsel %vm181, %v5346, 0.0
    %5348 = vadd.xlane.f32.xlu0 %v5347
    %v5349 = vpop.xlane.xlu0 %5348
    %v5350 = vmul.f32 %v5349, %v5343
    %v5351 = vadd.f32 %v5350, 1e-05
    %v5352 = vrsqrt.pop %v5351
    %v5353 = vmul.f32 %v5345, %v5352
    %v5354 = vlaneseq
    %v5355 = vshrl.u32 %v5354, 7
    %v5356 = vsub.s32 0, %v5355
    %v5357 = vrot.slane %v5338, %v5356
    %v5358 = vmul.f32 %v5353, %v5357
    %v5359 = vlaneseq
    %v5360 = vshrl.u32 %v5359, 7
    %v5361 = vsub.s32 0, %v5360
    %v5362 = vrot.slane %v5339, %v5361
    %v5363 = vadd.f32 %v5358, %v5362
    %v5364 = vpack.c.bf16 %v5363, %v5363
    %v5365 = vld [vmem:[#allocation10] sm:$0xff]
    %v5366 = vld [vmem:[#allocation10 + $0x8] sm:$0xff]
    %v5367 = vld [vmem:[#allocation10 + $0x10] sm:$0xff]
    %v5368 = vld [vmem:[#allocation10 + $0x18] sm:$0xff]
    %v5369 = vld [vmem:[#allocation10 + $0x20] sm:$0xff]
    %v5370 = vld [vmem:[#allocation10 + $0x28] sm:$0xff]
    %v5371 = vld [vmem:[#allocation10 + $0x30] sm:$0xff]
    %v5372 = vld [vmem:[#allocation10 + $0x38] sm:$0xff]
    %v5373 = vld [vmem:[#allocation10 + $0x40] sm:$0xff]
    %v5374 = vld [vmem:[#allocation10 + $0x48] sm:$0xff]
    %v5375 = vld [vmem:[#allocation10 + $0x50] sm:$0xff]
    %v5376 = vld [vmem:[#allocation10 + $0x58] sm:$0xff]
    %v5377 = vld [vmem:[#allocation10 + $0x60] sm:$0xff]
    %v5378 = vld [vmem:[#allocation10 + $0x68] sm:$0xff]
    %v5379 = vld [vmem:[#allocation10 + $0x70] sm:$0xff]
    %v5380 = vld [vmem:[#allocation10 + $0x78] sm:$0xff]
    %v5381 = vld [vmem:[#allocation10 + $0x80] sm:$0xff]
    %v5382 = vld [vmem:[#allocation10 + $0x88] sm:$0xff]
    %v5383 = vld [vmem:[#allocation10 + $0x90] sm:$0xff]
    %v5384 = vld [vmem:[#allocation10 + $0x98] sm:$0xff]
    %v5385 = vld [vmem:[#allocation10 + $0xa0] sm:$0xff]
    %v5386 = vld [vmem:[#allocation10 + $0xa8] sm:$0xff]
    %v5387 = vld [vmem:[#allocation10 + $0xb0] sm:$0xff]
    %v5388 = vld [vmem:[#allocation10 + $0xb8] sm:$0xff]
    %v5389 = vld [vmem:[#allocation10 + $0xc0] sm:$0xff]
    %v5390 = vld [vmem:[#allocation10 + $0xc8] sm:$0xff]
    %v5391 = vld [vmem:[#allocation10 + $0xd0] sm:$0xff]
    %v5392 = vld [vmem:[#allocation10 + $0xd8] sm:$0xff]
    %v5393 = vld [vmem:[#allocation10 + $0xe0] sm:$0xff]
    %v5394 = vld [vmem:[#allocation10 + $0xe8] sm:$0xff]
    %v5395 = vld [vmem:[#allocation10 + $0xf0] sm:$0xff]
    %v5396 = vld [vmem:[#allocation10 + $0xf8] sm:$0xff]
    %v5397 = vld [vmem:[#allocation13] sm:$0xff]
    %v5398 = vld [vmem:[#allocation13 + $0x8] sm:$0xff]
    %v5401 = vlaneseq
    %v5402 = vshrl.u32 %v5401, 7
    %v5403 = vsub.s32 0, %v5402
    %v5404 = vrot.slane %v5397, %v5403
    %v5405 = vlaneseq
    %v5406 = vshrl.u32 %v5405, 7
    %v5407 = vsub.s32 1, %v5406
    %v5408 = vrot.slane %v5397, %v5407
    %v5409 = vlaneseq
    %v5410 = vshrl.u32 %v5409, 7
    %v5411 = vsub.s32 2, %v5410
    %v5412 = vrot.slane %v5397, %v5411
    %v5413 = vlaneseq
    %v5414 = vshrl.u32 %v5413, 7
    %v5415 = vsub.s32 3, %v5414
    %v5416 = vrot.slane %v5397, %v5415
    %v5417 = vlaneseq
    %v5418 = vshrl.u32 %v5417, 7
    %v5419 = vsub.s32 4, %v5418
    %v5420 = vrot.slane %v5397, %v5419
    %v5421 = vlaneseq
    %v5422 = vshrl.u32 %v5421, 7
    %v5423 = vsub.s32 5, %v5422
    %v5424 = vrot.slane %v5397, %v5423
    %v5425 = vlaneseq
    %v5426 = vshrl.u32 %v5425, 7
    %v5427 = vsub.s32 6, %v5426
    %v5428 = vrot.slane %v5397, %v5427
    %v5429 = vlaneseq
    %v5430 = vshrl.u32 %v5429, 7
    %v5431 = vsub.s32 7, %v5430
    %v5432 = vrot.slane %v5397, %v5431
    %v5433 = vlaneseq
    %v5434 = vshrl.u32 %v5433, 7
    %v5435 = vsub.s32 0, %v5434
    %v5436 = vrot.slane %v5398, %v5435
    %v5437 = vlaneseq
    %v5438 = vshrl.u32 %v5437, 7
    %v5439 = vsub.s32 1, %v5438
    %v5440 = vrot.slane %v5398, %v5439
    %v5441 = vlaneseq
    %v5442 = vshrl.u32 %v5441, 7
    %v5443 = vsub.s32 2, %v5442
    %v5444 = vrot.slane %v5398, %v5443
    %v5445 = vlaneseq
    %v5446 = vshrl.u32 %v5445, 7
    %v5447 = vsub.s32 3, %v5446
    %v5448 = vrot.slane %v5398, %v5447
    %v5449 = vlaneseq
    %v5450 = vshrl.u32 %v5449, 7
    %v5451 = vsub.s32 4, %v5450
    %v5452 = vrot.slane %v5398, %v5451
    %v5453 = vlaneseq
    %v5454 = vshrl.u32 %v5453, 7
    %v5455 = vsub.s32 5, %v5454
    %v5456 = vrot.slane %v5398, %v5455
    %v5457 = vlaneseq
    %v5458 = vshrl.u32 %v5457, 7
    %v5459 = vsub.s32 6, %v5458
    %v5460 = vrot.slane %v5398, %v5459
    %v5461 = vlaneseq
    %v5462 = vshrl.u32 %v5461, 7
    %v5463 = vsub.s32 7, %v5462
    %v5464 = vrot.slane %v5398, %v5463
    %v5513 = vunpack.c.l.b16 %v5365
    %v5514 = vunpack.c.h.b16 %v5365
    %v5515 = vunpack.c.l.b16 %v5366
    %v5516 = vunpack.c.h.b16 %v5366
    %v5517 = vunpack.c.l.b16 %v5367
    %v5518 = vunpack.c.h.b16 %v5367
    %v5519 = vunpack.c.l.b16 %v5368
    %v5520 = vunpack.c.h.b16 %v5368
    %v5521 = vunpack.c.l.b16 %v5369
    %v5522 = vunpack.c.h.b16 %v5369
    %v5523 = vunpack.c.l.b16 %v5370
    %v5524 = vunpack.c.h.b16 %v5370
    %v5525 = vunpack.c.l.b16 %v5371
    %v5526 = vunpack.c.h.b16 %v5371
    %v5527 = vunpack.c.l.b16 %v5372
    %v5528 = vunpack.c.h.b16 %v5372
    %v5529 = vunpack.c.l.b16 %v5373
    %v5530 = vunpack.c.h.b16 %v5373
    %v5531 = vunpack.c.l.b16 %v5374
    %v5532 = vunpack.c.h.b16 %v5374
    %v5533 = vunpack.c.l.b16 %v5375
    %v5534 = vunpack.c.h.b16 %v5375
    %v5535 = vunpack.c.l.b16 %v5376
    %v5536 = vunpack.c.h.b16 %v5376
    %v5537 = vunpack.c.l.b16 %v5377
    %v5538 = vunpack.c.h.b16 %v5377
    %v5539 = vunpack.c.l.b16 %v5378
    %v5540 = vunpack.c.h.b16 %v5378
    %v5541 = vunpack.c.l.b16 %v5379
    %v5542 = vunpack.c.h.b16 %v5379
    %v5543 = vunpack.c.l.b16 %v5380
    %v5544 = vunpack.c.h.b16 %v5380
    %v5545 = vunpack.c.l.b16 %v5381
    %v5546 = vunpack.c.h.b16 %v5381
    %v5547 = vunpack.c.l.b16 %v5382
    %v5548 = vunpack.c.h.b16 %v5382
    %v5549 = vunpack.c.l.b16 %v5383
    %v5550 = vunpack.c.h.b16 %v5383
    %v5551 = vunpack.c.l.b16 %v5384
    %v5552 = vunpack.c.h.b16 %v5384
    %v5553 = vunpack.c.l.b16 %v5385
    %v5554 = vunpack.c.h.b16 %v5385
    %v5555 = vunpack.c.l.b16 %v5386
    %v5556 = vunpack.c.h.b16 %v5386
    %v5557 = vunpack.c.l.b16 %v5387
    %v5558 = vunpack.c.h.b16 %v5387
    %v5559 = vunpack.c.l.b16 %v5388
    %v5560 = vunpack.c.h.b16 %v5388
    %v5561 = vunpack.c.l.b16 %v5389
    %v5562 = vunpack.c.h.b16 %v5389
    %v5563 = vunpack.c.l.b16 %v5390
    %v5564 = vunpack.c.h.b16 %v5390
    %v5565 = vunpack.c.l.b16 %v5391
    %v5566 = vunpack.c.h.b16 %v5391
    %v5567 = vunpack.c.l.b16 %v5392
    %v5568 = vunpack.c.h.b16 %v5392
    %v5569 = vunpack.c.l.b16 %v5393
    %v5570 = vunpack.c.h.b16 %v5393
    %v5571 = vunpack.c.l.b16 %v5394
    %v5572 = vunpack.c.h.b16 %v5394
    %v5573 = vunpack.c.l.b16 %v5395
    %v5574 = vunpack.c.h.b16 %v5395
    %v5575 = vunpack.c.l.b16 %v5396
    %v5576 = vunpack.c.h.b16 %v5396
    %v5577 = vpack.c.b16 %v5529, %v5513
    %v5578 = vpack.c.b16 %v5530, %v5514
    %v5579 = vpack.c.b16 %v5531, %v5515
    %v5580 = vpack.c.b16 %v5532, %v5516
    %v5581 = vpack.c.b16 %v5533, %v5517
    %v5582 = vpack.c.b16 %v5534, %v5518
    %v5583 = vpack.c.b16 %v5535, %v5519
    %v5584 = vpack.c.b16 %v5536, %v5520
    %v5585 = vpack.c.b16 %v5537, %v5521
    %v5586 = vpack.c.b16 %v5538, %v5522
    %v5587 = vpack.c.b16 %v5539, %v5523
    %v5588 = vpack.c.b16 %v5540, %v5524
    %v5589 = vpack.c.b16 %v5541, %v5525
    %v5590 = vpack.c.b16 %v5542, %v5526
    %v5591 = vpack.c.b16 %v5543, %v5527
    %v5592 = vpack.c.b16 %v5544, %v5528
    %v5593 = vpack.c.b16 %v5561, %v5545
    %v5594 = vpack.c.b16 %v5562, %v5546
    %v5595 = vpack.c.b16 %v5563, %v5547
    %v5596 = vpack.c.b16 %v5564, %v5548
    %v5597 = vpack.c.b16 %v5565, %v5549
    %v5598 = vpack.c.b16 %v5566, %v5550
    %v5599 = vpack.c.b16 %v5567, %v5551
    %v5600 = vpack.c.b16 %v5568, %v5552
    %v5601 = vpack.c.b16 %v5569, %v5553
    %v5602 = vpack.c.b16 %v5570, %v5554
    %v5603 = vpack.c.b16 %v5571, %v5555
    %v5604 = vpack.c.b16 %v5572, %v5556
    %v5605 = vpack.c.b16 %v5573, %v5557
    %v5606 = vpack.c.b16 %v5574, %v5558
    %v5607 = vpack.c.b16 %v5575, %v5559
    %v5608 = vpack.c.b16 %v5576, %v5560
    %v5642 = vsel %vm181, %v5364, 0
    %5644 = vmatprep.subr.bf16.mxu0 %v5578
    %5645 = vmatpush1.bf16.msra.mxu0 %v5577
    %5646 = vmatprep.subr.bf16.mxu0 %v5594
    %5647 = vmatpush1.bf16.msra.mxu0 %v5593
    %5648 = vmatprep.subr.bf16.mxu0 0
    %5649 = vmatpush1.bf16.msra.mxu0 0
    %5650 = vmatprep.subr.bf16.mxu0 0
    %5651 = vmatpush1.bf16.msra.mxu0 0
    %5652 = vmatprep.subr.bf16.mxu0 0
    %5653 = vmatpush1.bf16.msra.mxu0 0
    %5654 = vmatprep.subr.bf16.mxu0 0
    %5655 = vmatpush1.bf16.msra.mxu0 0
    %5656 = vmatprep.subr.bf16.mxu0 0
    %5657 = vmatpush1.bf16.msra.mxu0 0
    %5658 = vmatprep.subr.bf16.mxu0 0
    %5659 = vmatpush1.bf16.msra.mxu0 0
    %5660 = vmatprep.subr.bf16.mxu0 0
    %5661 = vmatpush1.bf16.msra.mxu0 0
    %5662 = vmatprep.subr.bf16.mxu0 0
    %5663 = vmatpush1.bf16.msra.mxu0 0
    %5664 = vmatprep.subr.bf16.mxu0 0
    %5665 = vmatpush1.bf16.msra.mxu0 0
    %5666 = vmatprep.subr.bf16.mxu0 0
    %5667 = vmatpush1.bf16.msra.mxu0 0
    %5668 = vmatprep.subr.bf16.mxu0 0
    %5669 = vmatpush1.bf16.msra.mxu0 0
    %5670 = vmatprep.subr.bf16.mxu0 0
    %5671 = vmatpush1.bf16.msra.mxu0 0
    %5672 = vmatprep.subr.bf16.mxu0 0
    %5673 = vmatpush1.bf16.msra.mxu0 0
    %5674 = vmatprep.subr.bf16.mxu0 0
    %5675 = vmatpush1.bf16.msra.mxu0 0
    %5676 = vmatprep.mubr.bf16.mxu0 0
    %5677 = vmatmul.mubr.bf16.gmra.mrb[0].mxu0 %v5642
    %v5678 = vpop.f32.mrb[0].mxu0
    %v5679 = vadd.f32 %v5404, %v5678
    %v5680 = vpop.f32.mrb[0].mxu0
    %v5681 = vadd.f32 %v5408, %v5680
    %v5682 = vpop.f32.mrb[0].mxu0
    %v5683 = vpop.f32.mrb[0].mxu0
    %5684 = vdwg.mxu0
    %5685 = vmatprep.subr.bf16.mxu0 %v5580
    %5686 = vmatpush1.bf16.msra.mxu0 %v5579
    %5687 = vmatprep.subr.bf16.mxu0 %v5596
    %5688 = vmatpush1.bf16.msra.mxu0 %v5595
    %5689 = vmatprep.subr.bf16.mxu0 0
    %5690 = vmatpush1.bf16.msra.mxu0 0
    %5691 = vmatprep.subr.bf16.mxu0 0
    %5692 = vmatpush1.bf16.msra.mxu0 0
    %5693 = vmatprep.subr.bf16.mxu0 0
    %5694 = vmatpush1.bf16.msra.mxu0 0
    %5695 = vmatprep.subr.bf16.mxu0 0
    %5696 = vmatpush1.bf16.msra.mxu0 0
    %5697 = vmatprep.subr.bf16.mxu0 0
    %5698 = vmatpush1.bf16.msra.mxu0 0
    %5699 = vmatprep.subr.bf16.mxu0 0
    %5700 = vmatpush1.bf16.msra.mxu0 0
    %5701 = vmatprep.subr.bf16.mxu0 0
    %5702 = vmatpush1.bf16.msra.mxu0 0
    %5703 = vmatprep.subr.bf16.mxu0 0
    %5704 = vmatpush1.bf16.msra.mxu0 0
    %5705 = vmatprep.subr.bf16.mxu0 0
    %5706 = vmatpush1.bf16.msra.mxu0 0
    %5707 = vmatprep.subr.bf16.mxu0 0
    %5708 = vmatpush1.bf16.msra.mxu0 0
    %5709 = vmatprep.subr.bf16.mxu0 0
    %5710 = vmatpush1.bf16.msra.mxu0 0
    %5711 = vmatprep.subr.bf16.mxu0 0
    %5712 = vmatpush1.bf16.msra.mxu0 0
    %5713 = vmatprep.subr.bf16.mxu0 0
    %5714 = vmatpush1.bf16.msra.mxu0 0
    %5715 = vmatprep.subr.bf16.mxu0 0
    %5716 = vmatpush1.bf16.msra.mxu0 0
    %5717 = vmatprep.mubr.bf16.mxu0 0
    %5718 = vmatmul.mubr.bf16.gmra.mrb[0].mxu0 %v5642
    %v5719 = vpop.f32.mrb[0].mxu0
    %v5720 = vadd.f32 %v5412, %v5719
    %v5721 = vpop.f32.mrb[0].mxu0
    %v5722 = vadd.f32 %v5416, %v5721
    %v5723 = vpop.f32.mrb[0].mxu0
    %v5724 = vpop.f32.mrb[0].mxu0
    %5725 = vdwg.mxu0
    %5726 = vmatprep.subr.bf16.mxu0 %v5582
    %5727 = vmatpush1.bf16.msra.mxu0 %v5581
    %5728 = vmatprep.subr.bf16.mxu0 %v5598
    %5729 = vmatpush1.bf16.msra.mxu0 %v5597
    %5730 = vmatprep.subr.bf16.mxu0 0
    %5731 = vmatpush1.bf16.msra.mxu0 0
    %5732 = vmatprep.subr.bf16.mxu0 0
    %5733 = vmatpush1.bf16.msra.mxu0 0
    %5734 = vmatprep.subr.bf16.mxu0 0
    %5735 = vmatpush1.bf16.msra.mxu0 0
    %5736 = vmatprep.subr.bf16.mxu0 0
    %5737 = vmatpush1.bf16.msra.mxu0 0
    %5738 = vmatprep.subr.bf16.mxu0 0
    %5739 = vmatpush1.bf16.msra.mxu0 0
    %5740 = vmatprep.subr.bf16.mxu0 0
    %5741 = vmatpush1.bf16.msra.mxu0 0
    %5742 = vmatprep.subr.bf16.mxu0 0
    %5743 = vmatpush1.bf16.msra.mxu0 0
    %5744 = vmatprep.subr.bf16.mxu0 0
    %5745 = vmatpush1.bf16.msra.mxu0 0
    %5746 = vmatprep.subr.bf16.mxu0 0
    %5747 = vmatpush1.bf16.msra.mxu0 0
    %5748 = vmatprep.subr.bf16.mxu0 0
    %5749 = vmatpush1.bf16.msra.mxu0 0
    %5750 = vmatprep.subr.bf16.mxu0 0
    %5751 = vmatpush1.bf16.msra.mxu0 0
    %5752 = vmatprep.subr.bf16.mxu0 0
    %5753 = vmatpush1.bf16.msra.mxu0 0
    %5754 = vmatprep.subr.bf16.mxu0 0
    %5755 = vmatpush1.bf16.msra.mxu0 0
    %5756 = vmatprep.subr.bf16.mxu0 0
    %5757 = vmatpush1.bf16.msra.mxu0 0
    %5758 = vmatprep.mubr.bf16.mxu0 0
    %5759 = vmatmul.mubr.bf16.gmra.mrb[0].mxu0 %v5642
    %v5760 = vpop.f32.mrb[0].mxu0
    %v5761 = vadd.f32 %v5420, %v5760
    %v5762 = vpop.f32.mrb[0].mxu0
    %v5763 = vadd.f32 %v5424, %v5762
    %v5764 = vpop.f32.mrb[0].mxu0
    %v5765 = vpop.f32.mrb[0].mxu0
    %5766 = vdwg.mxu0
    %5767 = vmatprep.subr.bf16.mxu0 %v5584
    %5768 = vmatpush1.bf16.msra.mxu0 %v5583
    %5769 = vmatprep.subr.bf16.mxu0 %v5600
    %5770 = vmatpush1.bf16.msra.mxu0 %v5599
    %5771 = vmatprep.subr.bf16.mxu0 0
    %5772 = vmatpush1.bf16.msra.mxu0 0
    %5773 = vmatprep.subr.bf16.mxu0 0
    %5774 = vmatpush1.bf16.msra.mxu0 0
    %5775 = vmatprep.subr.bf16.mxu0 0
    %5776 = vmatpush1.bf16.msra.mxu0 0
    %5777 = vmatprep.subr.bf16.mxu0 0
    %5778 = vmatpush1.bf16.msra.mxu0 0
    %5779 = vmatprep.subr.bf16.mxu0 0
    %5780 = vmatpush1.bf16.msra.mxu0 0
    %5781 = vmatprep.subr.bf16.mxu0 0
    %5782 = vmatpush1.bf16.msra.mxu0 0
    %5783 = vmatprep.subr.bf16.mxu0 0
    %5784 = vmatpush1.bf16.msra.mxu0 0
    %5785 = vmatprep.subr.bf16.mxu0 0
    %5786 = vmatpush1.bf16.msra.mxu0 0
    %5787 = vmatprep.subr.bf16.mxu0 0
    %5788 = vmatpush1.bf16.msra.mxu0 0
    %5789 = vmatprep.subr.bf16.mxu0 0
    %5790 = vmatpush1.bf16.msra.mxu0 0
    %5791 = vmatprep.subr.bf16.mxu0 0
    %5792 = vmatpush1.bf16.msra.mxu0 0
    %5793 = vmatprep.subr.bf16.mxu0 0
    %5794 = vmatpush1.bf16.msra.mxu0 0
    %5795 = vmatprep.subr.bf16.mxu0 0
    %5796 = vmatpush1.bf16.msra.mxu0 0
    %5797 = vmatprep.subr.bf16.mxu0 0
    %5798 = vmatpush1.bf16.msra.mxu0 0
    %5799 = vmatprep.mubr.bf16.mxu0 0
    %5800 = vmatmul.mubr.bf16.gmra.mrb[0].mxu0 %v5642
    %v5801 = vpop.f32.mrb[0].mxu0
    %v5802 = vadd.f32 %v5428, %v5801
    %v5803 = vpop.f32.mrb[0].mxu0
    %v5804 = vadd.f32 %v5432, %v5803
    %v5805 = vpop.f32.mrb[0].mxu0
    %v5806 = vpop.f32.mrb[0].mxu0
    %5807 = vdwg.mxu0
    %5808 = vmatprep.subr.bf16.mxu0 %v5586
    %5809 = vmatpush1.bf16.msra.mxu0 %v5585
    %5810 = vmatprep.subr.bf16.mxu0 %v5602
    %5811 = vmatpush1.bf16.msra.mxu0 %v5601
    %5812 = vmatprep.subr.bf16.mxu0 0
    %5813 = vmatpush1.bf16.msra.mxu0 0
    %5814 = vmatprep.subr.bf16.mxu0 0
    %5815 = vmatpush1.bf16.msra.mxu0 0
    %5816 = vmatprep.subr.bf16.mxu0 0
    %5817 = vmatpush1.bf16.msra.mxu0 0
    %5818 = vmatprep.subr.bf16.mxu0 0
    %5819 = vmatpush1.bf16.msra.mxu0 0
    %5820 = vmatprep.subr.bf16.mxu0 0
    %5821 = vmatpush1.bf16.msra.mxu0 0
    %5822 = vmatprep.subr.bf16.mxu0 0
    %5823 = vmatpush1.bf16.msra.mxu0 0
    %5824 = vmatprep.subr.bf16.mxu0 0
    %5825 = vmatpush1.bf16.msra.mxu0 0
    %5826 = vmatprep.subr.bf16.mxu0 0
    %5827 = vmatpush1.bf16.msra.mxu0 0
    %5828 = vmatprep.subr.bf16.mxu0 0
    %5829 = vmatpush1.bf16.msra.mxu0 0
    %5830 = vmatprep.subr.bf16.mxu0 0
    %5831 = vmatpush1.bf16.msra.mxu0 0
    %5832 = vmatprep.subr.bf16.mxu0 0
    %5833 = vmatpush1.bf16.msra.mxu0 0
    %5834 = vmatprep.subr.bf16.mxu0 0
    %5835 = vmatpush1.bf16.msra.mxu0 0
    %5836 = vmatprep.subr.bf16.mxu0 0
    %5837 = vmatpush1.bf16.msra.mxu0 0
    %5838 = vmatprep.subr.bf16.mxu0 0
    %5839 = vmatpush1.bf16.msra.mxu0 0
    %5840 = vmatprep.mubr.bf16.mxu0 0
    %5841 = vmatmul.mubr.bf16.gmra.mrb[0].mxu0 %v5642
    %v5842 = vpop.f32.mrb[0].mxu0
    %v5843 = vadd.f32 %v5436, %v5842
    %v5844 = vpop.f32.mrb[0].mxu0
    %v5845 = vadd.f32 %v5440, %v5844
    %v5846 = vpop.f32.mrb[0].mxu0
    %v5847 = vpop.f32.mrb[0].mxu0
    %5848 = vdwg.mxu0
    %5849 = vmatprep.subr.bf16.mxu0 %v5588
    %5850 = vmatpush1.bf16.msra.mxu0 %v5587
    %5851 = vmatprep.subr.bf16.mxu0 %v5604
    %5852 = vmatpush1.bf16.msra.mxu0 %v5603
    %5853 = vmatprep.subr.bf16.mxu0 0
    %5854 = vmatpush1.bf16.msra.mxu0 0
    %5855 = vmatprep.subr.bf16.mxu0 0
    %5856 = vmatpush1.bf16.msra.mxu0 0
    %5857 = vmatprep.subr.bf16.mxu0 0
    %5858 = vmatpush1.bf16.msra.mxu0 0
    %5859 = vmatprep.subr.bf16.mxu0 0
    %5860 = vmatpush1.bf16.msra.mxu0 0
    %5861 = vmatprep.subr.bf16.mxu0 0
    %5862 = vmatpush1.bf16.msra.mxu0 0
    %5863 = vmatprep.subr.bf16.mxu0 0
    %5864 = vmatpush1.bf16.msra.mxu0 0
    %5865 = vmatprep.subr.bf16.mxu0 0
    %5866 = vmatpush1.bf16.msra.mxu0 0
    %5867 = vmatprep.subr.bf16.mxu0 0
    %5868 = vmatpush1.bf16.msra.mxu0 0
    %5869 = vmatprep.subr.bf16.mxu0 0
    %5870 = vmatpush1.bf16.msra.mxu0 0
    %5871 = vmatprep.subr.bf16.mxu0 0
    %5872 = vmatpush1.bf16.msra.mxu0 0
    %5873 = vmatprep.subr.bf16.mxu0 0
    %5874 = vmatpush1.bf16.msra.mxu0 0
    %5875 = vmatprep.subr.bf16.mxu0 0
    %5876 = vmatpush1.bf16.msra.mxu0 0
    %5877 = vmatprep.subr.bf16.mxu0 0
    %5878 = vmatpush1.bf16.msra.mxu0 0
    %5879 = vmatprep.subr.bf16.mxu0 0
    %5880 = vmatpush1.bf16.msra.mxu0 0
    %5881 = vmatprep.mubr.bf16.mxu0 0
    %5882 = vmatmul.mubr.bf16.gmra.mrb[0].mxu0 %v5642
    %v5883 = vpop.f32.mrb[0].mxu0
    %v5884 = vadd.f32 %v5444, %v5883
    %v5885 = vpop.f32.mrb[0].mxu0
    %v5886 = vadd.f32 %v5448, %v5885
    %v5887 = vpop.f32.mrb[0].mxu0
    %v5888 = vpop.f32.mrb[0].mxu0
    %5889 = vdwg.mxu0
    %5890 = vmatprep.subr.bf16.mxu0 %v5590
    %5891 = vmatpush1.bf16.msra.mxu0 %v5589
    %5892 = vmatprep.subr.bf16.mxu0 %v5606
    %5893 = vmatpush1.bf16.msra.mxu0 %v5605
    %5894 = vmatprep.subr.bf16.mxu0 0
    %5895 = vmatpush1.bf16.msra.mxu0 0
    %5896 = vmatprep.subr.bf16.mxu0 0
    %5897 = vmatpush1.bf16.msra.mxu0 0
    %5898 = vmatprep.subr.bf16.mxu0 0
    %5899 = vmatpush1.bf16.msra.mxu0 0
    %5900 = vmatprep.subr.bf16.mxu0 0
    %5901 = vmatpush1.bf16.msra.mxu0 0
    %5902 = vmatprep.subr.bf16.mxu0 0
    %5903 = vmatpush1.bf16.msra.mxu0 0
    %5904 = vmatprep.subr.bf16.mxu0 0
    %5905 = vmatpush1.bf16.msra.mxu0 0
    %5906 = vmatprep.subr.bf16.mxu0 0
    %5907 = vmatpush1.bf16.msra.mxu0 0
    %5908 = vmatprep.subr.bf16.mxu0 0
    %5909 = vmatpush1.bf16.msra.mxu0 0
    %5910 = vmatprep.subr.bf16.mxu0 0
    %5911 = vmatpush1.bf16.msra.mxu0 0
    %5912 = vmatprep.subr.bf16.mxu0 0
    %5913 = vmatpush1.bf16.msra.mxu0 0
    %5914 = vmatprep.subr.bf16.mxu0 0
    %5915 = vmatpush1.bf16.msra.mxu0 0
    %5916 = vmatprep.subr.bf16.mxu0 0
    %5917 = vmatpush1.bf16.msra.mxu0 0
    %5918 = vmatprep.subr.bf16.mxu0 0
    %5919 = vmatpush1.bf16.msra.mxu0 0
    %5920 = vmatprep.subr.bf16.mxu0 0
    %5921 = vmatpush1.bf16.msra.mxu0 0
    %5922 = vmatprep.mubr.bf16.mxu0 0
    %5923 = vmatmul.mubr.bf16.gmra.mrb[0].mxu0 %v5642
    %v5924 = vpop.f32.mrb[0].mxu0
    %v5925 = vadd.f32 %v5452, %v5924
    %v5926 = vpop.f32.mrb[0].mxu0
    %v5927 = vadd.f32 %v5456, %v5926
    %v5928 = vpop.f32.mrb[0].mxu0
    %v5929 = vpop.f32.mrb[0].mxu0
    %5930 = vdwg.mxu0
    %5931 = vmatprep.subr.bf16.mxu0 %v5592
    %5932 = vmatpush1.bf16.msra.mxu0 %v5591
    %5933 = vmatprep.subr.bf16.mxu0 %v5608
    %5934 = vmatpush1.bf16.msra.mxu0 %v5607
    %5935 = vmatprep.subr.bf16.mxu0 0
    %5936 = vmatpush1.bf16.msra.mxu0 0
    %5937 = vmatprep.subr.bf16.mxu0 0
    %5938 = vmatpush1.bf16.msra.mxu0 0
    %5939 = vmatprep.subr.bf16.mxu0 0
    %5940 = vmatpush1.bf16.msra.mxu0 0
    %5941 = vmatprep.subr.bf16.mxu0 0
    %5942 = vmatpush1.bf16.msra.mxu0 0
    %5943 = vmatprep.subr.bf16.mxu0 0
    %5944 = vmatpush1.bf16.msra.mxu0 0
    %5945 = vmatprep.subr.bf16.mxu0 0
    %5946 = vmatpush1.bf16.msra.mxu0 0
    %5947 = vmatprep.subr.bf16.mxu0 0
    %5948 = vmatpush1.bf16.msra.mxu0 0
    %5949 = vmatprep.subr.bf16.mxu0 0
    %5950 = vmatpush1.bf16.msra.mxu0 0
    %5951 = vmatprep.subr.bf16.mxu0 0
    %5952 = vmatpush1.bf16.msra.mxu0 0
    %5953 = vmatprep.subr.bf16.mxu0 0
    %5954 = vmatpush1.bf16.msra.mxu0 0
    %5955 = vmatprep.subr.bf16.mxu0 0
    %5956 = vmatpush1.bf16.msra.mxu0 0
    %5957 = vmatprep.subr.bf16.mxu0 0
    %5958 = vmatpush1.bf16.msra.mxu0 0
    %5959 = vmatprep.subr.bf16.mxu0 0
    %5960 = vmatpush1.bf16.msra.mxu0 0
    %5961 = vmatprep.subr.bf16.mxu0 0
    %5962 = vmatpush1.bf16.msra.mxu0 0
    %5963 = vmatprep.mubr.bf16.mxu0 0
    %5964 = vmatmul.mubr.bf16.gmra.mrb[0].mxu0 %v5642
    %v5965 = vpop.f32.mrb[0].mxu0
    %v5966 = vadd.f32 %v5460, %v5965
    %v5967 = vpop.f32.mrb[0].mxu0
    %v5968 = vadd.f32 %v5464, %v5967
    %v5969 = vpop.f32.mrb[0].mxu0
    %v5970 = vpop.f32.mrb[0].mxu0
    %5971 = vdwg.mxu0
    %v5972 = vmax.f32 %v5679, 0.0
    %v5973 = vmax.f32 %v5681, 0.0
    %v5974 = vmax.f32 %v5720, 0.0
    %v5975 = vmax.f32 %v5722, 0.0
    %v5976 = vmax.f32 %v5761, 0.0
    %v5977 = vmax.f32 %v5763, 0.0
    %v5978 = vmax.f32 %v5802, 0.0
    %v5979 = vmax.f32 %v5804, 0.0
    %v5980 = vmax.f32 %v5843, 0.0
    %v5981 = vmax.f32 %v5845, 0.0
    %v5982 = vmax.f32 %v5884, 0.0
    %v5983 = vmax.f32 %v5886, 0.0
    %v5984 = vmax.f32 %v5925, 0.0
    %v5985 = vmax.f32 %v5927, 0.0
    %v5986 = vmax.f32 %v5966, 0.0
    %v5987 = vmax.f32 %v5968, 0.0
    %v5988 = vpack.c.bf16 %v5972, %v5972
    %v5989 = vpack.c.bf16 %v5973, %v5973
    %v5990 = vpack.c.bf16 %v5974, %v5974
    %v5991 = vpack.c.bf16 %v5975, %v5975
    %v5992 = vpack.c.bf16 %v5976, %v5976
    %v5993 = vpack.c.bf16 %v5977, %v5977
    %v5994 = vpack.c.bf16 %v5978, %v5978
    %v5995 = vpack.c.bf16 %v5979, %v5979
    %v5996 = vpack.c.bf16 %v5980, %v5980
    %v5997 = vpack.c.bf16 %v5981, %v5981
    %v5998 = vpack.c.bf16 %v5982, %v5982
    %v5999 = vpack.c.bf16 %v5983, %v5983
    %v6000 = vpack.c.bf16 %v5984, %v5984
    %v6001 = vpack.c.bf16 %v5985, %v5985
    %v6002 = vpack.c.bf16 %v5986, %v5986
    %v6003 = vpack.c.bf16 %v5987, %v5987
    %v6004 = vld [vmem:[#allocation11] sm:$0xff]
    %v6005 = vld [vmem:[#allocation11 + $0x8] sm:$0xff]
    %v6006 = vld [vmem:[#allocation11 + $0x10] sm:$0xff]
    %v6007 = vld [vmem:[#allocation11 + $0x18] sm:$0xff]
    %v6008 = vld [vmem:[#allocation11 + $0x20] sm:$0xff]
    %v6009 = vld [vmem:[#allocation11 + $0x28] sm:$0xff]
    %v6010 = vld [vmem:[#allocation11 + $0x30] sm:$0xff]
    %v6011 = vld [vmem:[#allocation11 + $0x38] sm:$0xff]
    %v6012 = vld [vmem:[#allocation11 + $0x40] sm:$0xff]
    %v6013 = vld [vmem:[#allocation11 + $0x48] sm:$0xff]
    %v6014 = vld [vmem:[#allocation11 + $0x50] sm:$0xff]
    %v6015 = vld [vmem:[#allocation11 + $0x58] sm:$0xff]
    %v6016 = vld [vmem:[#allocation11 + $0x60] sm:$0xff]
    %v6017 = vld [vmem:[#allocation11 + $0x68] sm:$0xff]
    %v6018 = vld [vmem:[#allocation11 + $0x70] sm:$0xff]
    %v6019 = vld [vmem:[#allocation11 + $0x78] sm:$0xff]
    %v6020 = vld [vmem:[#allocation11 + $0x80] sm:$0xff]
    %v6021 = vld [vmem:[#allocation11 + $0x88] sm:$0xff]
    %v6022 = vld [vmem:[#allocation11 + $0x90] sm:$0xff]
    %v6023 = vld [vmem:[#allocation11 + $0x98] sm:$0xff]
    %v6024 = vld [vmem:[#allocation11 + $0xa0] sm:$0xff]
    %v6025 = vld [vmem:[#allocation11 + $0xa8] sm:$0xff]
    %v6026 = vld [vmem:[#allocation11 + $0xb0] sm:$0xff]
    %v6027 = vld [vmem:[#allocation11 + $0xb8] sm:$0xff]
    %v6028 = vld [vmem:[#allocation11 + $0xc0] sm:$0xff]
    %v6029 = vld [vmem:[#allocation11 + $0xc8] sm:$0xff]
    %v6030 = vld [vmem:[#allocation11 + $0xd0] sm:$0xff]
    %v6031 = vld [vmem:[#allocation11 + $0xd8] sm:$0xff]
    %v6032 = vld [vmem:[#allocation11 + $0xe0] sm:$0xff]
    %v6033 = vld [vmem:[#allocation11 + $0xe8] sm:$0xff]
    %v6034 = vld [vmem:[#allocation11 + $0xf0] sm:$0xff]
    %v6035 = vld [vmem:[#allocation11 + $0xf8] sm:$0xff]
    %v6036 = vld [vmem:[#allocation7 + $0xf] sm:$0x1]
    %v6037 = vlaneseq
    %v6038 = vshrl.u32 %v6037, 7
    %v6039 = vsub.s32 0, %v6038
    %v6040 = vrot.slane %v6036, %v6039
    %v6073 = vunpack.c.l.b16 %v6004
    %v6074 = vunpack.c.h.b16 %v6004
    %v6075 = vunpack.c.l.b16 %v6005
    %v6076 = vunpack.c.h.b16 %v6005
    %v6077 = vunpack.c.l.b16 %v6006
    %v6078 = vunpack.c.h.b16 %v6006
    %v6079 = vunpack.c.l.b16 %v6007
    %v6080 = vunpack.c.h.b16 %v6007
    %v6081 = vunpack.c.l.b16 %v6008
    %v6082 = vunpack.c.h.b16 %v6008
    %v6083 = vunpack.c.l.b16 %v6009
    %v6084 = vunpack.c.h.b16 %v6009
    %v6085 = vunpack.c.l.b16 %v6010
    %v6086 = vunpack.c.h.b16 %v6010
    %v6087 = vunpack.c.l.b16 %v6011
    %v6088 = vunpack.c.h.b16 %v6011
    %v6089 = vunpack.c.l.b16 %v6012
    %v6090 = vunpack.c.h.b16 %v6012
    %v6091 = vunpack.c.l.b16 %v6013
    %v6092 = vunpack.c.h.b16 %v6013
    %v6093 = vunpack.c.l.b16 %v6014
    %v6094 = vunpack.c.h.b16 %v6014
    %v6095 = vunpack.c.l.b16 %v6015
    %v6096 = vunpack.c.h.b16 %v6015
    %v6097 = vunpack.c.l.b16 %v6016
    %v6098 = vunpack.c.h.b16 %v6016
    %v6099 = vunpack.c.l.b16 %v6017
    %v6100 = vunpack.c.h.b16 %v6017
    %v6101 = vunpack.c.l.b16 %v6018
    %v6102 = vunpack.c.h.b16 %v6018
    %v6103 = vunpack.c.l.b16 %v6019
    %v6104 = vunpack.c.h.b16 %v6019
    %v6105 = vunpack.c.l.b16 %v6020
    %v6106 = vunpack.c.h.b16 %v6020
    %v6107 = vunpack.c.l.b16 %v6021
    %v6108 = vunpack.c.h.b16 %v6021
    %v6109 = vunpack.c.l.b16 %v6022
    %v6110 = vunpack.c.h.b16 %v6022
    %v6111 = vunpack.c.l.b16 %v6023
    %v6112 = vunpack.c.h.b16 %v6023
    %v6113 = vunpack.c.l.b16 %v6024
    %v6114 = vunpack.c.h.b16 %v6024
    %v6115 = vunpack.c.l.b16 %v6025
    %v6116 = vunpack.c.h.b16 %v6025
    %v6117 = vunpack.c.l.b16 %v6026
    %v6118 = vunpack.c.h.b16 %v6026
    %v6119 = vunpack.c.l.b16 %v6027
    %v6120 = vunpack.c.h.b16 %v6027
    %v6121 = vunpack.c.l.b16 %v6028
    %v6122 = vunpack.c.h.b16 %v6028
    %v6123 = vunpack.c.l.b16 %v6029
    %v6124 = vunpack.c.h.b16 %v6029
    %v6125 = vunpack.c.l.b16 %v6030
    %v6126 = vunpack.c.h.b16 %v6030
    %v6127 = vunpack.c.l.b16 %v6031
    %v6128 = vunpack.c.h.b16 %v6031
    %v6129 = vunpack.c.l.b16 %v6032
    %v6130 = vunpack.c.h.b16 %v6032
    %v6131 = vunpack.c.l.b16 %v6033
    %v6132 = vunpack.c.h.b16 %v6033
    %v6133 = vunpack.c.l.b16 %v6034
    %v6134 = vunpack.c.h.b16 %v6034
    %v6135 = vunpack.c.l.b16 %v6035
    %v6136 = vunpack.c.h.b16 %v6035
    %v6137 = vpack.c.b16 %v6089, %v6073
    %v6138 = vpack.c.b16 %v6090, %v6074
    %v6139 = vpack.c.b16 %v6091, %v6075
    %v6140 = vpack.c.b16 %v6092, %v6076
    %v6141 = vpack.c.b16 %v6093, %v6077
    %v6142 = vpack.c.b16 %v6094, %v6078
    %v6143 = vpack.c.b16 %v6095, %v6079
    %v6144 = vpack.c.b16 %v6096, %v6080
    %v6145 = vpack.c.b16 %v6097, %v6081
    %v6146 = vpack.c.b16 %v6098, %v6082
    %v6147 = vpack.c.b16 %v6099, %v6083
    %v6148 = vpack.c.b16 %v6100, %v6084
    %v6149 = vpack.c.b16 %v6101, %v6085
    %v6150 = vpack.c.b16 %v6102, %v6086
    %v6151 = vpack.c.b16 %v6103, %v6087
    %v6152 = vpack.c.b16 %v6104, %v6088
    %v6153 = vpack.c.b16 %v6121, %v6105
    %v6154 = vpack.c.b16 %v6122, %v6106
    %v6155 = vpack.c.b16 %v6123, %v6107
    %v6156 = vpack.c.b16 %v6124, %v6108
    %v6157 = vpack.c.b16 %v6125, %v6109
    %v6158 = vpack.c.b16 %v6126, %v6110
    %v6159 = vpack.c.b16 %v6127, %v6111
    %v6160 = vpack.c.b16 %v6128, %v6112
    %v6161 = vpack.c.b16 %v6129, %v6113
    %v6162 = vpack.c.b16 %v6130, %v6114
    %v6163 = vpack.c.b16 %v6131, %v6115
    %v6164 = vpack.c.b16 %v6132, %v6116
    %v6165 = vpack.c.b16 %v6133, %v6117
    %v6166 = vpack.c.b16 %v6134, %v6118
    %v6167 = vpack.c.b16 %v6135, %v6119
    %v6168 = vpack.c.b16 %v6136, %v6120
    %6201 = vmatprep.subr.bf16.mxu0 %v6138
    %6202 = vmatpush1.bf16.xpose.msra.mxu0 %v6137
    %6203 = vmatprep.subr.bf16.mxu0 %v6154
    %6204 = vmatpush1.bf16.xpose.msra.mxu0 %v6153
    %6205 = vmatprep.subr.bf16.mxu0 0
    %6206 = vmatpush1.bf16.xpose.msra.mxu0 0
    %6207 = vmatprep.subr.bf16.mxu0 0
    %6208 = vmatpush1.bf16.xpose.msra.mxu0 0
    %6209 = vmatprep.subr.bf16.mxu0 0
    %6210 = vmatpush1.bf16.xpose.msra.mxu0 0
    %6211 = vmatprep.subr.bf16.mxu0 0
    %6212 = vmatpush1.bf16.xpose.msra.mxu0 0
    %6213 = vmatprep.subr.bf16.mxu0 0
    %6214 = vmatpush1.bf16.xpose.msra.mxu0 0
    %6215 = vmatprep.subr.bf16.mxu0 0
    %6216 = vmatpush1.bf16.xpose.msra.mxu0 0
    %6217 = vmatprep.subr.bf16.mxu0 0
    %6218 = vmatpush1.bf16.xpose.msra.mxu0 0
    %6219 = vmatprep.subr.bf16.mxu0 0
    %6220 = vmatpush1.bf16.xpose.msra.mxu0 0
    %6221 = vmatprep.subr.bf16.mxu0 0
    %6222 = vmatpush1.bf16.xpose.msra.mxu0 0
    %6223 = vmatprep.subr.bf16.mxu0 0
    %6224 = vmatpush1.bf16.xpose.msra.mxu0 0
    %6225 = vmatprep.subr.bf16.mxu0 0
    %6226 = vmatpush1.bf16.xpose.msra.mxu0 0
    %6227 = vmatprep.subr.bf16.mxu0 0
    %6228 = vmatpush1.bf16.xpose.msra.mxu0 0
    %6229 = vmatprep.subr.bf16.mxu0 0
    %6230 = vmatpush1.bf16.xpose.msra.mxu0 0
    %6231 = vmatprep.subr.bf16.mxu0 0
    %6232 = vmatpush1.bf16.xpose.msra.mxu0 0
    %6233 = vmatprep.mubr.bf16.mxu0 %v5989
    %6234 = vmatmul.mubr.bf16.gmra.mrb[0].mxu0 %v5988
    %v6235 = vpop.f32.mrb[0].mxu0
    %v6236 = vadd.f32 %v6040, %v6235
    %v6237 = vpop.f32.mrb[0].mxu0
    %v6238 = vpop.f32.mrb[0].mxu0
    %v6239 = vpop.f32.mrb[0].mxu0
    %6240 = vdwg.mxu0
    %6241 = vmatprep.subr.bf16.mxu0 %v6140
    %6242 = vmatpush1.bf16.xpose.msra.mxu0 %v6139
    %6243 = vmatprep.subr.bf16.mxu0 %v6156
    %6244 = vmatpush1.bf16.xpose.msra.mxu0 %v6155
    %6245 = vmatprep.subr.bf16.mxu0 0
    %6246 = vmatpush1.bf16.xpose.msra.mxu0 0
    %6247 = vmatprep.subr.bf16.mxu0 0
    %6248 = vmatpush1.bf16.xpose.msra.mxu0 0
    %6249 = vmatprep.subr.bf16.mxu0 0
    %6250 = vmatpush1.bf16.xpose.msra.mxu0 0
    %6251 = vmatprep.subr.bf16.mxu0 0
    %6252 = vmatpush1.bf16.xpose.msra.mxu0 0
    %6253 = vmatprep.subr.bf16.mxu0 0
    %6254 = vmatpush1.bf16.xpose.msra.mxu0 0
    %6255 = vmatprep.subr.bf16.mxu0 0
    %6256 = vmatpush1.bf16.xpose.msra.mxu0 0
    %6257 = vmatprep.subr.bf16.mxu0 0
    %6258 = vmatpush1.bf16.xpose.msra.mxu0 0
    %6259 = vmatprep.subr.bf16.mxu0 0
    %6260 = vmatpush1.bf16.xpose.msra.mxu0 0
    %6261 = vmatprep.subr.bf16.mxu0 0
    %6262 = vmatpush1.bf16.xpose.msra.mxu0 0
    %6263 = vmatprep.subr.bf16.mxu0 0
    %6264 = vmatpush1.bf16.xpose.msra.mxu0 0
    %6265 = vmatprep.subr.bf16.mxu0 0
    %6266 = vmatpush1.bf16.xpose.msra.mxu0 0
    %6267 = vmatprep.subr.bf16.mxu0 0
    %6268 = vmatpush1.bf16.xpose.msra.mxu0 0
    %6269 = vmatprep.subr.bf16.mxu0 0
    %6270 = vmatpush1.bf16.xpose.msra.mxu0 0
    %6271 = vmatprep.subr.bf16.mxu0 0
    %6272 = vmatpush1.bf16.xpose.msra.mxu0 0
    %6273 = vmatprep.mubr.bf16.mxu0 %v5991
    %6274 = vmatmul.mubr.bf16.gmra.mrb[0].mxu0 %v5990
    %v6275 = vpop.f32.mrb[0].mxu0
    %v6276 = vadd.f32 %v6236, %v6275
    %v6277 = vpop.f32.mrb[0].mxu0
    %v6278 = vpop.f32.mrb[0].mxu0
    %v6279 = vpop.f32.mrb[0].mxu0
    %6280 = vdwg.mxu0
    %6281 = vmatprep.subr.bf16.mxu0 %v6142
    %6282 = vmatpush1.bf16.xpose.msra.mxu0 %v6141
    %6283 = vmatprep.subr.bf16.mxu0 %v6158
    %6284 = vmatpush1.bf16.xpose.msra.mxu0 %v6157
    %6285 = vmatprep.subr.bf16.mxu0 0
    %6286 = vmatpush1.bf16.xpose.msra.mxu0 0
    %6287 = vmatprep.subr.bf16.mxu0 0
    %6288 = vmatpush1.bf16.xpose.msra.mxu0 0
    %6289 = vmatprep.subr.bf16.mxu0 0
    %6290 = vmatpush1.bf16.xpose.msra.mxu0 0
    %6291 = vmatprep.subr.bf16.mxu0 0
    %6292 = vmatpush1.bf16.xpose.msra.mxu0 0
    %6293 = vmatprep.subr.bf16.mxu0 0
    %6294 = vmatpush1.bf16.xpose.msra.mxu0 0
    %6295 = vmatprep.subr.bf16.mxu0 0
    %6296 = vmatpush1.bf16.xpose.msra.mxu0 0
    %6297 = vmatprep.subr.bf16.mxu0 0
    %6298 = vmatpush1.bf16.xpose.msra.mxu0 0
    %6299 = vmatprep.subr.bf16.mxu0 0
    %6300 = vmatpush1.bf16.xpose.msra.mxu0 0
    %6301 = vmatprep.subr.bf16.mxu0 0
    %6302 = vmatpush1.bf16.xpose.msra.mxu0 0
    %6303 = vmatprep.subr.bf16.mxu0 0
    %6304 = vmatpush1.bf16.xpose.msra.mxu0 0
    %6305 = vmatprep.subr.bf16.mxu0 0
    %6306 = vmatpush1.bf16.xpose.msra.mxu0 0
    %6307 = vmatprep.subr.bf16.mxu0 0
    %6308 = vmatpush1.bf16.xpose.msra.mxu0 0
    %6309 = vmatprep.subr.bf16.mxu0 0
    %6310 = vmatpush1.bf16.xpose.msra.mxu0 0
    %6311 = vmatprep.subr.bf16.mxu0 0
    %6312 = vmatpush1.bf16.xpose.msra.mxu0 0
    %6313 = vmatprep.mubr.bf16.mxu0 %v5993
    %6314 = vmatmul.mubr.bf16.gmra.mrb[0].mxu0 %v5992
    %v6315 = vpop.f32.mrb[0].mxu0
    %v6316 = vadd.f32 %v6276, %v6315
    %v6317 = vpop.f32.mrb[0].mxu0
    %v6318 = vpop.f32.mrb[0].mxu0
    %v6319 = vpop.f32.mrb[0].mxu0
    %6320 = vdwg.mxu0
    %6321 = vmatprep.subr.bf16.mxu0 %v6144
    %6322 = vmatpush1.bf16.xpose.msra.mxu0 %v6143
    %6323 = vmatprep.subr.bf16.mxu0 %v6160
    %6324 = vmatpush1.bf16.xpose.msra.mxu0 %v6159
    %6325 = vmatprep.subr.bf16.mxu0 0
    %6326 = vmatpush1.bf16.xpose.msra.mxu0 0
    %6327 = vmatprep.subr.bf16.mxu0 0
    %6328 = vmatpush1.bf16.xpose.msra.mxu0 0
    %6329 = vmatprep.subr.bf16.mxu0 0
    %6330 = vmatpush1.bf16.xpose.msra.mxu0 0
    %6331 = vmatprep.subr.bf16.mxu0 0
    %6332 = vmatpush1.bf16.xpose.msra.mxu0 0
    %6333 = vmatprep.subr.bf16.mxu0 0
    %6334 = vmatpush1.bf16.xpose.msra.mxu0 0
    %6335 = vmatprep.subr.bf16.mxu0 0
    %6336 = vmatpush1.bf16.xpose.msra.mxu0 0
    %6337 = vmatprep.subr.bf16.mxu0 0
    %6338 = vmatpush1.bf16.xpose.msra.mxu0 0
    %6339 = vmatprep.subr.bf16.mxu0 0
    %6340 = vmatpush1.bf16.xpose.msra.mxu0 0
    %6341 = vmatprep.subr.bf16.mxu0 0
    %6342 = vmatpush1.bf16.xpose.msra.mxu0 0
    %6343 = vmatprep.subr.bf16.mxu0 0
    %6344 = vmatpush1.bf16.xpose.msra.mxu0 0
    %6345 = vmatprep.subr.bf16.mxu0 0
    %6346 = vmatpush1.bf16.xpose.msra.mxu0 0
    %6347 = vmatprep.subr.bf16.mxu0 0
    %6348 = vmatpush1.bf16.xpose.msra.mxu0 0
    %6349 = vmatprep.subr.bf16.mxu0 0
    %6350 = vmatpush1.bf16.xpose.msra.mxu0 0
    %6351 = vmatprep.subr.bf16.mxu0 0
    %6352 = vmatpush1.bf16.xpose.msra.mxu0 0
    %6353 = vmatprep.mubr.bf16.mxu0 %v5995
    %6354 = vmatmul.mubr.bf16.gmra.mrb[0].mxu0 %v5994
    %v6355 = vpop.f32.mrb[0].mxu0
    %v6356 = vadd.f32 %v6316, %v6355
    %v6357 = vpop.f32.mrb[0].mxu0
    %v6358 = vpop.f32.mrb[0].mxu0
    %v6359 = vpop.f32.mrb[0].mxu0
    %6360 = vdwg.mxu0
    %6361 = vmatprep.subr.bf16.mxu0 %v6146
    %6362 = vmatpush1.bf16.xpose.msra.mxu0 %v6145
    %6363 = vmatprep.subr.bf16.mxu0 %v6162
    %6364 = vmatpush1.bf16.xpose.msra.mxu0 %v6161
    %6365 = vmatprep.subr.bf16.mxu0 0
    %6366 = vmatpush1.bf16.xpose.msra.mxu0 0
    %6367 = vmatprep.subr.bf16.mxu0 0
    %6368 = vmatpush1.bf16.xpose.msra.mxu0 0
    %6369 = vmatprep.subr.bf16.mxu0 0
    %6370 = vmatpush1.bf16.xpose.msra.mxu0 0
    %6371 = vmatprep.subr.bf16.mxu0 0
    %6372 = vmatpush1.bf16.xpose.msra.mxu0 0
    %6373 = vmatprep.subr.bf16.mxu0 0
    %6374 = vmatpush1.bf16.xpose.msra.mxu0 0
    %6375 = vmatprep.subr.bf16.mxu0 0
    %6376 = vmatpush1.bf16.xpose.msra.mxu0 0
    %6377 = vmatprep.subr.bf16.mxu0 0
    %6378 = vmatpush1.bf16.xpose.msra.mxu0 0
    %6379 = vmatprep.subr.bf16.mxu0 0
    %6380 = vmatpush1.bf16.xpose.msra.mxu0 0
    %6381 = vmatprep.subr.bf16.mxu0 0
    %6382 = vmatpush1.bf16.xpose.msra.mxu0 0
    %6383 = vmatprep.subr.bf16.mxu0 0
    %6384 = vmatpush1.bf16.xpose.msra.mxu0 0
    %6385 = vmatprep.subr.bf16.mxu0 0
    %6386 = vmatpush1.bf16.xpose.msra.mxu0 0
    %6387 = vmatprep.subr.bf16.mxu0 0
    %6388 = vmatpush1.bf16.xpose.msra.mxu0 0
    %6389 = vmatprep.subr.bf16.mxu0 0
    %6390 = vmatpush1.bf16.xpose.msra.mxu0 0
    %6391 = vmatprep.subr.bf16.mxu0 0
    %6392 = vmatpush1.bf16.xpose.msra.mxu0 0
    %6393 = vmatprep.mubr.bf16.mxu0 %v5997
    %6394 = vmatmul.mubr.bf16.gmra.mrb[0].mxu0 %v5996
    %v6395 = vpop.f32.mrb[0].mxu0
    %v6396 = vadd.f32 %v6356, %v6395
    %v6397 = vpop.f32.mrb[0].mxu0
    %v6398 = vpop.f32.mrb[0].mxu0
    %v6399 = vpop.f32.mrb[0].mxu0
    %6400 = vdwg.mxu0
    %6401 = vmatprep.subr.bf16.mxu0 %v6148
    %6402 = vmatpush1.bf16.xpose.msra.mxu0 %v6147
    %6403 = vmatprep.subr.bf16.mxu0 %v6164
    %6404 = vmatpush1.bf16.xpose.msra.mxu0 %v6163
    %6405 = vmatprep.subr.bf16.mxu0 0
    %6406 = vmatpush1.bf16.xpose.msra.mxu0 0
    %6407 = vmatprep.subr.bf16.mxu0 0
    %6408 = vmatpush1.bf16.xpose.msra.mxu0 0
    %6409 = vmatprep.subr.bf16.mxu0 0
    %6410 = vmatpush1.bf16.xpose.msra.mxu0 0
    %6411 = vmatprep.subr.bf16.mxu0 0
    %6412 = vmatpush1.bf16.xpose.msra.mxu0 0
    %6413 = vmatprep.subr.bf16.mxu0 0
    %6414 = vmatpush1.bf16.xpose.msra.mxu0 0
    %6415 = vmatprep.subr.bf16.mxu0 0
    %6416 = vmatpush1.bf16.xpose.msra.mxu0 0
    %6417 = vmatprep.subr.bf16.mxu0 0
    %6418 = vmatpush1.bf16.xpose.msra.mxu0 0
    %6419 = vmatprep.subr.bf16.mxu0 0
    %6420 = vmatpush1.bf16.xpose.msra.mxu0 0
    %6421 = vmatprep.subr.bf16.mxu0 0
    %6422 = vmatpush1.bf16.xpose.msra.mxu0 0
    %6423 = vmatprep.subr.bf16.mxu0 0
    %6424 = vmatpush1.bf16.xpose.msra.mxu0 0
    %6425 = vmatprep.subr.bf16.mxu0 0
    %6426 = vmatpush1.bf16.xpose.msra.mxu0 0
    %6427 = vmatprep.subr.bf16.mxu0 0
    %6428 = vmatpush1.bf16.xpose.msra.mxu0 0
    %6429 = vmatprep.subr.bf16.mxu0 0
    %6430 = vmatpush1.bf16.xpose.msra.mxu0 0
    %6431 = vmatprep.subr.bf16.mxu0 0
    %6432 = vmatpush1.bf16.xpose.msra.mxu0 0
    %6433 = vmatprep.mubr.bf16.mxu0 %v5999
    %6434 = vmatmul.mubr.bf16.gmra.mrb[0].mxu0 %v5998
    %v6435 = vpop.f32.mrb[0].mxu0
    %v6436 = vadd.f32 %v6396, %v6435
    %v6437 = vpop.f32.mrb[0].mxu0
    %v6438 = vpop.f32.mrb[0].mxu0
    %v6439 = vpop.f32.mrb[0].mxu0
    %6440 = vdwg.mxu0
    %6441 = vmatprep.subr.bf16.mxu0 %v6150
    %6442 = vmatpush1.bf16.xpose.msra.mxu0 %v6149
    %6443 = vmatprep.subr.bf16.mxu0 %v6166
    %6444 = vmatpush1.bf16.xpose.msra.mxu0 %v6165
    %6445 = vmatprep.subr.bf16.mxu0 0
    %6446 = vmatpush1.bf16.xpose.msra.mxu0 0
    %6447 = vmatprep.subr.bf16.mxu0 0
    %6448 = vmatpush1.bf16.xpose.msra.mxu0 0
    %6449 = vmatprep.subr.bf16.mxu0 0
    %6450 = vmatpush1.bf16.xpose.msra.mxu0 0
    %6451 = vmatprep.subr.bf16.mxu0 0
    %6452 = vmatpush1.bf16.xpose.msra.mxu0 0
    %6453 = vmatprep.subr.bf16.mxu0 0
    %6454 = vmatpush1.bf16.xpose.msra.mxu0 0
    %6455 = vmatprep.subr.bf16.mxu0 0
    %6456 = vmatpush1.bf16.xpose.msra.mxu0 0
    %6457 = vmatprep.subr.bf16.mxu0 0
    %6458 = vmatpush1.bf16.xpose.msra.mxu0 0
    %6459 = vmatprep.subr.bf16.mxu0 0
    %6460 = vmatpush1.bf16.xpose.msra.mxu0 0
    %6461 = vmatprep.subr.bf16.mxu0 0
    %6462 = vmatpush1.bf16.xpose.msra.mxu0 0
    %6463 = vmatprep.subr.bf16.mxu0 0
    %6464 = vmatpush1.bf16.xpose.msra.mxu0 0
    %6465 = vmatprep.subr.bf16.mxu0 0
    %6466 = vmatpush1.bf16.xpose.msra.mxu0 0
    %6467 = vmatprep.subr.bf16.mxu0 0
    %6468 = vmatpush1.bf16.xpose.msra.mxu0 0
    %6469 = vmatprep.subr.bf16.mxu0 0
    %6470 = vmatpush1.bf16.xpose.msra.mxu0 0
    %6471 = vmatprep.subr.bf16.mxu0 0
    %6472 = vmatpush1.bf16.xpose.msra.mxu0 0
    %6473 = vmatprep.mubr.bf16.mxu0 %v6001
    %6474 = vmatmul.mubr.bf16.gmra.mrb[0].mxu0 %v6000
    %v6475 = vpop.f32.mrb[0].mxu0
    %v6476 = vadd.f32 %v6436, %v6475
    %v6477 = vpop.f32.mrb[0].mxu0
    %v6478 = vpop.f32.mrb[0].mxu0
    %v6479 = vpop.f32.mrb[0].mxu0
    %6480 = vdwg.mxu0
    %6481 = vmatprep.subr.bf16.mxu0 %v6152
    %6482 = vmatpush1.bf16.xpose.msra.mxu0 %v6151
    %6483 = vmatprep.subr.bf16.mxu0 %v6168
    %6484 = vmatpush1.bf16.xpose.msra.mxu0 %v6167
    %6485 = vmatprep.subr.bf16.mxu0 0
    %6486 = vmatpush1.bf16.xpose.msra.mxu0 0
    %6487 = vmatprep.subr.bf16.mxu0 0
    %6488 = vmatpush1.bf16.xpose.msra.mxu0 0
    %6489 = vmatprep.subr.bf16.mxu0 0
    %6490 = vmatpush1.bf16.xpose.msra.mxu0 0
    %6491 = vmatprep.subr.bf16.mxu0 0
    %6492 = vmatpush1.bf16.xpose.msra.mxu0 0
    %6493 = vmatprep.subr.bf16.mxu0 0
    %6494 = vmatpush1.bf16.xpose.msra.mxu0 0
    %6495 = vmatprep.subr.bf16.mxu0 0
    %6496 = vmatpush1.bf16.xpose.msra.mxu0 0
    %6497 = vmatprep.subr.bf16.mxu0 0
    %6498 = vmatpush1.bf16.xpose.msra.mxu0 0
    %6499 = vmatprep.subr.bf16.mxu0 0
    %6500 = vmatpush1.bf16.xpose.msra.mxu0 0
    %6501 = vmatprep.subr.bf16.mxu0 0
    %6502 = vmatpush1.bf16.xpose.msra.mxu0 0
    %6503 = vmatprep.subr.bf16.mxu0 0
    %6504 = vmatpush1.bf16.xpose.msra.mxu0 0
    %6505 = vmatprep.subr.bf16.mxu0 0
    %6506 = vmatpush1.bf16.xpose.msra.mxu0 0
    %6507 = vmatprep.subr.bf16.mxu0 0
    %6508 = vmatpush1.bf16.xpose.msra.mxu0 0
    %6509 = vmatprep.subr.bf16.mxu0 0
    %6510 = vmatpush1.bf16.xpose.msra.mxu0 0
    %6511 = vmatprep.subr.bf16.mxu0 0
    %6512 = vmatpush1.bf16.xpose.msra.mxu0 0
    %6513 = vmatprep.mubr.bf16.mxu0 %v6003
    %6514 = vmatmul.mubr.bf16.gmra.mrb[0].mxu0 %v6002
    %v6515 = vpop.f32.mrb[0].mxu0
    %v6516 = vadd.f32 %v6476, %v6515
    %v6517 = vpop.f32.mrb[0].mxu0
    %v6518 = vpop.f32.mrb[0].mxu0
    %v6519 = vpop.f32.mrb[0].mxu0
    %6520 = vdwg.mxu0
    %v6521 = vadd.f32 %v5363, %v6516
    %v6522 = vld [vmem:[#allocation7 + $0x10] sm:$0x1]
    %v6523 = vld [vmem:[#allocation7 + $0x11] sm:$0x1]
    %v6524 = vsel %vm181, %v6521, 0.0
    %6525 = vadd.xlane.f32.xlu0 %v6524
    %v6526 = vpop.xlane.xlu0 %6525
    %v6527 = vmul.f32 %v6526, %v5343
    %v6528 = vsub.f32 %v6521, %v6527
    %v6529 = vmul.f32 %v6528, %v6528
    %v6530 = vsel %vm181, %v6529, 0.0
    %6531 = vadd.xlane.f32.xlu0 %v6530
    %v6532 = vpop.xlane.xlu0 %6531
    %v6533 = vmul.f32 %v6532, %v5343
    %v6534 = vadd.f32 %v6533, 1e-05
    %v6535 = vrsqrt.pop %v6534
    %v6536 = vmul.f32 %v6528, %v6535
    %v6537 = vlaneseq
    %v6538 = vshrl.u32 %v6537, 7
    %v6539 = vsub.s32 0, %v6538
    %v6540 = vrot.slane %v6522, %v6539
    %v6541 = vmul.f32 %v6536, %v6540
    %v6542 = vlaneseq
    %v6543 = vshrl.u32 %v6542, 7
    %v6544 = vsub.s32 0, %v6543
    %v6545 = vrot.slane %v6523, %v6544
    %v6546 = vadd.f32 %v6541, %v6545
    %s6547 = scalar_lea.vmem [#allocation8], 128
    %v6548 = vld [vmem:[%s6547] sm:$0xff]
    %v6549 = vld [vmem:[%s6547 + $0x8] sm:$0xff]
    %v6550 = vld [vmem:[%s6547 + $0x10] sm:$0xff]
    %v6551 = vld [vmem:[%s6547 + $0x18] sm:$0xff]
    %s6552 = scalar_lea.vmem [#allocation8], 160
    %v6553 = vld [vmem:[%s6552] sm:$0xff]
    %v6554 = vld [vmem:[%s6552 + $0x8] sm:$0xff]
    %v6555 = vld [vmem:[%s6552 + $0x10] sm:$0xff]
    %v6556 = vld [vmem:[%s6552 + $0x18] sm:$0xff]
    %s6557 = scalar_lea.vmem [#allocation8], 192
    %v6558 = vld [vmem:[%s6557] sm:$0xff]
    %v6559 = vld [vmem:[%s6557 + $0x8] sm:$0xff]
    %v6560 = vld [vmem:[%s6557 + $0x10] sm:$0xff]
    %v6561 = vld [vmem:[%s6557 + $0x18] sm:$0xff]
    %s6562 = scalar_lea.vmem [#allocation8], 224
    %v6563 = vld [vmem:[%s6562] sm:$0xff]
    %v6564 = vld [vmem:[%s6562 + $0x8] sm:$0xff]
    %v6565 = vld [vmem:[%s6562 + $0x10] sm:$0xff]
    %v6566 = vld [vmem:[%s6562 + $0x18] sm:$0xff]
    %v6567 = vld [vmem:[#allocation7 + $0x12] sm:$0x1]
    %v6568 = vlaneseq
    %v6569 = vshrl.u32 %v6568, 7
    %v6570 = vsub.s32 0, %v6569
    %v6571 = vrot.slane %v6567, %v6570
    %v6573 = vsel %vm181, %v6546, 0
    %6575 = vmatprep.subr.mxu0 0.0
    %6576 = vmatpush1.msra.mxu0 %v6548
    %6577 = vmatprep.subr.mxu0 0.0
    %6578 = vmatpush1.msra.mxu0 %v6549
    %6579 = vmatprep.subr.mxu0 0.0
    %6580 = vmatpush1.msra.mxu0 %v6550
    %6581 = vmatprep.subr.mxu0 0.0
    %6582 = vmatpush1.msra.mxu0 %v6551
    %6583 = vmatprep.subr.mxu0 0.0
    %6584 = vmatpush1.msra.mxu0 0.0
    %6585 = vmatprep.subr.mxu0 0.0
    %6586 = vmatpush1.msra.mxu0 0.0
    %6587 = vmatprep.subr.mxu0 0.0
    %6588 = vmatpush1.msra.mxu0 0.0
    %6589 = vmatprep.subr.mxu0 0.0
    %6590 = vmatpush1.msra.mxu0 0.0
    %6591 = vmatprep.subr.mxu0 0.0
    %6592 = vmatpush1.msra.mxu0 0.0
    %6593 = vmatprep.subr.mxu0 0.0
    %6594 = vmatpush1.msra.mxu0 0.0
    %6595 = vmatprep.subr.mxu0 0.0
    %6596 = vmatpush1.msra.mxu0 0.0
    %6597 = vmatprep.subr.mxu0 0.0
    %6598 = vmatpush1.msra.mxu0 0.0
    %6599 = vmatprep.subr.mxu0 0.0
    %6600 = vmatpush1.msra.mxu0 0.0
    %6601 = vmatprep.subr.mxu0 0.0
    %6602 = vmatpush1.msra.mxu0 0.0
    %6603 = vmatprep.subr.mxu0 0.0
    %6604 = vmatpush1.msra.mxu0 0.0
    %6605 = vmatprep.subr.mxu0 0.0
    %6606 = vmatpush1.msra.mxu0 0.0
    %6607 = vmatprep.subr.mxu0 0.0
    %6608 = vmatpush1.msra.mxu0 0.0
    %6609 = vmatprep.subr.mxu0 0.0
    %6610 = vmatpush1.msra.mxu0 0.0
    %6611 = vmatprep.subr.mxu0 0.0
    %6612 = vmatpush1.msra.mxu0 0.0
    %6613 = vmatprep.subr.mxu0 0.0
    %6614 = vmatpush1.msra.mxu0 0.0
    %6615 = vmatprep.subr.mxu0 0.0
    %6616 = vmatpush1.msra.mxu0 0.0
    %6617 = vmatprep.subr.mxu0 0.0
    %6618 = vmatpush1.msra.mxu0 0.0
    %6619 = vmatprep.subr.mxu0 0.0
    %6620 = vmatpush1.msra.mxu0 0.0
    %6621 = vmatprep.subr.mxu0 0.0
    %6622 = vmatpush1.msra.mxu0 0.0
    %6623 = vmatprep.subr.mxu0 0.0
    %6624 = vmatpush1.msra.mxu0 0.0
    %6625 = vmatprep.subr.mxu0 0.0
    %6626 = vmatpush1.msra.mxu0 0.0
    %6627 = vmatprep.subr.mxu0 0.0
    %6628 = vmatpush1.msra.mxu0 0.0
    %6629 = vmatprep.subr.mxu0 0.0
    %6630 = vmatpush1.msra.mxu0 0.0
    %6631 = vmatprep.subr.mxu0 0.0
    %6632 = vmatpush1.msra.mxu0 0.0
    %6633 = vmatprep.subr.mxu0 0.0
    %6634 = vmatpush1.msra.mxu0 0.0
    %6635 = vmatprep.subr.mxu0 0.0
    %6636 = vmatpush1.msra.mxu0 0.0
    %6637 = vmatprep.subr.mxu0 0.0
    %6638 = vmatpush1.msra.mxu0 0.0
    %6639 = vmatprep.mubr.f32.mxu0 0.0
    %6640 = vmatmul.mubr.f32.gmra.mrb[0].mxu0 %v6573
    %v6641 = vpop.f32.mrb[0].mxu0
    %v6642 = vadd.f32 %v6571, %v6641
    %v6643 = vpop.f32.mrb[0].mxu0
    %6644 = vdwg.mxu0
    %v6645 = vld [vmem:[#allocation7 + $0x13] sm:$0x1]
    %v6646 = vlaneseq
    %v6647 = vshrl.u32 %v6646, 7
    %v6648 = vsub.s32 0, %v6647
    %v6649 = vrot.slane %v6645, %v6648
    %6650 = vmatprep.subr.mxu0 0.0
    %6651 = vmatpush1.msra.mxu0 %v6553
    %6652 = vmatprep.subr.mxu0 0.0
    %6653 = vmatpush1.msra.mxu0 %v6554
    %6654 = vmatprep.subr.mxu0 0.0
    %6655 = vmatpush1.msra.mxu0 %v6555
    %6656 = vmatprep.subr.mxu0 0.0
    %6657 = vmatpush1.msra.mxu0 %v6556
    %6658 = vmatprep.subr.mxu0 0.0
    %6659 = vmatpush1.msra.mxu0 0.0
    %6660 = vmatprep.subr.mxu0 0.0
    %6661 = vmatpush1.msra.mxu0 0.0
    %6662 = vmatprep.subr.mxu0 0.0
    %6663 = vmatpush1.msra.mxu0 0.0
    %6664 = vmatprep.subr.mxu0 0.0
    %6665 = vmatpush1.msra.mxu0 0.0
    %6666 = vmatprep.subr.mxu0 0.0
    %6667 = vmatpush1.msra.mxu0 0.0
    %6668 = vmatprep.subr.mxu0 0.0
    %6669 = vmatpush1.msra.mxu0 0.0
    %6670 = vmatprep.subr.mxu0 0.0
    %6671 = vmatpush1.msra.mxu0 0.0
    %6672 = vmatprep.subr.mxu0 0.0
    %6673 = vmatpush1.msra.mxu0 0.0
    %6674 = vmatprep.subr.mxu0 0.0
    %6675 = vmatpush1.msra.mxu0 0.0
    %6676 = vmatprep.subr.mxu0 0.0
    %6677 = vmatpush1.msra.mxu0 0.0
    %6678 = vmatprep.subr.mxu0 0.0
    %6679 = vmatpush1.msra.mxu0 0.0
    %6680 = vmatprep.subr.mxu0 0.0
    %6681 = vmatpush1.msra.mxu0 0.0
    %6682 = vmatprep.subr.mxu0 0.0
    %6683 = vmatpush1.msra.mxu0 0.0
    %6684 = vmatprep.subr.mxu0 0.0
    %6685 = vmatpush1.msra.mxu0 0.0
    %6686 = vmatprep.subr.mxu0 0.0
    %6687 = vmatpush1.msra.mxu0 0.0
    %6688 = vmatprep.subr.mxu0 0.0
    %6689 = vmatpush1.msra.mxu0 0.0
    %6690 = vmatprep.subr.mxu0 0.0
    %6691 = vmatpush1.msra.mxu0 0.0
    %6692 = vmatprep.subr.mxu0 0.0
    %6693 = vmatpush1.msra.mxu0 0.0
    %6694 = vmatprep.subr.mxu0 0.0
    %6695 = vmatpush1.msra.mxu0 0.0
    %6696 = vmatprep.subr.mxu0 0.0
    %6697 = vmatpush1.msra.mxu0 0.0
    %6698 = vmatprep.subr.mxu0 0.0
    %6699 = vmatpush1.msra.mxu0 0.0
    %6700 = vmatprep.subr.mxu0 0.0
    %6701 = vmatpush1.msra.mxu0 0.0
    %6702 = vmatprep.subr.mxu0 0.0
    %6703 = vmatpush1.msra.mxu0 0.0
    %6704 = vmatprep.subr.mxu0 0.0
    %6705 = vmatpush1.msra.mxu0 0.0
    %6706 = vmatprep.subr.mxu0 0.0
    %6707 = vmatpush1.msra.mxu0 0.0
    %6708 = vmatprep.subr.mxu0 0.0
    %6709 = vmatpush1.msra.mxu0 0.0
    %6710 = vmatprep.subr.mxu0 0.0
    %6711 = vmatpush1.msra.mxu0 0.0
    %6712 = vmatprep.subr.mxu0 0.0
    %6713 = vmatpush1.msra.mxu0 0.0
    %6714 = vmatprep.mubr.f32.mxu0 0.0
    %6715 = vmatmul.mubr.f32.gmra.mrb[0].mxu0 %v6573
    %v6716 = vpop.f32.mrb[0].mxu0
    %v6717 = vadd.f32 %v6649, %v6716
    %v6718 = vpop.f32.mrb[0].mxu0
    %6719 = vdwg.mxu0
    %v6720 = vld [vmem:[#allocation7 + $0x14] sm:$0x1]
    %v6721 = vlaneseq
    %v6722 = vshrl.u32 %v6721, 7
    %v6723 = vsub.s32 0, %v6722
    %v6724 = vrot.slane %v6720, %v6723
    %6725 = vmatprep.subr.mxu0 0.0
    %6726 = vmatpush1.msra.mxu0 %v6558
    %6727 = vmatprep.subr.mxu0 0.0
    %6728 = vmatpush1.msra.mxu0 %v6559
    %6729 = vmatprep.subr.mxu0 0.0
    %6730 = vmatpush1.msra.mxu0 %v6560
    %6731 = vmatprep.subr.mxu0 0.0
    %6732 = vmatpush1.msra.mxu0 %v6561
    %6733 = vmatprep.subr.mxu0 0.0
    %6734 = vmatpush1.msra.mxu0 0.0
    %6735 = vmatprep.subr.mxu0 0.0
    %6736 = vmatpush1.msra.mxu0 0.0
    %6737 = vmatprep.subr.mxu0 0.0
    %6738 = vmatpush1.msra.mxu0 0.0
    %6739 = vmatprep.subr.mxu0 0.0
    %6740 = vmatpush1.msra.mxu0 0.0
    %6741 = vmatprep.subr.mxu0 0.0
    %6742 = vmatpush1.msra.mxu0 0.0
    %6743 = vmatprep.subr.mxu0 0.0
    %6744 = vmatpush1.msra.mxu0 0.0
    %6745 = vmatprep.subr.mxu0 0.0
    %6746 = vmatpush1.msra.mxu0 0.0
    %6747 = vmatprep.subr.mxu0 0.0
    %6748 = vmatpush1.msra.mxu0 0.0
    %6749 = vmatprep.subr.mxu0 0.0
    %6750 = vmatpush1.msra.mxu0 0.0
    %6751 = vmatprep.subr.mxu0 0.0
    %6752 = vmatpush1.msra.mxu0 0.0
    %6753 = vmatprep.subr.mxu0 0.0
    %6754 = vmatpush1.msra.mxu0 0.0
    %6755 = vmatprep.subr.mxu0 0.0
    %6756 = vmatpush1.msra.mxu0 0.0
    %6757 = vmatprep.subr.mxu0 0.0
    %6758 = vmatpush1.msra.mxu0 0.0
    %6759 = vmatprep.subr.mxu0 0.0
    %6760 = vmatpush1.msra.mxu0 0.0
    %6761 = vmatprep.subr.mxu0 0.0
    %6762 = vmatpush1.msra.mxu0 0.0
    %6763 = vmatprep.subr.mxu0 0.0
    %6764 = vmatpush1.msra.mxu0 0.0
    %6765 = vmatprep.subr.mxu0 0.0
    %6766 = vmatpush1.msra.mxu0 0.0
    %6767 = vmatprep.subr.mxu0 0.0
    %6768 = vmatpush1.msra.mxu0 0.0
    %6769 = vmatprep.subr.mxu0 0.0
    %6770 = vmatpush1.msra.mxu0 0.0
    %6771 = vmatprep.subr.mxu0 0.0
    %6772 = vmatpush1.msra.mxu0 0.0
    %6773 = vmatprep.subr.mxu0 0.0
    %6774 = vmatpush1.msra.mxu0 0.0
    %6775 = vmatprep.subr.mxu0 0.0
    %6776 = vmatpush1.msra.mxu0 0.0
    %6777 = vmatprep.subr.mxu0 0.0
    %6778 = vmatpush1.msra.mxu0 0.0
    %6779 = vmatprep.subr.mxu0 0.0
    %6780 = vmatpush1.msra.mxu0 0.0
    %6781 = vmatprep.subr.mxu0 0.0
    %6782 = vmatpush1.msra.mxu0 0.0
    %6783 = vmatprep.subr.mxu0 0.0
    %6784 = vmatpush1.msra.mxu0 0.0
    %6785 = vmatprep.subr.mxu0 0.0
    %6786 = vmatpush1.msra.mxu0 0.0
    %6787 = vmatprep.subr.mxu0 0.0
    %6788 = vmatpush1.msra.mxu0 0.0
    %6789 = vmatprep.mubr.f32.mxu0 0.0
    %6790 = vmatmul.mubr.f32.gmra.mrb[0].mxu0 %v6573
    %v6791 = vpop.f32.mrb[0].mxu0
    %v6792 = vadd.f32 %v6724, %v6791
    %v6793 = vpop.f32.mrb[0].mxu0
    %6794 = vdwg.mxu0
    %v6795 = vmul.f32 %v6642, 0.35355338
    %v6797 = vsel %vm4586, %v6795, 0
    %v6800 = vsel %vm4586, %v6717, 0
    %6802 = vmatprep.subr.mxu0 0.0
    %6803 = vmatpush1.xpose.msra.mxu0 %v6800
    %6804 = vmatprep.subr.mxu0 0.0
    %6805 = vmatpush1.xpose.msra.mxu0 0.0
    %6806 = vmatprep.subr.mxu0 0.0
    %6807 = vmatpush1.xpose.msra.mxu0 0.0
    %6808 = vmatprep.subr.mxu0 0.0
    %6809 = vmatpush1.xpose.msra.mxu0 0.0
    %6810 = vmatprep.subr.mxu0 0.0
    %6811 = vmatpush1.xpose.msra.mxu0 0.0
    %6812 = vmatprep.subr.mxu0 0.0
    %6813 = vmatpush1.xpose.msra.mxu0 0.0
    %6814 = vmatprep.subr.mxu0 0.0
    %6815 = vmatpush1.xpose.msra.mxu0 0.0
    %6816 = vmatprep.subr.mxu0 0.0
    %6817 = vmatpush1.xpose.msra.mxu0 0.0
    %6818 = vmatprep.subr.mxu0 0.0
    %6819 = vmatpush1.xpose.msra.mxu0 0.0
    %6820 = vmatprep.subr.mxu0 0.0
    %6821 = vmatpush1.xpose.msra.mxu0 0.0
    %6822 = vmatprep.subr.mxu0 0.0
    %6823 = vmatpush1.xpose.msra.mxu0 0.0
    %6824 = vmatprep.subr.mxu0 0.0
    %6825 = vmatpush1.xpose.msra.mxu0 0.0
    %6826 = vmatprep.subr.mxu0 0.0
    %6827 = vmatpush1.xpose.msra.mxu0 0.0
    %6828 = vmatprep.subr.mxu0 0.0
    %6829 = vmatpush1.xpose.msra.mxu0 0.0
    %6830 = vmatprep.subr.mxu0 0.0
    %6831 = vmatpush1.xpose.msra.mxu0 0.0
    %6832 = vmatprep.subr.mxu0 0.0
    %6833 = vmatpush1.xpose.msra.mxu0 0.0
    %6834 = vmatprep.subr.mxu0 0.0
    %6835 = vmatpush1.xpose.msra.mxu0 0.0
    %6836 = vmatprep.subr.mxu0 0.0
    %6837 = vmatpush1.xpose.msra.mxu0 0.0
    %6838 = vmatprep.subr.mxu0 0.0
    %6839 = vmatpush1.xpose.msra.mxu0 0.0
    %6840 = vmatprep.subr.mxu0 0.0
    %6841 = vmatpush1.xpose.msra.mxu0 0.0
    %6842 = vmatprep.subr.mxu0 0.0
    %6843 = vmatpush1.xpose.msra.mxu0 0.0
    %6844 = vmatprep.subr.mxu0 0.0
    %6845 = vmatpush1.xpose.msra.mxu0 0.0
    %6846 = vmatprep.subr.mxu0 0.0
    %6847 = vmatpush1.xpose.msra.mxu0 0.0
    %6848 = vmatprep.subr.mxu0 0.0
    %6849 = vmatpush1.xpose.msra.mxu0 0.0
    %6850 = vmatprep.subr.mxu0 0.0
    %6851 = vmatpush1.xpose.msra.mxu0 0.0
    %6852 = vmatprep.subr.mxu0 0.0
    %6853 = vmatpush1.xpose.msra.mxu0 0.0
    %6854 = vmatprep.subr.mxu0 0.0
    %6855 = vmatpush1.xpose.msra.mxu0 0.0
    %6856 = vmatprep.subr.mxu0 0.0
    %6857 = vmatpush1.xpose.msra.mxu0 0.0
    %6858 = vmatprep.subr.mxu0 0.0
    %6859 = vmatpush1.xpose.msra.mxu0 0.0
    %6860 = vmatprep.subr.mxu0 0.0
    %6861 = vmatpush1.xpose.msra.mxu0 0.0
    %6862 = vmatprep.subr.mxu0 0.0
    %6863 = vmatpush1.xpose.msra.mxu0 0.0
    %6864 = vmatprep.subr.mxu0 0.0
    %6865 = vmatpush1.xpose.msra.mxu0 0.0
    %6866 = vmatprep.mubr.f32.mxu0 0.0
    %6867 = vmatmul.mubr.f32.gmra.mrb[0].mxu0 %v6797
    %v6868 = vpop.f32.mrb[0].mxu0
    %v6869 = vadd.f32 %v4337, %v6868
    %v6870 = vpop.f32.mrb[0].mxu0
    %6871 = vdwg.mxu0
    %v6872 = vsel %vm4586, %v6869, -inf
    %6873 = vmax.xlane.f32.xlu0 %v6872
    %v6874 = vpop.xlane.xlu0 %6873
    %v6875 = vsub.f32 %v6869, %v6874
    %v6876 = vmul.f32 %v6875, 1.442695
    %v6877 = vpow.pop %v6876
    %v6878 = vsel %vm4586, %v6877, 0.0
    %6879 = vadd.xlane.f32.xlu0 %v6878
    %v6880 = vpop.xlane.xlu0 %6879
    %v6881 = vrcp.pop %v6880
    %v6882 = vmul.f32 %v6877, %v6881
    %v6884 = vsel %vm4586, %v6882, 0
    %6886 = vmatprep.subr.mxu0 0.0
    %6887 = vmatpush1.msra.mxu0 %v6792
    %6888 = vmatprep.subr.mxu0 0.0
    %6889 = vmatpush1.msra.mxu0 0.0
    %6890 = vmatprep.subr.mxu0 0.0
    %6891 = vmatpush1.msra.mxu0 0.0
    %6892 = vmatprep.subr.mxu0 0.0
    %6893 = vmatpush1.msra.mxu0 0.0
    %6894 = vmatprep.subr.mxu0 0.0
    %6895 = vmatpush1.msra.mxu0 0.0
    %6896 = vmatprep.subr.mxu0 0.0
    %6897 = vmatpush1.msra.mxu0 0.0
    %6898 = vmatprep.subr.mxu0 0.0
    %6899 = vmatpush1.msra.mxu0 0.0
    %6900 = vmatprep.subr.mxu0 0.0
    %6901 = vmatpush1.msra.mxu0 0.0
    %6902 = vmatprep.subr.mxu0 0.0
    %6903 = vmatpush1.msra.mxu0 0.0
    %6904 = vmatprep.subr.mxu0 0.0
    %6905 = vmatpush1.msra.mxu0 0.0
    %6906 = vmatprep.subr.mxu0 0.0
    %6907 = vmatpush1.msra.mxu0 0.0
    %6908 = vmatprep.subr.mxu0 0.0
    %6909 = vmatpush1.msra.mxu0 0.0
    %6910 = vmatprep.subr.mxu0 0.0
    %6911 = vmatpush1.msra.mxu0 0.0
    %6912 = vmatprep.subr.mxu0 0.0
    %6913 = vmatpush1.msra.mxu0 0.0
    %6914 = vmatprep.subr.mxu0 0.0
    %6915 = vmatpush1.msra.mxu0 0.0
    %6916 = vmatprep.subr.mxu0 0.0
    %6917 = vmatpush1.msra.mxu0 0.0
    %6918 = vmatprep.subr.mxu0 0.0
    %6919 = vmatpush1.msra.mxu0 0.0
    %6920 = vmatprep.subr.mxu0 0.0
    %6921 = vmatpush1.msra.mxu0 0.0
    %6922 = vmatprep.subr.mxu0 0.0
    %6923 = vmatpush1.msra.mxu0 0.0
    %6924 = vmatprep.subr.mxu0 0.0
    %6925 = vmatpush1.msra.mxu0 0.0
    %6926 = vmatprep.subr.mxu0 0.0
    %6927 = vmatpush1.msra.mxu0 0.0
    %6928 = vmatprep.subr.mxu0 0.0
    %6929 = vmatpush1.msra.mxu0 0.0
    %6930 = vmatprep.subr.mxu0 0.0
    %6931 = vmatpush1.msra.mxu0 0.0
    %6932 = vmatprep.subr.mxu0 0.0
    %6933 = vmatpush1.msra.mxu0 0.0
    %6934 = vmatprep.subr.mxu0 0.0
    %6935 = vmatpush1.msra.mxu0 0.0
    %6936 = vmatprep.subr.mxu0 0.0
    %6937 = vmatpush1.msra.mxu0 0.0
    %6938 = vmatprep.subr.mxu0 0.0
    %6939 = vmatpush1.msra.mxu0 0.0
    %6940 = vmatprep.subr.mxu0 0.0
    %6941 = vmatpush1.msra.mxu0 0.0
    %6942 = vmatprep.subr.mxu0 0.0
    %6943 = vmatpush1.msra.mxu0 0.0
    %6944 = vmatprep.subr.mxu0 0.0
    %6945 = vmatpush1.msra.mxu0 0.0
    %6946 = vmatprep.subr.mxu0 0.0
    %6947 = vmatpush1.msra.mxu0 0.0
    %6948 = vmatprep.subr.mxu0 0.0
    %6949 = vmatpush1.msra.mxu0 0.0
    %6950 = vmatprep.mubr.f32.mxu0 0.0
    %6951 = vmatmul.mubr.f32.gmra.mrb[0].mxu0 %v6884
    %v6952 = vpop.f32.mrb[0].mxu0
    %v6953 = vadd.f32 0.0, %v6952
    %v6954 = vpop.f32.mrb[0].mxu0
    %6955 = vdwg.mxu0
    %6956 = vrot.lane.b32.xlu0 %v6795, 120
    %v6957 = vpop.permute.xlu0 %6956
    %6958 = vrot.lane.b32.xlu0 %v6717, 120
    %v6959 = vpop.permute.xlu0 %6958
    %v6960 = vsel %vm4586, %v6957, 0
    %v6962 = vsel %vm4586, %v6959, 0
    %6964 = vmatprep.subr.mxu0 0.0
    %6965 = vmatpush1.xpose.msra.mxu0 %v6962
    %6966 = vmatprep.subr.mxu0 0.0
    %6967 = vmatpush1.xpose.msra.mxu0 0.0
    %6968 = vmatprep.subr.mxu0 0.0
    %6969 = vmatpush1.xpose.msra.mxu0 0.0
    %6970 = vmatprep.subr.mxu0 0.0
    %6971 = vmatpush1.xpose.msra.mxu0 0.0
    %6972 = vmatprep.subr.mxu0 0.0
    %6973 = vmatpush1.xpose.msra.mxu0 0.0
    %6974 = vmatprep.subr.mxu0 0.0
    %6975 = vmatpush1.xpose.msra.mxu0 0.0
    %6976 = vmatprep.subr.mxu0 0.0
    %6977 = vmatpush1.xpose.msra.mxu0 0.0
    %6978 = vmatprep.subr.mxu0 0.0
    %6979 = vmatpush1.xpose.msra.mxu0 0.0
    %6980 = vmatprep.subr.mxu0 0.0
    %6981 = vmatpush1.xpose.msra.mxu0 0.0
    %6982 = vmatprep.subr.mxu0 0.0
    %6983 = vmatpush1.xpose.msra.mxu0 0.0
    %6984 = vmatprep.subr.mxu0 0.0
    %6985 = vmatpush1.xpose.msra.mxu0 0.0
    %6986 = vmatprep.subr.mxu0 0.0
    %6987 = vmatpush1.xpose.msra.mxu0 0.0
    %6988 = vmatprep.subr.mxu0 0.0
    %6989 = vmatpush1.xpose.msra.mxu0 0.0
    %6990 = vmatprep.subr.mxu0 0.0
    %6991 = vmatpush1.xpose.msra.mxu0 0.0
    %6992 = vmatprep.subr.mxu0 0.0
    %6993 = vmatpush1.xpose.msra.mxu0 0.0
    %6994 = vmatprep.subr.mxu0 0.0
    %6995 = vmatpush1.xpose.msra.mxu0 0.0
    %6996 = vmatprep.subr.mxu0 0.0
    %6997 = vmatpush1.xpose.msra.mxu0 0.0
    %6998 = vmatprep.subr.mxu0 0.0
    %6999 = vmatpush1.xpose.msra.mxu0 0.0
    %7000 = vmatprep.subr.mxu0 0.0
    %7001 = vmatpush1.xpose.msra.mxu0 0.0
    %7002 = vmatprep.subr.mxu0 0.0
    %7003 = vmatpush1.xpose.msra.mxu0 0.0
    %7004 = vmatprep.subr.mxu0 0.0
    %7005 = vmatpush1.xpose.msra.mxu0 0.0
    %7006 = vmatprep.subr.mxu0 0.0
    %7007 = vmatpush1.xpose.msra.mxu0 0.0
    %7008 = vmatprep.subr.mxu0 0.0
    %7009 = vmatpush1.xpose.msra.mxu0 0.0
    %7010 = vmatprep.subr.mxu0 0.0
    %7011 = vmatpush1.xpose.msra.mxu0 0.0
    %7012 = vmatprep.subr.mxu0 0.0
    %7013 = vmatpush1.xpose.msra.mxu0 0.0
    %7014 = vmatprep.subr.mxu0 0.0
    %7015 = vmatpush1.xpose.msra.mxu0 0.0
    %7016 = vmatprep.subr.mxu0 0.0
    %7017 = vmatpush1.xpose.msra.mxu0 0.0
    %7018 = vmatprep.subr.mxu0 0.0
    %7019 = vmatpush1.xpose.msra.mxu0 0.0
    %7020 = vmatprep.subr.mxu0 0.0
    %7021 = vmatpush1.xpose.msra.mxu0 0.0
    %7022 = vmatprep.subr.mxu0 0.0
    %7023 = vmatpush1.xpose.msra.mxu0 0.0
    %7024 = vmatprep.subr.mxu0 0.0
    %7025 = vmatpush1.xpose.msra.mxu0 0.0
    %7026 = vmatprep.subr.mxu0 0.0
    %7027 = vmatpush1.xpose.msra.mxu0 0.0
    %7028 = vmatprep.mubr.f32.mxu0 0.0
    %7029 = vmatmul.mubr.f32.gmra.mrb[0].mxu0 %v6960
    %v7030 = vpop.f32.mrb[0].mxu0
    %v7031 = vadd.f32 %v4337, %v7030
    %v7032 = vpop.f32.mrb[0].mxu0
    %7033 = vdwg.mxu0
    %v7034 = vsel %vm4586, %v7031, -inf
    %7035 = vmax.xlane.f32.xlu0 %v7034
    %v7036 = vpop.xlane.xlu0 %7035
    %v7037 = vsub.f32 %v7031, %v7036
    %v7038 = vmul.f32 %v7037, 1.442695
    %v7039 = vpow.pop %v7038
    %v7040 = vsel %vm4586, %v7039, 0.0
    %7041 = vadd.xlane.f32.xlu0 %v7040
    %v7042 = vpop.xlane.xlu0 %7041
    %v7043 = vrcp.pop %v7042
    %v7044 = vmul.f32 %v7039, %v7043
    %7046 = vrot.lane.b32.xlu0 %v6792, 120
    %v7047 = vpop.permute.xlu0 %7046
    %v7050 = vsel %vm4586, %v7044, 0
    %7052 = vmatprep.subr.mxu0 0.0
    %7053 = vmatpush1.msra.mxu0 %v7047
    %7054 = vmatprep.subr.mxu0 0.0
    %7055 = vmatpush1.msra.mxu0 0.0
    %7056 = vmatprep.subr.mxu0 0.0
    %7057 = vmatpush1.msra.mxu0 0.0
    %7058 = vmatprep.subr.mxu0 0.0
    %7059 = vmatpush1.msra.mxu0 0.0
    %7060 = vmatprep.subr.mxu0 0.0
    %7061 = vmatpush1.msra.mxu0 0.0
    %7062 = vmatprep.subr.mxu0 0.0
    %7063 = vmatpush1.msra.mxu0 0.0
    %7064 = vmatprep.subr.mxu0 0.0
    %7065 = vmatpush1.msra.mxu0 0.0
    %7066 = vmatprep.subr.mxu0 0.0
    %7067 = vmatpush1.msra.mxu0 0.0
    %7068 = vmatprep.subr.mxu0 0.0
    %7069 = vmatpush1.msra.mxu0 0.0
    %7070 = vmatprep.subr.mxu0 0.0
    %7071 = vmatpush1.msra.mxu0 0.0
    %7072 = vmatprep.subr.mxu0 0.0
    %7073 = vmatpush1.msra.mxu0 0.0
    %7074 = vmatprep.subr.mxu0 0.0
    %7075 = vmatpush1.msra.mxu0 0.0
    %7076 = vmatprep.subr.mxu0 0.0
    %7077 = vmatpush1.msra.mxu0 0.0
    %7078 = vmatprep.subr.mxu0 0.0
    %7079 = vmatpush1.msra.mxu0 0.0
    %7080 = vmatprep.subr.mxu0 0.0
    %7081 = vmatpush1.msra.mxu0 0.0
    %7082 = vmatprep.subr.mxu0 0.0
    %7083 = vmatpush1.msra.mxu0 0.0
    %7084 = vmatprep.subr.mxu0 0.0
    %7085 = vmatpush1.msra.mxu0 0.0
    %7086 = vmatprep.subr.mxu0 0.0
    %7087 = vmatpush1.msra.mxu0 0.0
    %7088 = vmatprep.subr.mxu0 0.0
    %7089 = vmatpush1.msra.mxu0 0.0
    %7090 = vmatprep.subr.mxu0 0.0
    %7091 = vmatpush1.msra.mxu0 0.0
    %7092 = vmatprep.subr.mxu0 0.0
    %7093 = vmatpush1.msra.mxu0 0.0
    %7094 = vmatprep.subr.mxu0 0.0
    %7095 = vmatpush1.msra.mxu0 0.0
    %7096 = vmatprep.subr.mxu0 0.0
    %7097 = vmatpush1.msra.mxu0 0.0
    %7098 = vmatprep.subr.mxu0 0.0
    %7099 = vmatpush1.msra.mxu0 0.0
    %7100 = vmatprep.subr.mxu0 0.0
    %7101 = vmatpush1.msra.mxu0 0.0
    %7102 = vmatprep.subr.mxu0 0.0
    %7103 = vmatpush1.msra.mxu0 0.0
    %7104 = vmatprep.subr.mxu0 0.0
    %7105 = vmatpush1.msra.mxu0 0.0
    %7106 = vmatprep.subr.mxu0 0.0
    %7107 = vmatpush1.msra.mxu0 0.0
    %7108 = vmatprep.subr.mxu0 0.0
    %7109 = vmatpush1.msra.mxu0 0.0
    %7110 = vmatprep.subr.mxu0 0.0
    %7111 = vmatpush1.msra.mxu0 0.0
    %7112 = vmatprep.subr.mxu0 0.0
    %7113 = vmatpush1.msra.mxu0 0.0
    %7114 = vmatprep.subr.mxu0 0.0
    %7115 = vmatpush1.msra.mxu0 0.0
    %7116 = vmatprep.mubr.f32.mxu0 0.0
    %7117 = vmatmul.mubr.f32.gmra.mrb[0].mxu0 %v7050
    %v7118 = vpop.f32.mrb[0].mxu0
    %v7119 = vadd.f32 0.0, %v7118
    %v7120 = vpop.f32.mrb[0].mxu0
    %7121 = vdwg.mxu0
    %7122 = vrot.lane.b32.xlu0 %v6795, 112
    %v7123 = vpop.permute.xlu0 %7122
    %7124 = vrot.lane.b32.xlu0 %v6717, 112
    %v7125 = vpop.permute.xlu0 %7124
    %v7126 = vsel %vm4586, %v7123, 0
    %v7128 = vsel %vm4586, %v7125, 0
    %7130 = vmatprep.subr.mxu0 0.0
    %7131 = vmatpush1.xpose.msra.mxu0 %v7128
    %7132 = vmatprep.subr.mxu0 0.0
    %7133 = vmatpush1.xpose.msra.mxu0 0.0
    %7134 = vmatprep.subr.mxu0 0.0
    %7135 = vmatpush1.xpose.msra.mxu0 0.0
    %7136 = vmatprep.subr.mxu0 0.0
    %7137 = vmatpush1.xpose.msra.mxu0 0.0
    %7138 = vmatprep.subr.mxu0 0.0
    %7139 = vmatpush1.xpose.msra.mxu0 0.0
    %7140 = vmatprep.subr.mxu0 0.0
    %7141 = vmatpush1.xpose.msra.mxu0 0.0
    %7142 = vmatprep.subr.mxu0 0.0
    %7143 = vmatpush1.xpose.msra.mxu0 0.0
    %7144 = vmatprep.subr.mxu0 0.0
    %7145 = vmatpush1.xpose.msra.mxu0 0.0
    %7146 = vmatprep.subr.mxu0 0.0
    %7147 = vmatpush1.xpose.msra.mxu0 0.0
    %7148 = vmatprep.subr.mxu0 0.0
    %7149 = vmatpush1.xpose.msra.mxu0 0.0
    %7150 = vmatprep.subr.mxu0 0.0
    %7151 = vmatpush1.xpose.msra.mxu0 0.0
    %7152 = vmatprep.subr.mxu0 0.0
    %7153 = vmatpush1.xpose.msra.mxu0 0.0
    %7154 = vmatprep.subr.mxu0 0.0
    %7155 = vmatpush1.xpose.msra.mxu0 0.0
    %7156 = vmatprep.subr.mxu0 0.0
    %7157 = vmatpush1.xpose.msra.mxu0 0.0
    %7158 = vmatprep.subr.mxu0 0.0
    %7159 = vmatpush1.xpose.msra.mxu0 0.0
    %7160 = vmatprep.subr.mxu0 0.0
    %7161 = vmatpush1.xpose.msra.mxu0 0.0
    %7162 = vmatprep.subr.mxu0 0.0
    %7163 = vmatpush1.xpose.msra.mxu0 0.0
    %7164 = vmatprep.subr.mxu0 0.0
    %7165 = vmatpush1.xpose.msra.mxu0 0.0
    %7166 = vmatprep.subr.mxu0 0.0
    %7167 = vmatpush1.xpose.msra.mxu0 0.0
    %7168 = vmatprep.subr.mxu0 0.0
    %7169 = vmatpush1.xpose.msra.mxu0 0.0
    %7170 = vmatprep.subr.mxu0 0.0
    %7171 = vmatpush1.xpose.msra.mxu0 0.0
    %7172 = vmatprep.subr.mxu0 0.0
    %7173 = vmatpush1.xpose.msra.mxu0 0.0
    %7174 = vmatprep.subr.mxu0 0.0
    %7175 = vmatpush1.xpose.msra.mxu0 0.0
    %7176 = vmatprep.subr.mxu0 0.0
    %7177 = vmatpush1.xpose.msra.mxu0 0.0
    %7178 = vmatprep.subr.mxu0 0.0
    %7179 = vmatpush1.xpose.msra.mxu0 0.0
    %7180 = vmatprep.subr.mxu0 0.0
    %7181 = vmatpush1.xpose.msra.mxu0 0.0
    %7182 = vmatprep.subr.mxu0 0.0
    %7183 = vmatpush1.xpose.msra.mxu0 0.0
    %7184 = vmatprep.subr.mxu0 0.0
    %7185 = vmatpush1.xpose.msra.mxu0 0.0
    %7186 = vmatprep.subr.mxu0 0.0
    %7187 = vmatpush1.xpose.msra.mxu0 0.0
    %7188 = vmatprep.subr.mxu0 0.0
    %7189 = vmatpush1.xpose.msra.mxu0 0.0
    %7190 = vmatprep.subr.mxu0 0.0
    %7191 = vmatpush1.xpose.msra.mxu0 0.0
    %7192 = vmatprep.subr.mxu0 0.0
    %7193 = vmatpush1.xpose.msra.mxu0 0.0
    %7194 = vmatprep.mubr.f32.mxu0 0.0
    %7195 = vmatmul.mubr.f32.gmra.mrb[0].mxu0 %v7126
    %v7196 = vpop.f32.mrb[0].mxu0
    %v7197 = vadd.f32 %v4337, %v7196
    %v7198 = vpop.f32.mrb[0].mxu0
    %7199 = vdwg.mxu0
    %v7200 = vsel %vm4586, %v7197, -inf
    %7201 = vmax.xlane.f32.xlu0 %v7200
    %v7202 = vpop.xlane.xlu0 %7201
    %v7203 = vsub.f32 %v7197, %v7202
    %v7204 = vmul.f32 %v7203, 1.442695
    %v7205 = vpow.pop %v7204
    %v7206 = vsel %vm4586, %v7205, 0.0
    %7207 = vadd.xlane.f32.xlu0 %v7206
    %v7208 = vpop.xlane.xlu0 %7207
    %v7209 = vrcp.pop %v7208
    %v7210 = vmul.f32 %v7205, %v7209
    %7211 = vrot.lane.b32.xlu0 %v6792, 112
    %v7212 = vpop.permute.xlu0 %7211
    %v7215 = vsel %vm4586, %v7210, 0
    %7217 = vmatprep.subr.mxu0 0.0
    %7218 = vmatpush1.msra.mxu0 %v7212
    %7219 = vmatprep.subr.mxu0 0.0
    %7220 = vmatpush1.msra.mxu0 0.0
    %7221 = vmatprep.subr.mxu0 0.0
    %7222 = vmatpush1.msra.mxu0 0.0
    %7223 = vmatprep.subr.mxu0 0.0
    %7224 = vmatpush1.msra.mxu0 0.0
    %7225 = vmatprep.subr.mxu0 0.0
    %7226 = vmatpush1.msra.mxu0 0.0
    %7227 = vmatprep.subr.mxu0 0.0
    %7228 = vmatpush1.msra.mxu0 0.0
    %7229 = vmatprep.subr.mxu0 0.0
    %7230 = vmatpush1.msra.mxu0 0.0
    %7231 = vmatprep.subr.mxu0 0.0
    %7232 = vmatpush1.msra.mxu0 0.0
    %7233 = vmatprep.subr.mxu0 0.0
    %7234 = vmatpush1.msra.mxu0 0.0
    %7235 = vmatprep.subr.mxu0 0.0
    %7236 = vmatpush1.msra.mxu0 0.0
    %7237 = vmatprep.subr.mxu0 0.0
    %7238 = vmatpush1.msra.mxu0 0.0
    %7239 = vmatprep.subr.mxu0 0.0
    %7240 = vmatpush1.msra.mxu0 0.0
    %7241 = vmatprep.subr.mxu0 0.0
    %7242 = vmatpush1.msra.mxu0 0.0
    %7243 = vmatprep.subr.mxu0 0.0
    %7244 = vmatpush1.msra.mxu0 0.0
    %7245 = vmatprep.subr.mxu0 0.0
    %7246 = vmatpush1.msra.mxu0 0.0
    %7247 = vmatprep.subr.mxu0 0.0
    %7248 = vmatpush1.msra.mxu0 0.0
    %7249 = vmatprep.subr.mxu0 0.0
    %7250 = vmatpush1.msra.mxu0 0.0
    %7251 = vmatprep.subr.mxu0 0.0
    %7252 = vmatpush1.msra.mxu0 0.0
    %7253 = vmatprep.subr.mxu0 0.0
    %7254 = vmatpush1.msra.mxu0 0.0
    %7255 = vmatprep.subr.mxu0 0.0
    %7256 = vmatpush1.msra.mxu0 0.0
    %7257 = vmatprep.subr.mxu0 0.0
    %7258 = vmatpush1.msra.mxu0 0.0
    %7259 = vmatprep.subr.mxu0 0.0
    %7260 = vmatpush1.msra.mxu0 0.0
    %7261 = vmatprep.subr.mxu0 0.0
    %7262 = vmatpush1.msra.mxu0 0.0
    %7263 = vmatprep.subr.mxu0 0.0
    %7264 = vmatpush1.msra.mxu0 0.0
    %7265 = vmatprep.subr.mxu0 0.0
    %7266 = vmatpush1.msra.mxu0 0.0
    %7267 = vmatprep.subr.mxu0 0.0
    %7268 = vmatpush1.msra.mxu0 0.0
    %7269 = vmatprep.subr.mxu0 0.0
    %7270 = vmatpush1.msra.mxu0 0.0
    %7271 = vmatprep.subr.mxu0 0.0
    %7272 = vmatpush1.msra.mxu0 0.0
    %7273 = vmatprep.subr.mxu0 0.0
    %7274 = vmatpush1.msra.mxu0 0.0
    %7275 = vmatprep.subr.mxu0 0.0
    %7276 = vmatpush1.msra.mxu0 0.0
    %7277 = vmatprep.subr.mxu0 0.0
    %7278 = vmatpush1.msra.mxu0 0.0
    %7279 = vmatprep.subr.mxu0 0.0
    %7280 = vmatpush1.msra.mxu0 0.0
    %7281 = vmatprep.mubr.f32.mxu0 0.0
    %7282 = vmatmul.mubr.f32.gmra.mrb[0].mxu0 %v7215
    %v7283 = vpop.f32.mrb[0].mxu0
    %v7284 = vadd.f32 0.0, %v7283
    %v7285 = vpop.f32.mrb[0].mxu0
    %7286 = vdwg.mxu0
    %7287 = vrot.lane.b32.xlu0 %v6795, 104
    %v7288 = vpop.permute.xlu0 %7287
    %7289 = vrot.lane.b32.xlu0 %v6717, 104
    %v7290 = vpop.permute.xlu0 %7289
    %v7291 = vsel %vm4586, %v7288, 0
    %v7293 = vsel %vm4586, %v7290, 0
    %7295 = vmatprep.subr.mxu0 0.0
    %7296 = vmatpush1.xpose.msra.mxu0 %v7293
    %7297 = vmatprep.subr.mxu0 0.0
    %7298 = vmatpush1.xpose.msra.mxu0 0.0
    %7299 = vmatprep.subr.mxu0 0.0
    %7300 = vmatpush1.xpose.msra.mxu0 0.0
    %7301 = vmatprep.subr.mxu0 0.0
    %7302 = vmatpush1.xpose.msra.mxu0 0.0
    %7303 = vmatprep.subr.mxu0 0.0
    %7304 = vmatpush1.xpose.msra.mxu0 0.0
    %7305 = vmatprep.subr.mxu0 0.0
    %7306 = vmatpush1.xpose.msra.mxu0 0.0
    %7307 = vmatprep.subr.mxu0 0.0
    %7308 = vmatpush1.xpose.msra.mxu0 0.0
    %7309 = vmatprep.subr.mxu0 0.0
    %7310 = vmatpush1.xpose.msra.mxu0 0.0
    %7311 = vmatprep.subr.mxu0 0.0
    %7312 = vmatpush1.xpose.msra.mxu0 0.0
    %7313 = vmatprep.subr.mxu0 0.0
    %7314 = vmatpush1.xpose.msra.mxu0 0.0
    %7315 = vmatprep.subr.mxu0 0.0
    %7316 = vmatpush1.xpose.msra.mxu0 0.0
    %7317 = vmatprep.subr.mxu0 0.0
    %7318 = vmatpush1.xpose.msra.mxu0 0.0
    %7319 = vmatprep.subr.mxu0 0.0
    %7320 = vmatpush1.xpose.msra.mxu0 0.0
    %7321 = vmatprep.subr.mxu0 0.0
    %7322 = vmatpush1.xpose.msra.mxu0 0.0
    %7323 = vmatprep.subr.mxu0 0.0
    %7324 = vmatpush1.xpose.msra.mxu0 0.0
    %7325 = vmatprep.subr.mxu0 0.0
    %7326 = vmatpush1.xpose.msra.mxu0 0.0
    %7327 = vmatprep.subr.mxu0 0.0
    %7328 = vmatpush1.xpose.msra.mxu0 0.0
    %7329 = vmatprep.subr.mxu0 0.0
    %7330 = vmatpush1.xpose.msra.mxu0 0.0
    %7331 = vmatprep.subr.mxu0 0.0
    %7332 = vmatpush1.xpose.msra.mxu0 0.0
    %7333 = vmatprep.subr.mxu0 0.0
    %7334 = vmatpush1.xpose.msra.mxu0 0.0
    %7335 = vmatprep.subr.mxu0 0.0
    %7336 = vmatpush1.xpose.msra.mxu0 0.0
    %7337 = vmatprep.subr.mxu0 0.0
    %7338 = vmatpush1.xpose.msra.mxu0 0.0
    %7339 = vmatprep.subr.mxu0 0.0
    %7340 = vmatpush1.xpose.msra.mxu0 0.0
    %7341 = vmatprep.subr.mxu0 0.0
    %7342 = vmatpush1.xpose.msra.mxu0 0.0
    %7343 = vmatprep.subr.mxu0 0.0
    %7344 = vmatpush1.xpose.msra.mxu0 0.0
    %7345 = vmatprep.subr.mxu0 0.0
    %7346 = vmatpush1.xpose.msra.mxu0 0.0
    %7347 = vmatprep.subr.mxu0 0.0
    %7348 = vmatpush1.xpose.msra.mxu0 0.0
    %7349 = vmatprep.subr.mxu0 0.0
    %7350 = vmatpush1.xpose.msra.mxu0 0.0
    %7351 = vmatprep.subr.mxu0 0.0
    %7352 = vmatpush1.xpose.msra.mxu0 0.0
    %7353 = vmatprep.subr.mxu0 0.0
    %7354 = vmatpush1.xpose.msra.mxu0 0.0
    %7355 = vmatprep.subr.mxu0 0.0
    %7356 = vmatpush1.xpose.msra.mxu0 0.0
    %7357 = vmatprep.subr.mxu0 0.0
    %7358 = vmatpush1.xpose.msra.mxu0 0.0
    %7359 = vmatprep.mubr.f32.mxu0 0.0
    %7360 = vmatmul.mubr.f32.gmra.mrb[0].mxu0 %v7291
    %v7361 = vpop.f32.mrb[0].mxu0
    %v7362 = vadd.f32 %v4337, %v7361
    %v7363 = vpop.f32.mrb[0].mxu0
    %7364 = vdwg.mxu0
    %v7365 = vsel %vm4586, %v7362, -inf
    %7366 = vmax.xlane.f32.xlu0 %v7365
    %v7367 = vpop.xlane.xlu0 %7366
    %v7368 = vsub.f32 %v7362, %v7367
    %v7369 = vmul.f32 %v7368, 1.442695
    %v7370 = vpow.pop %v7369
    %v7371 = vsel %vm4586, %v7370, 0.0
    %7372 = vadd.xlane.f32.xlu0 %v7371
    %v7373 = vpop.xlane.xlu0 %7372
    %v7374 = vrcp.pop %v7373
    %v7375 = vmul.f32 %v7370, %v7374
    %7376 = vrot.lane.b32.xlu0 %v6792, 104
    %v7377 = vpop.permute.xlu0 %7376
    %v7380 = vsel %vm4586, %v7375, 0
    %7382 = vmatprep.subr.mxu0 0.0
    %7383 = vmatpush1.msra.mxu0 %v7377
    %7384 = vmatprep.subr.mxu0 0.0
    %7385 = vmatpush1.msra.mxu0 0.0
    %7386 = vmatprep.subr.mxu0 0.0
    %7387 = vmatpush1.msra.mxu0 0.0
    %7388 = vmatprep.subr.mxu0 0.0
    %7389 = vmatpush1.msra.mxu0 0.0
    %7390 = vmatprep.subr.mxu0 0.0
    %7391 = vmatpush1.msra.mxu0 0.0
    %7392 = vmatprep.subr.mxu0 0.0
    %7393 = vmatpush1.msra.mxu0 0.0
    %7394 = vmatprep.subr.mxu0 0.0
    %7395 = vmatpush1.msra.mxu0 0.0
    %7396 = vmatprep.subr.mxu0 0.0
    %7397 = vmatpush1.msra.mxu0 0.0
    %7398 = vmatprep.subr.mxu0 0.0
    %7399 = vmatpush1.msra.mxu0 0.0
    %7400 = vmatprep.subr.mxu0 0.0
    %7401 = vmatpush1.msra.mxu0 0.0
    %7402 = vmatprep.subr.mxu0 0.0
    %7403 = vmatpush1.msra.mxu0 0.0
    %7404 = vmatprep.subr.mxu0 0.0
    %7405 = vmatpush1.msra.mxu0 0.0
    %7406 = vmatprep.subr.mxu0 0.0
    %7407 = vmatpush1.msra.mxu0 0.0
    %7408 = vmatprep.subr.mxu0 0.0
    %7409 = vmatpush1.msra.mxu0 0.0
    %7410 = vmatprep.subr.mxu0 0.0
    %7411 = vmatpush1.msra.mxu0 0.0
    %7412 = vmatprep.subr.mxu0 0.0
    %7413 = vmatpush1.msra.mxu0 0.0
    %7414 = vmatprep.subr.mxu0 0.0
    %7415 = vmatpush1.msra.mxu0 0.0
    %7416 = vmatprep.subr.mxu0 0.0
    %7417 = vmatpush1.msra.mxu0 0.0
    %7418 = vmatprep.subr.mxu0 0.0
    %7419 = vmatpush1.msra.mxu0 0.0
    %7420 = vmatprep.subr.mxu0 0.0
    %7421 = vmatpush1.msra.mxu0 0.0
    %7422 = vmatprep.subr.mxu0 0.0
    %7423 = vmatpush1.msra.mxu0 0.0
    %7424 = vmatprep.subr.mxu0 0.0
    %7425 = vmatpush1.msra.mxu0 0.0
    %7426 = vmatprep.subr.mxu0 0.0
    %7427 = vmatpush1.msra.mxu0 0.0
    %7428 = vmatprep.subr.mxu0 0.0
    %7429 = vmatpush1.msra.mxu0 0.0
    %7430 = vmatprep.subr.mxu0 0.0
    %7431 = vmatpush1.msra.mxu0 0.0
    %7432 = vmatprep.subr.mxu0 0.0
    %7433 = vmatpush1.msra.mxu0 0.0
    %7434 = vmatprep.subr.mxu0 0.0
    %7435 = vmatpush1.msra.mxu0 0.0
    %7436 = vmatprep.subr.mxu0 0.0
    %7437 = vmatpush1.msra.mxu0 0.0
    %7438 = vmatprep.subr.mxu0 0.0
    %7439 = vmatpush1.msra.mxu0 0.0
    %7440 = vmatprep.subr.mxu0 0.0
    %7441 = vmatpush1.msra.mxu0 0.0
    %7442 = vmatprep.subr.mxu0 0.0
    %7443 = vmatpush1.msra.mxu0 0.0
    %7444 = vmatprep.subr.mxu0 0.0
    %7445 = vmatpush1.msra.mxu0 0.0
    %7446 = vmatprep.mubr.f32.mxu0 0.0
    %7447 = vmatmul.mubr.f32.gmra.mrb[0].mxu0 %v7380
    %v7448 = vpop.f32.mrb[0].mxu0
    %v7449 = vadd.f32 0.0, %v7448
    %v7450 = vpop.f32.mrb[0].mxu0
    %7451 = vdwg.mxu0
    %7453 = vrot.lane.b32.xlu0 %v7119, 8
    %v7454 = vpop.permute.xlu0 %7453
    %7457 = vrot.lane.b32.xlu0 %v7284, 16
    %v7458 = vpop.permute.xlu0 %7457
    %7461 = vrot.lane.b32.xlu0 %v7449, 24
    %v7462 = vpop.permute.xlu0 %7461
    %v7464 = vsel %vm4586, %v6953, %v7454
    %v7465 = vsel %vm4260, %v7464, %v7458
    %v7466 = vsel %vm5257, %v7465, %v7462
    %v7467 = vld [vmem:[#allocation7 + $0x15] sm:$0x1]
    %v7468 = vlaneseq
    %v7469 = vshrl.u32 %v7468, 7
    %v7470 = vsub.s32 0, %v7469
    %v7471 = vrot.slane %v7467, %v7470
    %v7473 = vsel %vm181, %v7466, 0
    %7475 = vmatprep.subr.mxu0 0.0
    %7476 = vmatpush1.msra.mxu0 %v6563
    %7477 = vmatprep.subr.mxu0 0.0
    %7478 = vmatpush1.msra.mxu0 %v6564
    %7479 = vmatprep.subr.mxu0 0.0
    %7480 = vmatpush1.msra.mxu0 %v6565
    %7481 = vmatprep.subr.mxu0 0.0
    %7482 = vmatpush1.msra.mxu0 %v6566
    %7483 = vmatprep.subr.mxu0 0.0
    %7484 = vmatpush1.msra.mxu0 0.0
    %7485 = vmatprep.subr.mxu0 0.0
    %7486 = vmatpush1.msra.mxu0 0.0
    %7487 = vmatprep.subr.mxu0 0.0
    %7488 = vmatpush1.msra.mxu0 0.0
    %7489 = vmatprep.subr.mxu0 0.0
    %7490 = vmatpush1.msra.mxu0 0.0
    %7491 = vmatprep.subr.mxu0 0.0
    %7492 = vmatpush1.msra.mxu0 0.0
    %7493 = vmatprep.subr.mxu0 0.0
    %7494 = vmatpush1.msra.mxu0 0.0
    %7495 = vmatprep.subr.mxu0 0.0
    %7496 = vmatpush1.msra.mxu0 0.0
    %7497 = vmatprep.subr.mxu0 0.0
    %7498 = vmatpush1.msra.mxu0 0.0
    %7499 = vmatprep.subr.mxu0 0.0
    %7500 = vmatpush1.msra.mxu0 0.0
    %7501 = vmatprep.subr.mxu0 0.0
    %7502 = vmatpush1.msra.mxu0 0.0
    %7503 = vmatprep.subr.mxu0 0.0
    %7504 = vmatpush1.msra.mxu0 0.0
    %7505 = vmatprep.subr.mxu0 0.0
    %7506 = vmatpush1.msra.mxu0 0.0
    %7507 = vmatprep.subr.mxu0 0.0
    %7508 = vmatpush1.msra.mxu0 0.0
    %7509 = vmatprep.subr.mxu0 0.0
    %7510 = vmatpush1.msra.mxu0 0.0
    %7511 = vmatprep.subr.mxu0 0.0
    %7512 = vmatpush1.msra.mxu0 0.0
    %7513 = vmatprep.subr.mxu0 0.0
    %7514 = vmatpush1.msra.mxu0 0.0
    %7515 = vmatprep.subr.mxu0 0.0
    %7516 = vmatpush1.msra.mxu0 0.0
    %7517 = vmatprep.subr.mxu0 0.0
    %7518 = vmatpush1.msra.mxu0 0.0
    %7519 = vmatprep.subr.mxu0 0.0
    %7520 = vmatpush1.msra.mxu0 0.0
    %7521 = vmatprep.subr.mxu0 0.0
    %7522 = vmatpush1.msra.mxu0 0.0
    %7523 = vmatprep.subr.mxu0 0.0
    %7524 = vmatpush1.msra.mxu0 0.0
    %7525 = vmatprep.subr.mxu0 0.0
    %7526 = vmatpush1.msra.mxu0 0.0
    %7527 = vmatprep.subr.mxu0 0.0
    %7528 = vmatpush1.msra.mxu0 0.0
    %7529 = vmatprep.subr.mxu0 0.0
    %7530 = vmatpush1.msra.mxu0 0.0
    %7531 = vmatprep.subr.mxu0 0.0
    %7532 = vmatpush1.msra.mxu0 0.0
    %7533 = vmatprep.subr.mxu0 0.0
    %7534 = vmatpush1.msra.mxu0 0.0
    %7535 = vmatprep.subr.mxu0 0.0
    %7536 = vmatpush1.msra.mxu0 0.0
    %7537 = vmatprep.subr.mxu0 0.0
    %7538 = vmatpush1.msra.mxu0 0.0
    %7539 = vmatprep.mubr.f32.mxu0 0.0
    %7540 = vmatmul.mubr.f32.gmra.mrb[0].mxu0 %v7473
    %v7541 = vpop.f32.mrb[0].mxu0
    %v7542 = vadd.f32 %v7471, %v7541
    %v7543 = vpop.f32.mrb[0].mxu0
    %7544 = vdwg.mxu0
    %v7545 = vadd.f32 %v6546, %v7542
    %v7546 = vld [vmem:[#allocation7 + $0x16] sm:$0x1]
    %v7547 = vld [vmem:[#allocation7 + $0x17] sm:$0x1]
    %v7548 = vsel %vm181, %v7545, 0.0
    %7549 = vadd.xlane.f32.xlu0 %v7548
    %v7550 = vpop.xlane.xlu0 %7549
    %v7551 = vmul.f32 %v7550, %v5343
    %v7552 = vsub.f32 %v7545, %v7551
    %v7553 = vmul.f32 %v7552, %v7552
    %v7554 = vsel %vm181, %v7553, 0.0
    %7555 = vadd.xlane.f32.xlu0 %v7554
    %v7556 = vpop.xlane.xlu0 %7555
    %v7557 = vmul.f32 %v7556, %v5343
    %v7558 = vadd.f32 %v7557, 1e-05
    %v7559 = vrsqrt.pop %v7558
    %v7560 = vmul.f32 %v7552, %v7559
    %v7561 = vlaneseq
    %v7562 = vshrl.u32 %v7561, 7
    %v7563 = vsub.s32 0, %v7562
    %v7564 = vrot.slane %v7546, %v7563
    %v7565 = vmul.f32 %v7560, %v7564
    %v7566 = vlaneseq
    %v7567 = vshrl.u32 %v7566, 7
    %v7568 = vsub.s32 0, %v7567
    %v7569 = vrot.slane %v7547, %v7568
    %v7570 = vadd.f32 %v7565, %v7569
    %v7571 = vpack.c.bf16 %v7570, %v7570
    %s7572 = scalar_lea.vmem [#allocation10], 256
    %v7573 = vld [vmem:[%s7572] sm:$0xff]
    %v7574 = vld [vmem:[%s7572 + $0x8] sm:$0xff]
    %v7575 = vld [vmem:[%s7572 + $0x10] sm:$0xff]
    %v7576 = vld [vmem:[%s7572 + $0x18] sm:$0xff]
    %v7577 = vld [vmem:[%s7572 + $0x20] sm:$0xff]
    %v7578 = vld [vmem:[%s7572 + $0x28] sm:$0xff]
    %v7579 = vld [vmem:[%s7572 + $0x30] sm:$0xff]
    %v7580 = vld [vmem:[%s7572 + $0x38] sm:$0xff]
    %v7581 = vld [vmem:[%s7572 + $0x40] sm:$0xff]
    %v7582 = vld [vmem:[%s7572 + $0x48] sm:$0xff]
    %v7583 = vld [vmem:[%s7572 + $0x50] sm:$0xff]
    %v7584 = vld [vmem:[%s7572 + $0x58] sm:$0xff]
    %v7585 = vld [vmem:[%s7572 + $0x60] sm:$0xff]
    %v7586 = vld [vmem:[%s7572 + $0x68] sm:$0xff]
    %v7587 = vld [vmem:[%s7572 + $0x70] sm:$0xff]
    %v7588 = vld [vmem:[%s7572 + $0x78] sm:$0xff]
    %v7589 = vld [vmem:[%s7572 + $0x80] sm:$0xff]
    %v7590 = vld [vmem:[%s7572 + $0x88] sm:$0xff]
    %v7591 = vld [vmem:[%s7572 + $0x90] sm:$0xff]
    %v7592 = vld [vmem:[%s7572 + $0x98] sm:$0xff]
    %v7593 = vld [vmem:[%s7572 + $0xa0] sm:$0xff]
    %v7594 = vld [vmem:[%s7572 + $0xa8] sm:$0xff]
    %v7595 = vld [vmem:[%s7572 + $0xb0] sm:$0xff]
    %v7596 = vld [vmem:[%s7572 + $0xb8] sm:$0xff]
    %v7597 = vld [vmem:[%s7572 + $0xc0] sm:$0xff]
    %v7598 = vld [vmem:[%s7572 + $0xc8] sm:$0xff]
    %v7599 = vld [vmem:[%s7572 + $0xd0] sm:$0xff]
    %v7600 = vld [vmem:[%s7572 + $0xd8] sm:$0xff]
    %v7601 = vld [vmem:[%s7572 + $0xe0] sm:$0xff]
    %v7602 = vld [vmem:[%s7572 + $0xe8] sm:$0xff]
    %v7603 = vld [vmem:[%s7572 + $0xf0] sm:$0xff]
    %v7604 = vld [vmem:[%s7572 + $0xf8] sm:$0xff]
    %s7605 = scalar_lea.vmem [#allocation13], 16
    %v7606 = vld [vmem:[%s7605] sm:$0xff]
    %v7607 = vld [vmem:[%s7605 + $0x8] sm:$0xff]
    %v7610 = vlaneseq
    %v7611 = vshrl.u32 %v7610, 7
    %v7612 = vsub.s32 0, %v7611
    %v7613 = vrot.slane %v7606, %v7612
    %v7614 = vlaneseq
    %v7615 = vshrl.u32 %v7614, 7
    %v7616 = vsub.s32 1, %v7615
    %v7617 = vrot.slane %v7606, %v7616
    %v7618 = vlaneseq
    %v7619 = vshrl.u32 %v7618, 7
    %v7620 = vsub.s32 2, %v7619
    %v7621 = vrot.slane %v7606, %v7620
    %v7622 = vlaneseq
    %v7623 = vshrl.u32 %v7622, 7
    %v7624 = vsub.s32 3, %v7623
    %v7625 = vrot.slane %v7606, %v7624
    %v7626 = vlaneseq
    %v7627 = vshrl.u32 %v7626, 7
    %v7628 = vsub.s32 4, %v7627
    %v7629 = vrot.slane %v7606, %v7628
    %v7630 = vlaneseq
    %v7631 = vshrl.u32 %v7630, 7
    %v7632 = vsub.s32 5, %v7631
    %v7633 = vrot.slane %v7606, %v7632
    %v7634 = vlaneseq
    %v7635 = vshrl.u32 %v7634, 7
    %v7636 = vsub.s32 6, %v7635
    %v7637 = vrot.slane %v7606, %v7636
    %v7638 = vlaneseq
    %v7639 = vshrl.u32 %v7638, 7
    %v7640 = vsub.s32 7, %v7639
    %v7641 = vrot.slane %v7606, %v7640
    %v7642 = vlaneseq
    %v7643 = vshrl.u32 %v7642, 7
    %v7644 = vsub.s32 0, %v7643
    %v7645 = vrot.slane %v7607, %v7644
    %v7646 = vlaneseq
    %v7647 = vshrl.u32 %v7646, 7
    %v7648 = vsub.s32 1, %v7647
    %v7649 = vrot.slane %v7607, %v7648
    %v7650 = vlaneseq
    %v7651 = vshrl.u32 %v7650, 7
    %v7652 = vsub.s32 2, %v7651
    %v7653 = vrot.slane %v7607, %v7652
    %v7654 = vlaneseq
    %v7655 = vshrl.u32 %v7654, 7
    %v7656 = vsub.s32 3, %v7655
    %v7657 = vrot.slane %v7607, %v7656
    %v7658 = vlaneseq
    %v7659 = vshrl.u32 %v7658, 7
    %v7660 = vsub.s32 4, %v7659
    %v7661 = vrot.slane %v7607, %v7660
    %v7662 = vlaneseq
    %v7663 = vshrl.u32 %v7662, 7
    %v7664 = vsub.s32 5, %v7663
    %v7665 = vrot.slane %v7607, %v7664
    %v7666 = vlaneseq
    %v7667 = vshrl.u32 %v7666, 7
    %v7668 = vsub.s32 6, %v7667
    %v7669 = vrot.slane %v7607, %v7668
    %v7670 = vlaneseq
    %v7671 = vshrl.u32 %v7670, 7
    %v7672 = vsub.s32 7, %v7671
    %v7673 = vrot.slane %v7607, %v7672
    %v7722 = vunpack.c.l.b16 %v7573
    %v7723 = vunpack.c.h.b16 %v7573
    %v7724 = vunpack.c.l.b16 %v7574
    %v7725 = vunpack.c.h.b16 %v7574
    %v7726 = vunpack.c.l.b16 %v7575
    %v7727 = vunpack.c.h.b16 %v7575
    %v7728 = vunpack.c.l.b16 %v7576
    %v7729 = vunpack.c.h.b16 %v7576
    %v7730 = vunpack.c.l.b16 %v7577
    %v7731 = vunpack.c.h.b16 %v7577
    %v7732 = vunpack.c.l.b16 %v7578
    %v7733 = vunpack.c.h.b16 %v7578
    %v7734 = vunpack.c.l.b16 %v7579
    %v7735 = vunpack.c.h.b16 %v7579
    %v7736 = vunpack.c.l.b16 %v7580
    %v7737 = vunpack.c.h.b16 %v7580
    %v7738 = vunpack.c.l.b16 %v7581
    %v7739 = vunpack.c.h.b16 %v7581
    %v7740 = vunpack.c.l.b16 %v7582
    %v7741 = vunpack.c.h.b16 %v7582
    %v7742 = vunpack.c.l.b16 %v7583
    %v7743 = vunpack.c.h.b16 %v7583
    %v7744 = vunpack.c.l.b16 %v7584
    %v7745 = vunpack.c.h.b16 %v7584
    %v7746 = vunpack.c.l.b16 %v7585
    %v7747 = vunpack.c.h.b16 %v7585
    %v7748 = vunpack.c.l.b16 %v7586
    %v7749 = vunpack.c.h.b16 %v7586
    %v7750 = vunpack.c.l.b16 %v7587
    %v7751 = vunpack.c.h.b16 %v7587
    %v7752 = vunpack.c.l.b16 %v7588
    %v7753 = vunpack.c.h.b16 %v7588
    %v7754 = vunpack.c.l.b16 %v7589
    %v7755 = vunpack.c.h.b16 %v7589
    %v7756 = vunpack.c.l.b16 %v7590
    %v7757 = vunpack.c.h.b16 %v7590
    %v7758 = vunpack.c.l.b16 %v7591
    %v7759 = vunpack.c.h.b16 %v7591
    %v7760 = vunpack.c.l.b16 %v7592
    %v7761 = vunpack.c.h.b16 %v7592
    %v7762 = vunpack.c.l.b16 %v7593
    %v7763 = vunpack.c.h.b16 %v7593
    %v7764 = vunpack.c.l.b16 %v7594
    %v7765 = vunpack.c.h.b16 %v7594
    %v7766 = vunpack.c.l.b16 %v7595
    %v7767 = vunpack.c.h.b16 %v7595
    %v7768 = vunpack.c.l.b16 %v7596
    %v7769 = vunpack.c.h.b16 %v7596
    %v7770 = vunpack.c.l.b16 %v7597
    %v7771 = vunpack.c.h.b16 %v7597
    %v7772 = vunpack.c.l.b16 %v7598
    %v7773 = vunpack.c.h.b16 %v7598
    %v7774 = vunpack.c.l.b16 %v7599
    %v7775 = vunpack.c.h.b16 %v7599
    %v7776 = vunpack.c.l.b16 %v7600
    %v7777 = vunpack.c.h.b16 %v7600
    %v7778 = vunpack.c.l.b16 %v7601
    %v7779 = vunpack.c.h.b16 %v7601
    %v7780 = vunpack.c.l.b16 %v7602
    %v7781 = vunpack.c.h.b16 %v7602
    %v7782 = vunpack.c.l.b16 %v7603
    %v7783 = vunpack.c.h.b16 %v7603
    %v7784 = vunpack.c.l.b16 %v7604
    %v7785 = vunpack.c.h.b16 %v7604
    %v7786 = vpack.c.b16 %v7738, %v7722
    %v7787 = vpack.c.b16 %v7739, %v7723
    %v7788 = vpack.c.b16 %v7740, %v7724
    %v7789 = vpack.c.b16 %v7741, %v7725
    %v7790 = vpack.c.b16 %v7742, %v7726
    %v7791 = vpack.c.b16 %v7743, %v7727
    %v7792 = vpack.c.b16 %v7744, %v7728
    %v7793 = vpack.c.b16 %v7745, %v7729
    %v7794 = vpack.c.b16 %v7746, %v7730
    %v7795 = vpack.c.b16 %v7747, %v7731
    %v7796 = vpack.c.b16 %v7748, %v7732
    %v7797 = vpack.c.b16 %v7749, %v7733
    %v7798 = vpack.c.b16 %v7750, %v7734
    %v7799 = vpack.c.b16 %v7751, %v7735
    %v7800 = vpack.c.b16 %v7752, %v7736
    %v7801 = vpack.c.b16 %v7753, %v7737
    %v7802 = vpack.c.b16 %v7770, %v7754
    %v7803 = vpack.c.b16 %v7771, %v7755
    %v7804 = vpack.c.b16 %v7772, %v7756
    %v7805 = vpack.c.b16 %v7773, %v7757
    %v7806 = vpack.c.b16 %v7774, %v7758
    %v7807 = vpack.c.b16 %v7775, %v7759
    %v7808 = vpack.c.b16 %v7776, %v7760
    %v7809 = vpack.c.b16 %v7777, %v7761
    %v7810 = vpack.c.b16 %v7778, %v7762
    %v7811 = vpack.c.b16 %v7779, %v7763
    %v7812 = vpack.c.b16 %v7780, %v7764
    %v7813 = vpack.c.b16 %v7781, %v7765
    %v7814 = vpack.c.b16 %v7782, %v7766
    %v7815 = vpack.c.b16 %v7783, %v7767
    %v7816 = vpack.c.b16 %v7784, %v7768
    %v7817 = vpack.c.b16 %v7785, %v7769
    %v7851 = vsel %vm181, %v7571, 0
    %7853 = vmatprep.subr.bf16.mxu0 %v7787
    %7854 = vmatpush1.bf16.msra.mxu0 %v7786
    %7855 = vmatprep.subr.bf16.mxu0 %v7803
    %7856 = vmatpush1.bf16.msra.mxu0 %v7802
    %7857 = vmatprep.subr.bf16.mxu0 0
    %7858 = vmatpush1.bf16.msra.mxu0 0
    %7859 = vmatprep.subr.bf16.mxu0 0
    %7860 = vmatpush1.bf16.msra.mxu0 0
    %7861 = vmatprep.subr.bf16.mxu0 0
    %7862 = vmatpush1.bf16.msra.mxu0 0
    %7863 = vmatprep.subr.bf16.mxu0 0
    %7864 = vmatpush1.bf16.msra.mxu0 0
    %7865 = vmatprep.subr.bf16.mxu0 0
    %7866 = vmatpush1.bf16.msra.mxu0 0
    %7867 = vmatprep.subr.bf16.mxu0 0
    %7868 = vmatpush1.bf16.msra.mxu0 0
    %7869 = vmatprep.subr.bf16.mxu0 0
    %7870 = vmatpush1.bf16.msra.mxu0 0
    %7871 = vmatprep.subr.bf16.mxu0 0
    %7872 = vmatpush1.bf16.msra.mxu0 0
    %7873 = vmatprep.subr.bf16.mxu0 0
    %7874 = vmatpush1.bf16.msra.mxu0 0
    %7875 = vmatprep.subr.bf16.mxu0 0
    %7876 = vmatpush1.bf16.msra.mxu0 0
    %7877 = vmatprep.subr.bf16.mxu0 0
    %7878 = vmatpush1.bf16.msra.mxu0 0
    %7879 = vmatprep.subr.bf16.mxu0 0
    %7880 = vmatpush1.bf16.msra.mxu0 0
    %7881 = vmatprep.subr.bf16.mxu0 0
    %7882 = vmatpush1.bf16.msra.mxu0 0
    %7883 = vmatprep.subr.bf16.mxu0 0
    %7884 = vmatpush1.bf16.msra.mxu0 0
    %7885 = vmatprep.mubr.bf16.mxu0 0
    %7886 = vmatmul.mubr.bf16.gmra.mrb[0].mxu0 %v7851
    %v7887 = vpop.f32.mrb[0].mxu0
    %v7888 = vadd.f32 %v7613, %v7887
    %v7889 = vpop.f32.mrb[0].mxu0
    %v7890 = vadd.f32 %v7617, %v7889
    %v7891 = vpop.f32.mrb[0].mxu0
    %v7892 = vpop.f32.mrb[0].mxu0
    %7893 = vdwg.mxu0
    %7894 = vmatprep.subr.bf16.mxu0 %v7789
    %7895 = vmatpush1.bf16.msra.mxu0 %v7788
    %7896 = vmatprep.subr.bf16.mxu0 %v7805
    %7897 = vmatpush1.bf16.msra.mxu0 %v7804
    %7898 = vmatprep.subr.bf16.mxu0 0
    %7899 = vmatpush1.bf16.msra.mxu0 0
    %7900 = vmatprep.subr.bf16.mxu0 0
    %7901 = vmatpush1.bf16.msra.mxu0 0
    %7902 = vmatprep.subr.bf16.mxu0 0
    %7903 = vmatpush1.bf16.msra.mxu0 0
    %7904 = vmatprep.subr.bf16.mxu0 0
    %7905 = vmatpush1.bf16.msra.mxu0 0
    %7906 = vmatprep.subr.bf16.mxu0 0
    %7907 = vmatpush1.bf16.msra.mxu0 0
    %7908 = vmatprep.subr.bf16.mxu0 0
    %7909 = vmatpush1.bf16.msra.mxu0 0
    %7910 = vmatprep.subr.bf16.mxu0 0
    %7911 = vmatpush1.bf16.msra.mxu0 0
    %7912 = vmatprep.subr.bf16.mxu0 0
    %7913 = vmatpush1.bf16.msra.mxu0 0
    %7914 = vmatprep.subr.bf16.mxu0 0
    %7915 = vmatpush1.bf16.msra.mxu0 0
    %7916 = vmatprep.subr.bf16.mxu0 0
    %7917 = vmatpush1.bf16.msra.mxu0 0
    %7918 = vmatprep.subr.bf16.mxu0 0
    %7919 = vmatpush1.bf16.msra.mxu0 0
    %7920 = vmatprep.subr.bf16.mxu0 0
    %7921 = vmatpush1.bf16.msra.mxu0 0
    %7922 = vmatprep.subr.bf16.mxu0 0
    %7923 = vmatpush1.bf16.msra.mxu0 0
    %7924 = vmatprep.subr.bf16.mxu0 0
    %7925 = vmatpush1.bf16.msra.mxu0 0
    %7926 = vmatprep.mubr.bf16.mxu0 0
    %7927 = vmatmul.mubr.bf16.gmra.mrb[0].mxu0 %v7851
    %v7928 = vpop.f32.mrb[0].mxu0
    %v7929 = vadd.f32 %v7621, %v7928
    %v7930 = vpop.f32.mrb[0].mxu0
    %v7931 = vadd.f32 %v7625, %v7930
    %v7932 = vpop.f32.mrb[0].mxu0
    %v7933 = vpop.f32.mrb[0].mxu0
    %7934 = vdwg.mxu0
    %7935 = vmatprep.subr.bf16.mxu0 %v7791
    %7936 = vmatpush1.bf16.msra.mxu0 %v7790
    %7937 = vmatprep.subr.bf16.mxu0 %v7807
    %7938 = vmatpush1.bf16.msra.mxu0 %v7806
    %7939 = vmatprep.subr.bf16.mxu0 0
    %7940 = vmatpush1.bf16.msra.mxu0 0
    %7941 = vmatprep.subr.bf16.mxu0 0
    %7942 = vmatpush1.bf16.msra.mxu0 0
    %7943 = vmatprep.subr.bf16.mxu0 0
    %7944 = vmatpush1.bf16.msra.mxu0 0
    %7945 = vmatprep.subr.bf16.mxu0 0
    %7946 = vmatpush1.bf16.msra.mxu0 0
    %7947 = vmatprep.subr.bf16.mxu0 0
    %7948 = vmatpush1.bf16.msra.mxu0 0
    %7949 = vmatprep.subr.bf16.mxu0 0
    %7950 = vmatpush1.bf16.msra.mxu0 0
    %7951 = vmatprep.subr.bf16.mxu0 0
    %7952 = vmatpush1.bf16.msra.mxu0 0
    %7953 = vmatprep.subr.bf16.mxu0 0
    %7954 = vmatpush1.bf16.msra.mxu0 0
    %7955 = vmatprep.subr.bf16.mxu0 0
    %7956 = vmatpush1.bf16.msra.mxu0 0
    %7957 = vmatprep.subr.bf16.mxu0 0
    %7958 = vmatpush1.bf16.msra.mxu0 0
    %7959 = vmatprep.subr.bf16.mxu0 0
    %7960 = vmatpush1.bf16.msra.mxu0 0
    %7961 = vmatprep.subr.bf16.mxu0 0
    %7962 = vmatpush1.bf16.msra.mxu0 0
    %7963 = vmatprep.subr.bf16.mxu0 0
    %7964 = vmatpush1.bf16.msra.mxu0 0
    %7965 = vmatprep.subr.bf16.mxu0 0
    %7966 = vmatpush1.bf16.msra.mxu0 0
    %7967 = vmatprep.mubr.bf16.mxu0 0
    %7968 = vmatmul.mubr.bf16.gmra.mrb[0].mxu0 %v7851
    %v7969 = vpop.f32.mrb[0].mxu0
    %v7970 = vadd.f32 %v7629, %v7969
    %v7971 = vpop.f32.mrb[0].mxu0
    %v7972 = vadd.f32 %v7633, %v7971
    %v7973 = vpop.f32.mrb[0].mxu0
    %v7974 = vpop.f32.mrb[0].mxu0
    %7975 = vdwg.mxu0
    %7976 = vmatprep.subr.bf16.mxu0 %v7793
    %7977 = vmatpush1.bf16.msra.mxu0 %v7792
    %7978 = vmatprep.subr.bf16.mxu0 %v7809
    %7979 = vmatpush1.bf16.msra.mxu0 %v7808
    %7980 = vmatprep.subr.bf16.mxu0 0
    %7981 = vmatpush1.bf16.msra.mxu0 0
    %7982 = vmatprep.subr.bf16.mxu0 0
    %7983 = vmatpush1.bf16.msra.mxu0 0
    %7984 = vmatprep.subr.bf16.mxu0 0
    %7985 = vmatpush1.bf16.msra.mxu0 0
    %7986 = vmatprep.subr.bf16.mxu0 0
    %7987 = vmatpush1.bf16.msra.mxu0 0
    %7988 = vmatprep.subr.bf16.mxu0 0
    %7989 = vmatpush1.bf16.msra.mxu0 0
    %7990 = vmatprep.subr.bf16.mxu0 0
    %7991 = vmatpush1.bf16.msra.mxu0 0
    %7992 = vmatprep.subr.bf16.mxu0 0
    %7993 = vmatpush1.bf16.msra.mxu0 0
    %7994 = vmatprep.subr.bf16.mxu0 0
    %7995 = vmatpush1.bf16.msra.mxu0 0
    %7996 = vmatprep.subr.bf16.mxu0 0
    %7997 = vmatpush1.bf16.msra.mxu0 0
    %7998 = vmatprep.subr.bf16.mxu0 0
    %7999 = vmatpush1.bf16.msra.mxu0 0
    %8000 = vmatprep.subr.bf16.mxu0 0
    %8001 = vmatpush1.bf16.msra.mxu0 0
    %8002 = vmatprep.subr.bf16.mxu0 0
    %8003 = vmatpush1.bf16.msra.mxu0 0
    %8004 = vmatprep.subr.bf16.mxu0 0
    %8005 = vmatpush1.bf16.msra.mxu0 0
    %8006 = vmatprep.subr.bf16.mxu0 0
    %8007 = vmatpush1.bf16.msra.mxu0 0
    %8008 = vmatprep.mubr.bf16.mxu0 0
    %8009 = vmatmul.mubr.bf16.gmra.mrb[0].mxu0 %v7851
    %v8010 = vpop.f32.mrb[0].mxu0
    %v8011 = vadd.f32 %v7637, %v8010
    %v8012 = vpop.f32.mrb[0].mxu0
    %v8013 = vadd.f32 %v7641, %v8012
    %v8014 = vpop.f32.mrb[0].mxu0
    %v8015 = vpop.f32.mrb[0].mxu0
    %8016 = vdwg.mxu0
    %8017 = vmatprep.subr.bf16.mxu0 %v7795
    %8018 = vmatpush1.bf16.msra.mxu0 %v7794
    %8019 = vmatprep.subr.bf16.mxu0 %v7811
    %8020 = vmatpush1.bf16.msra.mxu0 %v7810
    %8021 = vmatprep.subr.bf16.mxu0 0
    %8022 = vmatpush1.bf16.msra.mxu0 0
    %8023 = vmatprep.subr.bf16.mxu0 0
    %8024 = vmatpush1.bf16.msra.mxu0 0
    %8025 = vmatprep.subr.bf16.mxu0 0
    %8026 = vmatpush1.bf16.msra.mxu0 0
    %8027 = vmatprep.subr.bf16.mxu0 0
    %8028 = vmatpush1.bf16.msra.mxu0 0
    %8029 = vmatprep.subr.bf16.mxu0 0
    %8030 = vmatpush1.bf16.msra.mxu0 0
    %8031 = vmatprep.subr.bf16.mxu0 0
    %8032 = vmatpush1.bf16.msra.mxu0 0
    %8033 = vmatprep.subr.bf16.mxu0 0
    %8034 = vmatpush1.bf16.msra.mxu0 0
    %8035 = vmatprep.subr.bf16.mxu0 0
    %8036 = vmatpush1.bf16.msra.mxu0 0
    %8037 = vmatprep.subr.bf16.mxu0 0
    %8038 = vmatpush1.bf16.msra.mxu0 0
    %8039 = vmatprep.subr.bf16.mxu0 0
    %8040 = vmatpush1.bf16.msra.mxu0 0
    %8041 = vmatprep.subr.bf16.mxu0 0
    %8042 = vmatpush1.bf16.msra.mxu0 0
    %8043 = vmatprep.subr.bf16.mxu0 0
    %8044 = vmatpush1.bf16.msra.mxu0 0
    %8045 = vmatprep.subr.bf16.mxu0 0
    %8046 = vmatpush1.bf16.msra.mxu0 0
    %8047 = vmatprep.subr.bf16.mxu0 0
    %8048 = vmatpush1.bf16.msra.mxu0 0
    %8049 = vmatprep.mubr.bf16.mxu0 0
    %8050 = vmatmul.mubr.bf16.gmra.mrb[0].mxu0 %v7851
    %v8051 = vpop.f32.mrb[0].mxu0
    %v8052 = vadd.f32 %v7645, %v8051
    %v8053 = vpop.f32.mrb[0].mxu0
    %v8054 = vadd.f32 %v7649, %v8053
    %v8055 = vpop.f32.mrb[0].mxu0
    %v8056 = vpop.f32.mrb[0].mxu0
    %8057 = vdwg.mxu0
    %8058 = vmatprep.subr.bf16.mxu0 %v7797
    %8059 = vmatpush1.bf16.msra.mxu0 %v7796
    %8060 = vmatprep.subr.bf16.mxu0 %v7813
    %8061 = vmatpush1.bf16.msra.mxu0 %v7812
    %8062 = vmatprep.subr.bf16.mxu0 0
    %8063 = vmatpush1.bf16.msra.mxu0 0
    %8064 = vmatprep.subr.bf16.mxu0 0
    %8065 = vmatpush1.bf16.msra.mxu0 0
    %8066 = vmatprep.subr.bf16.mxu0 0
    %8067 = vmatpush1.bf16.msra.mxu0 0
    %8068 = vmatprep.subr.bf16.mxu0 0
    %8069 = vmatpush1.bf16.msra.mxu0 0
    %8070 = vmatprep.subr.bf16.mxu0 0
    %8071 = vmatpush1.bf16.msra.mxu0 0
    %8072 = vmatprep.subr.bf16.mxu0 0
    %8073 = vmatpush1.bf16.msra.mxu0 0
    %8074 = vmatprep.subr.bf16.mxu0 0
    %8075 = vmatpush1.bf16.msra.mxu0 0
    %8076 = vmatprep.subr.bf16.mxu0 0
    %8077 = vmatpush1.bf16.msra.mxu0 0
    %8078 = vmatprep.subr.bf16.mxu0 0
    %8079 = vmatpush1.bf16.msra.mxu0 0
    %8080 = vmatprep.subr.bf16.mxu0 0
    %8081 = vmatpush1.bf16.msra.mxu0 0
    %8082 = vmatprep.subr.bf16.mxu0 0
    %8083 = vmatpush1.bf16.msra.mxu0 0
    %8084 = vmatprep.subr.bf16.mxu0 0
    %8085 = vmatpush1.bf16.msra.mxu0 0
    %8086 = vmatprep.subr.bf16.mxu0 0
    %8087 = vmatpush1.bf16.msra.mxu0 0
    %8088 = vmatprep.subr.bf16.mxu0 0
    %8089 = vmatpush1.bf16.msra.mxu0 0
    %8090 = vmatprep.mubr.bf16.mxu0 0
    %8091 = vmatmul.mubr.bf16.gmra.mrb[0].mxu0 %v7851
    %v8092 = vpop.f32.mrb[0].mxu0
    %v8093 = vadd.f32 %v7653, %v8092
    %v8094 = vpop.f32.mrb[0].mxu0
    %v8095 = vadd.f32 %v7657, %v8094
    %v8096 = vpop.f32.mrb[0].mxu0
    %v8097 = vpop.f32.mrb[0].mxu0
    %8098 = vdwg.mxu0
    %8099 = vmatprep.subr.bf16.mxu0 %v7799
    %8100 = vmatpush1.bf16.msra.mxu0 %v7798
    %8101 = vmatprep.subr.bf16.mxu0 %v7815
    %8102 = vmatpush1.bf16.msra.mxu0 %v7814
    %8103 = vmatprep.subr.bf16.mxu0 0
    %8104 = vmatpush1.bf16.msra.mxu0 0
    %8105 = vmatprep.subr.bf16.mxu0 0
    %8106 = vmatpush1.bf16.msra.mxu0 0
    %8107 = vmatprep.subr.bf16.mxu0 0
    %8108 = vmatpush1.bf16.msra.mxu0 0
    %8109 = vmatprep.subr.bf16.mxu0 0
    %8110 = vmatpush1.bf16.msra.mxu0 0
    %8111 = vmatprep.subr.bf16.mxu0 0
    %8112 = vmatpush1.bf16.msra.mxu0 0
    %8113 = vmatprep.subr.bf16.mxu0 0
    %8114 = vmatpush1.bf16.msra.mxu0 0
    %8115 = vmatprep.subr.bf16.mxu0 0
    %8116 = vmatpush1.bf16.msra.mxu0 0
    %8117 = vmatprep.subr.bf16.mxu0 0
    %8118 = vmatpush1.bf16.msra.mxu0 0
    %8119 = vmatprep.subr.bf16.mxu0 0
    %8120 = vmatpush1.bf16.msra.mxu0 0
    %8121 = vmatprep.subr.bf16.mxu0 0
    %8122 = vmatpush1.bf16.msra.mxu0 0
    %8123 = vmatprep.subr.bf16.mxu0 0
    %8124 = vmatpush1.bf16.msra.mxu0 0
    %8125 = vmatprep.subr.bf16.mxu0 0
    %8126 = vmatpush1.bf16.msra.mxu0 0
    %8127 = vmatprep.subr.bf16.mxu0 0
    %8128 = vmatpush1.bf16.msra.mxu0 0
    %8129 = vmatprep.subr.bf16.mxu0 0
    %8130 = vmatpush1.bf16.msra.mxu0 0
    %8131 = vmatprep.mubr.bf16.mxu0 0
    %8132 = vmatmul.mubr.bf16.gmra.mrb[0].mxu0 %v7851
    %v8133 = vpop.f32.mrb[0].mxu0
    %v8134 = vadd.f32 %v7661, %v8133
    %v8135 = vpop.f32.mrb[0].mxu0
    %v8136 = vadd.f32 %v7665, %v8135
    %v8137 = vpop.f32.mrb[0].mxu0
    %v8138 = vpop.f32.mrb[0].mxu0
    %8139 = vdwg.mxu0
    %8140 = vmatprep.subr.bf16.mxu0 %v7801
    %8141 = vmatpush1.bf16.msra.mxu0 %v7800
    %8142 = vmatprep.subr.bf16.mxu0 %v7817
    %8143 = vmatpush1.bf16.msra.mxu0 %v7816
    %8144 = vmatprep.subr.bf16.mxu0 0
    %8145 = vmatpush1.bf16.msra.mxu0 0
    %8146 = vmatprep.subr.bf16.mxu0 0
    %8147 = vmatpush1.bf16.msra.mxu0 0
    %8148 = vmatprep.subr.bf16.mxu0 0
    %8149 = vmatpush1.bf16.msra.mxu0 0
    %8150 = vmatprep.subr.bf16.mxu0 0
    %8151 = vmatpush1.bf16.msra.mxu0 0
    %8152 = vmatprep.subr.bf16.mxu0 0
    %8153 = vmatpush1.bf16.msra.mxu0 0
    %8154 = vmatprep.subr.bf16.mxu0 0
    %8155 = vmatpush1.bf16.msra.mxu0 0
    %8156 = vmatprep.subr.bf16.mxu0 0
    %8157 = vmatpush1.bf16.msra.mxu0 0
    %8158 = vmatprep.subr.bf16.mxu0 0
    %8159 = vmatpush1.bf16.msra.mxu0 0
    %8160 = vmatprep.subr.bf16.mxu0 0
    %8161 = vmatpush1.bf16.msra.mxu0 0
    %8162 = vmatprep.subr.bf16.mxu0 0
    %8163 = vmatpush1.bf16.msra.mxu0 0
    %8164 = vmatprep.subr.bf16.mxu0 0
    %8165 = vmatpush1.bf16.msra.mxu0 0
    %8166 = vmatprep.subr.bf16.mxu0 0
    %8167 = vmatpush1.bf16.msra.mxu0 0
    %8168 = vmatprep.subr.bf16.mxu0 0
    %8169 = vmatpush1.bf16.msra.mxu0 0
    %8170 = vmatprep.subr.bf16.mxu0 0
    %8171 = vmatpush1.bf16.msra.mxu0 0
    %8172 = vmatprep.mubr.bf16.mxu0 0
    %8173 = vmatmul.mubr.bf16.gmra.mrb[0].mxu0 %v7851
    %v8174 = vpop.f32.mrb[0].mxu0
    %v8175 = vadd.f32 %v7669, %v8174
    %v8176 = vpop.f32.mrb[0].mxu0
    %v8177 = vadd.f32 %v7673, %v8176
    %v8178 = vpop.f32.mrb[0].mxu0
    %v8179 = vpop.f32.mrb[0].mxu0
    %8180 = vdwg.mxu0
    %v8181 = vmax.f32 %v7888, 0.0
    %v8182 = vmax.f32 %v7890, 0.0
    %v8183 = vmax.f32 %v7929, 0.0
    %v8184 = vmax.f32 %v7931, 0.0
    %v8185 = vmax.f32 %v7970, 0.0
    %v8186 = vmax.f32 %v7972, 0.0
    %v8187 = vmax.f32 %v8011, 0.0
    %v8188 = vmax.f32 %v8013, 0.0
    %v8189 = vmax.f32 %v8052, 0.0
    %v8190 = vmax.f32 %v8054, 0.0
    %v8191 = vmax.f32 %v8093, 0.0
    %v8192 = vmax.f32 %v8095, 0.0
    %v8193 = vmax.f32 %v8134, 0.0
    %v8194 = vmax.f32 %v8136, 0.0
    %v8195 = vmax.f32 %v8175, 0.0
    %v8196 = vmax.f32 %v8177, 0.0
    %v8197 = vpack.c.bf16 %v8181, %v8181
    %v8198 = vpack.c.bf16 %v8182, %v8182
    %v8199 = vpack.c.bf16 %v8183, %v8183
    %v8200 = vpack.c.bf16 %v8184, %v8184
    %v8201 = vpack.c.bf16 %v8185, %v8185
    %v8202 = vpack.c.bf16 %v8186, %v8186
    %v8203 = vpack.c.bf16 %v8187, %v8187
    %v8204 = vpack.c.bf16 %v8188, %v8188
    %v8205 = vpack.c.bf16 %v8189, %v8189
    %v8206 = vpack.c.bf16 %v8190, %v8190
    %v8207 = vpack.c.bf16 %v8191, %v8191
    %v8208 = vpack.c.bf16 %v8192, %v8192
    %v8209 = vpack.c.bf16 %v8193, %v8193
    %v8210 = vpack.c.bf16 %v8194, %v8194
    %v8211 = vpack.c.bf16 %v8195, %v8195
    %v8212 = vpack.c.bf16 %v8196, %v8196
    %s8213 = scalar_lea.vmem [#allocation11], 256
    %v8214 = vld [vmem:[%s8213] sm:$0xff]
    %v8215 = vld [vmem:[%s8213 + $0x8] sm:$0xff]
    %v8216 = vld [vmem:[%s8213 + $0x10] sm:$0xff]
    %v8217 = vld [vmem:[%s8213 + $0x18] sm:$0xff]
    %v8218 = vld [vmem:[%s8213 + $0x20] sm:$0xff]
    %v8219 = vld [vmem:[%s8213 + $0x28] sm:$0xff]
    %v8220 = vld [vmem:[%s8213 + $0x30] sm:$0xff]
    %v8221 = vld [vmem:[%s8213 + $0x38] sm:$0xff]
    %v8222 = vld [vmem:[%s8213 + $0x40] sm:$0xff]
    %v8223 = vld [vmem:[%s8213 + $0x48] sm:$0xff]
    %v8224 = vld [vmem:[%s8213 + $0x50] sm:$0xff]
    %v8225 = vld [vmem:[%s8213 + $0x58] sm:$0xff]
    %v8226 = vld [vmem:[%s8213 + $0x60] sm:$0xff]
    %v8227 = vld [vmem:[%s8213 + $0x68] sm:$0xff]
    %v8228 = vld [vmem:[%s8213 + $0x70] sm:$0xff]
    %v8229 = vld [vmem:[%s8213 + $0x78] sm:$0xff]
    %v8230 = vld [vmem:[%s8213 + $0x80] sm:$0xff]
    %v8231 = vld [vmem:[%s8213 + $0x88] sm:$0xff]
    %v8232 = vld [vmem:[%s8213 + $0x90] sm:$0xff]
    %v8233 = vld [vmem:[%s8213 + $0x98] sm:$0xff]
    %v8234 = vld [vmem:[%s8213 + $0xa0] sm:$0xff]
    %v8235 = vld [vmem:[%s8213 + $0xa8] sm:$0xff]
    %v8236 = vld [vmem:[%s8213 + $0xb0] sm:$0xff]
    %v8237 = vld [vmem:[%s8213 + $0xb8] sm:$0xff]
    %v8238 = vld [vmem:[%s8213 + $0xc0] sm:$0xff]
    %v8239 = vld [vmem:[%s8213 + $0xc8] sm:$0xff]
    %v8240 = vld [vmem:[%s8213 + $0xd0] sm:$0xff]
    %v8241 = vld [vmem:[%s8213 + $0xd8] sm:$0xff]
    %v8242 = vld [vmem:[%s8213 + $0xe0] sm:$0xff]
    %v8243 = vld [vmem:[%s8213 + $0xe8] sm:$0xff]
    %v8244 = vld [vmem:[%s8213 + $0xf0] sm:$0xff]
    %v8245 = vld [vmem:[%s8213 + $0xf8] sm:$0xff]
    %v8246 = vld [vmem:[#allocation7 + $0x18] sm:$0x1]
    %v8247 = vlaneseq
    %v8248 = vshrl.u32 %v8247, 7
    %v8249 = vsub.s32 0, %v8248
    %v8250 = vrot.slane %v8246, %v8249
    %v8283 = vunpack.c.l.b16 %v8214
    %v8284 = vunpack.c.h.b16 %v8214
    %v8285 = vunpack.c.l.b16 %v8215
    %v8286 = vunpack.c.h.b16 %v8215
    %v8287 = vunpack.c.l.b16 %v8216
    %v8288 = vunpack.c.h.b16 %v8216
    %v8289 = vunpack.c.l.b16 %v8217
    %v8290 = vunpack.c.h.b16 %v8217
    %v8291 = vunpack.c.l.b16 %v8218
    %v8292 = vunpack.c.h.b16 %v8218
    %v8293 = vunpack.c.l.b16 %v8219
    %v8294 = vunpack.c.h.b16 %v8219
    %v8295 = vunpack.c.l.b16 %v8220
    %v8296 = vunpack.c.h.b16 %v8220
    %v8297 = vunpack.c.l.b16 %v8221
    %v8298 = vunpack.c.h.b16 %v8221
    %v8299 = vunpack.c.l.b16 %v8222
    %v8300 = vunpack.c.h.b16 %v8222
    %v8301 = vunpack.c.l.b16 %v8223
    %v8302 = vunpack.c.h.b16 %v8223
    %v8303 = vunpack.c.l.b16 %v8224
    %v8304 = vunpack.c.h.b16 %v8224
    %v8305 = vunpack.c.l.b16 %v8225
    %v8306 = vunpack.c.h.b16 %v8225
    %v8307 = vunpack.c.l.b16 %v8226
    %v8308 = vunpack.c.h.b16 %v8226
    %v8309 = vunpack.c.l.b16 %v8227
    %v8310 = vunpack.c.h.b16 %v8227
    %v8311 = vunpack.c.l.b16 %v8228
    %v8312 = vunpack.c.h.b16 %v8228
    %v8313 = vunpack.c.l.b16 %v8229
    %v8314 = vunpack.c.h.b16 %v8229
    %v8315 = vunpack.c.l.b16 %v8230
    %v8316 = vunpack.c.h.b16 %v8230
    %v8317 = vunpack.c.l.b16 %v8231
    %v8318 = vunpack.c.h.b16 %v8231
    %v8319 = vunpack.c.l.b16 %v8232
    %v8320 = vunpack.c.h.b16 %v8232
    %v8321 = vunpack.c.l.b16 %v8233
    %v8322 = vunpack.c.h.b16 %v8233
    %v8323 = vunpack.c.l.b16 %v8234
    %v8324 = vunpack.c.h.b16 %v8234
    %v8325 = vunpack.c.l.b16 %v8235
    %v8326 = vunpack.c.h.b16 %v8235
    %v8327 = vunpack.c.l.b16 %v8236
    %v8328 = vunpack.c.h.b16 %v8236
    %v8329 = vunpack.c.l.b16 %v8237
    %v8330 = vunpack.c.h.b16 %v8237
    %v8331 = vunpack.c.l.b16 %v8238
    %v8332 = vunpack.c.h.b16 %v8238
    %v8333 = vunpack.c.l.b16 %v8239
    %v8334 = vunpack.c.h.b16 %v8239
    %v8335 = vunpack.c.l.b16 %v8240
    %v8336 = vunpack.c.h.b16 %v8240
    %v8337 = vunpack.c.l.b16 %v8241
    %v8338 = vunpack.c.h.b16 %v8241
    %v8339 = vunpack.c.l.b16 %v8242
    %v8340 = vunpack.c.h.b16 %v8242
    %v8341 = vunpack.c.l.b16 %v8243
    %v8342 = vunpack.c.h.b16 %v8243
    %v8343 = vunpack.c.l.b16 %v8244
    %v8344 = vunpack.c.h.b16 %v8244
    %v8345 = vunpack.c.l.b16 %v8245
    %v8346 = vunpack.c.h.b16 %v8245
    %v8347 = vpack.c.b16 %v8299, %v8283
    %v8348 = vpack.c.b16 %v8300, %v8284
    %v8349 = vpack.c.b16 %v8301, %v8285
    %v8350 = vpack.c.b16 %v8302, %v8286
    %v8351 = vpack.c.b16 %v8303, %v8287
    %v8352 = vpack.c.b16 %v8304, %v8288
    %v8353 = vpack.c.b16 %v8305, %v8289
    %v8354 = vpack.c.b16 %v8306, %v8290
    %v8355 = vpack.c.b16 %v8307, %v8291
    %v8356 = vpack.c.b16 %v8308, %v8292
    %v8357 = vpack.c.b16 %v8309, %v8293
    %v8358 = vpack.c.b16 %v8310, %v8294
    %v8359 = vpack.c.b16 %v8311, %v8295
    %v8360 = vpack.c.b16 %v8312, %v8296
    %v8361 = vpack.c.b16 %v8313, %v8297
    %v8362 = vpack.c.b16 %v8314, %v8298
    %v8363 = vpack.c.b16 %v8331, %v8315
    %v8364 = vpack.c.b16 %v8332, %v8316
    %v8365 = vpack.c.b16 %v8333, %v8317
    %v8366 = vpack.c.b16 %v8334, %v8318
    %v8367 = vpack.c.b16 %v8335, %v8319
    %v8368 = vpack.c.b16 %v8336, %v8320
    %v8369 = vpack.c.b16 %v8337, %v8321
    %v8370 = vpack.c.b16 %v8338, %v8322
    %v8371 = vpack.c.b16 %v8339, %v8323
    %v8372 = vpack.c.b16 %v8340, %v8324
    %v8373 = vpack.c.b16 %v8341, %v8325
    %v8374 = vpack.c.b16 %v8342, %v8326
    %v8375 = vpack.c.b16 %v8343, %v8327
    %v8376 = vpack.c.b16 %v8344, %v8328
    %v8377 = vpack.c.b16 %v8345, %v8329
    %v8378 = vpack.c.b16 %v8346, %v8330
    %8411 = vmatprep.subr.bf16.mxu0 %v8348
    %8412 = vmatpush1.bf16.xpose.msra.mxu0 %v8347
    %8413 = vmatprep.subr.bf16.mxu0 %v8364
    %8414 = vmatpush1.bf16.xpose.msra.mxu0 %v8363
    %8415 = vmatprep.subr.bf16.mxu0 0
    %8416 = vmatpush1.bf16.xpose.msra.mxu0 0
    %8417 = vmatprep.subr.bf16.mxu0 0
    %8418 = vmatpush1.bf16.xpose.msra.mxu0 0
    %8419 = vmatprep.subr.bf16.mxu0 0
    %8420 = vmatpush1.bf16.xpose.msra.mxu0 0
    %8421 = vmatprep.subr.bf16.mxu0 0
    %8422 = vmatpush1.bf16.xpose.msra.mxu0 0
    %8423 = vmatprep.subr.bf16.mxu0 0
    %8424 = vmatpush1.bf16.xpose.msra.mxu0 0
    %8425 = vmatprep.subr.bf16.mxu0 0
    %8426 = vmatpush1.bf16.xpose.msra.mxu0 0
    %8427 = vmatprep.subr.bf16.mxu0 0
    %8428 = vmatpush1.bf16.xpose.msra.mxu0 0
    %8429 = vmatprep.subr.bf16.mxu0 0
    %8430 = vmatpush1.bf16.xpose.msra.mxu0 0
    %8431 = vmatprep.subr.bf16.mxu0 0
    %8432 = vmatpush1.bf16.xpose.msra.mxu0 0
    %8433 = vmatprep.subr.bf16.mxu0 0
    %8434 = vmatpush1.bf16.xpose.msra.mxu0 0
    %8435 = vmatprep.subr.bf16.mxu0 0
    %8436 = vmatpush1.bf16.xpose.msra.mxu0 0
    %8437 = vmatprep.subr.bf16.mxu0 0
    %8438 = vmatpush1.bf16.xpose.msra.mxu0 0
    %8439 = vmatprep.subr.bf16.mxu0 0
    %8440 = vmatpush1.bf16.xpose.msra.mxu0 0
    %8441 = vmatprep.subr.bf16.mxu0 0
    %8442 = vmatpush1.bf16.xpose.msra.mxu0 0
    %8443 = vmatprep.mubr.bf16.mxu0 %v8198
    %8444 = vmatmul.mubr.bf16.gmra.mrb[0].mxu0 %v8197
    %v8445 = vpop.f32.mrb[0].mxu0
    %v8446 = vadd.f32 %v8250, %v8445
    %v8447 = vpop.f32.mrb[0].mxu0
    %v8448 = vpop.f32.mrb[0].mxu0
    %v8449 = vpop.f32.mrb[0].mxu0
    %8450 = vdwg.mxu0
    %8451 = vmatprep.subr.bf16.mxu0 %v8350
    %8452 = vmatpush1.bf16.xpose.msra.mxu0 %v8349
    %8453 = vmatprep.subr.bf16.mxu0 %v8366
    %8454 = vmatpush1.bf16.xpose.msra.mxu0 %v8365
    %8455 = vmatprep.subr.bf16.mxu0 0
    %8456 = vmatpush1.bf16.xpose.msra.mxu0 0
    %8457 = vmatprep.subr.bf16.mxu0 0
    %8458 = vmatpush1.bf16.xpose.msra.mxu0 0
    %8459 = vmatprep.subr.bf16.mxu0 0
    %8460 = vmatpush1.bf16.xpose.msra.mxu0 0
    %8461 = vmatprep.subr.bf16.mxu0 0
    %8462 = vmatpush1.bf16.xpose.msra.mxu0 0
    %8463 = vmatprep.subr.bf16.mxu0 0
    %8464 = vmatpush1.bf16.xpose.msra.mxu0 0
    %8465 = vmatprep.subr.bf16.mxu0 0
    %8466 = vmatpush1.bf16.xpose.msra.mxu0 0
    %8467 = vmatprep.subr.bf16.mxu0 0
    %8468 = vmatpush1.bf16.xpose.msra.mxu0 0
    %8469 = vmatprep.subr.bf16.mxu0 0
    %8470 = vmatpush1.bf16.xpose.msra.mxu0 0
    %8471 = vmatprep.subr.bf16.mxu0 0
    %8472 = vmatpush1.bf16.xpose.msra.mxu0 0
    %8473 = vmatprep.subr.bf16.mxu0 0
    %8474 = vmatpush1.bf16.xpose.msra.mxu0 0
    %8475 = vmatprep.subr.bf16.mxu0 0
    %8476 = vmatpush1.bf16.xpose.msra.mxu0 0
    %8477 = vmatprep.subr.bf16.mxu0 0
    %8478 = vmatpush1.bf16.xpose.msra.mxu0 0
    %8479 = vmatprep.subr.bf16.mxu0 0
    %8480 = vmatpush1.bf16.xpose.msra.mxu0 0
    %8481 = vmatprep.subr.bf16.mxu0 0
    %8482 = vmatpush1.bf16.xpose.msra.mxu0 0
    %8483 = vmatprep.mubr.bf16.mxu0 %v8200
    %8484 = vmatmul.mubr.bf16.gmra.mrb[0].mxu0 %v8199
    %v8485 = vpop.f32.mrb[0].mxu0
    %v8486 = vadd.f32 %v8446, %v8485
    %v8487 = vpop.f32.mrb[0].mxu0
    %v8488 = vpop.f32.mrb[0].mxu0
    %v8489 = vpop.f32.mrb[0].mxu0
    %8490 = vdwg.mxu0
    %8491 = vmatprep.subr.bf16.mxu0 %v8352
    %8492 = vmatpush1.bf16.xpose.msra.mxu0 %v8351
    %8493 = vmatprep.subr.bf16.mxu0 %v8368
    %8494 = vmatpush1.bf16.xpose.msra.mxu0 %v8367
    %8495 = vmatprep.subr.bf16.mxu0 0
    %8496 = vmatpush1.bf16.xpose.msra.mxu0 0
    %8497 = vmatprep.subr.bf16.mxu0 0
    %8498 = vmatpush1.bf16.xpose.msra.mxu0 0
    %8499 = vmatprep.subr.bf16.mxu0 0
    %8500 = vmatpush1.bf16.xpose.msra.mxu0 0
    %8501 = vmatprep.subr.bf16.mxu0 0
    %8502 = vmatpush1.bf16.xpose.msra.mxu0 0
    %8503 = vmatprep.subr.bf16.mxu0 0
    %8504 = vmatpush1.bf16.xpose.msra.mxu0 0
    %8505 = vmatprep.subr.bf16.mxu0 0
    %8506 = vmatpush1.bf16.xpose.msra.mxu0 0
    %8507 = vmatprep.subr.bf16.mxu0 0
    %8508 = vmatpush1.bf16.xpose.msra.mxu0 0
    %8509 = vmatprep.subr.bf16.mxu0 0
    %8510 = vmatpush1.bf16.xpose.msra.mxu0 0
    %8511 = vmatprep.subr.bf16.mxu0 0
    %8512 = vmatpush1.bf16.xpose.msra.mxu0 0
    %8513 = vmatprep.subr.bf16.mxu0 0
    %8514 = vmatpush1.bf16.xpose.msra.mxu0 0
    %8515 = vmatprep.subr.bf16.mxu0 0
    %8516 = vmatpush1.bf16.xpose.msra.mxu0 0
    %8517 = vmatprep.subr.bf16.mxu0 0
    %8518 = vmatpush1.bf16.xpose.msra.mxu0 0
    %8519 = vmatprep.subr.bf16.mxu0 0
    %8520 = vmatpush1.bf16.xpose.msra.mxu0 0
    %8521 = vmatprep.subr.bf16.mxu0 0
    %8522 = vmatpush1.bf16.xpose.msra.mxu0 0
    %8523 = vmatprep.mubr.bf16.mxu0 %v8202
    %8524 = vmatmul.mubr.bf16.gmra.mrb[0].mxu0 %v8201
    %v8525 = vpop.f32.mrb[0].mxu0
    %v8526 = vadd.f32 %v8486, %v8525
    %v8527 = vpop.f32.mrb[0].mxu0
    %v8528 = vpop.f32.mrb[0].mxu0
    %v8529 = vpop.f32.mrb[0].mxu0
    %8530 = vdwg.mxu0
    %8531 = vmatprep.subr.bf16.mxu0 %v8354
    %8532 = vmatpush1.bf16.xpose.msra.mxu0 %v8353
    %8533 = vmatprep.subr.bf16.mxu0 %v8370
    %8534 = vmatpush1.bf16.xpose.msra.mxu0 %v8369
    %8535 = vmatprep.subr.bf16.mxu0 0
    %8536 = vmatpush1.bf16.xpose.msra.mxu0 0
    %8537 = vmatprep.subr.bf16.mxu0 0
    %8538 = vmatpush1.bf16.xpose.msra.mxu0 0
    %8539 = vmatprep.subr.bf16.mxu0 0
    %8540 = vmatpush1.bf16.xpose.msra.mxu0 0
    %8541 = vmatprep.subr.bf16.mxu0 0
    %8542 = vmatpush1.bf16.xpose.msra.mxu0 0
    %8543 = vmatprep.subr.bf16.mxu0 0
    %8544 = vmatpush1.bf16.xpose.msra.mxu0 0
    %8545 = vmatprep.subr.bf16.mxu0 0
    %8546 = vmatpush1.bf16.xpose.msra.mxu0 0
    %8547 = vmatprep.subr.bf16.mxu0 0
    %8548 = vmatpush1.bf16.xpose.msra.mxu0 0
    %8549 = vmatprep.subr.bf16.mxu0 0
    %8550 = vmatpush1.bf16.xpose.msra.mxu0 0
    %8551 = vmatprep.subr.bf16.mxu0 0
    %8552 = vmatpush1.bf16.xpose.msra.mxu0 0
    %8553 = vmatprep.subr.bf16.mxu0 0
    %8554 = vmatpush1.bf16.xpose.msra.mxu0 0
    %8555 = vmatprep.subr.bf16.mxu0 0
    %8556 = vmatpush1.bf16.xpose.msra.mxu0 0
    %8557 = vmatprep.subr.bf16.mxu0 0
    %8558 = vmatpush1.bf16.xpose.msra.mxu0 0
    %8559 = vmatprep.subr.bf16.mxu0 0
    %8560 = vmatpush1.bf16.xpose.msra.mxu0 0
    %8561 = vmatprep.subr.bf16.mxu0 0
    %8562 = vmatpush1.bf16.xpose.msra.mxu0 0
    %8563 = vmatprep.mubr.bf16.mxu0 %v8204
    %8564 = vmatmul.mubr.bf16.gmra.mrb[0].mxu0 %v8203
    %v8565 = vpop.f32.mrb[0].mxu0
    %v8566 = vadd.f32 %v8526, %v8565
    %v8567 = vpop.f32.mrb[0].mxu0
    %v8568 = vpop.f32.mrb[0].mxu0
    %v8569 = vpop.f32.mrb[0].mxu0
    %8570 = vdwg.mxu0
    %8571 = vmatprep.subr.bf16.mxu0 %v8356
    %8572 = vmatpush1.bf16.xpose.msra.mxu0 %v8355
    %8573 = vmatprep.subr.bf16.mxu0 %v8372
    %8574 = vmatpush1.bf16.xpose.msra.mxu0 %v8371
    %8575 = vmatprep.subr.bf16.mxu0 0
    %8576 = vmatpush1.bf16.xpose.msra.mxu0 0
    %8577 = vmatprep.subr.bf16.mxu0 0
    %8578 = vmatpush1.bf16.xpose.msra.mxu0 0
    %8579 = vmatprep.subr.bf16.mxu0 0
    %8580 = vmatpush1.bf16.xpose.msra.mxu0 0
    %8581 = vmatprep.subr.bf16.mxu0 0
    %8582 = vmatpush1.bf16.xpose.msra.mxu0 0
    %8583 = vmatprep.subr.bf16.mxu0 0
    %8584 = vmatpush1.bf16.xpose.msra.mxu0 0
    %8585 = vmatprep.subr.bf16.mxu0 0
    %8586 = vmatpush1.bf16.xpose.msra.mxu0 0
    %8587 = vmatprep.subr.bf16.mxu0 0
    %8588 = vmatpush1.bf16.xpose.msra.mxu0 0
    %8589 = vmatprep.subr.bf16.mxu0 0
    %8590 = vmatpush1.bf16.xpose.msra.mxu0 0
    %8591 = vmatprep.subr.bf16.mxu0 0
    %8592 = vmatpush1.bf16.xpose.msra.mxu0 0
    %8593 = vmatprep.subr.bf16.mxu0 0
    %8594 = vmatpush1.bf16.xpose.msra.mxu0 0
    %8595 = vmatprep.subr.bf16.mxu0 0
    %8596 = vmatpush1.bf16.xpose.msra.mxu0 0
    %8597 = vmatprep.subr.bf16.mxu0 0
    %8598 = vmatpush1.bf16.xpose.msra.mxu0 0
    %8599 = vmatprep.subr.bf16.mxu0 0
    %8600 = vmatpush1.bf16.xpose.msra.mxu0 0
    %8601 = vmatprep.subr.bf16.mxu0 0
    %8602 = vmatpush1.bf16.xpose.msra.mxu0 0
    %8603 = vmatprep.mubr.bf16.mxu0 %v8206
    %8604 = vmatmul.mubr.bf16.gmra.mrb[0].mxu0 %v8205
    %v8605 = vpop.f32.mrb[0].mxu0
    %v8606 = vadd.f32 %v8566, %v8605
    %v8607 = vpop.f32.mrb[0].mxu0
    %v8608 = vpop.f32.mrb[0].mxu0
    %v8609 = vpop.f32.mrb[0].mxu0
    %8610 = vdwg.mxu0
    %8611 = vmatprep.subr.bf16.mxu0 %v8358
    %8612 = vmatpush1.bf16.xpose.msra.mxu0 %v8357
    %8613 = vmatprep.subr.bf16.mxu0 %v8374
    %8614 = vmatpush1.bf16.xpose.msra.mxu0 %v8373
    %8615 = vmatprep.subr.bf16.mxu0 0
    %8616 = vmatpush1.bf16.xpose.msra.mxu0 0
    %8617 = vmatprep.subr.bf16.mxu0 0
    %8618 = vmatpush1.bf16.xpose.msra.mxu0 0
    %8619 = vmatprep.subr.bf16.mxu0 0
    %8620 = vmatpush1.bf16.xpose.msra.mxu0 0
    %8621 = vmatprep.subr.bf16.mxu0 0
    %8622 = vmatpush1.bf16.xpose.msra.mxu0 0
    %8623 = vmatprep.subr.bf16.mxu0 0
    %8624 = vmatpush1.bf16.xpose.msra.mxu0 0
    %8625 = vmatprep.subr.bf16.mxu0 0
    %8626 = vmatpush1.bf16.xpose.msra.mxu0 0
    %8627 = vmatprep.subr.bf16.mxu0 0
    %8628 = vmatpush1.bf16.xpose.msra.mxu0 0
    %8629 = vmatprep.subr.bf16.mxu0 0
    %8630 = vmatpush1.bf16.xpose.msra.mxu0 0
    %8631 = vmatprep.subr.bf16.mxu0 0
    %8632 = vmatpush1.bf16.xpose.msra.mxu0 0
    %8633 = vmatprep.subr.bf16.mxu0 0
    %8634 = vmatpush1.bf16.xpose.msra.mxu0 0
    %8635 = vmatprep.subr.bf16.mxu0 0
    %8636 = vmatpush1.bf16.xpose.msra.mxu0 0
    %8637 = vmatprep.subr.bf16.mxu0 0
    %8638 = vmatpush1.bf16.xpose.msra.mxu0 0
    %8639 = vmatprep.subr.bf16.mxu0 0
    %8640 = vmatpush1.bf16.xpose.msra.mxu0 0
    %8641 = vmatprep.subr.bf16.mxu0 0
    %8642 = vmatpush1.bf16.xpose.msra.mxu0 0
    %8643 = vmatprep.mubr.bf16.mxu0 %v8208
    %8644 = vmatmul.mubr.bf16.gmra.mrb[0].mxu0 %v8207
    %v8645 = vpop.f32.mrb[0].mxu0
    %v8646 = vadd.f32 %v8606, %v8645
    %v8647 = vpop.f32.mrb[0].mxu0
    %v8648 = vpop.f32.mrb[0].mxu0
    %v8649 = vpop.f32.mrb[0].mxu0
    %8650 = vdwg.mxu0
    %8651 = vmatprep.subr.bf16.mxu0 %v8360
    %8652 = vmatpush1.bf16.xpose.msra.mxu0 %v8359
    %8653 = vmatprep.subr.bf16.mxu0 %v8376
    %8654 = vmatpush1.bf16.xpose.msra.mxu0 %v8375
    %8655 = vmatprep.subr.bf16.mxu0 0
    %8656 = vmatpush1.bf16.xpose.msra.mxu0 0
    %8657 = vmatprep.subr.bf16.mxu0 0
    %8658 = vmatpush1.bf16.xpose.msra.mxu0 0
    %8659 = vmatprep.subr.bf16.mxu0 0
    %8660 = vmatpush1.bf16.xpose.msra.mxu0 0
    %8661 = vmatprep.subr.bf16.mxu0 0
    %8662 = vmatpush1.bf16.xpose.msra.mxu0 0
    %8663 = vmatprep.subr.bf16.mxu0 0
    %8664 = vmatpush1.bf16.xpose.msra.mxu0 0
    %8665 = vmatprep.subr.bf16.mxu0 0
    %8666 = vmatpush1.bf16.xpose.msra.mxu0 0
    %8667 = vmatprep.subr.bf16.mxu0 0
    %8668 = vmatpush1.bf16.xpose.msra.mxu0 0
    %8669 = vmatprep.subr.bf16.mxu0 0
    %8670 = vmatpush1.bf16.xpose.msra.mxu0 0
    %8671 = vmatprep.subr.bf16.mxu0 0
    %8672 = vmatpush1.bf16.xpose.msra.mxu0 0
    %8673 = vmatprep.subr.bf16.mxu0 0
    %8674 = vmatpush1.bf16.xpose.msra.mxu0 0
    %8675 = vmatprep.subr.bf16.mxu0 0
    %8676 = vmatpush1.bf16.xpose.msra.mxu0 0
    %8677 = vmatprep.subr.bf16.mxu0 0
    %8678 = vmatpush1.bf16.xpose.msra.mxu0 0
    %8679 = vmatprep.subr.bf16.mxu0 0
    %8680 = vmatpush1.bf16.xpose.msra.mxu0 0
    %8681 = vmatprep.subr.bf16.mxu0 0
    %8682 = vmatpush1.bf16.xpose.msra.mxu0 0
    %8683 = vmatprep.mubr.bf16.mxu0 %v8210
    %8684 = vmatmul.mubr.bf16.gmra.mrb[0].mxu0 %v8209
    %v8685 = vpop.f32.mrb[0].mxu0
    %v8686 = vadd.f32 %v8646, %v8685
    %v8687 = vpop.f32.mrb[0].mxu0
    %v8688 = vpop.f32.mrb[0].mxu0
    %v8689 = vpop.f32.mrb[0].mxu0
    %8690 = vdwg.mxu0
    %8691 = vmatprep.subr.bf16.mxu0 %v8362
    %8692 = vmatpush1.bf16.xpose.msra.mxu0 %v8361
    %8693 = vmatprep.subr.bf16.mxu0 %v8378
    %8694 = vmatpush1.bf16.xpose.msra.mxu0 %v8377
    %8695 = vmatprep.subr.bf16.mxu0 0
    %8696 = vmatpush1.bf16.xpose.msra.mxu0 0
    %8697 = vmatprep.subr.bf16.mxu0 0
    %8698 = vmatpush1.bf16.xpose.msra.mxu0 0
    %8699 = vmatprep.subr.bf16.mxu0 0
    %8700 = vmatpush1.bf16.xpose.msra.mxu0 0
    %8701 = vmatprep.subr.bf16.mxu0 0
    %8702 = vmatpush1.bf16.xpose.msra.mxu0 0
    %8703 = vmatprep.subr.bf16.mxu0 0
    %8704 = vmatpush1.bf16.xpose.msra.mxu0 0
    %8705 = vmatprep.subr.bf16.mxu0 0
    %8706 = vmatpush1.bf16.xpose.msra.mxu0 0
    %8707 = vmatprep.subr.bf16.mxu0 0
    %8708 = vmatpush1.bf16.xpose.msra.mxu0 0
    %8709 = vmatprep.subr.bf16.mxu0 0
    %8710 = vmatpush1.bf16.xpose.msra.mxu0 0
    %8711 = vmatprep.subr.bf16.mxu0 0
    %8712 = vmatpush1.bf16.xpose.msra.mxu0 0
    %8713 = vmatprep.subr.bf16.mxu0 0
    %8714 = vmatpush1.bf16.xpose.msra.mxu0 0
    %8715 = vmatprep.subr.bf16.mxu0 0
    %8716 = vmatpush1.bf16.xpose.msra.mxu0 0
    %8717 = vmatprep.subr.bf16.mxu0 0
    %8718 = vmatpush1.bf16.xpose.msra.mxu0 0
    %8719 = vmatprep.subr.bf16.mxu0 0
    %8720 = vmatpush1.bf16.xpose.msra.mxu0 0
    %8721 = vmatprep.subr.bf16.mxu0 0
    %8722 = vmatpush1.bf16.xpose.msra.mxu0 0
    %8723 = vmatprep.mubr.bf16.mxu0 %v8212
    %8724 = vmatmul.mubr.bf16.gmra.mrb[0].mxu0 %v8211
    %v8725 = vpop.f32.mrb[0].mxu0
    %v8726 = vadd.f32 %v8686, %v8725
    %v8727 = vpop.f32.mrb[0].mxu0
    %v8728 = vpop.f32.mrb[0].mxu0
    %v8729 = vpop.f32.mrb[0].mxu0
    %8730 = vdwg.mxu0
    %v8731 = vadd.f32 %v7570, %v8726
    %v8732 = vld [vmem:[#allocation7 + $0x19] sm:$0x1]
    %v8733 = vld [vmem:[#allocation7 + $0x1a] sm:$0x1]
    %v8734 = vsel %vm181, %v8731, 0.0
    %8735 = vadd.xlane.f32.xlu0 %v8734
    %v8736 = vpop.xlane.xlu0 %8735
    %v8737 = vmul.f32 %v8736, %v5343
    %v8738 = vsub.f32 %v8731, %v8737
    %v8739 = vmul.f32 %v8738, %v8738
    %v8740 = vsel %vm181, %v8739, 0.0
    %8741 = vadd.xlane.f32.xlu0 %v8740
    %v8742 = vpop.xlane.xlu0 %8741
    %v8743 = vmul.f32 %v8742, %v5343
    %v8744 = vadd.f32 %v8743, 1e-05
    %v8745 = vrsqrt.pop %v8744
    %v8746 = vmul.f32 %v8738, %v8745
    %v8747 = vlaneseq
    %v8748 = vshrl.u32 %v8747, 7
    %v8749 = vsub.s32 0, %v8748
    %v8750 = vrot.slane %v8732, %v8749
    %v8751 = vmul.f32 %v8746, %v8750
    %v8752 = vlaneseq
    %v8753 = vshrl.u32 %v8752, 7
    %v8754 = vsub.s32 0, %v8753
    %v8755 = vrot.slane %v8733, %v8754
    %v8756 = vadd.f32 %v8751, %v8755
    %v8757 = vmul.u32 %v157, 4
    %vm8758 = vcmp.eq.s32.totalorder %v162, %v8757
    %v8759 = vsel %vm8758, 1.0, 0.0
    %v8761 = vsel %vm4586, %v8759, 0
    %8763 = vmatprep.subr.mxu0 0.0
    %8764 = vmatpush1.msra.mxu0 %v8756
    %8765 = vmatprep.subr.mxu0 0.0
    %8766 = vmatpush1.msra.mxu0 0.0
    %8767 = vmatprep.subr.mxu0 0.0
    %8768 = vmatpush1.msra.mxu0 0.0
    %8769 = vmatprep.subr.mxu0 0.0
    %8770 = vmatpush1.msra.mxu0 0.0
    %8771 = vmatprep.subr.mxu0 0.0
    %8772 = vmatpush1.msra.mxu0 0.0
    %8773 = vmatprep.subr.mxu0 0.0
    %8774 = vmatpush1.msra.mxu0 0.0
    %8775 = vmatprep.subr.mxu0 0.0
    %8776 = vmatpush1.msra.mxu0 0.0
    %8777 = vmatprep.subr.mxu0 0.0
    %8778 = vmatpush1.msra.mxu0 0.0
    %8779 = vmatprep.subr.mxu0 0.0
    %8780 = vmatpush1.msra.mxu0 0.0
    %8781 = vmatprep.subr.mxu0 0.0
    %8782 = vmatpush1.msra.mxu0 0.0
    %8783 = vmatprep.subr.mxu0 0.0
    %8784 = vmatpush1.msra.mxu0 0.0
    %8785 = vmatprep.subr.mxu0 0.0
    %8786 = vmatpush1.msra.mxu0 0.0
    %8787 = vmatprep.subr.mxu0 0.0
    %8788 = vmatpush1.msra.mxu0 0.0
    %8789 = vmatprep.subr.mxu0 0.0
    %8790 = vmatpush1.msra.mxu0 0.0
    %8791 = vmatprep.subr.mxu0 0.0
    %8792 = vmatpush1.msra.mxu0 0.0
    %8793 = vmatprep.subr.mxu0 0.0
    %8794 = vmatpush1.msra.mxu0 0.0
    %8795 = vmatprep.subr.mxu0 0.0
    %8796 = vmatpush1.msra.mxu0 0.0
    %8797 = vmatprep.subr.mxu0 0.0
    %8798 = vmatpush1.msra.mxu0 0.0
    %8799 = vmatprep.subr.mxu0 0.0
    %8800 = vmatpush1.msra.mxu0 0.0
    %8801 = vmatprep.subr.mxu0 0.0
    %8802 = vmatpush1.msra.mxu0 0.0
    %8803 = vmatprep.subr.mxu0 0.0
    %8804 = vmatpush1.msra.mxu0 0.0
    %8805 = vmatprep.subr.mxu0 0.0
    %8806 = vmatpush1.msra.mxu0 0.0
    %8807 = vmatprep.subr.mxu0 0.0
    %8808 = vmatpush1.msra.mxu0 0.0
    %8809 = vmatprep.subr.mxu0 0.0
    %8810 = vmatpush1.msra.mxu0 0.0
    %8811 = vmatprep.subr.mxu0 0.0
    %8812 = vmatpush1.msra.mxu0 0.0
    %8813 = vmatprep.subr.mxu0 0.0
    %8814 = vmatpush1.msra.mxu0 0.0
    %8815 = vmatprep.subr.mxu0 0.0
    %8816 = vmatpush1.msra.mxu0 0.0
    %8817 = vmatprep.subr.mxu0 0.0
    %8818 = vmatpush1.msra.mxu0 0.0
    %8819 = vmatprep.subr.mxu0 0.0
    %8820 = vmatpush1.msra.mxu0 0.0
    %8821 = vmatprep.subr.mxu0 0.0
    %8822 = vmatpush1.msra.mxu0 0.0
    %8823 = vmatprep.subr.mxu0 0.0
    %8824 = vmatpush1.msra.mxu0 0.0
    %8825 = vmatprep.subr.mxu0 0.0
    %8826 = vmatpush1.msra.mxu0 0.0
    %8827 = vmatprep.mubr.f32.mxu0 0.0
    %8828 = vmatmul.mubr.f32.gmra.mrb[0].mxu0 %v8761
    %v8829 = vpop.f32.mrb[0].mxu0
    %v8830 = vadd.f32 0.0, %v8829
    %v8831 = vpop.f32.mrb[0].mxu0
    %8832 = vdwg.mxu0
    %v8833 = vadd.s32 %v8757, 1
    %vm8834 = vcmp.eq.s32.totalorder %v162, %v8833
    %v8835 = vsel %vm8834, 1.0, 0.0
    %v8837 = vsel %vm4586, %v8835, 0
    %8839 = vmatprep.subr.mxu0 0.0
    %8840 = vmatpush1.msra.mxu0 %v8756
    %8841 = vmatprep.subr.mxu0 0.0
    %8842 = vmatpush1.msra.mxu0 0.0
    %8843 = vmatprep.subr.mxu0 0.0
    %8844 = vmatpush1.msra.mxu0 0.0
    %8845 = vmatprep.subr.mxu0 0.0
    %8846 = vmatpush1.msra.mxu0 0.0
    %8847 = vmatprep.subr.mxu0 0.0
    %8848 = vmatpush1.msra.mxu0 0.0
    %8849 = vmatprep.subr.mxu0 0.0
    %8850 = vmatpush1.msra.mxu0 0.0
    %8851 = vmatprep.subr.mxu0 0.0
    %8852 = vmatpush1.msra.mxu0 0.0
    %8853 = vmatprep.subr.mxu0 0.0
    %8854 = vmatpush1.msra.mxu0 0.0
    %8855 = vmatprep.subr.mxu0 0.0
    %8856 = vmatpush1.msra.mxu0 0.0
    %8857 = vmatprep.subr.mxu0 0.0
    %8858 = vmatpush1.msra.mxu0 0.0
    %8859 = vmatprep.subr.mxu0 0.0
    %8860 = vmatpush1.msra.mxu0 0.0
    %8861 = vmatprep.subr.mxu0 0.0
    %8862 = vmatpush1.msra.mxu0 0.0
    %8863 = vmatprep.subr.mxu0 0.0
    %8864 = vmatpush1.msra.mxu0 0.0
    %8865 = vmatprep.subr.mxu0 0.0
    %8866 = vmatpush1.msra.mxu0 0.0
    %8867 = vmatprep.subr.mxu0 0.0
    %8868 = vmatpush1.msra.mxu0 0.0
    %8869 = vmatprep.subr.mxu0 0.0
    %8870 = vmatpush1.msra.mxu0 0.0
    %8871 = vmatprep.subr.mxu0 0.0
    %8872 = vmatpush1.msra.mxu0 0.0
    %8873 = vmatprep.subr.mxu0 0.0
    %8874 = vmatpush1.msra.mxu0 0.0
    %8875 = vmatprep.subr.mxu0 0.0
    %8876 = vmatpush1.msra.mxu0 0.0
    %8877 = vmatprep.subr.mxu0 0.0
    %8878 = vmatpush1.msra.mxu0 0.0
    %8879 = vmatprep.subr.mxu0 0.0
    %8880 = vmatpush1.msra.mxu0 0.0
    %8881 = vmatprep.subr.mxu0 0.0
    %8882 = vmatpush1.msra.mxu0 0.0
    %8883 = vmatprep.subr.mxu0 0.0
    %8884 = vmatpush1.msra.mxu0 0.0
    %8885 = vmatprep.subr.mxu0 0.0
    %8886 = vmatpush1.msra.mxu0 0.0
    %8887 = vmatprep.subr.mxu0 0.0
    %8888 = vmatpush1.msra.mxu0 0.0
    %8889 = vmatprep.subr.mxu0 0.0
    %8890 = vmatpush1.msra.mxu0 0.0
    %8891 = vmatprep.subr.mxu0 0.0
    %8892 = vmatpush1.msra.mxu0 0.0
    %8893 = vmatprep.subr.mxu0 0.0
    %8894 = vmatpush1.msra.mxu0 0.0
    %8895 = vmatprep.subr.mxu0 0.0
    %8896 = vmatpush1.msra.mxu0 0.0
    %8897 = vmatprep.subr.mxu0 0.0
    %8898 = vmatpush1.msra.mxu0 0.0
    %8899 = vmatprep.subr.mxu0 0.0
    %8900 = vmatpush1.msra.mxu0 0.0
    %8901 = vmatprep.subr.mxu0 0.0
    %8902 = vmatpush1.msra.mxu0 0.0
    %8903 = vmatprep.mubr.f32.mxu0 0.0
    %8904 = vmatmul.mubr.f32.gmra.mrb[0].mxu0 %v8837
    %v8905 = vpop.f32.mrb[0].mxu0
    %v8906 = vadd.f32 0.0, %v8905
    %v8907 = vpop.f32.mrb[0].mxu0
    %8908 = vdwg.mxu0
    %v8909 = vadd.s32 %v8757, 2
    %vm8910 = vcmp.eq.s32.totalorder %v162, %v8909
    %v8911 = vsel %vm8910, 1.0, 0.0
    %v8913 = vsel %vm4586, %v8911, 0
    %8915 = vmatprep.subr.mxu0 0.0
    %8916 = vmatpush1.msra.mxu0 %v8756
    %8917 = vmatprep.subr.mxu0 0.0
    %8918 = vmatpush1.msra.mxu0 0.0
    %8919 = vmatprep.subr.mxu0 0.0
    %8920 = vmatpush1.msra.mxu0 0.0
    %8921 = vmatprep.subr.mxu0 0.0
    %8922 = vmatpush1.msra.mxu0 0.0
    %8923 = vmatprep.subr.mxu0 0.0
    %8924 = vmatpush1.msra.mxu0 0.0
    %8925 = vmatprep.subr.mxu0 0.0
    %8926 = vmatpush1.msra.mxu0 0.0
    %8927 = vmatprep.subr.mxu0 0.0
    %8928 = vmatpush1.msra.mxu0 0.0
    %8929 = vmatprep.subr.mxu0 0.0
    %8930 = vmatpush1.msra.mxu0 0.0
    %8931 = vmatprep.subr.mxu0 0.0
    %8932 = vmatpush1.msra.mxu0 0.0
    %8933 = vmatprep.subr.mxu0 0.0
    %8934 = vmatpush1.msra.mxu0 0.0
    %8935 = vmatprep.subr.mxu0 0.0
    %8936 = vmatpush1.msra.mxu0 0.0
    %8937 = vmatprep.subr.mxu0 0.0
    %8938 = vmatpush1.msra.mxu0 0.0
    %8939 = vmatprep.subr.mxu0 0.0
    %8940 = vmatpush1.msra.mxu0 0.0
    %8941 = vmatprep.subr.mxu0 0.0
    %8942 = vmatpush1.msra.mxu0 0.0
    %8943 = vmatprep.subr.mxu0 0.0
    %8944 = vmatpush1.msra.mxu0 0.0
    %8945 = vmatprep.subr.mxu0 0.0
    %8946 = vmatpush1.msra.mxu0 0.0
    %8947 = vmatprep.subr.mxu0 0.0
    %8948 = vmatpush1.msra.mxu0 0.0
    %8949 = vmatprep.subr.mxu0 0.0
    %8950 = vmatpush1.msra.mxu0 0.0
    %8951 = vmatprep.subr.mxu0 0.0
    %8952 = vmatpush1.msra.mxu0 0.0
    %8953 = vmatprep.subr.mxu0 0.0
    %8954 = vmatpush1.msra.mxu0 0.0
    %8955 = vmatprep.subr.mxu0 0.0
    %8956 = vmatpush1.msra.mxu0 0.0
    %8957 = vmatprep.subr.mxu0 0.0
    %8958 = vmatpush1.msra.mxu0 0.0
    %8959 = vmatprep.subr.mxu0 0.0
    %8960 = vmatpush1.msra.mxu0 0.0
    %8961 = vmatprep.subr.mxu0 0.0
    %8962 = vmatpush1.msra.mxu0 0.0
    %8963 = vmatprep.subr.mxu0 0.0
    %8964 = vmatpush1.msra.mxu0 0.0
    %8965 = vmatprep.subr.mxu0 0.0
    %8966 = vmatpush1.msra.mxu0 0.0
    %8967 = vmatprep.subr.mxu0 0.0
    %8968 = vmatpush1.msra.mxu0 0.0
    %8969 = vmatprep.subr.mxu0 0.0
    %8970 = vmatpush1.msra.mxu0 0.0
    %8971 = vmatprep.subr.mxu0 0.0
    %8972 = vmatpush1.msra.mxu0 0.0
    %8973 = vmatprep.subr.mxu0 0.0
    %8974 = vmatpush1.msra.mxu0 0.0
    %8975 = vmatprep.subr.mxu0 0.0
    %8976 = vmatpush1.msra.mxu0 0.0
    %8977 = vmatprep.subr.mxu0 0.0
    %8978 = vmatpush1.msra.mxu0 0.0
    %8979 = vmatprep.mubr.f32.mxu0 0.0
    %8980 = vmatmul.mubr.f32.gmra.mrb[0].mxu0 %v8913
    %v8981 = vpop.f32.mrb[0].mxu0
    %v8982 = vadd.f32 0.0, %v8981
    %v8983 = vpop.f32.mrb[0].mxu0
    %8984 = vdwg.mxu0
    %v8985 = vadd.s32 %v8757, 3
    %vm8986 = vcmp.eq.s32.totalorder %v162, %v8985
    %v8987 = vsel %vm8986, 1.0, 0.0
    %v8989 = vsel %vm4586, %v8987, 0
    %8991 = vmatprep.subr.mxu0 0.0
    %8992 = vmatpush1.msra.mxu0 %v8756
    %8993 = vmatprep.subr.mxu0 0.0
    %8994 = vmatpush1.msra.mxu0 0.0
    %8995 = vmatprep.subr.mxu0 0.0
    %8996 = vmatpush1.msra.mxu0 0.0
    %8997 = vmatprep.subr.mxu0 0.0
    %8998 = vmatpush1.msra.mxu0 0.0
    %8999 = vmatprep.subr.mxu0 0.0
    %9000 = vmatpush1.msra.mxu0 0.0
    %9001 = vmatprep.subr.mxu0 0.0
    %9002 = vmatpush1.msra.mxu0 0.0
    %9003 = vmatprep.subr.mxu0 0.0
    %9004 = vmatpush1.msra.mxu0 0.0
    %9005 = vmatprep.subr.mxu0 0.0
    %9006 = vmatpush1.msra.mxu0 0.0
    %9007 = vmatprep.subr.mxu0 0.0
    %9008 = vmatpush1.msra.mxu0 0.0
    %9009 = vmatprep.subr.mxu0 0.0
    %9010 = vmatpush1.msra.mxu0 0.0
    %9011 = vmatprep.subr.mxu0 0.0
    %9012 = vmatpush1.msra.mxu0 0.0
    %9013 = vmatprep.subr.mxu0 0.0
    %9014 = vmatpush1.msra.mxu0 0.0
    %9015 = vmatprep.subr.mxu0 0.0
    %9016 = vmatpush1.msra.mxu0 0.0
    %9017 = vmatprep.subr.mxu0 0.0
    %9018 = vmatpush1.msra.mxu0 0.0
    %9019 = vmatprep.subr.mxu0 0.0
    %9020 = vmatpush1.msra.mxu0 0.0
    %9021 = vmatprep.subr.mxu0 0.0
    %9022 = vmatpush1.msra.mxu0 0.0
    %9023 = vmatprep.subr.mxu0 0.0
    %9024 = vmatpush1.msra.mxu0 0.0
    %9025 = vmatprep.subr.mxu0 0.0
    %9026 = vmatpush1.msra.mxu0 0.0
    %9027 = vmatprep.subr.mxu0 0.0
    %9028 = vmatpush1.msra.mxu0 0.0
    %9029 = vmatprep.subr.mxu0 0.0
    %9030 = vmatpush1.msra.mxu0 0.0
    %9031 = vmatprep.subr.mxu0 0.0
    %9032 = vmatpush1.msra.mxu0 0.0
    %9033 = vmatprep.subr.mxu0 0.0
    %9034 = vmatpush1.msra.mxu0 0.0
    %9035 = vmatprep.subr.mxu0 0.0
    %9036 = vmatpush1.msra.mxu0 0.0
    %9037 = vmatprep.subr.mxu0 0.0
    %9038 = vmatpush1.msra.mxu0 0.0
    %9039 = vmatprep.subr.mxu0 0.0
    %9040 = vmatpush1.msra.mxu0 0.0
    %9041 = vmatprep.subr.mxu0 0.0
    %9042 = vmatpush1.msra.mxu0 0.0
    %9043 = vmatprep.subr.mxu0 0.0
    %9044 = vmatpush1.msra.mxu0 0.0
    %9045 = vmatprep.subr.mxu0 0.0
    %9046 = vmatpush1.msra.mxu0 0.0
    %9047 = vmatprep.subr.mxu0 0.0
    %9048 = vmatpush1.msra.mxu0 0.0
    %9049 = vmatprep.subr.mxu0 0.0
    %9050 = vmatpush1.msra.mxu0 0.0
    %9051 = vmatprep.subr.mxu0 0.0
    %9052 = vmatpush1.msra.mxu0 0.0
    %9053 = vmatprep.subr.mxu0 0.0
    %9054 = vmatpush1.msra.mxu0 0.0
    %9055 = vmatprep.mubr.f32.mxu0 0.0
    %9056 = vmatmul.mubr.f32.gmra.mrb[0].mxu0 %v8989
    %v9057 = vpop.f32.mrb[0].mxu0
    %v9058 = vadd.f32 0.0, %v9057
    %v9059 = vpop.f32.mrb[0].mxu0
    %9060 = vdwg.mxu0
    %9062 = vrot.lane.b32.xlu0 %v8906, 32
    %v9063 = vpop.permute.xlu0 %9062
    %9066 = vrot.lane.b32.xlu0 %v8982, 64
    %v9067 = vpop.permute.xlu0 %9066
    %9070 = vrot.lane.b32.xlu0 %v9058, 96
    %v9071 = vpop.permute.xlu0 %9070
    %v9073 = vsel %vm181, %v8830, %v9063
    %v9074 = vsel %vm3198, %v9073, %v9067
    %vm9075 = vcmask 785408
    %v9076 = vsel %vm9075, %v9074, %v9071
    %9077 = vst [vmem:[%s13] sm:$0x3] %v9076
    %v9078 = vpack.c.bf16 %v9076, %v9076
    %v9079 = vld [vmem:[#allocation14] sm:$0xf]
    %v9080 = vld [vmem:[#allocation14 + $0x4] sm:$0xf]
    %v9081 = vld [vmem:[#allocation14 + $0x8] sm:$0xf]
    %v9082 = vld [vmem:[#allocation14 + $0xc] sm:$0xf]
    %v9083 = vld [vmem:[#allocation14 + $0x10] sm:$0xf]
    %v9084 = vld [vmem:[#allocation14 + $0x14] sm:$0xf]
    %v9085 = vld [vmem:[#allocation14 + $0x18] sm:$0xf]
    %v9086 = vld [vmem:[#allocation14 + $0x1c] sm:$0xf]
    %v9087 = vld [vmem:[#allocation7 + $0x7] sm:$0x1]
    %v9088 = vlaneseq
    %v9089 = vshrl.u32 %v9088, 7
    %v9090 = vsub.s32 0, %v9089
    %v9091 = vrot.slane %v9087, %v9090
    %v9100 = vunpack.c.l.b16 %v9079
    %v9101 = vunpack.c.l.b16 %v9080
    %v9102 = vunpack.c.l.b16 %v9081
    %v9103 = vunpack.c.l.b16 %v9082
    %v9104 = vunpack.c.l.b16 %v9083
    %v9105 = vunpack.c.l.b16 %v9084
    %v9106 = vunpack.c.l.b16 %v9085
    %v9107 = vunpack.c.l.b16 %v9086
    %v9108 = vpack.c.b16 %v9101, %v9100
    %v9109 = vpack.c.b16 %v9103, %v9102
    %v9110 = vpack.c.b16 %v9105, %v9104
    %v9111 = vpack.c.b16 %v9107, %v9106
    %9116 = vmatprep.subr.bf16.mxu0 0
    %9117 = vmatpush1.bf16.xpose.msra.mxu0 %v9108
    %9118 = vmatprep.subr.bf16.mxu0 0
    %9119 = vmatpush1.bf16.xpose.msra.mxu0 %v9109
    %9120 = vmatprep.subr.bf16.mxu0 0
    %9121 = vmatpush1.bf16.xpose.msra.mxu0 %v9110
    %9122 = vmatprep.subr.bf16.mxu0 0
    %9123 = vmatpush1.bf16.xpose.msra.mxu0 %v9111
    %9124 = vmatprep.subr.bf16.mxu0 0
    %9125 = vmatpush1.bf16.xpose.msra.mxu0 0
    %9126 = vmatprep.subr.bf16.mxu0 0
    %9127 = vmatpush1.bf16.xpose.msra.mxu0 0
    %9128 = vmatprep.subr.bf16.mxu0 0
    %9129 = vmatpush1.bf16.xpose.msra.mxu0 0
    %9130 = vmatprep.subr.bf16.mxu0 0
    %9131 = vmatpush1.bf16.xpose.msra.mxu0 0
    %9132 = vmatprep.subr.bf16.mxu0 0
    %9133 = vmatpush1.bf16.xpose.msra.mxu0 0
    %9134 = vmatprep.subr.bf16.mxu0 0
    %9135 = vmatpush1.bf16.xpose.msra.mxu0 0
    %9136 = vmatprep.subr.bf16.mxu0 0
    %9137 = vmatpush1.bf16.xpose.msra.mxu0 0
    %9138 = vmatprep.subr.bf16.mxu0 0
    %9139 = vmatpush1.bf16.xpose.msra.mxu0 0
    %9140 = vmatprep.subr.bf16.mxu0 0
    %9141 = vmatpush1.bf16.xpose.msra.mxu0 0
    %9142 = vmatprep.subr.bf16.mxu0 0
    %9143 = vmatpush1.bf16.xpose.msra.mxu0 0
    %9144 = vmatprep.subr.bf16.mxu0 0
    %9145 = vmatpush1.bf16.xpose.msra.mxu0 0
    %9146 = vmatprep.subr.bf16.mxu0 0
    %9147 = vmatpush1.bf16.xpose.msra.mxu0 0
    %9148 = vmatprep.mubr.bf16.mxu0 0
    %9149 = vmatmul.mubr.bf16.gmra.mrb[0].mxu0 %v9078
    %v9150 = vpop.f32.mrb[0].mxu0
    %v9151 = vadd.f32 %v9091, %v9150
    %v9152 = vpop.f32.mrb[0].mxu0
    %v9153 = vpop.f32.mrb[0].mxu0
    %v9154 = vpop.f32.mrb[0].mxu0
    %9155 = vdwg.mxu0
    %v9156 = vmax.f32 %v9151, 0.0
    %v9157 = vld [vmem:[%s11] sm:$0xff]
    %v9158 = vld [vmem:[%s11 + $0x8] sm:$0xff]
    %v9159 = vld [vmem:[%s11 + $0x10] sm:$0xff]
    %v9160 = vld [vmem:[%s11 + $0x18] sm:$0xff]
    %v9161 = vld [vmem:[%s11 + $0x20] sm:$0xff]
    %v9162 = vld [vmem:[%s11 + $0x28] sm:$0xff]
    %v9163 = vld [vmem:[%s11 + $0x30] sm:$0xff]
    %v9164 = vld [vmem:[%s11 + $0x38] sm:$0xff]
    %v9165 = vld [vmem:[#allocation7 + $0x8] sm:$0x1]
    %v9166 = vlaneseq
    %v9167 = vshrl.u32 %v9166, 7
    %v9168 = vsub.s32 0, %v9167
    %v9169 = vrot.slane %v9165, %v9168
    %v9171 = vsel %vm3198, %v9156, 0
    %9173 = vmatprep.subr.mxu0 0.0
    %9174 = vmatpush1.msra.mxu0 %v9157
    %9175 = vmatprep.subr.mxu0 0.0
    %9176 = vmatpush1.msra.mxu0 %v9158
    %9177 = vmatprep.subr.mxu0 0.0
    %9178 = vmatpush1.msra.mxu0 %v9159
    %9179 = vmatprep.subr.mxu0 0.0
    %9180 = vmatpush1.msra.mxu0 %v9160
    %9181 = vmatprep.subr.mxu0 0.0
    %9182 = vmatpush1.msra.mxu0 %v9161
    %9183 = vmatprep.subr.mxu0 0.0
    %9184 = vmatpush1.msra.mxu0 %v9162
    %9185 = vmatprep.subr.mxu0 0.0
    %9186 = vmatpush1.msra.mxu0 %v9163
    %9187 = vmatprep.subr.mxu0 0.0
    %9188 = vmatpush1.msra.mxu0 %v9164
    %9189 = vmatprep.subr.mxu0 0.0
    %9190 = vmatpush1.msra.mxu0 0.0
    %9191 = vmatprep.subr.mxu0 0.0
    %9192 = vmatpush1.msra.mxu0 0.0
    %9193 = vmatprep.subr.mxu0 0.0
    %9194 = vmatpush1.msra.mxu0 0.0
    %9195 = vmatprep.subr.mxu0 0.0
    %9196 = vmatpush1.msra.mxu0 0.0
    %9197 = vmatprep.subr.mxu0 0.0
    %9198 = vmatpush1.msra.mxu0 0.0
    %9199 = vmatprep.subr.mxu0 0.0
    %9200 = vmatpush1.msra.mxu0 0.0
    %9201 = vmatprep.subr.mxu0 0.0
    %9202 = vmatpush1.msra.mxu0 0.0
    %9203 = vmatprep.subr.mxu0 0.0
    %9204 = vmatpush1.msra.mxu0 0.0
    %9205 = vmatprep.subr.mxu0 0.0
    %9206 = vmatpush1.msra.mxu0 0.0
    %9207 = vmatprep.subr.mxu0 0.0
    %9208 = vmatpush1.msra.mxu0 0.0
    %9209 = vmatprep.subr.mxu0 0.0
    %9210 = vmatpush1.msra.mxu0 0.0
    %9211 = vmatprep.subr.mxu0 0.0
    %9212 = vmatpush1.msra.mxu0 0.0
    %9213 = vmatprep.subr.mxu0 0.0
    %9214 = vmatpush1.msra.mxu0 0.0
    %9215 = vmatprep.subr.mxu0 0.0
    %9216 = vmatpush1.msra.mxu0 0.0
    %9217 = vmatprep.subr.mxu0 0.0
    %9218 = vmatpush1.msra.mxu0 0.0
    %9219 = vmatprep.subr.mxu0 0.0
    %9220 = vmatpush1.msra.mxu0 0.0
    %9221 = vmatprep.subr.mxu0 0.0
    %9222 = vmatpush1.msra.mxu0 0.0
    %9223 = vmatprep.subr.mxu0 0.0
    %9224 = vmatpush1.msra.mxu0 0.0
    %9225 = vmatprep.subr.mxu0 0.0
    %9226 = vmatpush1.msra.mxu0 0.0
    %9227 = vmatprep.subr.mxu0 0.0
    %9228 = vmatpush1.msra.mxu0 0.0
    %9229 = vmatprep.subr.mxu0 0.0
    %9230 = vmatpush1.msra.mxu0 0.0
    %9231 = vmatprep.subr.mxu0 0.0
    %9232 = vmatpush1.msra.mxu0 0.0
    %9233 = vmatprep.subr.mxu0 0.0
    %9234 = vmatpush1.msra.mxu0 0.0
    %9235 = vmatprep.subr.mxu0 0.0
    %9236 = vmatpush1.msra.mxu0 0.0
    %9237 = vmatprep.mubr.f32.mxu0 0.0
    %9238 = vmatmul.mubr.f32.gmra.mrb[0].mxu0 %v9171
    %v9239 = vpop.f32.mrb[0].mxu0
    %v9240 = vadd.f32 %v9169, %v9239
    %v9241 = vpop.f32.mrb[0].mxu0
    %9242 = vdwg.mxu0
    %vm9243 = vcmask 33792
    %9244 = vst.msk [vmem:[#allocation16] sm:$0x3] %vm9243, %v9240
    // Predicated region
    $region82: #{forward.1} parent=1 // pred_check
      _
    $region83: #{forward.1} parent=1 // pred_check_branch
      %9246 = sbr.rel (0) target = $region85
    $region84: #{forward.1} parent=1 // pred_region
      %s9248 = ssub.s32 32, 32
      %9249 = vsyncadd [#allocation4], %s9248
      %s9251 = sshll.u32 [#allocation16], 4
      %s9252 = int_to_ptr.vmem [resolvable:$true] %s9251
      %9254 = dma.vmem_to_hbm [thread:$0]  %s9252, 32, %s12, [#allocation4]
    $region85: #{forward.1} parent=1 // pred_fallthru
      _
    // Predicated region
    $region86: #{forward.1} parent=1 // pred_check
      _
    $region87: #{forward.1} parent=1 // pred_check_branch
      %9256 = sbr.rel (0) target = $region89
    $region88: #{forward.1} parent=1 // pred_region
      _
    $region89: #{forward.1} parent=1 // pred_fallthru
      _
    // Predicated region
    $region90: #{forward.1} parent=1 // pred_check
      _
    $region91: #{forward.1} parent=1 // pred_check_branch
      %9258 = sbr.rel (0) target = $region93
    $region92: #{forward.1} parent=1 // pred_region
      %9259 = dma.done [#allocation4], 32
    $region93: #{forward.1} parent=1 // pred_fallthru
      _
    // Predicated region
    $region94: #{forward.1} parent=1 // pred_check
      _
    $region95: #{forward.1} parent=1 // pred_check_branch
      %9261 = sbr.rel (0) target = $region97
    $region96: #{forward.1} parent=1 // pred_region
      _
    $region97: #{forward.1} parent=1 // pred_fallthru
      _
    %9262 = vsyncpa [#allocation3], 1
    %9263 = vsyncpa [#allocation6], 1
    %9264 = vsyncpa [#allocation9], 1
    %9265 = vsyncpa [#allocation12], 1
    %9266 = vsyncpa [#allocation15], 1
    %9267 = vsyncpa [#allocation4], 1

</llo_original>
